<compile_context>
chip_gen: v7x
topology: tpu7x:2x2x1
jax: 0.10.0
libtpu: 0.0.40
codegen_flags: <defaults>
</compile_context>

<pallas_src>
import functools

import jax
import jax.numpy as jnp
from jax import lax
from jax.experimental import pallas as pl
from jax.experimental.pallas import tpu as pltpu


# ----------------------------- Pallas head kernel -----------------------------
def _head_kernel(act_ref, w_ref, b_ref, out_ref):
    # act (tb, HW, 1024) bf16: global average pool (f32) -> bf16 matmul ->
    # f32 bias / squared-L2 / rsqrt-normalize epilogue -> lane-dense f32 store.
    acts = act_ref[...].astype(jnp.float32)
    feat = jnp.mean(acts, axis=1)                                   # (tb, 1024) f32
    y = jnp.dot(feat.astype(jnp.bfloat16), w_ref[...],
                preferred_element_type=jnp.float32)                 # bf16 x bf16 -> f32
    y = y + b_ref[...]                                              # f32 epilogue
    ssq = jnp.sum(y * y, axis=1, keepdims=True)                     # padded cols are 0
    out_ref[...] = (y * lax.rsqrt(ssq + 1e-12)).astype(out_ref.dtype)


def _pick_tb(B, hw, cf, dp):
    # VMEM budget per tile (double-buffered bf16 activations + f32 output).
    bytes_per_row = hw * cf * 2 * 2 + dp * 4 * 2
    cap = max(8, (24 << 20) // bytes_per_row)
    min_steps = 2 if B >= 16 else 1        # >=2 steps lets v7x use both TensorCores
    for tb in (1024, 512, 256, 128, 64, 32, 16, 8):
        if tb <= cap and B % tb == 0 and B // tb >= min_steps:
            return tb
    return B                                # full-batch block (legal: full-dim block)


def pallas_pool_head(acts, w_head, b_head, dim):
    """acts: (B, HW, 1024) bf16; w_head: (1024, Dp) bf16; b_head: (1, Dp) f32."""
    B, HW, Cf = acts.shape
    _, Dp = w_head.shape
    tb = _pick_tb(B, HW, Cf, Dp)
    out = pl.pallas_call(
        _head_kernel,
        out_shape=jax.ShapeDtypeStruct((B, Dp), jnp.float32),
        grid=(B // tb,),
        in_specs=[
            pl.BlockSpec((tb, HW, Cf), lambda i: (i, 0, 0)),  # per-tile activations
            pl.BlockSpec((Cf, Dp), lambda i: (0, 0)),         # weights stay VMEM-resident
            pl.BlockSpec((1, Dp), lambda i: (0, 0)),
        ],
        out_specs=pl.BlockSpec((tb, Dp), lambda i: (i, 0)),   # lane-dense (Dp % 128 == 0)
        compiler_params=pltpu.CompilerParams(
            dimension_semantics=("parallel",),
            vmem_limit_bytes=32 << 20,
        ),
    )(acts, w_head, b_head)
    return out if Dp == dim else out[:, :dim]


# ----------------------------- Backbone (plain JAX, NHWC) ----------------------
class KeyGen:
    def __init__(self, key):
        self.key = key

    def __call__(self):
        self.key, sub = jax.random.split(self.key)
        return sub


def basic_conv_params(kg, cin, cout, k):
    std = (2.0 / (cin * k * k)) ** 0.5
    w = jax.random.normal(kg(), (k, k, cin, cout), jnp.float32) * std   # HWIO
    return dict(w=w.astype(jnp.bfloat16),                               # bf16 weights
                gamma=jnp.ones((cout,), jnp.float32),
                beta=jnp.zeros((cout,), jnp.float32))


def basic_conv(p, x, stride=1, padding=0):
    # Conv2d(bias=False) -> BatchNorm2d(eps=1e-3, eval stats mean=0, var=1) -> ReLU
    # NOTE: BN folding assumes running_mean=0, running_var=1 (true for this random
    # init); fold real running stats if loading pretrained weights.
    y = lax.conv_general_dilated(
        x.astype(jnp.bfloat16), p["w"], (stride, stride),
        ((padding, padding), (padding, padding)),
        dimension_numbers=("NHWC", "HWIO", "NHWC"),
        preferred_element_type=jnp.float32)
    scale = p["gamma"] / jnp.sqrt(1.0 + 1e-3)
    y = y * scale + p["beta"]                      # f32 epilogue (v5e-safe)
    return jax.nn.relu(y).astype(jnp.bfloat16)


def max_pool2d(x, k, s, pad=0, ceil_mode=False):
    N, H, W, C = x.shape

    def out_size(n):
        eff = n + 2 * pad - k
        if ceil_mode:
            o = -(-eff // s) + 1
            if (o - 1) * s >= n + pad:   # last window must start inside input+left pad
                o -= 1
        else:
            o = eff // s + 1
        return o

    oh, ow = out_size(H), out_size(W)
    pad_h = max(0, (oh - 1) * s + k - H - pad)
    pad_w = max(0, (ow - 1) * s + k - W - pad)
    return lax.reduce_window(
        x, jnp.array(-jnp.inf, x.dtype), lax.max,
        (1, k, k, 1), (1, s, s, 1),
        ((0, 0), (pad, pad_h), (pad, pad_w), (0, 0)))


def inception_params(kg, cin, c1, c3r, c3, c5r, c5, cp):
    return dict(
        b1=basic_conv_params(kg, cin, c1, 1),
        b2a=basic_conv_params(kg, cin, c3r, 1),
        b2b=basic_conv_params(kg, c3r, c3, 3),
        b3a=basic_conv_params(kg, cin, c5r, 1),
        b3b=basic_conv_params(kg, c5r, c5, 3),   # torchvision uses 3x3 here
        b4=basic_conv_params(kg, cin, cp, 1),
    )


def inception(p, x):
    br1 = basic_conv(p["b1"], x)
    br2 = basic_conv(p["b2b"], basic_conv(p["b2a"], x), padding=1)
    br3 = basic_conv(p["b3b"], basic_conv(p["b3a"], x), padding=1)
    br4 = basic_conv(p["b4"], max_pool2d(x, 3, 1, pad=1, ceil_mode=True))
    return jnp.concatenate([br1, br2, br3, br4], axis=-1)


def init_model_params(dim, seed=0):
    kg = KeyGen(jax.random.PRNGKey(seed))
    p = {}
    p["conv1"] = basic_conv_params(kg, 3, 64, 7)
    p["conv2"] = basic_conv_params(kg, 64, 64, 1)
    p["conv3"] = basic_conv_params(kg, 64, 192, 3)
    p["3a"] = inception_params(kg, 192, 64, 96, 128, 16, 32, 32)
    p["3b"] = inception_params(kg, 256, 128, 128, 192, 32, 96, 64)
    p["4a"] = inception_params(kg, 480, 192, 96, 208, 16, 48, 64)
    p["4b"] = inception_params(kg, 512, 160, 112, 224, 24, 64, 64)
    p["4c"] = inception_params(kg, 512, 128, 128, 256, 24, 64, 64)
    p["4d"] = inception_params(kg, 512, 112, 144, 288, 32, 64, 64)
    p["4e"] = inception_params(kg, 528, 256, 160, 320, 32, 128, 128)
    p["5a"] = inception_params(kg, 832, 256, 160, 320, 32, 128, 128)
    p["5b"] = inception_params(kg, 832, 384, 192, 384, 48, 128, 128)

    # googlenet.fc: Linear(1024, 1000)  (no pretrained checkpoint available here;
    # torchvision's fc.weight is (1000,1024) => transpose if loading real weights)
    w_fc = jax.random.normal(kg(), (1024, 1000), jnp.float32) * (1.0 / 1024 ** 0.5)
    b_fc = jnp.zeros((1000,), jnp.float32)
    # model.linear: Linear(1000, dim)
    w_lin = jax.random.normal(kg(), (1000, dim), jnp.float32) * (1.0 / 1000 ** 0.5)
    b_lin = jnp.zeros((dim,), jnp.float32)

    # Compose the two affine layers offline (no nonlinearity between them):
    #   y = (feat @ w_fc + b_fc) @ w_lin + b_lin = feat @ (w_fc @ w_lin) + (b_fc @ w_lin + b_lin)
    w_head = (w_fc @ w_lin).astype(jnp.float32)                 # (1024, dim)
    b_head = (b_fc @ w_lin + b_lin).astype(jnp.float32)         # (dim,)

    # Zero-pad head to a lane-dense width (multiple of 128) for unmasked stores.
    Dp = max(128, ((dim + 127) // 128) * 128)
    w_pad = jnp.zeros((1024, Dp), jnp.float32).at[:, :dim].set(w_head)
    b_pad = jnp.zeros((1, Dp), jnp.float32).at[:, :dim].set(b_head[None, :])
    p["w_head"] = w_pad.astype(jnp.bfloat16)    # bf16 MXU operand
    p["b_head"] = b_pad                         # f32 epilogue bias
    return p


def googlenet_features(p, x_nchw):
    # Transpose once to NHWC so channels sit on the 128-lane axis for every conv.
    x = jnp.transpose(x_nchw, (0, 2, 3, 1))
    # transform_input (pretrained=True path in torchvision GoogLeNet)
    scale = jnp.array([0.229 / 0.5, 0.224 / 0.5, 0.225 / 0.5], jnp.float32)
    shift = jnp.array([(0.485 - 0.5) / 0.5, (0.456 - 0.5) / 0.5,
                       (0.406 - 0.5) / 0.5], jnp.float32)
    x = x * scale + shift

    x = basic_conv(p["conv1"], x, stride=2, padding=3)
    x = max_pool2d(x, 3, 2, ceil_mode=True)
    x = basic_conv(p["conv2"], x)
    x = basic_conv(p["conv3"], x, padding=1)
    x = max_pool2d(x, 3, 2, ceil_mode=True)
    x = inception(p["3a"], x)
    x = inception(p["3b"], x)
    x = max_pool2d(x, 3, 2, ceil_mode=True)
    for n in ("4a", "4b", "4c", "4d", "4e"):
        x = inception(p[n], x)
    x = max_pool2d(x, 2, 2, ceil_mode=True)
    x = inception(p["5a"], x)
    x = inception(p["5b"], x)
    B, H, W, C = x.shape
    # Global average pool is fused into the Pallas head kernel; hand over the
    # raw (B, H*W, C) bf16 activations (dropout(0.2) is identity in eval mode).
    return x.reshape(B, H * W, C).astype(jnp.bfloat16)


def make_forward(dim):
    @jax.jit
    def model_forward(params, x):
        acts = googlenet_features(params, x)                          # (B, HW, 1024) bf16
        out = pallas_pool_head(acts, params["w_head"], params["b_head"], dim)
        return out                                                    # (B, dim), unit L2 rows
    return model_forward


# ----------------------------------- main -------------------------------------
if __name__ == "__main__":
    dim = 32
    params = init_model_params(dim, seed=0)
    model_forward = make_forward(dim)

    key = jax.random.PRNGKey(0)
    x = jax.random.normal(key, (2, 3, 64, 64), jnp.float32)      # NCHW, small image

    out = model_forward(params, x)
    out = jax.block_until_ready(out)

    assert out.shape == (2, dim)
    # each row should have unit L2 norm
    norms = jnp.linalg.norm(out, axis=1)
    assert jnp.all(jnp.abs(norms - 1.0) < 1e-3)
    print("KERNEL_OK")
</pallas_src>

<mosaic_0001>
module attributes {stable_mosaic.version = 11 : i64} {
  func.func @_head_kernel(%arg0: i32, %arg1: memref<2x4x1024xbf16, #tpu.memory_space<vmem>>, %arg2: memref<1024x128xbf16, #tpu.memory_space<vmem>>, %arg3: memref<1x128xf32, #tpu.memory_space<vmem>>, %arg4: memref<2x128xf32, #tpu.memory_space<vmem>>) attributes {dimension_semantics = [#tpu.dimension_semantics<parallel>], iteration_bounds = array<i64: 1>, scalar_prefetch = 0 : i64, scratch_operands = 0 : i64, tpu.core_type = #tpu.core_type<tc>, window_params = [{transform_indices = @transform_0, window_bounds = array<i64: 2, 4, 1024>}, {pipeline_mode = #tpu.pipeline_mode<synchronous>, transform_indices = @transform_1, window_bounds = array<i64: 1024, 128>}, {pipeline_mode = #tpu.pipeline_mode<synchronous>, transform_indices = @transform_2, window_bounds = array<i64: 1, 128>}, {transform_indices = @transform_3, window_bounds = array<i64: 2, 128>}]} {
    %c0 = arith.constant 0 : index
    %c0_0 = arith.constant 0 : index
    %c0_1 = arith.constant 0 : index
    %0 = vector.load %arg1[%c0, %c0_0, %c0_1] : memref<2x4x1024xbf16, #tpu.memory_space<vmem>>, vector<2x4x1024xbf16>
    %1 = arith.extf %0 : vector<2x4x1024xbf16> to vector<2x4x1024xf32>
    %cst = arith.constant dense<0.000000e+00> : vector<2x1024xf32>
    %2 = vector.multi_reduction <add>, %1, %cst [1] : vector<2x4x1024xf32> to vector<2x1024xf32>
    %cst_2 = arith.constant 4.000000e+00 : f32
    %3 = vector.broadcast %cst_2 : f32 to vector<2x1024xf32>
    %4 = arith.divf %2, %3 : vector<2x1024xf32>
    %5 = arith.truncf %4 : vector<2x1024xf32> to vector<2x1024xbf16>
    %c0_3 = arith.constant 0 : index
    %c0_4 = arith.constant 0 : index
    %6 = vector.load %arg2[%c0_3, %c0_4] : memref<1024x128xbf16, #tpu.memory_space<vmem>>, vector<1024x128xbf16>
    %cst_5 = arith.constant dense<0.000000e+00> : vector<2x128xf32>
    %7 = tpu.matmul %5, %6, %cst_5 {dimension_numbers = #tpu.dot_dimension_numbers<[1], [0], [0], [1], [0, 0, 1, 1], [], []>} : vector<2x1024xbf16>, vector<1024x128xbf16>, vector<2x128xf32> -> vector<2x128xf32>
    %c0_6 = arith.constant 0 : index
    %c0_7 = arith.constant 0 : index
    %8 = vector.load %arg3[%c0_6, %c0_7] : memref<1x128xf32, #tpu.memory_space<vmem>>, vector<1x128xf32>
    %9 = vector.broadcast %8 : vector<1x128xf32> to vector<2x128xf32>
    %10 = arith.addf %7, %9 : vector<2x128xf32>
    %11 = arith.mulf %10, %10 : vector<2x128xf32>
    %cst_8 = arith.constant dense<0.000000e+00> : vector<2xf32>
    %12 = vector.multi_reduction <add>, %11, %cst_8 [1] : vector<2x128xf32> to vector<2xf32>
    %13 = vector.shape_cast %12 : vector<2xf32> to vector<2x1xf32>
    %cst_9 = arith.constant 9.99999996E-13 : f32
    %14 = vector.broadcast %cst_9 : f32 to vector<2x1xf32>
    %15 = arith.addf %13, %14 : vector<2x1xf32>
    %16 = math.rsqrt %15 : vector<2x1xf32>
    %17 = vector.broadcast %16 : vector<2x1xf32> to vector<2x128xf32>
    %18 = arith.mulf %10, %17 : vector<2x128xf32>
    %c0_10 = arith.constant 0 : index
    %c0_11 = arith.constant 0 : index
    %19 = vector.load %arg4[%c0_10, %c0_11] : memref<2x128xf32, #tpu.memory_space<vmem>>, vector<2x128xf32>
    tpu.vector_store %arg4[%c0_10, %c0_11], %18 {strides = array<i32>} : memref<2x128xf32, #tpu.memory_space<vmem>>, vector<2x128xf32>,
    return
  }
  func.func @transform_0(%arg0: i32) -> (i32, i32, i32) {
    %c0_i32 = arith.constant 0 : i32
    %c0_i32_0 = arith.constant 0 : i32
    %c0_i32_1 = arith.constant 0 : i32
    return %arg0, %c0_i32, %c0_i32_0 : i32, i32, i32
  }
  func.func @transform_1(%arg0: i32) -> (i32, i32) {
    %c0_i32 = arith.constant 0 : i32
    %c0_i32_0 = arith.constant 0 : i32
    %c0_i32_1 = arith.constant 0 : i32
    return %c0_i32, %c0_i32_0 : i32, i32
  }
  func.func @transform_2(%arg0: i32) -> (i32, i32) {
    %c0_i32 = arith.constant 0 : i32
    %c0_i32_0 = arith.constant 0 : i32
    %c0_i32_1 = arith.constant 0 : i32
    return %c0_i32, %c0_i32_0 : i32, i32
  }
  func.func @transform_3(%arg0: i32) -> (i32, i32) {
    %c0_i32 = arith.constant 0 : i32
    %c0_i32_0 = arith.constant 0 : i32
    return %arg0, %c0_i32 : i32, i32
  }
}

</mosaic_0001>

<llo_original>
// kernel: reverse
$region0: #{reverse}
  #allocation0 [shape = 's32[1]{0}', space=sflag, size = 0x4, scoped, tag = 'scoped memory for reverse']
  %s0 = inlined_call_operand.vmem [shape: bf16[3,3,160,320], index: 0, kind: input, shape index: {}]
  %s1 = inlined_call_operand.vmem [shape: bf16[3,3,160,320], index: 1, kind: output, shape index: {}]
  %s2 = scalar_lea.vmem %s0, 1920
  %v3 = vld [vmem:[%s2] sm:$0xf]
  %v4 = vunpack.c.l.bf16 %v3
  %v5 = vunpack.c.h.bf16 %v3
  %s6 = scalar_lea.vmem %s0, 1200
  %v7 = vld [vmem:[%s6] sm:$0xf]
  %v8 = vunpack.c.l.bf16 %v7
  %v9 = vunpack.c.h.bf16 %v7
  %s10 = scalar_lea.vmem %s1, 720
  %s11 = scalar_lea.vmem %s0, 480
  %v12 = vld [vmem:[%s11] sm:$0xf]
  %v13 = vunpack.c.l.bf16 %v12
  %v14 = vunpack.c.h.bf16 %v12
  %s15 = scalar_lea.vmem %s1, 1440
  %s16 = scalar_lea.vmem %s0, 1680
  %v17 = vld [vmem:[%s16] sm:$0xf]
  %v18 = vunpack.c.l.bf16 %v17
  %v19 = vunpack.c.h.bf16 %v17
  %s20 = scalar_lea.vmem %s1, 240
  %s21 = scalar_lea.vmem %s0, 960
  %v22 = vld [vmem:[%s21] sm:$0xf]
  %v23 = vunpack.c.l.bf16 %v22
  %v24 = vunpack.c.h.bf16 %v22
  %s25 = scalar_lea.vmem %s1, 960
  %s26 = scalar_lea.vmem %s0, 240
  %v27 = vld [vmem:[%s26] sm:$0xf]
  %v28 = vunpack.c.l.bf16 %v27
  %v29 = vunpack.c.h.bf16 %v27
  %s30 = scalar_lea.vmem %s1, 1680
  %s31 = scalar_lea.vmem %s0, 1440
  %v32 = vld [vmem:[%s31] sm:$0xf]
  %v33 = vunpack.c.l.bf16 %v32
  %v34 = vunpack.c.h.bf16 %v32
  %s35 = scalar_lea.vmem %s1, 480
  %s36 = scalar_lea.vmem %s0, 720
  %v37 = vld [vmem:[%s36] sm:$0xf]
  %v38 = vunpack.c.l.bf16 %v37
  %v39 = vunpack.c.h.bf16 %v37
  %s40 = scalar_lea.vmem %s1, 1200
  %v41 = vld [vmem:[%s0] sm:$0xf]
  %v42 = vunpack.c.l.bf16 %v41
  %v43 = vunpack.c.h.bf16 %v41
  %s44 = scalar_lea.vmem %s1, 1920
  %s45 = scalar_lea.vmem %s0, 1932
  %v46 = vld [vmem:[%s45] sm:$0xf]
  %v47 = vunpack.c.l.bf16 %v46
  %v48 = vunpack.c.h.bf16 %v46
  %s49 = scalar_lea.vmem %s1, 12
  %s50 = scalar_lea.vmem %s0, 1212
  %v51 = vld [vmem:[%s50] sm:$0xf]
  %v52 = vunpack.c.l.bf16 %v51
  %v53 = vunpack.c.h.bf16 %v51
  %s54 = scalar_lea.vmem %s1, 732
  %s55 = scalar_lea.vmem %s0, 492
  %v56 = vld [vmem:[%s55] sm:$0xf]
  %v57 = vunpack.c.l.bf16 %v56
  %v58 = vunpack.c.h.bf16 %v56
  %s59 = scalar_lea.vmem %s1, 1452
  %s60 = scalar_lea.vmem %s0, 1692
  %v61 = vld [vmem:[%s60] sm:$0xf]
  %v62 = vunpack.c.l.bf16 %v61
  %v63 = vunpack.c.h.bf16 %v61
  %s64 = scalar_lea.vmem %s1, 252
  %s65 = scalar_lea.vmem %s0, 972
  %v66 = vld [vmem:[%s65] sm:$0xf]
  %v67 = vunpack.c.l.bf16 %v66
  %v68 = vunpack.c.h.bf16 %v66
  %s69 = scalar_lea.vmem %s1, 972
  %s70 = scalar_lea.vmem %s0, 252
  %v71 = vld [vmem:[%s70] sm:$0xf]
  %v72 = vunpack.c.l.bf16 %v71
  %v73 = vunpack.c.h.bf16 %v71
  %s74 = scalar_lea.vmem %s1, 1692
  %s75 = scalar_lea.vmem %s0, 1452
  %v76 = vld [vmem:[%s75] sm:$0xf]
  %v77 = vunpack.c.l.bf16 %v76
  %v78 = vunpack.c.h.bf16 %v76
  %s79 = scalar_lea.vmem %s1, 492
  %s80 = scalar_lea.vmem %s0, 732
  %v81 = vld [vmem:[%s80] sm:$0xf]
  %v82 = vunpack.c.l.bf16 %v81
  %v83 = vunpack.c.h.bf16 %v81
  %s84 = scalar_lea.vmem %s1, 1212
  %s85 = scalar_lea.vmem %s0, 12
  %v86 = vld [vmem:[%s85] sm:$0xf]
  %v87 = vunpack.c.l.bf16 %v86
  %v88 = vunpack.c.h.bf16 %v86
  %s89 = scalar_lea.vmem %s1, 1932
  %s90 = scalar_lea.vmem %s0, 1944
  %v91 = vld [vmem:[%s90] sm:$0xf]
  %v92 = vunpack.c.l.bf16 %v91
  %v93 = vunpack.c.h.bf16 %v91
  %s94 = scalar_lea.vmem %s1, 24
  %s95 = scalar_lea.vmem %s0, 1224
  %v96 = vld [vmem:[%s95] sm:$0xf]
  %v97 = vunpack.c.l.bf16 %v96
  %v98 = vunpack.c.h.bf16 %v96
  %s99 = scalar_lea.vmem %s1, 744
  %s100 = scalar_lea.vmem %s0, 504
  %v101 = vld [vmem:[%s100] sm:$0xf]
  %v102 = vunpack.c.l.bf16 %v101
  %v103 = vunpack.c.h.bf16 %v101
  %s104 = scalar_lea.vmem %s1, 1464
  %s105 = scalar_lea.vmem %s0, 1704
  %v106 = vld [vmem:[%s105] sm:$0xf]
  %v107 = vunpack.c.l.bf16 %v106
  %v108 = vunpack.c.h.bf16 %v106
  %s109 = scalar_lea.vmem %s1, 264
  %s110 = scalar_lea.vmem %s0, 984
  %v111 = vld [vmem:[%s110] sm:$0xf]
  %v112 = vunpack.c.l.bf16 %v111
  %v113 = vunpack.c.h.bf16 %v111
  %s114 = scalar_lea.vmem %s1, 984
  %s115 = scalar_lea.vmem %s0, 264
  %v116 = vld [vmem:[%s115] sm:$0xf]
  %v117 = vunpack.c.l.bf16 %v116
  %v118 = vunpack.c.h.bf16 %v116
  %s119 = scalar_lea.vmem %s1, 1704
  %s120 = scalar_lea.vmem %s0, 1464
  %v121 = vld [vmem:[%s120] sm:$0xf]
  %v122 = vunpack.c.l.bf16 %v121
  %v123 = vunpack.c.h.bf16 %v121
  %s124 = scalar_lea.vmem %s1, 504
  %s125 = scalar_lea.vmem %s0, 744
  %v126 = vld [vmem:[%s125] sm:$0xf]
  %v127 = vunpack.c.l.bf16 %v126
  %v128 = vunpack.c.h.bf16 %v126
  %s129 = scalar_lea.vmem %s1, 1224
  %s130 = scalar_lea.vmem %s0, 24
  %v131 = vld [vmem:[%s130] sm:$0xf]
  %v132 = vunpack.c.l.bf16 %v131
  %v133 = vunpack.c.h.bf16 %v131
  %s134 = scalar_lea.vmem %s1, 1944
  %s135 = scalar_lea.vmem %s0, 1956
  %v136 = vld [vmem:[%s135] sm:$0xf]
  %v137 = vunpack.c.l.bf16 %v136
  %v138 = vunpack.c.h.bf16 %v136
  %s139 = scalar_lea.vmem %s1, 36
  %s140 = scalar_lea.vmem %s0, 1236
  %v141 = vld [vmem:[%s140] sm:$0xf]
  %v142 = vunpack.c.l.bf16 %v141
  %v143 = vunpack.c.h.bf16 %v141
  %s144 = scalar_lea.vmem %s1, 756
  %s145 = scalar_lea.vmem %s0, 516
  %v146 = vld [vmem:[%s145] sm:$0xf]
  %v147 = vunpack.c.l.bf16 %v146
  %v148 = vunpack.c.h.bf16 %v146
  %s149 = scalar_lea.vmem %s1, 1476
  %s150 = scalar_lea.vmem %s0, 1716
  %v151 = vld [vmem:[%s150] sm:$0xf]
  %v152 = vunpack.c.l.bf16 %v151
  %v153 = vunpack.c.h.bf16 %v151
  %s154 = scalar_lea.vmem %s1, 276
  %s155 = scalar_lea.vmem %s0, 996
  %v156 = vld [vmem:[%s155] sm:$0xf]
  %v157 = vunpack.c.l.bf16 %v156
  %v158 = vunpack.c.h.bf16 %v156
  %s159 = scalar_lea.vmem %s1, 996
  %s160 = scalar_lea.vmem %s0, 276
  %v161 = vld [vmem:[%s160] sm:$0xf]
  %v162 = vunpack.c.l.bf16 %v161
  %v163 = vunpack.c.h.bf16 %v161
  %s164 = scalar_lea.vmem %s1, 1716
  %s165 = scalar_lea.vmem %s0, 1476
  %v166 = vld [vmem:[%s165] sm:$0xf]
  %v167 = vunpack.c.l.bf16 %v166
  %v168 = vunpack.c.h.bf16 %v166
  %s169 = scalar_lea.vmem %s1, 516
  %s170 = scalar_lea.vmem %s0, 756
  %v171 = vld [vmem:[%s170] sm:$0xf]
  %v172 = vunpack.c.l.bf16 %v171
  %v173 = vunpack.c.h.bf16 %v171
  %s174 = scalar_lea.vmem %s1, 1236
  %s175 = scalar_lea.vmem %s0, 36
  %v176 = vld [vmem:[%s175] sm:$0xf]
  %v177 = vunpack.c.l.bf16 %v176
  %v178 = vunpack.c.h.bf16 %v176
  %s179 = scalar_lea.vmem %s1, 1956
  %s180 = scalar_lea.vmem %s0, 1968
  %v181 = vld [vmem:[%s180] sm:$0xf]
  %v182 = vunpack.c.l.bf16 %v181
  %v183 = vunpack.c.h.bf16 %v181
  %s184 = scalar_lea.vmem %s1, 48
  %s185 = scalar_lea.vmem %s0, 1248
  %v186 = vld [vmem:[%s185] sm:$0xf]
  %v187 = vunpack.c.l.bf16 %v186
  %v188 = vunpack.c.h.bf16 %v186
  %s189 = scalar_lea.vmem %s1, 768
  %s190 = scalar_lea.vmem %s0, 528
  %v191 = vld [vmem:[%s190] sm:$0xf]
  %v192 = vunpack.c.l.bf16 %v191
  %v193 = vunpack.c.h.bf16 %v191
  %s194 = scalar_lea.vmem %s1, 1488
  %s195 = scalar_lea.vmem %s0, 1728
  %v196 = vld [vmem:[%s195] sm:$0xf]
  %v197 = vunpack.c.l.bf16 %v196
  %v198 = vunpack.c.h.bf16 %v196
  %s199 = scalar_lea.vmem %s1, 288
  %s200 = scalar_lea.vmem %s0, 1008
  %v201 = vld [vmem:[%s200] sm:$0xf]
  %v202 = vunpack.c.l.bf16 %v201
  %v203 = vunpack.c.h.bf16 %v201
  %s204 = scalar_lea.vmem %s1, 1008
  %s205 = scalar_lea.vmem %s0, 288
  %v206 = vld [vmem:[%s205] sm:$0xf]
  %v207 = vunpack.c.l.bf16 %v206
  %v208 = vunpack.c.h.bf16 %v206
  %s209 = scalar_lea.vmem %s1, 1728
  %s210 = scalar_lea.vmem %s0, 1488
  %v211 = vld [vmem:[%s210] sm:$0xf]
  %v212 = vunpack.c.l.bf16 %v211
  %v213 = vunpack.c.h.bf16 %v211
  %s214 = scalar_lea.vmem %s1, 528
  %s215 = scalar_lea.vmem %s0, 768
  %v216 = vld [vmem:[%s215] sm:$0xf]
  %v217 = vunpack.c.l.bf16 %v216
  %v218 = vunpack.c.h.bf16 %v216
  %s219 = scalar_lea.vmem %s1, 1248
  %s220 = scalar_lea.vmem %s0, 48
  %v221 = vld [vmem:[%s220] sm:$0xf]
  %v222 = vunpack.c.l.bf16 %v221
  %v223 = vunpack.c.h.bf16 %v221
  %s224 = scalar_lea.vmem %s1, 1968
  %s225 = scalar_lea.vmem %s0, 1980
  %v226 = vld [vmem:[%s225] sm:$0xf]
  %v227 = vunpack.c.l.bf16 %v226
  %v228 = vunpack.c.h.bf16 %v226
  %s229 = scalar_lea.vmem %s1, 60
  %s230 = scalar_lea.vmem %s0, 1260
  %v231 = vld [vmem:[%s230] sm:$0xf]
  %v232 = vunpack.c.l.bf16 %v231
  %v233 = vunpack.c.h.bf16 %v231
  %s234 = scalar_lea.vmem %s1, 780
  %s235 = scalar_lea.vmem %s0, 540
  %v236 = vld [vmem:[%s235] sm:$0xf]
  %v237 = vunpack.c.l.bf16 %v236
  %v238 = vunpack.c.h.bf16 %v236
  %s239 = scalar_lea.vmem %s1, 1500
  %s240 = scalar_lea.vmem %s0, 1740
  %v241 = vld [vmem:[%s240] sm:$0xf]
  %v242 = vunpack.c.l.bf16 %v241
  %v243 = vunpack.c.h.bf16 %v241
  %s244 = scalar_lea.vmem %s1, 300
  %s245 = scalar_lea.vmem %s0, 1020
  %v246 = vld [vmem:[%s245] sm:$0xf]
  %v247 = vunpack.c.l.bf16 %v246
  %v248 = vunpack.c.h.bf16 %v246
  %s249 = scalar_lea.vmem %s1, 1020
  %s250 = scalar_lea.vmem %s0, 300
  %v251 = vld [vmem:[%s250] sm:$0xf]
  %v252 = vunpack.c.l.bf16 %v251
  %v253 = vunpack.c.h.bf16 %v251
  %s254 = scalar_lea.vmem %s1, 1740
  %s255 = scalar_lea.vmem %s0, 1500
  %v256 = vld [vmem:[%s255] sm:$0xf]
  %v257 = vunpack.c.l.bf16 %v256
  %v258 = vunpack.c.h.bf16 %v256
  %s259 = scalar_lea.vmem %s1, 540
  %s260 = scalar_lea.vmem %s0, 780
  %v261 = vld [vmem:[%s260] sm:$0xf]
  %v262 = vunpack.c.l.bf16 %v261
  %v263 = vunpack.c.h.bf16 %v261
  %s264 = scalar_lea.vmem %s1, 1260
  %s265 = scalar_lea.vmem %s0, 60
  %v266 = vld [vmem:[%s265] sm:$0xf]
  %v267 = vunpack.c.l.bf16 %v266
  %v268 = vunpack.c.h.bf16 %v266
  %s269 = scalar_lea.vmem %s1, 1980
  %s270 = scalar_lea.vmem %s0, 1992
  %v271 = vld [vmem:[%s270] sm:$0xf]
  %v272 = vunpack.c.l.bf16 %v271
  %v273 = vunpack.c.h.bf16 %v271
  %s274 = scalar_lea.vmem %s1, 72
  %s275 = scalar_lea.vmem %s0, 1272
  %v276 = vld [vmem:[%s275] sm:$0xf]
  %v277 = vunpack.c.l.bf16 %v276
  %v278 = vunpack.c.h.bf16 %v276
  %s279 = scalar_lea.vmem %s1, 792
  %s280 = scalar_lea.vmem %s0, 552
  %v281 = vld [vmem:[%s280] sm:$0xf]
  %v282 = vunpack.c.l.bf16 %v281
  %v283 = vunpack.c.h.bf16 %v281
  %s284 = scalar_lea.vmem %s1, 1512
  %s285 = scalar_lea.vmem %s0, 1752
  %v286 = vld [vmem:[%s285] sm:$0xf]
  %v287 = vunpack.c.l.bf16 %v286
  %v288 = vunpack.c.h.bf16 %v286
  %s289 = scalar_lea.vmem %s1, 312
  %s290 = scalar_lea.vmem %s0, 1032
  %v291 = vld [vmem:[%s290] sm:$0xf]
  %v292 = vunpack.c.l.bf16 %v291
  %v293 = vunpack.c.h.bf16 %v291
  %s294 = scalar_lea.vmem %s1, 1032
  %s295 = scalar_lea.vmem %s0, 312
  %v296 = vld [vmem:[%s295] sm:$0xf]
  %v297 = vunpack.c.l.bf16 %v296
  %v298 = vunpack.c.h.bf16 %v296
  %s299 = scalar_lea.vmem %s1, 1752
  %s300 = scalar_lea.vmem %s0, 1512
  %v301 = vld [vmem:[%s300] sm:$0xf]
  %v302 = vunpack.c.l.bf16 %v301
  %v303 = vunpack.c.h.bf16 %v301
  %s304 = scalar_lea.vmem %s1, 552
  %s305 = scalar_lea.vmem %s0, 792
  %v306 = vld [vmem:[%s305] sm:$0xf]
  %v307 = vunpack.c.l.bf16 %v306
  %v308 = vunpack.c.h.bf16 %v306
  %s309 = scalar_lea.vmem %s1, 1272
  %s310 = scalar_lea.vmem %s0, 72
  %v311 = vld [vmem:[%s310] sm:$0xf]
  %v312 = vunpack.c.l.bf16 %v311
  %v313 = vunpack.c.h.bf16 %v311
  %s314 = scalar_lea.vmem %s1, 1992
  %s315 = scalar_lea.vmem %s0, 2004
  %v316 = vld [vmem:[%s315] sm:$0xf]
  %v317 = vunpack.c.l.bf16 %v316
  %v318 = vunpack.c.h.bf16 %v316
  %s319 = scalar_lea.vmem %s1, 84
  %s320 = scalar_lea.vmem %s0, 1284
  %v321 = vld [vmem:[%s320] sm:$0xf]
  %v322 = vunpack.c.l.bf16 %v321
  %v323 = vunpack.c.h.bf16 %v321
  %s324 = scalar_lea.vmem %s1, 804
  %s325 = scalar_lea.vmem %s0, 564
  %v326 = vld [vmem:[%s325] sm:$0xf]
  %v327 = vunpack.c.l.bf16 %v326
  %v328 = vunpack.c.h.bf16 %v326
  %s329 = scalar_lea.vmem %s1, 1524
  %s330 = scalar_lea.vmem %s0, 1764
  %v331 = vld [vmem:[%s330] sm:$0xf]
  %v332 = vunpack.c.l.bf16 %v331
  %v333 = vunpack.c.h.bf16 %v331
  %s334 = scalar_lea.vmem %s1, 324
  %s335 = scalar_lea.vmem %s0, 1044
  %v336 = vld [vmem:[%s335] sm:$0xf]
  %v337 = vunpack.c.l.bf16 %v336
  %v338 = vunpack.c.h.bf16 %v336
  %s339 = scalar_lea.vmem %s1, 1044
  %s340 = scalar_lea.vmem %s0, 324
  %v341 = vld [vmem:[%s340] sm:$0xf]
  %v342 = vunpack.c.l.bf16 %v341
  %v343 = vunpack.c.h.bf16 %v341
  %s344 = scalar_lea.vmem %s1, 1764
  %s345 = scalar_lea.vmem %s0, 1524
  %v346 = vld [vmem:[%s345] sm:$0xf]
  %v347 = vunpack.c.l.bf16 %v346
  %v348 = vunpack.c.h.bf16 %v346
  %s349 = scalar_lea.vmem %s1, 564
  %s350 = scalar_lea.vmem %s0, 804
  %v351 = vld [vmem:[%s350] sm:$0xf]
  %v352 = vunpack.c.l.bf16 %v351
  %v353 = vunpack.c.h.bf16 %v351
  %s354 = scalar_lea.vmem %s1, 1284
  %s355 = scalar_lea.vmem %s0, 84
  %v356 = vld [vmem:[%s355] sm:$0xf]
  %v357 = vunpack.c.l.bf16 %v356
  %v358 = vunpack.c.h.bf16 %v356
  %s359 = scalar_lea.vmem %s1, 2004
  %s360 = scalar_lea.vmem %s0, 2016
  %v361 = vld [vmem:[%s360] sm:$0xf]
  %v362 = vunpack.c.l.bf16 %v361
  %v363 = vunpack.c.h.bf16 %v361
  %s364 = scalar_lea.vmem %s1, 96
  %s365 = scalar_lea.vmem %s0, 1296
  %v366 = vld [vmem:[%s365] sm:$0xf]
  %v367 = vunpack.c.l.bf16 %v366
  %v368 = vunpack.c.h.bf16 %v366
  %s369 = scalar_lea.vmem %s1, 816
  %s370 = scalar_lea.vmem %s0, 576
  %v371 = vld [vmem:[%s370] sm:$0xf]
  %v372 = vunpack.c.l.bf16 %v371
  %v373 = vunpack.c.h.bf16 %v371
  %s374 = scalar_lea.vmem %s1, 1536
  %s375 = scalar_lea.vmem %s0, 1776
  %v376 = vld [vmem:[%s375] sm:$0xf]
  %v377 = vunpack.c.l.bf16 %v376
  %v378 = vunpack.c.h.bf16 %v376
  %s379 = scalar_lea.vmem %s1, 336
  %s380 = scalar_lea.vmem %s0, 1056
  %v381 = vld [vmem:[%s380] sm:$0xf]
  %v382 = vunpack.c.l.bf16 %v381
  %v383 = vunpack.c.h.bf16 %v381
  %s384 = scalar_lea.vmem %s1, 1056
  %s385 = scalar_lea.vmem %s0, 336
  %v386 = vld [vmem:[%s385] sm:$0xf]
  %v387 = vunpack.c.l.bf16 %v386
  %v388 = vunpack.c.h.bf16 %v386
  %s389 = scalar_lea.vmem %s1, 1776
  %s390 = scalar_lea.vmem %s0, 1536
  %v391 = vld [vmem:[%s390] sm:$0xf]
  %v392 = vunpack.c.l.bf16 %v391
  %v393 = vunpack.c.h.bf16 %v391
  %s394 = scalar_lea.vmem %s1, 576
  %s395 = scalar_lea.vmem %s0, 816
  %v396 = vld [vmem:[%s395] sm:$0xf]
  %v397 = vunpack.c.l.bf16 %v396
  %v398 = vunpack.c.h.bf16 %v396
  %s399 = scalar_lea.vmem %s1, 1296
  %s400 = scalar_lea.vmem %s0, 96
  %v401 = vld [vmem:[%s400] sm:$0xf]
  %v402 = vunpack.c.l.bf16 %v401
  %v403 = vunpack.c.h.bf16 %v401
  %s404 = scalar_lea.vmem %s1, 2016
  %s405 = scalar_lea.vmem %s0, 2028
  %v406 = vld [vmem:[%s405] sm:$0xf]
  %v407 = vunpack.c.l.bf16 %v406
  %v408 = vunpack.c.h.bf16 %v406
  %s409 = scalar_lea.vmem %s1, 108
  %s410 = scalar_lea.vmem %s0, 1308
  %v411 = vld [vmem:[%s410] sm:$0xf]
  %v412 = vunpack.c.l.bf16 %v411
  %v413 = vunpack.c.h.bf16 %v411
  %s414 = scalar_lea.vmem %s1, 828
  %s415 = scalar_lea.vmem %s0, 588
  %v416 = vld [vmem:[%s415] sm:$0xf]
  %v417 = vunpack.c.l.bf16 %v416
  %v418 = vunpack.c.h.bf16 %v416
  %s419 = scalar_lea.vmem %s1, 1548
  %s420 = scalar_lea.vmem %s0, 1788
  %v421 = vld [vmem:[%s420] sm:$0xf]
  %v422 = vunpack.c.l.bf16 %v421
  %v423 = vunpack.c.h.bf16 %v421
  %s424 = scalar_lea.vmem %s1, 348
  %s425 = scalar_lea.vmem %s0, 1068
  %v426 = vld [vmem:[%s425] sm:$0xf]
  %v427 = vunpack.c.l.bf16 %v426
  %v428 = vunpack.c.h.bf16 %v426
  %s429 = scalar_lea.vmem %s1, 1068
  %s430 = scalar_lea.vmem %s0, 348
  %v431 = vld [vmem:[%s430] sm:$0xf]
  %v432 = vunpack.c.l.bf16 %v431
  %v433 = vunpack.c.h.bf16 %v431
  %s434 = scalar_lea.vmem %s1, 1788
  %s435 = scalar_lea.vmem %s0, 1548
  %v436 = vld [vmem:[%s435] sm:$0xf]
  %v437 = vunpack.c.l.bf16 %v436
  %v438 = vunpack.c.h.bf16 %v436
  %s439 = scalar_lea.vmem %s1, 588
  %s440 = scalar_lea.vmem %s0, 828
  %v441 = vld [vmem:[%s440] sm:$0xf]
  %v442 = vunpack.c.l.bf16 %v441
  %v443 = vunpack.c.h.bf16 %v441
  %s444 = scalar_lea.vmem %s1, 1308
  %s445 = scalar_lea.vmem %s0, 108
  %v446 = vld [vmem:[%s445] sm:$0xf]
  %v447 = vunpack.c.l.bf16 %v446
  %v448 = vunpack.c.h.bf16 %v446
  %s449 = scalar_lea.vmem %s1, 2028
  %s450 = scalar_lea.vmem %s0, 2040
  %v451 = vld [vmem:[%s450] sm:$0xf]
  %v452 = vunpack.c.l.bf16 %v451
  %v453 = vunpack.c.h.bf16 %v451
  %s454 = scalar_lea.vmem %s1, 120
  %s455 = scalar_lea.vmem %s0, 1320
  %v456 = vld [vmem:[%s455] sm:$0xf]
  %v457 = vunpack.c.l.bf16 %v456
  %v458 = vunpack.c.h.bf16 %v456
  %s459 = scalar_lea.vmem %s1, 840
  %s460 = scalar_lea.vmem %s0, 600
  %v461 = vld [vmem:[%s460] sm:$0xf]
  %v462 = vunpack.c.l.bf16 %v461
  %v463 = vunpack.c.h.bf16 %v461
  %s464 = scalar_lea.vmem %s1, 1560
  %s465 = scalar_lea.vmem %s0, 1800
  %v466 = vld [vmem:[%s465] sm:$0xf]
  %v467 = vunpack.c.l.bf16 %v466
  %v468 = vunpack.c.h.bf16 %v466
  %s469 = scalar_lea.vmem %s1, 360
  %s470 = scalar_lea.vmem %s0, 1080
  %v471 = vld [vmem:[%s470] sm:$0xf]
  %v472 = vunpack.c.l.bf16 %v471
  %v473 = vunpack.c.h.bf16 %v471
  %s474 = scalar_lea.vmem %s1, 1080
  %s475 = scalar_lea.vmem %s0, 360
  %v476 = vld [vmem:[%s475] sm:$0xf]
  %v477 = vunpack.c.l.bf16 %v476
  %v478 = vunpack.c.h.bf16 %v476
  %s479 = scalar_lea.vmem %s1, 1800
  %s480 = scalar_lea.vmem %s0, 1560
  %v481 = vld [vmem:[%s480] sm:$0xf]
  %v482 = vunpack.c.l.bf16 %v481
  %v483 = vunpack.c.h.bf16 %v481
  %s484 = scalar_lea.vmem %s1, 600
  %s485 = scalar_lea.vmem %s0, 840
  %v486 = vld [vmem:[%s485] sm:$0xf]
  %v487 = vunpack.c.l.bf16 %v486
  %v488 = vunpack.c.h.bf16 %v486
  %s489 = scalar_lea.vmem %s1, 1320
  %s490 = scalar_lea.vmem %s0, 120
  %v491 = vld [vmem:[%s490] sm:$0xf]
  %v492 = vunpack.c.l.bf16 %v491
  %v493 = vunpack.c.h.bf16 %v491
  %s494 = scalar_lea.vmem %s1, 2040
  %s495 = scalar_lea.vmem %s0, 2052
  %v496 = vld [vmem:[%s495] sm:$0xf]
  %v497 = vunpack.c.l.bf16 %v496
  %v498 = vunpack.c.h.bf16 %v496
  %s499 = scalar_lea.vmem %s1, 132
  %s500 = scalar_lea.vmem %s0, 1332
  %v501 = vld [vmem:[%s500] sm:$0xf]
  %v502 = vunpack.c.l.bf16 %v501
  %v503 = vunpack.c.h.bf16 %v501
  %s504 = scalar_lea.vmem %s1, 852
  %s505 = scalar_lea.vmem %s0, 612
  %v506 = vld [vmem:[%s505] sm:$0xf]
  %v507 = vunpack.c.l.bf16 %v506
  %v508 = vunpack.c.h.bf16 %v506
  %s509 = scalar_lea.vmem %s1, 1572
  %s510 = scalar_lea.vmem %s0, 1812
  %v511 = vld [vmem:[%s510] sm:$0xf]
  %v512 = vunpack.c.l.bf16 %v511
  %v513 = vunpack.c.h.bf16 %v511
  %s514 = scalar_lea.vmem %s1, 372
  %s515 = scalar_lea.vmem %s0, 1092
  %v516 = vld [vmem:[%s515] sm:$0xf]
  %v517 = vunpack.c.l.bf16 %v516
  %v518 = vunpack.c.h.bf16 %v516
  %s519 = scalar_lea.vmem %s1, 1092
  %s520 = scalar_lea.vmem %s0, 372
  %v521 = vld [vmem:[%s520] sm:$0xf]
  %v522 = vunpack.c.l.bf16 %v521
  %v523 = vunpack.c.h.bf16 %v521
  %s524 = scalar_lea.vmem %s1, 1812
  %s525 = scalar_lea.vmem %s0, 1572
  %v526 = vld [vmem:[%s525] sm:$0xf]
  %v527 = vunpack.c.l.bf16 %v526
  %v528 = vunpack.c.h.bf16 %v526
  %s529 = scalar_lea.vmem %s1, 612
  %s530 = scalar_lea.vmem %s0, 852
  %v531 = vld [vmem:[%s530] sm:$0xf]
  %v532 = vunpack.c.l.bf16 %v531
  %v533 = vunpack.c.h.bf16 %v531
  %s534 = scalar_lea.vmem %s1, 1332
  %s535 = scalar_lea.vmem %s0, 132
  %v536 = vld [vmem:[%s535] sm:$0xf]
  %v537 = vunpack.c.l.bf16 %v536
  %v538 = vunpack.c.h.bf16 %v536
  %s539 = scalar_lea.vmem %s1, 2052
  %s540 = scalar_lea.vmem %s0, 2064
  %v541 = vld [vmem:[%s540] sm:$0xf]
  %v542 = vunpack.c.l.bf16 %v541
  %v543 = vunpack.c.h.bf16 %v541
  %s544 = scalar_lea.vmem %s1, 144
  %s545 = scalar_lea.vmem %s0, 1344
  %v546 = vld [vmem:[%s545] sm:$0xf]
  %v547 = vunpack.c.l.bf16 %v546
  %v548 = vunpack.c.h.bf16 %v546
  %s549 = scalar_lea.vmem %s1, 864
  %s550 = scalar_lea.vmem %s0, 624
  %v551 = vld [vmem:[%s550] sm:$0xf]
  %v552 = vunpack.c.l.bf16 %v551
  %v553 = vunpack.c.h.bf16 %v551
  %s554 = scalar_lea.vmem %s1, 1584
  %s555 = scalar_lea.vmem %s0, 1824
  %v556 = vld [vmem:[%s555] sm:$0xf]
  %v557 = vunpack.c.l.bf16 %v556
  %v558 = vunpack.c.h.bf16 %v556
  %s559 = scalar_lea.vmem %s1, 384
  %s560 = scalar_lea.vmem %s0, 1104
  %v561 = vld [vmem:[%s560] sm:$0xf]
  %v562 = vunpack.c.l.bf16 %v561
  %v563 = vunpack.c.h.bf16 %v561
  %s564 = scalar_lea.vmem %s1, 1104
  %s565 = scalar_lea.vmem %s0, 384
  %v566 = vld [vmem:[%s565] sm:$0xf]
  %v567 = vunpack.c.l.bf16 %v566
  %v568 = vunpack.c.h.bf16 %v566
  %s569 = scalar_lea.vmem %s1, 1824
  %s570 = scalar_lea.vmem %s0, 1584
  %v571 = vld [vmem:[%s570] sm:$0xf]
  %v572 = vunpack.c.l.bf16 %v571
  %v573 = vunpack.c.h.bf16 %v571
  %s574 = scalar_lea.vmem %s1, 624
  %s575 = scalar_lea.vmem %s0, 864
  %v576 = vld [vmem:[%s575] sm:$0xf]
  %v577 = vunpack.c.l.bf16 %v576
  %v578 = vunpack.c.h.bf16 %v576
  %s579 = scalar_lea.vmem %s1, 1344
  %s580 = scalar_lea.vmem %s0, 144
  %v581 = vld [vmem:[%s580] sm:$0xf]
  %v582 = vunpack.c.l.bf16 %v581
  %v583 = vunpack.c.h.bf16 %v581
  %s584 = scalar_lea.vmem %s1, 2064
  %s585 = scalar_lea.vmem %s0, 2076
  %v586 = vld [vmem:[%s585] sm:$0xf]
  %v587 = vunpack.c.l.bf16 %v586
  %v588 = vunpack.c.h.bf16 %v586
  %s589 = scalar_lea.vmem %s1, 156
  %s590 = scalar_lea.vmem %s0, 1356
  %v591 = vld [vmem:[%s590] sm:$0xf]
  %v592 = vunpack.c.l.bf16 %v591
  %v593 = vunpack.c.h.bf16 %v591
  %s594 = scalar_lea.vmem %s1, 876
  %s595 = scalar_lea.vmem %s0, 636
  %v596 = vld [vmem:[%s595] sm:$0xf]
  %v597 = vunpack.c.l.bf16 %v596
  %v598 = vunpack.c.h.bf16 %v596
  %s599 = scalar_lea.vmem %s1, 1596
  %s600 = scalar_lea.vmem %s0, 1836
  %v601 = vld [vmem:[%s600] sm:$0xf]
  %v602 = vunpack.c.l.bf16 %v601
  %v603 = vunpack.c.h.bf16 %v601
  %s604 = scalar_lea.vmem %s1, 396
  %s605 = scalar_lea.vmem %s0, 1116
  %v606 = vld [vmem:[%s605] sm:$0xf]
  %v607 = vunpack.c.l.bf16 %v606
  %v608 = vunpack.c.h.bf16 %v606
  %s609 = scalar_lea.vmem %s1, 1116
  %s610 = scalar_lea.vmem %s0, 396
  %v611 = vld [vmem:[%s610] sm:$0xf]
  %v612 = vunpack.c.l.bf16 %v611
  %v613 = vunpack.c.h.bf16 %v611
  %s614 = scalar_lea.vmem %s1, 1836
  %s615 = scalar_lea.vmem %s0, 1596
  %v616 = vld [vmem:[%s615] sm:$0xf]
  %v617 = vunpack.c.l.bf16 %v616
  %v618 = vunpack.c.h.bf16 %v616
  %s619 = scalar_lea.vmem %s1, 636
  %s620 = scalar_lea.vmem %s0, 876
  %v621 = vld [vmem:[%s620] sm:$0xf]
  %v622 = vunpack.c.l.bf16 %v621
  %v623 = vunpack.c.h.bf16 %v621
  %s624 = scalar_lea.vmem %s1, 1356
  %s625 = scalar_lea.vmem %s0, 156
  %v626 = vld [vmem:[%s625] sm:$0xf]
  %v627 = vunpack.c.l.bf16 %v626
  %v628 = vunpack.c.h.bf16 %v626
  %s629 = scalar_lea.vmem %s1, 2076
  %s630 = scalar_lea.vmem %s0, 2088
  %v631 = vld [vmem:[%s630] sm:$0xf]
  %v632 = vunpack.c.l.bf16 %v631
  %v633 = vunpack.c.h.bf16 %v631
  %s634 = scalar_lea.vmem %s1, 168
  %s635 = scalar_lea.vmem %s0, 1368
  %v636 = vld [vmem:[%s635] sm:$0xf]
  %v637 = vunpack.c.l.bf16 %v636
  %v638 = vunpack.c.h.bf16 %v636
  %s639 = scalar_lea.vmem %s1, 888
  %s640 = scalar_lea.vmem %s0, 648
  %v641 = vld [vmem:[%s640] sm:$0xf]
  %v642 = vunpack.c.l.bf16 %v641
  %v643 = vunpack.c.h.bf16 %v641
  %s644 = scalar_lea.vmem %s1, 1608
  %s645 = scalar_lea.vmem %s0, 1848
  %v646 = vld [vmem:[%s645] sm:$0xf]
  %v647 = vunpack.c.l.bf16 %v646
  %v648 = vunpack.c.h.bf16 %v646
  %s649 = scalar_lea.vmem %s1, 408
  %s650 = scalar_lea.vmem %s0, 1128
  %v651 = vld [vmem:[%s650] sm:$0xf]
  %v652 = vunpack.c.l.bf16 %v651
  %v653 = vunpack.c.h.bf16 %v651
  %s654 = scalar_lea.vmem %s1, 1128
  %s655 = scalar_lea.vmem %s0, 408
  %v656 = vld [vmem:[%s655] sm:$0xf]
  %v657 = vunpack.c.l.bf16 %v656
  %v658 = vunpack.c.h.bf16 %v656
  %s659 = scalar_lea.vmem %s1, 1848
  %s660 = scalar_lea.vmem %s0, 1608
  %v661 = vld [vmem:[%s660] sm:$0xf]
  %v662 = vunpack.c.l.bf16 %v661
  %v663 = vunpack.c.h.bf16 %v661
  %s664 = scalar_lea.vmem %s1, 648
  %s665 = scalar_lea.vmem %s0, 888
  %v666 = vld [vmem:[%s665] sm:$0xf]
  %v667 = vunpack.c.l.bf16 %v666
  %v668 = vunpack.c.h.bf16 %v666
  %s669 = scalar_lea.vmem %s1, 1368
  %s670 = scalar_lea.vmem %s0, 168
  %v671 = vld [vmem:[%s670] sm:$0xf]
  %v672 = vunpack.c.l.bf16 %v671
  %v673 = vunpack.c.h.bf16 %v671
  %s674 = scalar_lea.vmem %s1, 2088
  %s675 = scalar_lea.vmem %s0, 2100
  %v676 = vld [vmem:[%s675] sm:$0xf]
  %v677 = vunpack.c.l.bf16 %v676
  %v678 = vunpack.c.h.bf16 %v676
  %s679 = scalar_lea.vmem %s1, 180
  %s680 = scalar_lea.vmem %s0, 1380
  %v681 = vld [vmem:[%s680] sm:$0xf]
  %v682 = vunpack.c.l.bf16 %v681
  %v683 = vunpack.c.h.bf16 %v681
  %s684 = scalar_lea.vmem %s1, 900
  %s685 = scalar_lea.vmem %s0, 660
  %v686 = vld [vmem:[%s685] sm:$0xf]
  %v687 = vunpack.c.l.bf16 %v686
  %v688 = vunpack.c.h.bf16 %v686
  %s689 = scalar_lea.vmem %s1, 1620
  %s690 = scalar_lea.vmem %s0, 1860
  %v691 = vld [vmem:[%s690] sm:$0xf]
  %v692 = vunpack.c.l.bf16 %v691
  %v693 = vunpack.c.h.bf16 %v691
  %s694 = scalar_lea.vmem %s1, 420
  %s695 = scalar_lea.vmem %s0, 1140
  %v696 = vld [vmem:[%s695] sm:$0xf]
  %v697 = vunpack.c.l.bf16 %v696
  %v698 = vunpack.c.h.bf16 %v696
  %s699 = scalar_lea.vmem %s1, 1140
  %s700 = scalar_lea.vmem %s0, 420
  %v701 = vld [vmem:[%s700] sm:$0xf]
  %v702 = vunpack.c.l.bf16 %v701
  %v703 = vunpack.c.h.bf16 %v701
  %s704 = scalar_lea.vmem %s1, 1860
  %s705 = scalar_lea.vmem %s0, 1620
  %v706 = vld [vmem:[%s705] sm:$0xf]
  %v707 = vunpack.c.l.bf16 %v706
  %v708 = vunpack.c.h.bf16 %v706
  %s709 = scalar_lea.vmem %s1, 660
  %s710 = scalar_lea.vmem %s0, 900
  %v711 = vld [vmem:[%s710] sm:$0xf]
  %v712 = vunpack.c.l.bf16 %v711
  %v713 = vunpack.c.h.bf16 %v711
  %s714 = scalar_lea.vmem %s1, 1380
  %s715 = scalar_lea.vmem %s0, 180
  %v716 = vld [vmem:[%s715] sm:$0xf]
  %v717 = vunpack.c.l.bf16 %v716
  %v718 = vunpack.c.h.bf16 %v716
  %s719 = scalar_lea.vmem %s1, 2100
  %s720 = scalar_lea.vmem %s0, 2112
  %v721 = vld [vmem:[%s720] sm:$0xf]
  %v722 = vunpack.c.l.bf16 %v721
  %v723 = vunpack.c.h.bf16 %v721
  %s724 = scalar_lea.vmem %s1, 192
  %s725 = scalar_lea.vmem %s0, 1392
  %v726 = vld [vmem:[%s725] sm:$0xf]
  %v727 = vunpack.c.l.bf16 %v726
  %v728 = vunpack.c.h.bf16 %v726
  %s729 = scalar_lea.vmem %s1, 912
  %s730 = scalar_lea.vmem %s0, 672
  %v731 = vld [vmem:[%s730] sm:$0xf]
  %v732 = vunpack.c.l.bf16 %v731
  %v733 = vunpack.c.h.bf16 %v731
  %s734 = scalar_lea.vmem %s1, 1632
  %s735 = scalar_lea.vmem %s0, 1872
  %v736 = vld [vmem:[%s735] sm:$0xf]
  %v737 = vunpack.c.l.bf16 %v736
  %v738 = vunpack.c.h.bf16 %v736
  %s739 = scalar_lea.vmem %s1, 432
  %s740 = scalar_lea.vmem %s0, 1152
  %v741 = vld [vmem:[%s740] sm:$0xf]
  %v742 = vunpack.c.l.bf16 %v741
  %v743 = vunpack.c.h.bf16 %v741
  %s744 = scalar_lea.vmem %s1, 1152
  %s745 = scalar_lea.vmem %s0, 432
  %v746 = vld [vmem:[%s745] sm:$0xf]
  %v747 = vunpack.c.l.bf16 %v746
  %v748 = vunpack.c.h.bf16 %v746
  %s749 = scalar_lea.vmem %s1, 1872
  %s750 = scalar_lea.vmem %s0, 1632
  %v751 = vld [vmem:[%s750] sm:$0xf]
  %v752 = vunpack.c.l.bf16 %v751
  %v753 = vunpack.c.h.bf16 %v751
  %s754 = scalar_lea.vmem %s1, 672
  %s755 = scalar_lea.vmem %s0, 912
  %v756 = vld [vmem:[%s755] sm:$0xf]
  %v757 = vunpack.c.l.bf16 %v756
  %v758 = vunpack.c.h.bf16 %v756
  %s759 = scalar_lea.vmem %s1, 1392
  %s760 = scalar_lea.vmem %s0, 192
  %v761 = vld [vmem:[%s760] sm:$0xf]
  %v762 = vunpack.c.l.bf16 %v761
  %v763 = vunpack.c.h.bf16 %v761
  %s764 = scalar_lea.vmem %s1, 2112
  %s765 = scalar_lea.vmem %s0, 2124
  %v766 = vld [vmem:[%s765] sm:$0xf]
  %v767 = vunpack.c.l.bf16 %v766
  %v768 = vunpack.c.h.bf16 %v766
  %s769 = scalar_lea.vmem %s1, 204
  %s770 = scalar_lea.vmem %s0, 1404
  %v771 = vld [vmem:[%s770] sm:$0xf]
  %v772 = vunpack.c.l.bf16 %v771
  %v773 = vunpack.c.h.bf16 %v771
  %s774 = scalar_lea.vmem %s1, 924
  %s775 = scalar_lea.vmem %s0, 684
  %v776 = vld [vmem:[%s775] sm:$0xf]
  %v777 = vunpack.c.l.bf16 %v776
  %v778 = vunpack.c.h.bf16 %v776
  %s779 = scalar_lea.vmem %s1, 1644
  %s780 = scalar_lea.vmem %s0, 1884
  %v781 = vld [vmem:[%s780] sm:$0xf]
  %v782 = vunpack.c.l.bf16 %v781
  %v783 = vunpack.c.h.bf16 %v781
  %s784 = scalar_lea.vmem %s1, 444
  %s785 = scalar_lea.vmem %s0, 1164
  %v786 = vld [vmem:[%s785] sm:$0xf]
  %v787 = vunpack.c.l.bf16 %v786
  %v788 = vunpack.c.h.bf16 %v786
  %s789 = scalar_lea.vmem %s1, 1164
  %s790 = scalar_lea.vmem %s0, 444
  %v791 = vld [vmem:[%s790] sm:$0xf]
  %v792 = vunpack.c.l.bf16 %v791
  %v793 = vunpack.c.h.bf16 %v791
  %s794 = scalar_lea.vmem %s1, 1884
  %s795 = scalar_lea.vmem %s0, 1644
  %v796 = vld [vmem:[%s795] sm:$0xf]
  %v797 = vunpack.c.l.bf16 %v796
  %v798 = vunpack.c.h.bf16 %v796
  %s799 = scalar_lea.vmem %s1, 684
  %s800 = scalar_lea.vmem %s0, 924
  %v801 = vld [vmem:[%s800] sm:$0xf]
  %v802 = vunpack.c.l.bf16 %v801
  %v803 = vunpack.c.h.bf16 %v801
  %s804 = scalar_lea.vmem %s1, 1404
  %s805 = scalar_lea.vmem %s0, 204
  %v806 = vld [vmem:[%s805] sm:$0xf]
  %v807 = vunpack.c.l.bf16 %v806
  %v808 = vunpack.c.h.bf16 %v806
  %s809 = scalar_lea.vmem %s1, 2124
  %s810 = scalar_lea.vmem %s0, 2136
  %v811 = vld [vmem:[%s810] sm:$0xf]
  %v812 = vunpack.c.l.bf16 %v811
  %v813 = vunpack.c.h.bf16 %v811
  %s814 = scalar_lea.vmem %s1, 216
  %s815 = scalar_lea.vmem %s0, 1416
  %v816 = vld [vmem:[%s815] sm:$0xf]
  %v817 = vunpack.c.l.bf16 %v816
  %v818 = vunpack.c.h.bf16 %v816
  %s819 = scalar_lea.vmem %s1, 936
  %s820 = scalar_lea.vmem %s0, 696
  %v821 = vld [vmem:[%s820] sm:$0xf]
  %v822 = vunpack.c.l.bf16 %v821
  %v823 = vunpack.c.h.bf16 %v821
  %s824 = scalar_lea.vmem %s1, 1656
  %s825 = scalar_lea.vmem %s0, 1896
  %v826 = vld [vmem:[%s825] sm:$0xf]
  %v827 = vunpack.c.l.bf16 %v826
  %v828 = vunpack.c.h.bf16 %v826
  %s829 = scalar_lea.vmem %s1, 456
  %s830 = scalar_lea.vmem %s0, 1176
  %v831 = vld [vmem:[%s830] sm:$0xf]
  %v832 = vunpack.c.l.bf16 %v831
  %v833 = vunpack.c.h.bf16 %v831
  %s834 = scalar_lea.vmem %s1, 1176
  %s835 = scalar_lea.vmem %s0, 456
  %v836 = vld [vmem:[%s835] sm:$0xf]
  %v837 = vunpack.c.l.bf16 %v836
  %v838 = vunpack.c.h.bf16 %v836
  %s839 = scalar_lea.vmem %s1, 1896
  %s840 = scalar_lea.vmem %s0, 1656
  %v841 = vld [vmem:[%s840] sm:$0xf]
  %v842 = vunpack.c.l.bf16 %v841
  %v843 = vunpack.c.h.bf16 %v841
  %s844 = scalar_lea.vmem %s1, 696
  %s845 = scalar_lea.vmem %s0, 936
  %v846 = vld [vmem:[%s845] sm:$0xf]
  %v847 = vunpack.c.l.bf16 %v846
  %v848 = vunpack.c.h.bf16 %v846
  %s849 = scalar_lea.vmem %s1, 1416
  %s850 = scalar_lea.vmem %s0, 216
  %v851 = vld [vmem:[%s850] sm:$0xf]
  %v852 = vunpack.c.l.bf16 %v851
  %v853 = vunpack.c.h.bf16 %v851
  %s854 = scalar_lea.vmem %s1, 2136
  %s855 = scalar_lea.vmem %s0, 2148
  %v856 = vld [vmem:[%s855] sm:$0xf]
  %v857 = vunpack.c.l.bf16 %v856
  %v858 = vunpack.c.h.bf16 %v856
  %s859 = scalar_lea.vmem %s1, 228
  %s860 = scalar_lea.vmem %s0, 1428
  %v861 = vld [vmem:[%s860] sm:$0xf]
  %v862 = vunpack.c.l.bf16 %v861
  %v863 = vunpack.c.h.bf16 %v861
  %s864 = scalar_lea.vmem %s1, 948
  %s865 = scalar_lea.vmem %s0, 708
  %v866 = vld [vmem:[%s865] sm:$0xf]
  %v867 = vunpack.c.l.bf16 %v866
  %v868 = vunpack.c.h.bf16 %v866
  %s869 = scalar_lea.vmem %s1, 1668
  %s870 = scalar_lea.vmem %s0, 1908
  %v871 = vld [vmem:[%s870] sm:$0xf]
  %v872 = vunpack.c.l.bf16 %v871
  %v873 = vunpack.c.h.bf16 %v871
  %s874 = scalar_lea.vmem %s1, 468
  %s875 = scalar_lea.vmem %s0, 1188
  %v876 = vld [vmem:[%s875] sm:$0xf]
  %v877 = vunpack.c.l.bf16 %v876
  %v878 = vunpack.c.h.bf16 %v876
  %s879 = scalar_lea.vmem %s1, 1188
  %s880 = scalar_lea.vmem %s0, 468
  %v881 = vld [vmem:[%s880] sm:$0xf]
  %v882 = vunpack.c.l.bf16 %v881
  %v883 = vunpack.c.h.bf16 %v881
  %s884 = scalar_lea.vmem %s1, 1908
  %s885 = scalar_lea.vmem %s0, 1668
  %v886 = vld [vmem:[%s885] sm:$0xf]
  %v887 = vunpack.c.l.bf16 %v886
  %v888 = vunpack.c.h.bf16 %v886
  %s889 = scalar_lea.vmem %s1, 708
  %s890 = scalar_lea.vmem %s0, 948
  %v891 = vld [vmem:[%s890] sm:$0xf]
  %v892 = vunpack.c.l.bf16 %v891
  %v893 = vunpack.c.h.bf16 %v891
  %s894 = scalar_lea.vmem %s1, 1428
  %s895 = scalar_lea.vmem %s0, 228
  %v896 = vld [vmem:[%s895] sm:$0xf]
  %v897 = vunpack.c.l.bf16 %v896
  %v898 = vunpack.c.h.bf16 %v896
  %s899 = scalar_lea.vmem %s1, 2148
  %s900 = scalar_lea.vmem %s0, 1924
  %v901 = vld [vmem:[%s900] sm:$0xf]
  %v902 = vunpack.c.l.bf16 %v901
  %v903 = vunpack.c.h.bf16 %v901
  %s904 = scalar_lea.vmem %s1, 4
  %s906 = ssub.s32 0, 4
  %s907 = scalar_lea.vmem %s904, %s906
  %v908 = vpack.c.bf16 %v902, %v4
  %909 = vst [vmem:[%s907] sm:$0xff] %v908
  %s910 = scalar_lea.vmem %s0, 1204
  %v911 = vld [vmem:[%s910] sm:$0xf]
  %v912 = vunpack.c.l.bf16 %v911
  %v913 = vunpack.c.h.bf16 %v911
  %s914 = scalar_lea.vmem %s1, 724
  %s916 = ssub.s32 0, 4
  %s917 = scalar_lea.vmem %s914, %s916
  %v918 = vpack.c.bf16 %v912, %v8
  %919 = vst [vmem:[%s917] sm:$0xff] %v918
  %s920 = scalar_lea.vmem %s0, 484
  %v921 = vld [vmem:[%s920] sm:$0xf]
  %v922 = vunpack.c.l.bf16 %v921
  %v923 = vunpack.c.h.bf16 %v921
  %s924 = scalar_lea.vmem %s1, 1444
  %s926 = ssub.s32 0, 4
  %s927 = scalar_lea.vmem %s924, %s926
  %v928 = vpack.c.bf16 %v922, %v13
  %929 = vst [vmem:[%s927] sm:$0xff] %v928
  %s930 = scalar_lea.vmem %s0, 1684
  %v931 = vld [vmem:[%s930] sm:$0xf]
  %v932 = vunpack.c.l.bf16 %v931
  %v933 = vunpack.c.h.bf16 %v931
  %s934 = scalar_lea.vmem %s1, 244
  %s936 = ssub.s32 0, 4
  %s937 = scalar_lea.vmem %s934, %s936
  %v938 = vpack.c.bf16 %v932, %v18
  %939 = vst [vmem:[%s937] sm:$0xff] %v938
  %s940 = scalar_lea.vmem %s0, 964
  %v941 = vld [vmem:[%s940] sm:$0xf]
  %v942 = vunpack.c.l.bf16 %v941
  %v943 = vunpack.c.h.bf16 %v941
  %s944 = scalar_lea.vmem %s1, 964
  %s946 = ssub.s32 0, 4
  %s947 = scalar_lea.vmem %s944, %s946
  %v948 = vpack.c.bf16 %v942, %v23
  %949 = vst [vmem:[%s947] sm:$0xff] %v948
  %s950 = scalar_lea.vmem %s0, 244
  %v951 = vld [vmem:[%s950] sm:$0xf]
  %v952 = vunpack.c.l.bf16 %v951
  %v953 = vunpack.c.h.bf16 %v951
  %s954 = scalar_lea.vmem %s1, 1684
  %s956 = ssub.s32 0, 4
  %s957 = scalar_lea.vmem %s954, %s956
  %v958 = vpack.c.bf16 %v952, %v28
  %959 = vst [vmem:[%s957] sm:$0xff] %v958
  %s960 = scalar_lea.vmem %s0, 1444
  %v961 = vld [vmem:[%s960] sm:$0xf]
  %v962 = vunpack.c.l.bf16 %v961
  %v963 = vunpack.c.h.bf16 %v961
  %s964 = scalar_lea.vmem %s1, 484
  %s966 = ssub.s32 0, 4
  %s967 = scalar_lea.vmem %s964, %s966
  %v968 = vpack.c.bf16 %v962, %v33
  %969 = vst [vmem:[%s967] sm:$0xff] %v968
  %s970 = scalar_lea.vmem %s0, 724
  %v971 = vld [vmem:[%s970] sm:$0xf]
  %v972 = vunpack.c.l.bf16 %v971
  %v973 = vunpack.c.h.bf16 %v971
  %s974 = scalar_lea.vmem %s1, 1204
  %s976 = ssub.s32 0, 4
  %s977 = scalar_lea.vmem %s974, %s976
  %v978 = vpack.c.bf16 %v972, %v38
  %979 = vst [vmem:[%s977] sm:$0xff] %v978
  %s980 = scalar_lea.vmem %s0, 4
  %v981 = vld [vmem:[%s980] sm:$0xf]
  %v982 = vunpack.c.l.bf16 %v981
  %v983 = vunpack.c.h.bf16 %v981
  %s984 = scalar_lea.vmem %s1, 1924
  %s986 = ssub.s32 0, 4
  %s987 = scalar_lea.vmem %s984, %s986
  %v988 = vpack.c.bf16 %v982, %v42
  %989 = vst [vmem:[%s987] sm:$0xff] %v988
  %s990 = scalar_lea.vmem %s0, 1936
  %v991 = vld [vmem:[%s990] sm:$0xf]
  %v992 = vunpack.c.l.bf16 %v991
  %v993 = vunpack.c.h.bf16 %v991
  %s994 = scalar_lea.vmem %s1, 16
  %s996 = ssub.s32 0, 4
  %s997 = scalar_lea.vmem %s994, %s996
  %v998 = vpack.c.bf16 %v992, %v47
  %999 = vst [vmem:[%s997] sm:$0xff] %v998
  %s1000 = scalar_lea.vmem %s0, 1216
  %v1001 = vld [vmem:[%s1000] sm:$0xf]
  %v1002 = vunpack.c.l.bf16 %v1001
  %v1003 = vunpack.c.h.bf16 %v1001
  %s1004 = scalar_lea.vmem %s1, 736
  %s1006 = ssub.s32 0, 4
  %s1007 = scalar_lea.vmem %s1004, %s1006
  %v1008 = vpack.c.bf16 %v1002, %v52
  %1009 = vst [vmem:[%s1007] sm:$0xff] %v1008
  %s1010 = scalar_lea.vmem %s0, 496
  %v1011 = vld [vmem:[%s1010] sm:$0xf]
  %v1012 = vunpack.c.l.bf16 %v1011
  %v1013 = vunpack.c.h.bf16 %v1011
  %s1014 = scalar_lea.vmem %s1, 1456
  %s1016 = ssub.s32 0, 4
  %s1017 = scalar_lea.vmem %s1014, %s1016
  %v1018 = vpack.c.bf16 %v1012, %v57
  %1019 = vst [vmem:[%s1017] sm:$0xff] %v1018
  %s1020 = scalar_lea.vmem %s0, 1696
  %v1021 = vld [vmem:[%s1020] sm:$0xf]
  %v1022 = vunpack.c.l.bf16 %v1021
  %v1023 = vunpack.c.h.bf16 %v1021
  %s1024 = scalar_lea.vmem %s1, 256
  %s1026 = ssub.s32 0, 4
  %s1027 = scalar_lea.vmem %s1024, %s1026
  %v1028 = vpack.c.bf16 %v1022, %v62
  %1029 = vst [vmem:[%s1027] sm:$0xff] %v1028
  %s1030 = scalar_lea.vmem %s0, 976
  %v1031 = vld [vmem:[%s1030] sm:$0xf]
  %v1032 = vunpack.c.l.bf16 %v1031
  %v1033 = vunpack.c.h.bf16 %v1031
  %s1034 = scalar_lea.vmem %s1, 976
  %s1036 = ssub.s32 0, 4
  %s1037 = scalar_lea.vmem %s1034, %s1036
  %v1038 = vpack.c.bf16 %v1032, %v67
  %1039 = vst [vmem:[%s1037] sm:$0xff] %v1038
  %s1040 = scalar_lea.vmem %s0, 256
  %v1041 = vld [vmem:[%s1040] sm:$0xf]
  %v1042 = vunpack.c.l.bf16 %v1041
  %v1043 = vunpack.c.h.bf16 %v1041
  %s1044 = scalar_lea.vmem %s1, 1696
  %s1046 = ssub.s32 0, 4
  %s1047 = scalar_lea.vmem %s1044, %s1046
  %v1048 = vpack.c.bf16 %v1042, %v72
  %1049 = vst [vmem:[%s1047] sm:$0xff] %v1048
  %s1050 = scalar_lea.vmem %s0, 1456
  %v1051 = vld [vmem:[%s1050] sm:$0xf]
  %v1052 = vunpack.c.l.bf16 %v1051
  %v1053 = vunpack.c.h.bf16 %v1051
  %s1054 = scalar_lea.vmem %s1, 496
  %s1056 = ssub.s32 0, 4
  %s1057 = scalar_lea.vmem %s1054, %s1056
  %v1058 = vpack.c.bf16 %v1052, %v77
  %1059 = vst [vmem:[%s1057] sm:$0xff] %v1058
  %s1060 = scalar_lea.vmem %s0, 736
  %v1061 = vld [vmem:[%s1060] sm:$0xf]
  %v1062 = vunpack.c.l.bf16 %v1061
  %v1063 = vunpack.c.h.bf16 %v1061
  %s1064 = scalar_lea.vmem %s1, 1216
  %s1066 = ssub.s32 0, 4
  %s1067 = scalar_lea.vmem %s1064, %s1066
  %v1068 = vpack.c.bf16 %v1062, %v82
  %1069 = vst [vmem:[%s1067] sm:$0xff] %v1068
  %s1070 = scalar_lea.vmem %s0, 16
  %v1071 = vld [vmem:[%s1070] sm:$0xf]
  %v1072 = vunpack.c.l.bf16 %v1071
  %v1073 = vunpack.c.h.bf16 %v1071
  %s1074 = scalar_lea.vmem %s1, 1936
  %s1076 = ssub.s32 0, 4
  %s1077 = scalar_lea.vmem %s1074, %s1076
  %v1078 = vpack.c.bf16 %v1072, %v87
  %1079 = vst [vmem:[%s1077] sm:$0xff] %v1078
  %s1080 = scalar_lea.vmem %s0, 1948
  %v1081 = vld [vmem:[%s1080] sm:$0xf]
  %v1082 = vunpack.c.l.bf16 %v1081
  %v1083 = vunpack.c.h.bf16 %v1081
  %s1084 = scalar_lea.vmem %s1, 28
  %s1086 = ssub.s32 0, 4
  %s1087 = scalar_lea.vmem %s1084, %s1086
  %v1088 = vpack.c.bf16 %v1082, %v92
  %1089 = vst [vmem:[%s1087] sm:$0xff] %v1088
  %s1090 = scalar_lea.vmem %s0, 1228
  %v1091 = vld [vmem:[%s1090] sm:$0xf]
  %v1092 = vunpack.c.l.bf16 %v1091
  %v1093 = vunpack.c.h.bf16 %v1091
  %s1094 = scalar_lea.vmem %s1, 748
  %s1096 = ssub.s32 0, 4
  %s1097 = scalar_lea.vmem %s1094, %s1096
  %v1098 = vpack.c.bf16 %v1092, %v97
  %1099 = vst [vmem:[%s1097] sm:$0xff] %v1098
  %s1100 = scalar_lea.vmem %s0, 508
  %v1101 = vld [vmem:[%s1100] sm:$0xf]
  %v1102 = vunpack.c.l.bf16 %v1101
  %v1103 = vunpack.c.h.bf16 %v1101
  %s1104 = scalar_lea.vmem %s1, 1468
  %s1106 = ssub.s32 0, 4
  %s1107 = scalar_lea.vmem %s1104, %s1106
  %v1108 = vpack.c.bf16 %v1102, %v102
  %1109 = vst [vmem:[%s1107] sm:$0xff] %v1108
  %s1110 = scalar_lea.vmem %s0, 1708
  %v1111 = vld [vmem:[%s1110] sm:$0xf]
  %v1112 = vunpack.c.l.bf16 %v1111
  %v1113 = vunpack.c.h.bf16 %v1111
  %s1114 = scalar_lea.vmem %s1, 268
  %s1116 = ssub.s32 0, 4
  %s1117 = scalar_lea.vmem %s1114, %s1116
  %v1118 = vpack.c.bf16 %v1112, %v107
  %1119 = vst [vmem:[%s1117] sm:$0xff] %v1118
  %s1120 = scalar_lea.vmem %s0, 988
  %v1121 = vld [vmem:[%s1120] sm:$0xf]
  %v1122 = vunpack.c.l.bf16 %v1121
  %v1123 = vunpack.c.h.bf16 %v1121
  %s1124 = scalar_lea.vmem %s1, 988
  %s1126 = ssub.s32 0, 4
  %s1127 = scalar_lea.vmem %s1124, %s1126
  %v1128 = vpack.c.bf16 %v1122, %v112
  %1129 = vst [vmem:[%s1127] sm:$0xff] %v1128
  %s1130 = scalar_lea.vmem %s0, 268
  %v1131 = vld [vmem:[%s1130] sm:$0xf]
  %v1132 = vunpack.c.l.bf16 %v1131
  %v1133 = vunpack.c.h.bf16 %v1131
  %s1134 = scalar_lea.vmem %s1, 1708
  %s1136 = ssub.s32 0, 4
  %s1137 = scalar_lea.vmem %s1134, %s1136
  %v1138 = vpack.c.bf16 %v1132, %v117
  %1139 = vst [vmem:[%s1137] sm:$0xff] %v1138
  %s1140 = scalar_lea.vmem %s0, 1468
  %v1141 = vld [vmem:[%s1140] sm:$0xf]
  %v1142 = vunpack.c.l.bf16 %v1141
  %v1143 = vunpack.c.h.bf16 %v1141
  %s1144 = scalar_lea.vmem %s1, 508
  %s1146 = ssub.s32 0, 4
  %s1147 = scalar_lea.vmem %s1144, %s1146
  %v1148 = vpack.c.bf16 %v1142, %v122
  %1149 = vst [vmem:[%s1147] sm:$0xff] %v1148
  %s1150 = scalar_lea.vmem %s0, 748
  %v1151 = vld [vmem:[%s1150] sm:$0xf]
  %v1152 = vunpack.c.l.bf16 %v1151
  %v1153 = vunpack.c.h.bf16 %v1151
  %s1154 = scalar_lea.vmem %s1, 1228
  %s1156 = ssub.s32 0, 4
  %s1157 = scalar_lea.vmem %s1154, %s1156
  %v1158 = vpack.c.bf16 %v1152, %v127
  %1159 = vst [vmem:[%s1157] sm:$0xff] %v1158
  %s1160 = scalar_lea.vmem %s0, 28
  %v1161 = vld [vmem:[%s1160] sm:$0xf]
  %v1162 = vunpack.c.l.bf16 %v1161
  %v1163 = vunpack.c.h.bf16 %v1161
  %s1164 = scalar_lea.vmem %s1, 1948
  %s1166 = ssub.s32 0, 4
  %s1167 = scalar_lea.vmem %s1164, %s1166
  %v1168 = vpack.c.bf16 %v1162, %v132
  %1169 = vst [vmem:[%s1167] sm:$0xff] %v1168
  %s1170 = scalar_lea.vmem %s0, 1960
  %v1171 = vld [vmem:[%s1170] sm:$0xf]
  %v1172 = vunpack.c.l.bf16 %v1171
  %v1173 = vunpack.c.h.bf16 %v1171
  %s1174 = scalar_lea.vmem %s1, 40
  %s1176 = ssub.s32 0, 4
  %s1177 = scalar_lea.vmem %s1174, %s1176
  %v1178 = vpack.c.bf16 %v1172, %v137
  %1179 = vst [vmem:[%s1177] sm:$0xff] %v1178
  %s1180 = scalar_lea.vmem %s0, 1240
  %v1181 = vld [vmem:[%s1180] sm:$0xf]
  %v1182 = vunpack.c.l.bf16 %v1181
  %v1183 = vunpack.c.h.bf16 %v1181
  %s1184 = scalar_lea.vmem %s1, 760
  %s1186 = ssub.s32 0, 4
  %s1187 = scalar_lea.vmem %s1184, %s1186
  %v1188 = vpack.c.bf16 %v1182, %v142
  %1189 = vst [vmem:[%s1187] sm:$0xff] %v1188
  %s1190 = scalar_lea.vmem %s0, 520
  %v1191 = vld [vmem:[%s1190] sm:$0xf]
  %v1192 = vunpack.c.l.bf16 %v1191
  %v1193 = vunpack.c.h.bf16 %v1191
  %s1194 = scalar_lea.vmem %s1, 1480
  %s1196 = ssub.s32 0, 4
  %s1197 = scalar_lea.vmem %s1194, %s1196
  %v1198 = vpack.c.bf16 %v1192, %v147
  %1199 = vst [vmem:[%s1197] sm:$0xff] %v1198
  %s1200 = scalar_lea.vmem %s0, 1720
  %v1201 = vld [vmem:[%s1200] sm:$0xf]
  %v1202 = vunpack.c.l.bf16 %v1201
  %v1203 = vunpack.c.h.bf16 %v1201
  %s1204 = scalar_lea.vmem %s1, 280
  %s1206 = ssub.s32 0, 4
  %s1207 = scalar_lea.vmem %s1204, %s1206
  %v1208 = vpack.c.bf16 %v1202, %v152
  %1209 = vst [vmem:[%s1207] sm:$0xff] %v1208
  %s1210 = scalar_lea.vmem %s0, 1000
  %v1211 = vld [vmem:[%s1210] sm:$0xf]
  %v1212 = vunpack.c.l.bf16 %v1211
  %v1213 = vunpack.c.h.bf16 %v1211
  %s1214 = scalar_lea.vmem %s1, 1000
  %s1216 = ssub.s32 0, 4
  %s1217 = scalar_lea.vmem %s1214, %s1216
  %v1218 = vpack.c.bf16 %v1212, %v157
  %1219 = vst [vmem:[%s1217] sm:$0xff] %v1218
  %s1220 = scalar_lea.vmem %s0, 280
  %v1221 = vld [vmem:[%s1220] sm:$0xf]
  %v1222 = vunpack.c.l.bf16 %v1221
  %v1223 = vunpack.c.h.bf16 %v1221
  %s1224 = scalar_lea.vmem %s1, 1720
  %s1226 = ssub.s32 0, 4
  %s1227 = scalar_lea.vmem %s1224, %s1226
  %v1228 = vpack.c.bf16 %v1222, %v162
  %1229 = vst [vmem:[%s1227] sm:$0xff] %v1228
  %s1230 = scalar_lea.vmem %s0, 1480
  %v1231 = vld [vmem:[%s1230] sm:$0xf]
  %v1232 = vunpack.c.l.bf16 %v1231
  %v1233 = vunpack.c.h.bf16 %v1231
  %s1234 = scalar_lea.vmem %s1, 520
  %s1236 = ssub.s32 0, 4
  %s1237 = scalar_lea.vmem %s1234, %s1236
  %v1238 = vpack.c.bf16 %v1232, %v167
  %1239 = vst [vmem:[%s1237] sm:$0xff] %v1238
  %s1240 = scalar_lea.vmem %s0, 760
  %v1241 = vld [vmem:[%s1240] sm:$0xf]
  %v1242 = vunpack.c.l.bf16 %v1241
  %v1243 = vunpack.c.h.bf16 %v1241
  %s1244 = scalar_lea.vmem %s1, 1240
  %s1246 = ssub.s32 0, 4
  %s1247 = scalar_lea.vmem %s1244, %s1246
  %v1248 = vpack.c.bf16 %v1242, %v172
  %1249 = vst [vmem:[%s1247] sm:$0xff] %v1248
  %s1250 = scalar_lea.vmem %s0, 40
  %v1251 = vld [vmem:[%s1250] sm:$0xf]
  %v1252 = vunpack.c.l.bf16 %v1251
  %v1253 = vunpack.c.h.bf16 %v1251
  %s1254 = scalar_lea.vmem %s1, 1960
  %s1256 = ssub.s32 0, 4
  %s1257 = scalar_lea.vmem %s1254, %s1256
  %v1258 = vpack.c.bf16 %v1252, %v177
  %1259 = vst [vmem:[%s1257] sm:$0xff] %v1258
  %s1260 = scalar_lea.vmem %s0, 1972
  %v1261 = vld [vmem:[%s1260] sm:$0xf]
  %v1262 = vunpack.c.l.bf16 %v1261
  %v1263 = vunpack.c.h.bf16 %v1261
  %s1264 = scalar_lea.vmem %s1, 52
  %s1266 = ssub.s32 0, 4
  %s1267 = scalar_lea.vmem %s1264, %s1266
  %v1268 = vpack.c.bf16 %v1262, %v182
  %1269 = vst [vmem:[%s1267] sm:$0xff] %v1268
  %s1270 = scalar_lea.vmem %s0, 1252
  %v1271 = vld [vmem:[%s1270] sm:$0xf]
  %v1272 = vunpack.c.l.bf16 %v1271
  %v1273 = vunpack.c.h.bf16 %v1271
  %s1274 = scalar_lea.vmem %s1, 772
  %s1276 = ssub.s32 0, 4
  %s1277 = scalar_lea.vmem %s1274, %s1276
  %v1278 = vpack.c.bf16 %v1272, %v187
  %1279 = vst [vmem:[%s1277] sm:$0xff] %v1278
  %s1280 = scalar_lea.vmem %s0, 532
  %v1281 = vld [vmem:[%s1280] sm:$0xf]
  %v1282 = vunpack.c.l.bf16 %v1281
  %v1283 = vunpack.c.h.bf16 %v1281
  %s1284 = scalar_lea.vmem %s1, 1492
  %s1286 = ssub.s32 0, 4
  %s1287 = scalar_lea.vmem %s1284, %s1286
  %v1288 = vpack.c.bf16 %v1282, %v192
  %1289 = vst [vmem:[%s1287] sm:$0xff] %v1288
  %s1290 = scalar_lea.vmem %s0, 1732
  %v1291 = vld [vmem:[%s1290] sm:$0xf]
  %v1292 = vunpack.c.l.bf16 %v1291
  %v1293 = vunpack.c.h.bf16 %v1291
  %s1294 = scalar_lea.vmem %s1, 292
  %s1296 = ssub.s32 0, 4
  %s1297 = scalar_lea.vmem %s1294, %s1296
  %v1298 = vpack.c.bf16 %v1292, %v197
  %1299 = vst [vmem:[%s1297] sm:$0xff] %v1298
  %s1300 = scalar_lea.vmem %s0, 1012
  %v1301 = vld [vmem:[%s1300] sm:$0xf]
  %v1302 = vunpack.c.l.bf16 %v1301
  %v1303 = vunpack.c.h.bf16 %v1301
  %s1304 = scalar_lea.vmem %s1, 1012
  %s1306 = ssub.s32 0, 4
  %s1307 = scalar_lea.vmem %s1304, %s1306
  %v1308 = vpack.c.bf16 %v1302, %v202
  %1309 = vst [vmem:[%s1307] sm:$0xff] %v1308
  %s1310 = scalar_lea.vmem %s0, 292
  %v1311 = vld [vmem:[%s1310] sm:$0xf]
  %v1312 = vunpack.c.l.bf16 %v1311
  %v1313 = vunpack.c.h.bf16 %v1311
  %s1314 = scalar_lea.vmem %s1, 1732
  %s1316 = ssub.s32 0, 4
  %s1317 = scalar_lea.vmem %s1314, %s1316
  %v1318 = vpack.c.bf16 %v1312, %v207
  %1319 = vst [vmem:[%s1317] sm:$0xff] %v1318
  %s1320 = scalar_lea.vmem %s0, 1492
  %v1321 = vld [vmem:[%s1320] sm:$0xf]
  %v1322 = vunpack.c.l.bf16 %v1321
  %v1323 = vunpack.c.h.bf16 %v1321
  %s1324 = scalar_lea.vmem %s1, 532
  %s1326 = ssub.s32 0, 4
  %s1327 = scalar_lea.vmem %s1324, %s1326
  %v1328 = vpack.c.bf16 %v1322, %v212
  %1329 = vst [vmem:[%s1327] sm:$0xff] %v1328
  %s1330 = scalar_lea.vmem %s0, 772
  %v1331 = vld [vmem:[%s1330] sm:$0xf]
  %v1332 = vunpack.c.l.bf16 %v1331
  %v1333 = vunpack.c.h.bf16 %v1331
  %s1334 = scalar_lea.vmem %s1, 1252
  %s1336 = ssub.s32 0, 4
  %s1337 = scalar_lea.vmem %s1334, %s1336
  %v1338 = vpack.c.bf16 %v1332, %v217
  %1339 = vst [vmem:[%s1337] sm:$0xff] %v1338
  %s1340 = scalar_lea.vmem %s0, 52
  %v1341 = vld [vmem:[%s1340] sm:$0xf]
  %v1342 = vunpack.c.l.bf16 %v1341
  %v1343 = vunpack.c.h.bf16 %v1341
  %s1344 = scalar_lea.vmem %s1, 1972
  %s1346 = ssub.s32 0, 4
  %s1347 = scalar_lea.vmem %s1344, %s1346
  %v1348 = vpack.c.bf16 %v1342, %v222
  %1349 = vst [vmem:[%s1347] sm:$0xff] %v1348
  %s1350 = scalar_lea.vmem %s0, 1984
  %v1351 = vld [vmem:[%s1350] sm:$0xf]
  %v1352 = vunpack.c.l.bf16 %v1351
  %v1353 = vunpack.c.h.bf16 %v1351
  %s1354 = scalar_lea.vmem %s1, 64
  %s1356 = ssub.s32 0, 4
  %s1357 = scalar_lea.vmem %s1354, %s1356
  %v1358 = vpack.c.bf16 %v1352, %v227
  %1359 = vst [vmem:[%s1357] sm:$0xff] %v1358
  %s1360 = scalar_lea.vmem %s0, 1264
  %v1361 = vld [vmem:[%s1360] sm:$0xf]
  %v1362 = vunpack.c.l.bf16 %v1361
  %v1363 = vunpack.c.h.bf16 %v1361
  %s1364 = scalar_lea.vmem %s1, 784
  %s1366 = ssub.s32 0, 4
  %s1367 = scalar_lea.vmem %s1364, %s1366
  %v1368 = vpack.c.bf16 %v1362, %v232
  %1369 = vst [vmem:[%s1367] sm:$0xff] %v1368
  %s1370 = scalar_lea.vmem %s0, 544
  %v1371 = vld [vmem:[%s1370] sm:$0xf]
  %v1372 = vunpack.c.l.bf16 %v1371
  %v1373 = vunpack.c.h.bf16 %v1371
  %s1374 = scalar_lea.vmem %s1, 1504
  %s1376 = ssub.s32 0, 4
  %s1377 = scalar_lea.vmem %s1374, %s1376
  %v1378 = vpack.c.bf16 %v1372, %v237
  %1379 = vst [vmem:[%s1377] sm:$0xff] %v1378
  %s1380 = scalar_lea.vmem %s0, 1744
  %v1381 = vld [vmem:[%s1380] sm:$0xf]
  %v1382 = vunpack.c.l.bf16 %v1381
  %v1383 = vunpack.c.h.bf16 %v1381
  %s1384 = scalar_lea.vmem %s1, 304
  %s1386 = ssub.s32 0, 4
  %s1387 = scalar_lea.vmem %s1384, %s1386
  %v1388 = vpack.c.bf16 %v1382, %v242
  %1389 = vst [vmem:[%s1387] sm:$0xff] %v1388
  %s1390 = scalar_lea.vmem %s0, 1024
  %v1391 = vld [vmem:[%s1390] sm:$0xf]
  %v1392 = vunpack.c.l.bf16 %v1391
  %v1393 = vunpack.c.h.bf16 %v1391
  %s1394 = scalar_lea.vmem %s1, 1024
  %s1396 = ssub.s32 0, 4
  %s1397 = scalar_lea.vmem %s1394, %s1396
  %v1398 = vpack.c.bf16 %v1392, %v247
  %1399 = vst [vmem:[%s1397] sm:$0xff] %v1398
  %s1400 = scalar_lea.vmem %s0, 304
  %v1401 = vld [vmem:[%s1400] sm:$0xf]
  %v1402 = vunpack.c.l.bf16 %v1401
  %v1403 = vunpack.c.h.bf16 %v1401
  %s1404 = scalar_lea.vmem %s1, 1744
  %s1406 = ssub.s32 0, 4
  %s1407 = scalar_lea.vmem %s1404, %s1406
  %v1408 = vpack.c.bf16 %v1402, %v252
  %1409 = vst [vmem:[%s1407] sm:$0xff] %v1408
  %s1410 = scalar_lea.vmem %s0, 1504
  %v1411 = vld [vmem:[%s1410] sm:$0xf]
  %v1412 = vunpack.c.l.bf16 %v1411
  %v1413 = vunpack.c.h.bf16 %v1411
  %s1414 = scalar_lea.vmem %s1, 544
  %s1416 = ssub.s32 0, 4
  %s1417 = scalar_lea.vmem %s1414, %s1416
  %v1418 = vpack.c.bf16 %v1412, %v257
  %1419 = vst [vmem:[%s1417] sm:$0xff] %v1418
  %s1420 = scalar_lea.vmem %s0, 784
  %v1421 = vld [vmem:[%s1420] sm:$0xf]
  %v1422 = vunpack.c.l.bf16 %v1421
  %v1423 = vunpack.c.h.bf16 %v1421
  %s1424 = scalar_lea.vmem %s1, 1264
  %s1426 = ssub.s32 0, 4
  %s1427 = scalar_lea.vmem %s1424, %s1426
  %v1428 = vpack.c.bf16 %v1422, %v262
  %1429 = vst [vmem:[%s1427] sm:$0xff] %v1428
  %s1430 = scalar_lea.vmem %s0, 64
  %v1431 = vld [vmem:[%s1430] sm:$0xf]
  %v1432 = vunpack.c.l.bf16 %v1431
  %v1433 = vunpack.c.h.bf16 %v1431
  %s1434 = scalar_lea.vmem %s1, 1984
  %s1436 = ssub.s32 0, 4
  %s1437 = scalar_lea.vmem %s1434, %s1436
  %v1438 = vpack.c.bf16 %v1432, %v267
  %1439 = vst [vmem:[%s1437] sm:$0xff] %v1438
  %s1440 = scalar_lea.vmem %s0, 1996
  %v1441 = vld [vmem:[%s1440] sm:$0xf]
  %v1442 = vunpack.c.l.bf16 %v1441
  %v1443 = vunpack.c.h.bf16 %v1441
  %s1444 = scalar_lea.vmem %s1, 76
  %s1446 = ssub.s32 0, 4
  %s1447 = scalar_lea.vmem %s1444, %s1446
  %v1448 = vpack.c.bf16 %v1442, %v272
  %1449 = vst [vmem:[%s1447] sm:$0xff] %v1448
  %s1450 = scalar_lea.vmem %s0, 1276
  %v1451 = vld [vmem:[%s1450] sm:$0xf]
  %v1452 = vunpack.c.l.bf16 %v1451
  %v1453 = vunpack.c.h.bf16 %v1451
  %s1454 = scalar_lea.vmem %s1, 796
  %s1456 = ssub.s32 0, 4
  %s1457 = scalar_lea.vmem %s1454, %s1456
  %v1458 = vpack.c.bf16 %v1452, %v277
  %1459 = vst [vmem:[%s1457] sm:$0xff] %v1458
  %s1460 = scalar_lea.vmem %s0, 556
  %v1461 = vld [vmem:[%s1460] sm:$0xf]
  %v1462 = vunpack.c.l.bf16 %v1461
  %v1463 = vunpack.c.h.bf16 %v1461
  %s1464 = scalar_lea.vmem %s1, 1516
  %s1466 = ssub.s32 0, 4
  %s1467 = scalar_lea.vmem %s1464, %s1466
  %v1468 = vpack.c.bf16 %v1462, %v282
  %1469 = vst [vmem:[%s1467] sm:$0xff] %v1468
  %s1470 = scalar_lea.vmem %s0, 1756
  %v1471 = vld [vmem:[%s1470] sm:$0xf]
  %v1472 = vunpack.c.l.bf16 %v1471
  %v1473 = vunpack.c.h.bf16 %v1471
  %s1474 = scalar_lea.vmem %s1, 316
  %s1476 = ssub.s32 0, 4
  %s1477 = scalar_lea.vmem %s1474, %s1476
  %v1478 = vpack.c.bf16 %v1472, %v287
  %1479 = vst [vmem:[%s1477] sm:$0xff] %v1478
  %s1480 = scalar_lea.vmem %s0, 1036
  %v1481 = vld [vmem:[%s1480] sm:$0xf]
  %v1482 = vunpack.c.l.bf16 %v1481
  %v1483 = vunpack.c.h.bf16 %v1481
  %s1484 = scalar_lea.vmem %s1, 1036
  %s1486 = ssub.s32 0, 4
  %s1487 = scalar_lea.vmem %s1484, %s1486
  %v1488 = vpack.c.bf16 %v1482, %v292
  %1489 = vst [vmem:[%s1487] sm:$0xff] %v1488
  %s1490 = scalar_lea.vmem %s0, 316
  %v1491 = vld [vmem:[%s1490] sm:$0xf]
  %v1492 = vunpack.c.l.bf16 %v1491
  %v1493 = vunpack.c.h.bf16 %v1491
  %s1494 = scalar_lea.vmem %s1, 1756
  %s1496 = ssub.s32 0, 4
  %s1497 = scalar_lea.vmem %s1494, %s1496
  %v1498 = vpack.c.bf16 %v1492, %v297
  %1499 = vst [vmem:[%s1497] sm:$0xff] %v1498
  %s1500 = scalar_lea.vmem %s0, 1516
  %v1501 = vld [vmem:[%s1500] sm:$0xf]
  %v1502 = vunpack.c.l.bf16 %v1501
  %v1503 = vunpack.c.h.bf16 %v1501
  %s1504 = scalar_lea.vmem %s1, 556
  %s1506 = ssub.s32 0, 4
  %s1507 = scalar_lea.vmem %s1504, %s1506
  %v1508 = vpack.c.bf16 %v1502, %v302
  %1509 = vst [vmem:[%s1507] sm:$0xff] %v1508
  %s1510 = scalar_lea.vmem %s0, 796
  %v1511 = vld [vmem:[%s1510] sm:$0xf]
  %v1512 = vunpack.c.l.bf16 %v1511
  %v1513 = vunpack.c.h.bf16 %v1511
  %s1514 = scalar_lea.vmem %s1, 1276
  %s1516 = ssub.s32 0, 4
  %s1517 = scalar_lea.vmem %s1514, %s1516
  %v1518 = vpack.c.bf16 %v1512, %v307
  %1519 = vst [vmem:[%s1517] sm:$0xff] %v1518
  %s1520 = scalar_lea.vmem %s0, 76
  %v1521 = vld [vmem:[%s1520] sm:$0xf]
  %v1522 = vunpack.c.l.bf16 %v1521
  %v1523 = vunpack.c.h.bf16 %v1521
  %s1524 = scalar_lea.vmem %s1, 1996
  %s1526 = ssub.s32 0, 4
  %s1527 = scalar_lea.vmem %s1524, %s1526
  %v1528 = vpack.c.bf16 %v1522, %v312
  %1529 = vst [vmem:[%s1527] sm:$0xff] %v1528
  %s1530 = scalar_lea.vmem %s0, 2008
  %v1531 = vld [vmem:[%s1530] sm:$0xf]
  %v1532 = vunpack.c.l.bf16 %v1531
  %v1533 = vunpack.c.h.bf16 %v1531
  %s1534 = scalar_lea.vmem %s1, 88
  %s1536 = ssub.s32 0, 4
  %s1537 = scalar_lea.vmem %s1534, %s1536
  %v1538 = vpack.c.bf16 %v1532, %v317
  %1539 = vst [vmem:[%s1537] sm:$0xff] %v1538
  %s1540 = scalar_lea.vmem %s0, 1288
  %v1541 = vld [vmem:[%s1540] sm:$0xf]
  %v1542 = vunpack.c.l.bf16 %v1541
  %v1543 = vunpack.c.h.bf16 %v1541
  %s1544 = scalar_lea.vmem %s1, 808
  %s1546 = ssub.s32 0, 4
  %s1547 = scalar_lea.vmem %s1544, %s1546
  %v1548 = vpack.c.bf16 %v1542, %v322
  %1549 = vst [vmem:[%s1547] sm:$0xff] %v1548
  %s1550 = scalar_lea.vmem %s0, 568
  %v1551 = vld [vmem:[%s1550] sm:$0xf]
  %v1552 = vunpack.c.l.bf16 %v1551
  %v1553 = vunpack.c.h.bf16 %v1551
  %s1554 = scalar_lea.vmem %s1, 1528
  %s1556 = ssub.s32 0, 4
  %s1557 = scalar_lea.vmem %s1554, %s1556
  %v1558 = vpack.c.bf16 %v1552, %v327
  %1559 = vst [vmem:[%s1557] sm:$0xff] %v1558
  %s1560 = scalar_lea.vmem %s0, 1768
  %v1561 = vld [vmem:[%s1560] sm:$0xf]
  %v1562 = vunpack.c.l.bf16 %v1561
  %v1563 = vunpack.c.h.bf16 %v1561
  %s1564 = scalar_lea.vmem %s1, 328
  %s1566 = ssub.s32 0, 4
  %s1567 = scalar_lea.vmem %s1564, %s1566
  %v1568 = vpack.c.bf16 %v1562, %v332
  %1569 = vst [vmem:[%s1567] sm:$0xff] %v1568
  %s1570 = scalar_lea.vmem %s0, 1048
  %v1571 = vld [vmem:[%s1570] sm:$0xf]
  %v1572 = vunpack.c.l.bf16 %v1571
  %v1573 = vunpack.c.h.bf16 %v1571
  %s1574 = scalar_lea.vmem %s1, 1048
  %s1576 = ssub.s32 0, 4
  %s1577 = scalar_lea.vmem %s1574, %s1576
  %v1578 = vpack.c.bf16 %v1572, %v337
  %1579 = vst [vmem:[%s1577] sm:$0xff] %v1578
  %s1580 = scalar_lea.vmem %s0, 328
  %v1581 = vld [vmem:[%s1580] sm:$0xf]
  %v1582 = vunpack.c.l.bf16 %v1581
  %v1583 = vunpack.c.h.bf16 %v1581
  %s1584 = scalar_lea.vmem %s1, 1768
  %s1586 = ssub.s32 0, 4
  %s1587 = scalar_lea.vmem %s1584, %s1586
  %v1588 = vpack.c.bf16 %v1582, %v342
  %1589 = vst [vmem:[%s1587] sm:$0xff] %v1588
  %s1590 = scalar_lea.vmem %s0, 1528
  %v1591 = vld [vmem:[%s1590] sm:$0xf]
  %v1592 = vunpack.c.l.bf16 %v1591
  %v1593 = vunpack.c.h.bf16 %v1591
  %s1594 = scalar_lea.vmem %s1, 568
  %s1596 = ssub.s32 0, 4
  %s1597 = scalar_lea.vmem %s1594, %s1596
  %v1598 = vpack.c.bf16 %v1592, %v347
  %1599 = vst [vmem:[%s1597] sm:$0xff] %v1598
  %s1600 = scalar_lea.vmem %s0, 808
  %v1601 = vld [vmem:[%s1600] sm:$0xf]
  %v1602 = vunpack.c.l.bf16 %v1601
  %v1603 = vunpack.c.h.bf16 %v1601
  %s1604 = scalar_lea.vmem %s1, 1288
  %s1606 = ssub.s32 0, 4
  %s1607 = scalar_lea.vmem %s1604, %s1606
  %v1608 = vpack.c.bf16 %v1602, %v352
  %1609 = vst [vmem:[%s1607] sm:$0xff] %v1608
  %s1610 = scalar_lea.vmem %s0, 88
  %v1611 = vld [vmem:[%s1610] sm:$0xf]
  %v1612 = vunpack.c.l.bf16 %v1611
  %v1613 = vunpack.c.h.bf16 %v1611
  %s1614 = scalar_lea.vmem %s1, 2008
  %s1616 = ssub.s32 0, 4
  %s1617 = scalar_lea.vmem %s1614, %s1616
  %v1618 = vpack.c.bf16 %v1612, %v357
  %1619 = vst [vmem:[%s1617] sm:$0xff] %v1618
  %s1620 = scalar_lea.vmem %s0, 2020
  %v1621 = vld [vmem:[%s1620] sm:$0xf]
  %v1622 = vunpack.c.l.bf16 %v1621
  %v1623 = vunpack.c.h.bf16 %v1621
  %s1624 = scalar_lea.vmem %s1, 100
  %s1626 = ssub.s32 0, 4
  %s1627 = scalar_lea.vmem %s1624, %s1626
  %v1628 = vpack.c.bf16 %v1622, %v362
  %1629 = vst [vmem:[%s1627] sm:$0xff] %v1628
  %s1630 = scalar_lea.vmem %s0, 1300
  %v1631 = vld [vmem:[%s1630] sm:$0xf]
  %v1632 = vunpack.c.l.bf16 %v1631
  %v1633 = vunpack.c.h.bf16 %v1631
  %s1634 = scalar_lea.vmem %s1, 820
  %s1636 = ssub.s32 0, 4
  %s1637 = scalar_lea.vmem %s1634, %s1636
  %v1638 = vpack.c.bf16 %v1632, %v367
  %1639 = vst [vmem:[%s1637] sm:$0xff] %v1638
  %s1640 = scalar_lea.vmem %s0, 580
  %v1641 = vld [vmem:[%s1640] sm:$0xf]
  %v1642 = vunpack.c.l.bf16 %v1641
  %v1643 = vunpack.c.h.bf16 %v1641
  %s1644 = scalar_lea.vmem %s1, 1540
  %s1646 = ssub.s32 0, 4
  %s1647 = scalar_lea.vmem %s1644, %s1646
  %v1648 = vpack.c.bf16 %v1642, %v372
  %1649 = vst [vmem:[%s1647] sm:$0xff] %v1648
  %s1650 = scalar_lea.vmem %s0, 1780
  %v1651 = vld [vmem:[%s1650] sm:$0xf]
  %v1652 = vunpack.c.l.bf16 %v1651
  %v1653 = vunpack.c.h.bf16 %v1651
  %s1654 = scalar_lea.vmem %s1, 340
  %s1656 = ssub.s32 0, 4
  %s1657 = scalar_lea.vmem %s1654, %s1656
  %v1658 = vpack.c.bf16 %v1652, %v377
  %1659 = vst [vmem:[%s1657] sm:$0xff] %v1658
  %s1660 = scalar_lea.vmem %s0, 1060
  %v1661 = vld [vmem:[%s1660] sm:$0xf]
  %v1662 = vunpack.c.l.bf16 %v1661
  %v1663 = vunpack.c.h.bf16 %v1661
  %s1664 = scalar_lea.vmem %s1, 1060
  %s1666 = ssub.s32 0, 4
  %s1667 = scalar_lea.vmem %s1664, %s1666
  %v1668 = vpack.c.bf16 %v1662, %v382
  %1669 = vst [vmem:[%s1667] sm:$0xff] %v1668
  %s1670 = scalar_lea.vmem %s0, 340
  %v1671 = vld [vmem:[%s1670] sm:$0xf]
  %v1672 = vunpack.c.l.bf16 %v1671
  %v1673 = vunpack.c.h.bf16 %v1671
  %s1674 = scalar_lea.vmem %s1, 1780
  %s1676 = ssub.s32 0, 4
  %s1677 = scalar_lea.vmem %s1674, %s1676
  %v1678 = vpack.c.bf16 %v1672, %v387
  %1679 = vst [vmem:[%s1677] sm:$0xff] %v1678
  %s1680 = scalar_lea.vmem %s0, 1540
  %v1681 = vld [vmem:[%s1680] sm:$0xf]
  %v1682 = vunpack.c.l.bf16 %v1681
  %v1683 = vunpack.c.h.bf16 %v1681
  %s1684 = scalar_lea.vmem %s1, 580
  %s1686 = ssub.s32 0, 4
  %s1687 = scalar_lea.vmem %s1684, %s1686
  %v1688 = vpack.c.bf16 %v1682, %v392
  %1689 = vst [vmem:[%s1687] sm:$0xff] %v1688
  %s1690 = scalar_lea.vmem %s0, 820
  %v1691 = vld [vmem:[%s1690] sm:$0xf]
  %v1692 = vunpack.c.l.bf16 %v1691
  %v1693 = vunpack.c.h.bf16 %v1691
  %s1694 = scalar_lea.vmem %s1, 1300
  %s1696 = ssub.s32 0, 4
  %s1697 = scalar_lea.vmem %s1694, %s1696
  %v1698 = vpack.c.bf16 %v1692, %v397
  %1699 = vst [vmem:[%s1697] sm:$0xff] %v1698
  %s1700 = scalar_lea.vmem %s0, 100
  %v1701 = vld [vmem:[%s1700] sm:$0xf]
  %v1702 = vunpack.c.l.bf16 %v1701
  %v1703 = vunpack.c.h.bf16 %v1701
  %s1704 = scalar_lea.vmem %s1, 2020
  %s1706 = ssub.s32 0, 4
  %s1707 = scalar_lea.vmem %s1704, %s1706
  %v1708 = vpack.c.bf16 %v1702, %v402
  %1709 = vst [vmem:[%s1707] sm:$0xff] %v1708
  %s1710 = scalar_lea.vmem %s0, 2032
  %v1711 = vld [vmem:[%s1710] sm:$0xf]
  %v1712 = vunpack.c.l.bf16 %v1711
  %v1713 = vunpack.c.h.bf16 %v1711
  %s1714 = scalar_lea.vmem %s1, 112
  %s1716 = ssub.s32 0, 4
  %s1717 = scalar_lea.vmem %s1714, %s1716
  %v1718 = vpack.c.bf16 %v1712, %v407
  %1719 = vst [vmem:[%s1717] sm:$0xff] %v1718
  %s1720 = scalar_lea.vmem %s0, 1312
  %v1721 = vld [vmem:[%s1720] sm:$0xf]
  %v1722 = vunpack.c.l.bf16 %v1721
  %v1723 = vunpack.c.h.bf16 %v1721
  %s1724 = scalar_lea.vmem %s1, 832
  %s1726 = ssub.s32 0, 4
  %s1727 = scalar_lea.vmem %s1724, %s1726
  %v1728 = vpack.c.bf16 %v1722, %v412
  %1729 = vst [vmem:[%s1727] sm:$0xff] %v1728
  %s1730 = scalar_lea.vmem %s0, 592
  %v1731 = vld [vmem:[%s1730] sm:$0xf]
  %v1732 = vunpack.c.l.bf16 %v1731
  %v1733 = vunpack.c.h.bf16 %v1731
  %s1734 = scalar_lea.vmem %s1, 1552
  %s1736 = ssub.s32 0, 4
  %s1737 = scalar_lea.vmem %s1734, %s1736
  %v1738 = vpack.c.bf16 %v1732, %v417
  %1739 = vst [vmem:[%s1737] sm:$0xff] %v1738
  %s1740 = scalar_lea.vmem %s0, 1792
  %v1741 = vld [vmem:[%s1740] sm:$0xf]
  %v1742 = vunpack.c.l.bf16 %v1741
  %v1743 = vunpack.c.h.bf16 %v1741
  %s1744 = scalar_lea.vmem %s1, 352
  %s1746 = ssub.s32 0, 4
  %s1747 = scalar_lea.vmem %s1744, %s1746
  %v1748 = vpack.c.bf16 %v1742, %v422
  %1749 = vst [vmem:[%s1747] sm:$0xff] %v1748
  %s1750 = scalar_lea.vmem %s0, 1072
  %v1751 = vld [vmem:[%s1750] sm:$0xf]
  %v1752 = vunpack.c.l.bf16 %v1751
  %v1753 = vunpack.c.h.bf16 %v1751
  %s1754 = scalar_lea.vmem %s1, 1072
  %s1756 = ssub.s32 0, 4
  %s1757 = scalar_lea.vmem %s1754, %s1756
  %v1758 = vpack.c.bf16 %v1752, %v427
  %1759 = vst [vmem:[%s1757] sm:$0xff] %v1758
  %s1760 = scalar_lea.vmem %s0, 352
  %v1761 = vld [vmem:[%s1760] sm:$0xf]
  %v1762 = vunpack.c.l.bf16 %v1761
  %v1763 = vunpack.c.h.bf16 %v1761
  %s1764 = scalar_lea.vmem %s1, 1792
  %s1766 = ssub.s32 0, 4
  %s1767 = scalar_lea.vmem %s1764, %s1766
  %v1768 = vpack.c.bf16 %v1762, %v432
  %1769 = vst [vmem:[%s1767] sm:$0xff] %v1768
  %s1770 = scalar_lea.vmem %s0, 1552
  %v1771 = vld [vmem:[%s1770] sm:$0xf]
  %v1772 = vunpack.c.l.bf16 %v1771
  %v1773 = vunpack.c.h.bf16 %v1771
  %s1774 = scalar_lea.vmem %s1, 592
  %s1776 = ssub.s32 0, 4
  %s1777 = scalar_lea.vmem %s1774, %s1776
  %v1778 = vpack.c.bf16 %v1772, %v437
  %1779 = vst [vmem:[%s1777] sm:$0xff] %v1778
  %s1780 = scalar_lea.vmem %s0, 832
  %v1781 = vld [vmem:[%s1780] sm:$0xf]
  %v1782 = vunpack.c.l.bf16 %v1781
  %v1783 = vunpack.c.h.bf16 %v1781
  %s1784 = scalar_lea.vmem %s1, 1312
  %s1786 = ssub.s32 0, 4
  %s1787 = scalar_lea.vmem %s1784, %s1786
  %v1788 = vpack.c.bf16 %v1782, %v442
  %1789 = vst [vmem:[%s1787] sm:$0xff] %v1788
  %s1790 = scalar_lea.vmem %s0, 112
  %v1791 = vld [vmem:[%s1790] sm:$0xf]
  %v1792 = vunpack.c.l.bf16 %v1791
  %v1793 = vunpack.c.h.bf16 %v1791
  %s1794 = scalar_lea.vmem %s1, 2032
  %s1796 = ssub.s32 0, 4
  %s1797 = scalar_lea.vmem %s1794, %s1796
  %v1798 = vpack.c.bf16 %v1792, %v447
  %1799 = vst [vmem:[%s1797] sm:$0xff] %v1798
  %s1800 = scalar_lea.vmem %s0, 2044
  %v1801 = vld [vmem:[%s1800] sm:$0xf]
  %v1802 = vunpack.c.l.bf16 %v1801
  %v1803 = vunpack.c.h.bf16 %v1801
  %s1804 = scalar_lea.vmem %s1, 124
  %s1806 = ssub.s32 0, 4
  %s1807 = scalar_lea.vmem %s1804, %s1806
  %v1808 = vpack.c.bf16 %v1802, %v452
  %1809 = vst [vmem:[%s1807] sm:$0xff] %v1808
  %s1810 = scalar_lea.vmem %s0, 1324
  %v1811 = vld [vmem:[%s1810] sm:$0xf]
  %v1812 = vunpack.c.l.bf16 %v1811
  %v1813 = vunpack.c.h.bf16 %v1811
  %s1814 = scalar_lea.vmem %s1, 844
  %s1816 = ssub.s32 0, 4
  %s1817 = scalar_lea.vmem %s1814, %s1816
  %v1818 = vpack.c.bf16 %v1812, %v457
  %1819 = vst [vmem:[%s1817] sm:$0xff] %v1818
  %s1820 = scalar_lea.vmem %s0, 604
  %v1821 = vld [vmem:[%s1820] sm:$0xf]
  %v1822 = vunpack.c.l.bf16 %v1821
  %v1823 = vunpack.c.h.bf16 %v1821
  %s1824 = scalar_lea.vmem %s1, 1564
  %s1826 = ssub.s32 0, 4
  %s1827 = scalar_lea.vmem %s1824, %s1826
  %v1828 = vpack.c.bf16 %v1822, %v462
  %1829 = vst [vmem:[%s1827] sm:$0xff] %v1828
  %s1830 = scalar_lea.vmem %s0, 1804
  %v1831 = vld [vmem:[%s1830] sm:$0xf]
  %v1832 = vunpack.c.l.bf16 %v1831
  %v1833 = vunpack.c.h.bf16 %v1831
  %s1834 = scalar_lea.vmem %s1, 364
  %s1836 = ssub.s32 0, 4
  %s1837 = scalar_lea.vmem %s1834, %s1836
  %v1838 = vpack.c.bf16 %v1832, %v467
  %1839 = vst [vmem:[%s1837] sm:$0xff] %v1838
  %s1840 = scalar_lea.vmem %s0, 1084
  %v1841 = vld [vmem:[%s1840] sm:$0xf]
  %v1842 = vunpack.c.l.bf16 %v1841
  %v1843 = vunpack.c.h.bf16 %v1841
  %s1844 = scalar_lea.vmem %s1, 1084
  %s1846 = ssub.s32 0, 4
  %s1847 = scalar_lea.vmem %s1844, %s1846
  %v1848 = vpack.c.bf16 %v1842, %v472
  %1849 = vst [vmem:[%s1847] sm:$0xff] %v1848
  %s1850 = scalar_lea.vmem %s0, 364
  %v1851 = vld [vmem:[%s1850] sm:$0xf]
  %v1852 = vunpack.c.l.bf16 %v1851
  %v1853 = vunpack.c.h.bf16 %v1851
  %s1854 = scalar_lea.vmem %s1, 1804
  %s1856 = ssub.s32 0, 4
  %s1857 = scalar_lea.vmem %s1854, %s1856
  %v1858 = vpack.c.bf16 %v1852, %v477
  %1859 = vst [vmem:[%s1857] sm:$0xff] %v1858
  %s1860 = scalar_lea.vmem %s0, 1564
  %v1861 = vld [vmem:[%s1860] sm:$0xf]
  %v1862 = vunpack.c.l.bf16 %v1861
  %v1863 = vunpack.c.h.bf16 %v1861
  %s1864 = scalar_lea.vmem %s1, 604
  %s1866 = ssub.s32 0, 4
  %s1867 = scalar_lea.vmem %s1864, %s1866
  %v1868 = vpack.c.bf16 %v1862, %v482
  %1869 = vst [vmem:[%s1867] sm:$0xff] %v1868
  %s1870 = scalar_lea.vmem %s0, 844
  %v1871 = vld [vmem:[%s1870] sm:$0xf]
  %v1872 = vunpack.c.l.bf16 %v1871
  %v1873 = vunpack.c.h.bf16 %v1871
  %s1874 = scalar_lea.vmem %s1, 1324
  %s1876 = ssub.s32 0, 4
  %s1877 = scalar_lea.vmem %s1874, %s1876
  %v1878 = vpack.c.bf16 %v1872, %v487
  %1879 = vst [vmem:[%s1877] sm:$0xff] %v1878
  %s1880 = scalar_lea.vmem %s0, 124
  %v1881 = vld [vmem:[%s1880] sm:$0xf]
  %v1882 = vunpack.c.l.bf16 %v1881
  %v1883 = vunpack.c.h.bf16 %v1881
  %s1884 = scalar_lea.vmem %s1, 2044
  %s1886 = ssub.s32 0, 4
  %s1887 = scalar_lea.vmem %s1884, %s1886
  %v1888 = vpack.c.bf16 %v1882, %v492
  %1889 = vst [vmem:[%s1887] sm:$0xff] %v1888
  %s1890 = scalar_lea.vmem %s0, 2056
  %v1891 = vld [vmem:[%s1890] sm:$0xf]
  %v1892 = vunpack.c.l.bf16 %v1891
  %v1893 = vunpack.c.h.bf16 %v1891
  %s1894 = scalar_lea.vmem %s1, 136
  %s1896 = ssub.s32 0, 4
  %s1897 = scalar_lea.vmem %s1894, %s1896
  %v1898 = vpack.c.bf16 %v1892, %v497
  %1899 = vst [vmem:[%s1897] sm:$0xff] %v1898
  %s1900 = scalar_lea.vmem %s0, 1336
  %v1901 = vld [vmem:[%s1900] sm:$0xf]
  %v1902 = vunpack.c.l.bf16 %v1901
  %v1903 = vunpack.c.h.bf16 %v1901
  %s1904 = scalar_lea.vmem %s1, 856
  %s1906 = ssub.s32 0, 4
  %s1907 = scalar_lea.vmem %s1904, %s1906
  %v1908 = vpack.c.bf16 %v1902, %v502
  %1909 = vst [vmem:[%s1907] sm:$0xff] %v1908
  %s1910 = scalar_lea.vmem %s0, 616
  %v1911 = vld [vmem:[%s1910] sm:$0xf]
  %v1912 = vunpack.c.l.bf16 %v1911
  %v1913 = vunpack.c.h.bf16 %v1911
  %s1914 = scalar_lea.vmem %s1, 1576
  %s1916 = ssub.s32 0, 4
  %s1917 = scalar_lea.vmem %s1914, %s1916
  %v1918 = vpack.c.bf16 %v1912, %v507
  %1919 = vst [vmem:[%s1917] sm:$0xff] %v1918
  %s1920 = scalar_lea.vmem %s0, 1816
  %v1921 = vld [vmem:[%s1920] sm:$0xf]
  %v1922 = vunpack.c.l.bf16 %v1921
  %v1923 = vunpack.c.h.bf16 %v1921
  %s1924 = scalar_lea.vmem %s1, 376
  %s1926 = ssub.s32 0, 4
  %s1927 = scalar_lea.vmem %s1924, %s1926
  %v1928 = vpack.c.bf16 %v1922, %v512
  %1929 = vst [vmem:[%s1927] sm:$0xff] %v1928
  %s1930 = scalar_lea.vmem %s0, 1096
  %v1931 = vld [vmem:[%s1930] sm:$0xf]
  %v1932 = vunpack.c.l.bf16 %v1931
  %v1933 = vunpack.c.h.bf16 %v1931
  %s1934 = scalar_lea.vmem %s1, 1096
  %s1936 = ssub.s32 0, 4
  %s1937 = scalar_lea.vmem %s1934, %s1936
  %v1938 = vpack.c.bf16 %v1932, %v517
  %1939 = vst [vmem:[%s1937] sm:$0xff] %v1938
  %s1940 = scalar_lea.vmem %s0, 376
  %v1941 = vld [vmem:[%s1940] sm:$0xf]
  %v1942 = vunpack.c.l.bf16 %v1941
  %v1943 = vunpack.c.h.bf16 %v1941
  %s1944 = scalar_lea.vmem %s1, 1816
  %s1946 = ssub.s32 0, 4
  %s1947 = scalar_lea.vmem %s1944, %s1946
  %v1948 = vpack.c.bf16 %v1942, %v522
  %1949 = vst [vmem:[%s1947] sm:$0xff] %v1948
  %s1950 = scalar_lea.vmem %s0, 1576
  %v1951 = vld [vmem:[%s1950] sm:$0xf]
  %v1952 = vunpack.c.l.bf16 %v1951
  %v1953 = vunpack.c.h.bf16 %v1951
  %s1954 = scalar_lea.vmem %s1, 616
  %s1956 = ssub.s32 0, 4
  %s1957 = scalar_lea.vmem %s1954, %s1956
  %v1958 = vpack.c.bf16 %v1952, %v527
  %1959 = vst [vmem:[%s1957] sm:$0xff] %v1958
  %s1960 = scalar_lea.vmem %s0, 856
  %v1961 = vld [vmem:[%s1960] sm:$0xf]
  %v1962 = vunpack.c.l.bf16 %v1961
  %v1963 = vunpack.c.h.bf16 %v1961
  %s1964 = scalar_lea.vmem %s1, 1336
  %s1966 = ssub.s32 0, 4
  %s1967 = scalar_lea.vmem %s1964, %s1966
  %v1968 = vpack.c.bf16 %v1962, %v532
  %1969 = vst [vmem:[%s1967] sm:$0xff] %v1968
  %s1970 = scalar_lea.vmem %s0, 136
  %v1971 = vld [vmem:[%s1970] sm:$0xf]
  %v1972 = vunpack.c.l.bf16 %v1971
  %v1973 = vunpack.c.h.bf16 %v1971
  %s1974 = scalar_lea.vmem %s1, 2056
  %s1976 = ssub.s32 0, 4
  %s1977 = scalar_lea.vmem %s1974, %s1976
  %v1978 = vpack.c.bf16 %v1972, %v537
  %1979 = vst [vmem:[%s1977] sm:$0xff] %v1978
  %s1980 = scalar_lea.vmem %s0, 2068
  %v1981 = vld [vmem:[%s1980] sm:$0xf]
  %v1982 = vunpack.c.l.bf16 %v1981
  %v1983 = vunpack.c.h.bf16 %v1981
  %s1984 = scalar_lea.vmem %s1, 148
  %s1986 = ssub.s32 0, 4
  %s1987 = scalar_lea.vmem %s1984, %s1986
  %v1988 = vpack.c.bf16 %v1982, %v542
  %1989 = vst [vmem:[%s1987] sm:$0xff] %v1988
  %s1990 = scalar_lea.vmem %s0, 1348
  %v1991 = vld [vmem:[%s1990] sm:$0xf]
  %v1992 = vunpack.c.l.bf16 %v1991
  %v1993 = vunpack.c.h.bf16 %v1991
  %s1994 = scalar_lea.vmem %s1, 868
  %s1996 = ssub.s32 0, 4
  %s1997 = scalar_lea.vmem %s1994, %s1996
  %v1998 = vpack.c.bf16 %v1992, %v547
  %1999 = vst [vmem:[%s1997] sm:$0xff] %v1998
  %s2000 = scalar_lea.vmem %s0, 628
  %v2001 = vld [vmem:[%s2000] sm:$0xf]
  %v2002 = vunpack.c.l.bf16 %v2001
  %v2003 = vunpack.c.h.bf16 %v2001
  %s2004 = scalar_lea.vmem %s1, 1588
  %s2006 = ssub.s32 0, 4
  %s2007 = scalar_lea.vmem %s2004, %s2006
  %v2008 = vpack.c.bf16 %v2002, %v552
  %2009 = vst [vmem:[%s2007] sm:$0xff] %v2008
  %s2010 = scalar_lea.vmem %s0, 1828
  %v2011 = vld [vmem:[%s2010] sm:$0xf]
  %v2012 = vunpack.c.l.bf16 %v2011
  %v2013 = vunpack.c.h.bf16 %v2011
  %s2014 = scalar_lea.vmem %s1, 388
  %s2016 = ssub.s32 0, 4
  %s2017 = scalar_lea.vmem %s2014, %s2016
  %v2018 = vpack.c.bf16 %v2012, %v557
  %2019 = vst [vmem:[%s2017] sm:$0xff] %v2018
  %s2020 = scalar_lea.vmem %s0, 1108
  %v2021 = vld [vmem:[%s2020] sm:$0xf]
  %v2022 = vunpack.c.l.bf16 %v2021
  %v2023 = vunpack.c.h.bf16 %v2021
  %s2024 = scalar_lea.vmem %s1, 1108
  %s2026 = ssub.s32 0, 4
  %s2027 = scalar_lea.vmem %s2024, %s2026
  %v2028 = vpack.c.bf16 %v2022, %v562
  %2029 = vst [vmem:[%s2027] sm:$0xff] %v2028
  %s2030 = scalar_lea.vmem %s0, 388
  %v2031 = vld [vmem:[%s2030] sm:$0xf]
  %v2032 = vunpack.c.l.bf16 %v2031
  %v2033 = vunpack.c.h.bf16 %v2031
  %s2034 = scalar_lea.vmem %s1, 1828
  %s2036 = ssub.s32 0, 4
  %s2037 = scalar_lea.vmem %s2034, %s2036
  %v2038 = vpack.c.bf16 %v2032, %v567
  %2039 = vst [vmem:[%s2037] sm:$0xff] %v2038
  %s2040 = scalar_lea.vmem %s0, 1588
  %v2041 = vld [vmem:[%s2040] sm:$0xf]
  %v2042 = vunpack.c.l.bf16 %v2041
  %v2043 = vunpack.c.h.bf16 %v2041
  %s2044 = scalar_lea.vmem %s1, 628
  %s2046 = ssub.s32 0, 4
  %s2047 = scalar_lea.vmem %s2044, %s2046
  %v2048 = vpack.c.bf16 %v2042, %v572
  %2049 = vst [vmem:[%s2047] sm:$0xff] %v2048
  %s2050 = scalar_lea.vmem %s0, 868
  %v2051 = vld [vmem:[%s2050] sm:$0xf]
  %v2052 = vunpack.c.l.bf16 %v2051
  %v2053 = vunpack.c.h.bf16 %v2051
  %s2054 = scalar_lea.vmem %s1, 1348
  %s2056 = ssub.s32 0, 4
  %s2057 = scalar_lea.vmem %s2054, %s2056
  %v2058 = vpack.c.bf16 %v2052, %v577
  %2059 = vst [vmem:[%s2057] sm:$0xff] %v2058
  %s2060 = scalar_lea.vmem %s0, 148
  %v2061 = vld [vmem:[%s2060] sm:$0xf]
  %v2062 = vunpack.c.l.bf16 %v2061
  %v2063 = vunpack.c.h.bf16 %v2061
  %s2064 = scalar_lea.vmem %s1, 2068
  %s2066 = ssub.s32 0, 4
  %s2067 = scalar_lea.vmem %s2064, %s2066
  %v2068 = vpack.c.bf16 %v2062, %v582
  %2069 = vst [vmem:[%s2067] sm:$0xff] %v2068
  %s2070 = scalar_lea.vmem %s0, 2080
  %v2071 = vld [vmem:[%s2070] sm:$0xf]
  %v2072 = vunpack.c.l.bf16 %v2071
  %v2073 = vunpack.c.h.bf16 %v2071
  %s2074 = scalar_lea.vmem %s1, 160
  %s2076 = ssub.s32 0, 4
  %s2077 = scalar_lea.vmem %s2074, %s2076
  %v2078 = vpack.c.bf16 %v2072, %v587
  %2079 = vst [vmem:[%s2077] sm:$0xff] %v2078
  %s2080 = scalar_lea.vmem %s0, 1360
  %v2081 = vld [vmem:[%s2080] sm:$0xf]
  %v2082 = vunpack.c.l.bf16 %v2081
  %v2083 = vunpack.c.h.bf16 %v2081
  %s2084 = scalar_lea.vmem %s1, 880
  %s2086 = ssub.s32 0, 4
  %s2087 = scalar_lea.vmem %s2084, %s2086
  %v2088 = vpack.c.bf16 %v2082, %v592
  %2089 = vst [vmem:[%s2087] sm:$0xff] %v2088
  %s2090 = scalar_lea.vmem %s0, 640
  %v2091 = vld [vmem:[%s2090] sm:$0xf]
  %v2092 = vunpack.c.l.bf16 %v2091
  %v2093 = vunpack.c.h.bf16 %v2091
  %s2094 = scalar_lea.vmem %s1, 1600
  %s2096 = ssub.s32 0, 4
  %s2097 = scalar_lea.vmem %s2094, %s2096
  %v2098 = vpack.c.bf16 %v2092, %v597
  %2099 = vst [vmem:[%s2097] sm:$0xff] %v2098
  %s2100 = scalar_lea.vmem %s0, 1840
  %v2101 = vld [vmem:[%s2100] sm:$0xf]
  %v2102 = vunpack.c.l.bf16 %v2101
  %v2103 = vunpack.c.h.bf16 %v2101
  %s2104 = scalar_lea.vmem %s1, 400
  %s2106 = ssub.s32 0, 4
  %s2107 = scalar_lea.vmem %s2104, %s2106
  %v2108 = vpack.c.bf16 %v2102, %v602
  %2109 = vst [vmem:[%s2107] sm:$0xff] %v2108
  %s2110 = scalar_lea.vmem %s0, 1120
  %v2111 = vld [vmem:[%s2110] sm:$0xf]
  %v2112 = vunpack.c.l.bf16 %v2111
  %v2113 = vunpack.c.h.bf16 %v2111
  %s2114 = scalar_lea.vmem %s1, 1120
  %s2116 = ssub.s32 0, 4
  %s2117 = scalar_lea.vmem %s2114, %s2116
  %v2118 = vpack.c.bf16 %v2112, %v607
  %2119 = vst [vmem:[%s2117] sm:$0xff] %v2118
  %s2120 = scalar_lea.vmem %s0, 400
  %v2121 = vld [vmem:[%s2120] sm:$0xf]
  %v2122 = vunpack.c.l.bf16 %v2121
  %v2123 = vunpack.c.h.bf16 %v2121
  %s2124 = scalar_lea.vmem %s1, 1840
  %s2126 = ssub.s32 0, 4
  %s2127 = scalar_lea.vmem %s2124, %s2126
  %v2128 = vpack.c.bf16 %v2122, %v612
  %2129 = vst [vmem:[%s2127] sm:$0xff] %v2128
  %s2130 = scalar_lea.vmem %s0, 1600
  %v2131 = vld [vmem:[%s2130] sm:$0xf]
  %v2132 = vunpack.c.l.bf16 %v2131
  %v2133 = vunpack.c.h.bf16 %v2131
  %s2134 = scalar_lea.vmem %s1, 640
  %s2136 = ssub.s32 0, 4
  %s2137 = scalar_lea.vmem %s2134, %s2136
  %v2138 = vpack.c.bf16 %v2132, %v617
  %2139 = vst [vmem:[%s2137] sm:$0xff] %v2138
  %s2140 = scalar_lea.vmem %s0, 880
  %v2141 = vld [vmem:[%s2140] sm:$0xf]
  %v2142 = vunpack.c.l.bf16 %v2141
  %v2143 = vunpack.c.h.bf16 %v2141
  %s2144 = scalar_lea.vmem %s1, 1360
  %s2146 = ssub.s32 0, 4
  %s2147 = scalar_lea.vmem %s2144, %s2146
  %v2148 = vpack.c.bf16 %v2142, %v622
  %2149 = vst [vmem:[%s2147] sm:$0xff] %v2148
  %s2150 = scalar_lea.vmem %s0, 160
  %v2151 = vld [vmem:[%s2150] sm:$0xf]
  %v2152 = vunpack.c.l.bf16 %v2151
  %v2153 = vunpack.c.h.bf16 %v2151
  %s2154 = scalar_lea.vmem %s1, 2080
  %s2156 = ssub.s32 0, 4
  %s2157 = scalar_lea.vmem %s2154, %s2156
  %v2158 = vpack.c.bf16 %v2152, %v627
  %2159 = vst [vmem:[%s2157] sm:$0xff] %v2158
  %s2160 = scalar_lea.vmem %s0, 2092
  %v2161 = vld [vmem:[%s2160] sm:$0xf]
  %v2162 = vunpack.c.l.bf16 %v2161
  %v2163 = vunpack.c.h.bf16 %v2161
  %s2164 = scalar_lea.vmem %s1, 172
  %s2166 = ssub.s32 0, 4
  %s2167 = scalar_lea.vmem %s2164, %s2166
  %v2168 = vpack.c.bf16 %v2162, %v632
  %2169 = vst [vmem:[%s2167] sm:$0xff] %v2168
  %s2170 = scalar_lea.vmem %s0, 1372
  %v2171 = vld [vmem:[%s2170] sm:$0xf]
  %v2172 = vunpack.c.l.bf16 %v2171
  %v2173 = vunpack.c.h.bf16 %v2171
  %s2174 = scalar_lea.vmem %s1, 892
  %s2176 = ssub.s32 0, 4
  %s2177 = scalar_lea.vmem %s2174, %s2176
  %v2178 = vpack.c.bf16 %v2172, %v637
  %2179 = vst [vmem:[%s2177] sm:$0xff] %v2178
  %s2180 = scalar_lea.vmem %s0, 652
  %v2181 = vld [vmem:[%s2180] sm:$0xf]
  %v2182 = vunpack.c.l.bf16 %v2181
  %v2183 = vunpack.c.h.bf16 %v2181
  %s2184 = scalar_lea.vmem %s1, 1612
  %s2186 = ssub.s32 0, 4
  %s2187 = scalar_lea.vmem %s2184, %s2186
  %v2188 = vpack.c.bf16 %v2182, %v642
  %2189 = vst [vmem:[%s2187] sm:$0xff] %v2188
  %s2190 = scalar_lea.vmem %s0, 1852
  %v2191 = vld [vmem:[%s2190] sm:$0xf]
  %v2192 = vunpack.c.l.bf16 %v2191
  %v2193 = vunpack.c.h.bf16 %v2191
  %s2194 = scalar_lea.vmem %s1, 412
  %s2196 = ssub.s32 0, 4
  %s2197 = scalar_lea.vmem %s2194, %s2196
  %v2198 = vpack.c.bf16 %v2192, %v647
  %2199 = vst [vmem:[%s2197] sm:$0xff] %v2198
  %s2200 = scalar_lea.vmem %s0, 1132
  %v2201 = vld [vmem:[%s2200] sm:$0xf]
  %v2202 = vunpack.c.l.bf16 %v2201
  %v2203 = vunpack.c.h.bf16 %v2201
  %s2204 = scalar_lea.vmem %s1, 1132
  %s2206 = ssub.s32 0, 4
  %s2207 = scalar_lea.vmem %s2204, %s2206
  %v2208 = vpack.c.bf16 %v2202, %v652
  %2209 = vst [vmem:[%s2207] sm:$0xff] %v2208
  %s2210 = scalar_lea.vmem %s0, 412
  %v2211 = vld [vmem:[%s2210] sm:$0xf]
  %v2212 = vunpack.c.l.bf16 %v2211
  %v2213 = vunpack.c.h.bf16 %v2211
  %s2214 = scalar_lea.vmem %s1, 1852
  %s2216 = ssub.s32 0, 4
  %s2217 = scalar_lea.vmem %s2214, %s2216
  %v2218 = vpack.c.bf16 %v2212, %v657
  %2219 = vst [vmem:[%s2217] sm:$0xff] %v2218
  %s2220 = scalar_lea.vmem %s0, 1612
  %v2221 = vld [vmem:[%s2220] sm:$0xf]
  %v2222 = vunpack.c.l.bf16 %v2221
  %v2223 = vunpack.c.h.bf16 %v2221
  %s2224 = scalar_lea.vmem %s1, 652
  %s2226 = ssub.s32 0, 4
  %s2227 = scalar_lea.vmem %s2224, %s2226
  %v2228 = vpack.c.bf16 %v2222, %v662
  %2229 = vst [vmem:[%s2227] sm:$0xff] %v2228
  %s2230 = scalar_lea.vmem %s0, 892
  %v2231 = vld [vmem:[%s2230] sm:$0xf]
  %v2232 = vunpack.c.l.bf16 %v2231
  %v2233 = vunpack.c.h.bf16 %v2231
  %s2234 = scalar_lea.vmem %s1, 1372
  %s2236 = ssub.s32 0, 4
  %s2237 = scalar_lea.vmem %s2234, %s2236
  %v2238 = vpack.c.bf16 %v2232, %v667
  %2239 = vst [vmem:[%s2237] sm:$0xff] %v2238
  %s2240 = scalar_lea.vmem %s0, 172
  %v2241 = vld [vmem:[%s2240] sm:$0xf]
  %v2242 = vunpack.c.l.bf16 %v2241
  %v2243 = vunpack.c.h.bf16 %v2241
  %s2244 = scalar_lea.vmem %s1, 2092
  %s2246 = ssub.s32 0, 4
  %s2247 = scalar_lea.vmem %s2244, %s2246
  %v2248 = vpack.c.bf16 %v2242, %v672
  %2249 = vst [vmem:[%s2247] sm:$0xff] %v2248
  %s2250 = scalar_lea.vmem %s0, 2104
  %v2251 = vld [vmem:[%s2250] sm:$0xf]
  %v2252 = vunpack.c.l.bf16 %v2251
  %v2253 = vunpack.c.h.bf16 %v2251
  %s2254 = scalar_lea.vmem %s1, 184
  %s2256 = ssub.s32 0, 4
  %s2257 = scalar_lea.vmem %s2254, %s2256
  %v2258 = vpack.c.bf16 %v2252, %v677
  %2259 = vst [vmem:[%s2257] sm:$0xff] %v2258
  %s2260 = scalar_lea.vmem %s0, 1384
  %v2261 = vld [vmem:[%s2260] sm:$0xf]
  %v2262 = vunpack.c.l.bf16 %v2261
  %v2263 = vunpack.c.h.bf16 %v2261
  %s2264 = scalar_lea.vmem %s1, 904
  %s2266 = ssub.s32 0, 4
  %s2267 = scalar_lea.vmem %s2264, %s2266
  %v2268 = vpack.c.bf16 %v2262, %v682
  %2269 = vst [vmem:[%s2267] sm:$0xff] %v2268
  %s2270 = scalar_lea.vmem %s0, 664
  %v2271 = vld [vmem:[%s2270] sm:$0xf]
  %v2272 = vunpack.c.l.bf16 %v2271
  %v2273 = vunpack.c.h.bf16 %v2271
  %s2274 = scalar_lea.vmem %s1, 1624
  %s2276 = ssub.s32 0, 4
  %s2277 = scalar_lea.vmem %s2274, %s2276
  %v2278 = vpack.c.bf16 %v2272, %v687
  %2279 = vst [vmem:[%s2277] sm:$0xff] %v2278
  %s2280 = scalar_lea.vmem %s0, 1864
  %v2281 = vld [vmem:[%s2280] sm:$0xf]
  %v2282 = vunpack.c.l.bf16 %v2281
  %v2283 = vunpack.c.h.bf16 %v2281
  %s2284 = scalar_lea.vmem %s1, 424
  %s2286 = ssub.s32 0, 4
  %s2287 = scalar_lea.vmem %s2284, %s2286
  %v2288 = vpack.c.bf16 %v2282, %v692
  %2289 = vst [vmem:[%s2287] sm:$0xff] %v2288
  %s2290 = scalar_lea.vmem %s0, 1144
  %v2291 = vld [vmem:[%s2290] sm:$0xf]
  %v2292 = vunpack.c.l.bf16 %v2291
  %v2293 = vunpack.c.h.bf16 %v2291
  %s2294 = scalar_lea.vmem %s1, 1144
  %s2296 = ssub.s32 0, 4
  %s2297 = scalar_lea.vmem %s2294, %s2296
  %v2298 = vpack.c.bf16 %v2292, %v697
  %2299 = vst [vmem:[%s2297] sm:$0xff] %v2298
  %s2300 = scalar_lea.vmem %s0, 424
  %v2301 = vld [vmem:[%s2300] sm:$0xf]
  %v2302 = vunpack.c.l.bf16 %v2301
  %v2303 = vunpack.c.h.bf16 %v2301
  %s2304 = scalar_lea.vmem %s1, 1864
  %s2306 = ssub.s32 0, 4
  %s2307 = scalar_lea.vmem %s2304, %s2306
  %v2308 = vpack.c.bf16 %v2302, %v702
  %2309 = vst [vmem:[%s2307] sm:$0xff] %v2308
  %s2310 = scalar_lea.vmem %s0, 1624
  %v2311 = vld [vmem:[%s2310] sm:$0xf]
  %v2312 = vunpack.c.l.bf16 %v2311
  %v2313 = vunpack.c.h.bf16 %v2311
  %s2314 = scalar_lea.vmem %s1, 664
  %s2316 = ssub.s32 0, 4
  %s2317 = scalar_lea.vmem %s2314, %s2316
  %v2318 = vpack.c.bf16 %v2312, %v707
  %2319 = vst [vmem:[%s2317] sm:$0xff] %v2318
  %s2320 = scalar_lea.vmem %s0, 904
  %v2321 = vld [vmem:[%s2320] sm:$0xf]
  %v2322 = vunpack.c.l.bf16 %v2321
  %v2323 = vunpack.c.h.bf16 %v2321
  %s2324 = scalar_lea.vmem %s1, 1384
  %s2326 = ssub.s32 0, 4
  %s2327 = scalar_lea.vmem %s2324, %s2326
  %v2328 = vpack.c.bf16 %v2322, %v712
  %2329 = vst [vmem:[%s2327] sm:$0xff] %v2328
  %s2330 = scalar_lea.vmem %s0, 184
  %v2331 = vld [vmem:[%s2330] sm:$0xf]
  %v2332 = vunpack.c.l.bf16 %v2331
  %v2333 = vunpack.c.h.bf16 %v2331
  %s2334 = scalar_lea.vmem %s1, 2104
  %s2336 = ssub.s32 0, 4
  %s2337 = scalar_lea.vmem %s2334, %s2336
  %v2338 = vpack.c.bf16 %v2332, %v717
  %2339 = vst [vmem:[%s2337] sm:$0xff] %v2338
  %s2340 = scalar_lea.vmem %s0, 2116
  %v2341 = vld [vmem:[%s2340] sm:$0xf]
  %v2342 = vunpack.c.l.bf16 %v2341
  %v2343 = vunpack.c.h.bf16 %v2341
  %s2344 = scalar_lea.vmem %s1, 196
  %s2346 = ssub.s32 0, 4
  %s2347 = scalar_lea.vmem %s2344, %s2346
  %v2348 = vpack.c.bf16 %v2342, %v722
  %2349 = vst [vmem:[%s2347] sm:$0xff] %v2348
  %s2350 = scalar_lea.vmem %s0, 1396
  %v2351 = vld [vmem:[%s2350] sm:$0xf]
  %v2352 = vunpack.c.l.bf16 %v2351
  %v2353 = vunpack.c.h.bf16 %v2351
  %s2354 = scalar_lea.vmem %s1, 916
  %s2356 = ssub.s32 0, 4
  %s2357 = scalar_lea.vmem %s2354, %s2356
  %v2358 = vpack.c.bf16 %v2352, %v727
  %2359 = vst [vmem:[%s2357] sm:$0xff] %v2358
  %s2360 = scalar_lea.vmem %s0, 676
  %v2361 = vld [vmem:[%s2360] sm:$0xf]
  %v2362 = vunpack.c.l.bf16 %v2361
  %v2363 = vunpack.c.h.bf16 %v2361
  %s2364 = scalar_lea.vmem %s1, 1636
  %s2366 = ssub.s32 0, 4
  %s2367 = scalar_lea.vmem %s2364, %s2366
  %v2368 = vpack.c.bf16 %v2362, %v732
  %2369 = vst [vmem:[%s2367] sm:$0xff] %v2368
  %s2370 = scalar_lea.vmem %s0, 1876
  %v2371 = vld [vmem:[%s2370] sm:$0xf]
  %v2372 = vunpack.c.l.bf16 %v2371
  %v2373 = vunpack.c.h.bf16 %v2371
  %s2374 = scalar_lea.vmem %s1, 436
  %s2376 = ssub.s32 0, 4
  %s2377 = scalar_lea.vmem %s2374, %s2376
  %v2378 = vpack.c.bf16 %v2372, %v737
  %2379 = vst [vmem:[%s2377] sm:$0xff] %v2378
  %s2380 = scalar_lea.vmem %s0, 1156
  %v2381 = vld [vmem:[%s2380] sm:$0xf]
  %v2382 = vunpack.c.l.bf16 %v2381
  %v2383 = vunpack.c.h.bf16 %v2381
  %s2384 = scalar_lea.vmem %s1, 1156
  %s2386 = ssub.s32 0, 4
  %s2387 = scalar_lea.vmem %s2384, %s2386
  %v2388 = vpack.c.bf16 %v2382, %v742
  %2389 = vst [vmem:[%s2387] sm:$0xff] %v2388
  %s2390 = scalar_lea.vmem %s0, 436
  %v2391 = vld [vmem:[%s2390] sm:$0xf]
  %v2392 = vunpack.c.l.bf16 %v2391
  %v2393 = vunpack.c.h.bf16 %v2391
  %s2394 = scalar_lea.vmem %s1, 1876
  %s2396 = ssub.s32 0, 4
  %s2397 = scalar_lea.vmem %s2394, %s2396
  %v2398 = vpack.c.bf16 %v2392, %v747
  %2399 = vst [vmem:[%s2397] sm:$0xff] %v2398
  %s2400 = scalar_lea.vmem %s0, 1636
  %v2401 = vld [vmem:[%s2400] sm:$0xf]
  %v2402 = vunpack.c.l.bf16 %v2401
  %v2403 = vunpack.c.h.bf16 %v2401
  %s2404 = scalar_lea.vmem %s1, 676
  %s2406 = ssub.s32 0, 4
  %s2407 = scalar_lea.vmem %s2404, %s2406
  %v2408 = vpack.c.bf16 %v2402, %v752
  %2409 = vst [vmem:[%s2407] sm:$0xff] %v2408
  %s2410 = scalar_lea.vmem %s0, 916
  %v2411 = vld [vmem:[%s2410] sm:$0xf]
  %v2412 = vunpack.c.l.bf16 %v2411
  %v2413 = vunpack.c.h.bf16 %v2411
  %s2414 = scalar_lea.vmem %s1, 1396
  %s2416 = ssub.s32 0, 4
  %s2417 = scalar_lea.vmem %s2414, %s2416
  %v2418 = vpack.c.bf16 %v2412, %v757
  %2419 = vst [vmem:[%s2417] sm:$0xff] %v2418
  %s2420 = scalar_lea.vmem %s0, 196
  %v2421 = vld [vmem:[%s2420] sm:$0xf]
  %v2422 = vunpack.c.l.bf16 %v2421
  %v2423 = vunpack.c.h.bf16 %v2421
  %s2424 = scalar_lea.vmem %s1, 2116
  %s2426 = ssub.s32 0, 4
  %s2427 = scalar_lea.vmem %s2424, %s2426
  %v2428 = vpack.c.bf16 %v2422, %v762
  %2429 = vst [vmem:[%s2427] sm:$0xff] %v2428
  %s2430 = scalar_lea.vmem %s0, 2128
  %v2431 = vld [vmem:[%s2430] sm:$0xf]
  %v2432 = vunpack.c.l.bf16 %v2431
  %v2433 = vunpack.c.h.bf16 %v2431
  %s2434 = scalar_lea.vmem %s1, 208
  %s2436 = ssub.s32 0, 4
  %s2437 = scalar_lea.vmem %s2434, %s2436
  %v2438 = vpack.c.bf16 %v2432, %v767
  %2439 = vst [vmem:[%s2437] sm:$0xff] %v2438
  %s2440 = scalar_lea.vmem %s0, 1408
  %v2441 = vld [vmem:[%s2440] sm:$0xf]
  %v2442 = vunpack.c.l.bf16 %v2441
  %v2443 = vunpack.c.h.bf16 %v2441
  %s2444 = scalar_lea.vmem %s1, 928
  %s2446 = ssub.s32 0, 4
  %s2447 = scalar_lea.vmem %s2444, %s2446
  %v2448 = vpack.c.bf16 %v2442, %v772
  %2449 = vst [vmem:[%s2447] sm:$0xff] %v2448
  %s2450 = scalar_lea.vmem %s0, 688
  %v2451 = vld [vmem:[%s2450] sm:$0xf]
  %v2452 = vunpack.c.l.bf16 %v2451
  %v2453 = vunpack.c.h.bf16 %v2451
  %s2454 = scalar_lea.vmem %s1, 1648
  %s2456 = ssub.s32 0, 4
  %s2457 = scalar_lea.vmem %s2454, %s2456
  %v2458 = vpack.c.bf16 %v2452, %v777
  %2459 = vst [vmem:[%s2457] sm:$0xff] %v2458
  %s2460 = scalar_lea.vmem %s0, 1888
  %v2461 = vld [vmem:[%s2460] sm:$0xf]
  %v2462 = vunpack.c.l.bf16 %v2461
  %v2463 = vunpack.c.h.bf16 %v2461
  %s2464 = scalar_lea.vmem %s1, 448
  %s2466 = ssub.s32 0, 4
  %s2467 = scalar_lea.vmem %s2464, %s2466
  %v2468 = vpack.c.bf16 %v2462, %v782
  %2469 = vst [vmem:[%s2467] sm:$0xff] %v2468
  %s2470 = scalar_lea.vmem %s0, 1168
  %v2471 = vld [vmem:[%s2470] sm:$0xf]
  %v2472 = vunpack.c.l.bf16 %v2471
  %v2473 = vunpack.c.h.bf16 %v2471
  %s2474 = scalar_lea.vmem %s1, 1168
  %s2476 = ssub.s32 0, 4
  %s2477 = scalar_lea.vmem %s2474, %s2476
  %v2478 = vpack.c.bf16 %v2472, %v787
  %2479 = vst [vmem:[%s2477] sm:$0xff] %v2478
  %s2480 = scalar_lea.vmem %s0, 448
  %v2481 = vld [vmem:[%s2480] sm:$0xf]
  %v2482 = vunpack.c.l.bf16 %v2481
  %v2483 = vunpack.c.h.bf16 %v2481
  %s2484 = scalar_lea.vmem %s1, 1888
  %s2486 = ssub.s32 0, 4
  %s2487 = scalar_lea.vmem %s2484, %s2486
  %v2488 = vpack.c.bf16 %v2482, %v792
  %2489 = vst [vmem:[%s2487] sm:$0xff] %v2488
  %s2490 = scalar_lea.vmem %s0, 1648
  %v2491 = vld [vmem:[%s2490] sm:$0xf]
  %v2492 = vunpack.c.l.bf16 %v2491
  %v2493 = vunpack.c.h.bf16 %v2491
  %s2494 = scalar_lea.vmem %s1, 688
  %s2496 = ssub.s32 0, 4
  %s2497 = scalar_lea.vmem %s2494, %s2496
  %v2498 = vpack.c.bf16 %v2492, %v797
  %2499 = vst [vmem:[%s2497] sm:$0xff] %v2498
  %s2500 = scalar_lea.vmem %s0, 928
  %v2501 = vld [vmem:[%s2500] sm:$0xf]
  %v2502 = vunpack.c.l.bf16 %v2501
  %v2503 = vunpack.c.h.bf16 %v2501
  %s2504 = scalar_lea.vmem %s1, 1408
  %s2506 = ssub.s32 0, 4
  %s2507 = scalar_lea.vmem %s2504, %s2506
  %v2508 = vpack.c.bf16 %v2502, %v802
  %2509 = vst [vmem:[%s2507] sm:$0xff] %v2508
  %s2510 = scalar_lea.vmem %s0, 208
  %v2511 = vld [vmem:[%s2510] sm:$0xf]
  %v2512 = vunpack.c.l.bf16 %v2511
  %v2513 = vunpack.c.h.bf16 %v2511
  %s2514 = scalar_lea.vmem %s1, 2128
  %s2516 = ssub.s32 0, 4
  %s2517 = scalar_lea.vmem %s2514, %s2516
  %v2518 = vpack.c.bf16 %v2512, %v807
  %2519 = vst [vmem:[%s2517] sm:$0xff] %v2518
  %s2520 = scalar_lea.vmem %s0, 2140
  %v2521 = vld [vmem:[%s2520] sm:$0xf]
  %v2522 = vunpack.c.l.bf16 %v2521
  %v2523 = vunpack.c.h.bf16 %v2521
  %s2524 = scalar_lea.vmem %s1, 220
  %s2526 = ssub.s32 0, 4
  %s2527 = scalar_lea.vmem %s2524, %s2526
  %v2528 = vpack.c.bf16 %v2522, %v812
  %2529 = vst [vmem:[%s2527] sm:$0xff] %v2528
  %s2530 = scalar_lea.vmem %s0, 1420
  %v2531 = vld [vmem:[%s2530] sm:$0xf]
  %v2532 = vunpack.c.l.bf16 %v2531
  %v2533 = vunpack.c.h.bf16 %v2531
  %s2534 = scalar_lea.vmem %s1, 940
  %s2536 = ssub.s32 0, 4
  %s2537 = scalar_lea.vmem %s2534, %s2536
  %v2538 = vpack.c.bf16 %v2532, %v817
  %2539 = vst [vmem:[%s2537] sm:$0xff] %v2538
  %s2540 = scalar_lea.vmem %s0, 700
  %v2541 = vld [vmem:[%s2540] sm:$0xf]
  %v2542 = vunpack.c.l.bf16 %v2541
  %v2543 = vunpack.c.h.bf16 %v2541
  %s2544 = scalar_lea.vmem %s1, 1660
  %s2546 = ssub.s32 0, 4
  %s2547 = scalar_lea.vmem %s2544, %s2546
  %v2548 = vpack.c.bf16 %v2542, %v822
  %2549 = vst [vmem:[%s2547] sm:$0xff] %v2548
  %s2550 = scalar_lea.vmem %s0, 1900
  %v2551 = vld [vmem:[%s2550] sm:$0xf]
  %v2552 = vunpack.c.l.bf16 %v2551
  %v2553 = vunpack.c.h.bf16 %v2551
  %s2554 = scalar_lea.vmem %s1, 460
  %s2556 = ssub.s32 0, 4
  %s2557 = scalar_lea.vmem %s2554, %s2556
  %v2558 = vpack.c.bf16 %v2552, %v827
  %2559 = vst [vmem:[%s2557] sm:$0xff] %v2558
  %s2560 = scalar_lea.vmem %s0, 1180
  %v2561 = vld [vmem:[%s2560] sm:$0xf]
  %v2562 = vunpack.c.l.bf16 %v2561
  %v2563 = vunpack.c.h.bf16 %v2561
  %s2564 = scalar_lea.vmem %s1, 1180
  %s2566 = ssub.s32 0, 4
  %s2567 = scalar_lea.vmem %s2564, %s2566
  %v2568 = vpack.c.bf16 %v2562, %v832
  %2569 = vst [vmem:[%s2567] sm:$0xff] %v2568
  %s2570 = scalar_lea.vmem %s0, 460
  %v2571 = vld [vmem:[%s2570] sm:$0xf]
  %v2572 = vunpack.c.l.bf16 %v2571
  %v2573 = vunpack.c.h.bf16 %v2571
  %s2574 = scalar_lea.vmem %s1, 1900
  %s2576 = ssub.s32 0, 4
  %s2577 = scalar_lea.vmem %s2574, %s2576
  %v2578 = vpack.c.bf16 %v2572, %v837
  %2579 = vst [vmem:[%s2577] sm:$0xff] %v2578
  %s2580 = scalar_lea.vmem %s0, 1660
  %v2581 = vld [vmem:[%s2580] sm:$0xf]
  %v2582 = vunpack.c.l.bf16 %v2581
  %v2583 = vunpack.c.h.bf16 %v2581
  %s2584 = scalar_lea.vmem %s1, 700
  %s2586 = ssub.s32 0, 4
  %s2587 = scalar_lea.vmem %s2584, %s2586
  %v2588 = vpack.c.bf16 %v2582, %v842
  %2589 = vst [vmem:[%s2587] sm:$0xff] %v2588
  %s2590 = scalar_lea.vmem %s0, 940
  %v2591 = vld [vmem:[%s2590] sm:$0xf]
  %v2592 = vunpack.c.l.bf16 %v2591
  %v2593 = vunpack.c.h.bf16 %v2591
  %s2594 = scalar_lea.vmem %s1, 1420
  %s2596 = ssub.s32 0, 4
  %s2597 = scalar_lea.vmem %s2594, %s2596
  %v2598 = vpack.c.bf16 %v2592, %v847
  %2599 = vst [vmem:[%s2597] sm:$0xff] %v2598
  %s2600 = scalar_lea.vmem %s0, 220
  %v2601 = vld [vmem:[%s2600] sm:$0xf]
  %v2602 = vunpack.c.l.bf16 %v2601
  %v2603 = vunpack.c.h.bf16 %v2601
  %s2604 = scalar_lea.vmem %s1, 2140
  %s2606 = ssub.s32 0, 4
  %s2607 = scalar_lea.vmem %s2604, %s2606
  %v2608 = vpack.c.bf16 %v2602, %v852
  %2609 = vst [vmem:[%s2607] sm:$0xff] %v2608
  %s2610 = scalar_lea.vmem %s0, 2152
  %v2611 = vld [vmem:[%s2610] sm:$0xf]
  %v2612 = vunpack.c.l.bf16 %v2611
  %v2613 = vunpack.c.h.bf16 %v2611
  %s2614 = scalar_lea.vmem %s1, 232
  %s2616 = ssub.s32 0, 4
  %s2617 = scalar_lea.vmem %s2614, %s2616
  %v2618 = vpack.c.bf16 %v2612, %v857
  %2619 = vst [vmem:[%s2617] sm:$0xff] %v2618
  %s2620 = scalar_lea.vmem %s0, 1432
  %v2621 = vld [vmem:[%s2620] sm:$0xf]
  %v2622 = vunpack.c.l.bf16 %v2621
  %v2623 = vunpack.c.h.bf16 %v2621
  %s2624 = scalar_lea.vmem %s1, 952
  %s2626 = ssub.s32 0, 4
  %s2627 = scalar_lea.vmem %s2624, %s2626
  %v2628 = vpack.c.bf16 %v2622, %v862
  %2629 = vst [vmem:[%s2627] sm:$0xff] %v2628
  %s2630 = scalar_lea.vmem %s0, 712
  %v2631 = vld [vmem:[%s2630] sm:$0xf]
  %v2632 = vunpack.c.l.bf16 %v2631
  %v2633 = vunpack.c.h.bf16 %v2631
  %s2634 = scalar_lea.vmem %s1, 1672
  %s2636 = ssub.s32 0, 4
  %s2637 = scalar_lea.vmem %s2634, %s2636
  %v2638 = vpack.c.bf16 %v2632, %v867
  %2639 = vst [vmem:[%s2637] sm:$0xff] %v2638
  %s2640 = scalar_lea.vmem %s0, 1912
  %v2641 = vld [vmem:[%s2640] sm:$0xf]
  %v2642 = vunpack.c.l.bf16 %v2641
  %v2643 = vunpack.c.h.bf16 %v2641
  %s2644 = scalar_lea.vmem %s1, 472
  %s2646 = ssub.s32 0, 4
  %s2647 = scalar_lea.vmem %s2644, %s2646
  %v2648 = vpack.c.bf16 %v2642, %v872
  %2649 = vst [vmem:[%s2647] sm:$0xff] %v2648
  %s2650 = scalar_lea.vmem %s0, 1192
  %v2651 = vld [vmem:[%s2650] sm:$0xf]
  %v2652 = vunpack.c.l.bf16 %v2651
  %v2653 = vunpack.c.h.bf16 %v2651
  %s2654 = scalar_lea.vmem %s1, 1192
  %s2656 = ssub.s32 0, 4
  %s2657 = scalar_lea.vmem %s2654, %s2656
  %v2658 = vpack.c.bf16 %v2652, %v877
  %2659 = vst [vmem:[%s2657] sm:$0xff] %v2658
  %s2660 = scalar_lea.vmem %s0, 472
  %v2661 = vld [vmem:[%s2660] sm:$0xf]
  %v2662 = vunpack.c.l.bf16 %v2661
  %v2663 = vunpack.c.h.bf16 %v2661
  %s2664 = scalar_lea.vmem %s1, 1912
  %s2666 = ssub.s32 0, 4
  %s2667 = scalar_lea.vmem %s2664, %s2666
  %v2668 = vpack.c.bf16 %v2662, %v882
  %2669 = vst [vmem:[%s2667] sm:$0xff] %v2668
  %s2670 = scalar_lea.vmem %s0, 1672
  %v2671 = vld [vmem:[%s2670] sm:$0xf]
  %v2672 = vunpack.c.l.bf16 %v2671
  %v2673 = vunpack.c.h.bf16 %v2671
  %s2674 = scalar_lea.vmem %s1, 712
  %s2676 = ssub.s32 0, 4
  %s2677 = scalar_lea.vmem %s2674, %s2676
  %v2678 = vpack.c.bf16 %v2672, %v887
  %2679 = vst [vmem:[%s2677] sm:$0xff] %v2678
  %s2680 = scalar_lea.vmem %s0, 952
  %v2681 = vld [vmem:[%s2680] sm:$0xf]
  %v2682 = vunpack.c.l.bf16 %v2681
  %v2683 = vunpack.c.h.bf16 %v2681
  %s2684 = scalar_lea.vmem %s1, 1432
  %s2686 = ssub.s32 0, 4
  %s2687 = scalar_lea.vmem %s2684, %s2686
  %v2688 = vpack.c.bf16 %v2682, %v892
  %2689 = vst [vmem:[%s2687] sm:$0xff] %v2688
  %s2690 = scalar_lea.vmem %s0, 232
  %v2691 = vld [vmem:[%s2690] sm:$0xf]
  %v2692 = vunpack.c.l.bf16 %v2691
  %v2693 = vunpack.c.h.bf16 %v2691
  %s2694 = scalar_lea.vmem %s1, 2152
  %s2696 = ssub.s32 0, 4
  %s2697 = scalar_lea.vmem %s2694, %s2696
  %v2698 = vpack.c.bf16 %v2692, %v897
  %2699 = vst [vmem:[%s2697] sm:$0xff] %v2698
  %s2700 = scalar_lea.vmem %s0, 1928
  %v2701 = vld [vmem:[%s2700] sm:$0xf]
  %v2702 = vunpack.c.l.bf16 %v2701
  %v2703 = vunpack.c.h.bf16 %v2701
  %s2704 = scalar_lea.vmem %s1, 8
  %v2705 = vpack.c.bf16 0.0, %v2702
  %2706 = vst [vmem:[%s2704] sm:$0xf] %v2705
  %s2707 = scalar_lea.vmem %s0, 1208
  %v2708 = vld [vmem:[%s2707] sm:$0xf]
  %v2709 = vunpack.c.l.bf16 %v2708
  %v2710 = vunpack.c.h.bf16 %v2708
  %s2711 = scalar_lea.vmem %s1, 728
  %v2712 = vpack.c.bf16 0.0, %v2709
  %2713 = vst [vmem:[%s2711] sm:$0xf] %v2712
  %s2714 = scalar_lea.vmem %s0, 488
  %v2715 = vld [vmem:[%s2714] sm:$0xf]
  %v2716 = vunpack.c.l.bf16 %v2715
  %v2717 = vunpack.c.h.bf16 %v2715
  %s2718 = scalar_lea.vmem %s1, 1448
  %v2719 = vpack.c.bf16 0.0, %v2716
  %2720 = vst [vmem:[%s2718] sm:$0xf] %v2719
  %s2721 = scalar_lea.vmem %s0, 1688
  %v2722 = vld [vmem:[%s2721] sm:$0xf]
  %v2723 = vunpack.c.l.bf16 %v2722
  %v2724 = vunpack.c.h.bf16 %v2722
  %s2725 = scalar_lea.vmem %s1, 248
  %v2726 = vpack.c.bf16 0.0, %v2723
  %2727 = vst [vmem:[%s2725] sm:$0xf] %v2726
  %s2728 = scalar_lea.vmem %s0, 968
  %v2729 = vld [vmem:[%s2728] sm:$0xf]
  %v2730 = vunpack.c.l.bf16 %v2729
  %v2731 = vunpack.c.h.bf16 %v2729
  %s2732 = scalar_lea.vmem %s1, 968
  %v2733 = vpack.c.bf16 0.0, %v2730
  %2734 = vst [vmem:[%s2732] sm:$0xf] %v2733
  %s2735 = scalar_lea.vmem %s0, 248
  %v2736 = vld [vmem:[%s2735] sm:$0xf]
  %v2737 = vunpack.c.l.bf16 %v2736
  %v2738 = vunpack.c.h.bf16 %v2736
  %s2739 = scalar_lea.vmem %s1, 1688
  %v2740 = vpack.c.bf16 0.0, %v2737
  %2741 = vst [vmem:[%s2739] sm:$0xf] %v2740
  %s2742 = scalar_lea.vmem %s0, 1448
  %v2743 = vld [vmem:[%s2742] sm:$0xf]
  %v2744 = vunpack.c.l.bf16 %v2743
  %v2745 = vunpack.c.h.bf16 %v2743
  %s2746 = scalar_lea.vmem %s1, 488
  %v2747 = vpack.c.bf16 0.0, %v2744
  %2748 = vst [vmem:[%s2746] sm:$0xf] %v2747
  %s2749 = scalar_lea.vmem %s0, 728
  %v2750 = vld [vmem:[%s2749] sm:$0xf]
  %v2751 = vunpack.c.l.bf16 %v2750
  %v2752 = vunpack.c.h.bf16 %v2750
  %s2753 = scalar_lea.vmem %s1, 1208
  %v2754 = vpack.c.bf16 0.0, %v2751
  %2755 = vst [vmem:[%s2753] sm:$0xf] %v2754
  %s2756 = scalar_lea.vmem %s0, 8
  %v2757 = vld [vmem:[%s2756] sm:$0xf]
  %v2758 = vunpack.c.l.bf16 %v2757
  %v2759 = vunpack.c.h.bf16 %v2757
  %s2760 = scalar_lea.vmem %s1, 1928
  %v2761 = vpack.c.bf16 0.0, %v2758
  %2762 = vst [vmem:[%s2760] sm:$0xf] %v2761
  %s2763 = scalar_lea.vmem %s0, 1940
  %v2764 = vld [vmem:[%s2763] sm:$0xf]
  %v2765 = vunpack.c.l.bf16 %v2764
  %v2766 = vunpack.c.h.bf16 %v2764
  %s2767 = scalar_lea.vmem %s1, 20
  %v2768 = vpack.c.bf16 0.0, %v2765
  %2769 = vst [vmem:[%s2767] sm:$0xf] %v2768
  %s2770 = scalar_lea.vmem %s0, 1220
  %v2771 = vld [vmem:[%s2770] sm:$0xf]
  %v2772 = vunpack.c.l.bf16 %v2771
  %v2773 = vunpack.c.h.bf16 %v2771
  %s2774 = scalar_lea.vmem %s1, 740
  %v2775 = vpack.c.bf16 0.0, %v2772
  %2776 = vst [vmem:[%s2774] sm:$0xf] %v2775
  %s2777 = scalar_lea.vmem %s0, 500
  %v2778 = vld [vmem:[%s2777] sm:$0xf]
  %v2779 = vunpack.c.l.bf16 %v2778
  %v2780 = vunpack.c.h.bf16 %v2778
  %s2781 = scalar_lea.vmem %s1, 1460
  %v2782 = vpack.c.bf16 0.0, %v2779
  %2783 = vst [vmem:[%s2781] sm:$0xf] %v2782
  %s2784 = scalar_lea.vmem %s0, 1700
  %v2785 = vld [vmem:[%s2784] sm:$0xf]
  %v2786 = vunpack.c.l.bf16 %v2785
  %v2787 = vunpack.c.h.bf16 %v2785
  %s2788 = scalar_lea.vmem %s1, 260
  %v2789 = vpack.c.bf16 0.0, %v2786
  %2790 = vst [vmem:[%s2788] sm:$0xf] %v2789
  %s2791 = scalar_lea.vmem %s0, 980
  %v2792 = vld [vmem:[%s2791] sm:$0xf]
  %v2793 = vunpack.c.l.bf16 %v2792
  %v2794 = vunpack.c.h.bf16 %v2792
  %s2795 = scalar_lea.vmem %s1, 980
  %v2796 = vpack.c.bf16 0.0, %v2793
  %2797 = vst [vmem:[%s2795] sm:$0xf] %v2796
  %s2798 = scalar_lea.vmem %s0, 260
  %v2799 = vld [vmem:[%s2798] sm:$0xf]
  %v2800 = vunpack.c.l.bf16 %v2799
  %v2801 = vunpack.c.h.bf16 %v2799
  %s2802 = scalar_lea.vmem %s1, 1700
  %v2803 = vpack.c.bf16 0.0, %v2800
  %2804 = vst [vmem:[%s2802] sm:$0xf] %v2803
  %s2805 = scalar_lea.vmem %s0, 1460
  %v2806 = vld [vmem:[%s2805] sm:$0xf]
  %v2807 = vunpack.c.l.bf16 %v2806
  %v2808 = vunpack.c.h.bf16 %v2806
  %s2809 = scalar_lea.vmem %s1, 500
  %v2810 = vpack.c.bf16 0.0, %v2807
  %2811 = vst [vmem:[%s2809] sm:$0xf] %v2810
  %s2812 = scalar_lea.vmem %s0, 740
  %v2813 = vld [vmem:[%s2812] sm:$0xf]
  %v2814 = vunpack.c.l.bf16 %v2813
  %v2815 = vunpack.c.h.bf16 %v2813
  %s2816 = scalar_lea.vmem %s1, 1220
  %v2817 = vpack.c.bf16 0.0, %v2814
  %2818 = vst [vmem:[%s2816] sm:$0xf] %v2817
  %s2819 = scalar_lea.vmem %s0, 20
  %v2820 = vld [vmem:[%s2819] sm:$0xf]
  %v2821 = vunpack.c.l.bf16 %v2820
  %v2822 = vunpack.c.h.bf16 %v2820
  %s2823 = scalar_lea.vmem %s1, 1940
  %v2824 = vpack.c.bf16 0.0, %v2821
  %2825 = vst [vmem:[%s2823] sm:$0xf] %v2824
  %s2826 = scalar_lea.vmem %s0, 1952
  %v2827 = vld [vmem:[%s2826] sm:$0xf]
  %v2828 = vunpack.c.l.bf16 %v2827
  %v2829 = vunpack.c.h.bf16 %v2827
  %s2830 = scalar_lea.vmem %s1, 32
  %v2831 = vpack.c.bf16 0.0, %v2828
  %2832 = vst [vmem:[%s2830] sm:$0xf] %v2831
  %s2833 = scalar_lea.vmem %s0, 1232
  %v2834 = vld [vmem:[%s2833] sm:$0xf]
  %v2835 = vunpack.c.l.bf16 %v2834
  %v2836 = vunpack.c.h.bf16 %v2834
  %s2837 = scalar_lea.vmem %s1, 752
  %v2838 = vpack.c.bf16 0.0, %v2835
  %2839 = vst [vmem:[%s2837] sm:$0xf] %v2838
  %s2840 = scalar_lea.vmem %s0, 512
  %v2841 = vld [vmem:[%s2840] sm:$0xf]
  %v2842 = vunpack.c.l.bf16 %v2841
  %v2843 = vunpack.c.h.bf16 %v2841
  %s2844 = scalar_lea.vmem %s1, 1472
  %v2845 = vpack.c.bf16 0.0, %v2842
  %2846 = vst [vmem:[%s2844] sm:$0xf] %v2845
  %s2847 = scalar_lea.vmem %s0, 1712
  %v2848 = vld [vmem:[%s2847] sm:$0xf]
  %v2849 = vunpack.c.l.bf16 %v2848
  %v2850 = vunpack.c.h.bf16 %v2848
  %s2851 = scalar_lea.vmem %s1, 272
  %v2852 = vpack.c.bf16 0.0, %v2849
  %2853 = vst [vmem:[%s2851] sm:$0xf] %v2852
  %s2854 = scalar_lea.vmem %s0, 992
  %v2855 = vld [vmem:[%s2854] sm:$0xf]
  %v2856 = vunpack.c.l.bf16 %v2855
  %v2857 = vunpack.c.h.bf16 %v2855
  %s2858 = scalar_lea.vmem %s1, 992
  %v2859 = vpack.c.bf16 0.0, %v2856
  %2860 = vst [vmem:[%s2858] sm:$0xf] %v2859
  %s2861 = scalar_lea.vmem %s0, 272
  %v2862 = vld [vmem:[%s2861] sm:$0xf]
  %v2863 = vunpack.c.l.bf16 %v2862
  %v2864 = vunpack.c.h.bf16 %v2862
  %s2865 = scalar_lea.vmem %s1, 1712
  %v2866 = vpack.c.bf16 0.0, %v2863
  %2867 = vst [vmem:[%s2865] sm:$0xf] %v2866
  %s2868 = scalar_lea.vmem %s0, 1472
  %v2869 = vld [vmem:[%s2868] sm:$0xf]
  %v2870 = vunpack.c.l.bf16 %v2869
  %v2871 = vunpack.c.h.bf16 %v2869
  %s2872 = scalar_lea.vmem %s1, 512
  %v2873 = vpack.c.bf16 0.0, %v2870
  %2874 = vst [vmem:[%s2872] sm:$0xf] %v2873
  %s2875 = scalar_lea.vmem %s0, 752
  %v2876 = vld [vmem:[%s2875] sm:$0xf]
  %v2877 = vunpack.c.l.bf16 %v2876
  %v2878 = vunpack.c.h.bf16 %v2876
  %s2879 = scalar_lea.vmem %s1, 1232
  %v2880 = vpack.c.bf16 0.0, %v2877
  %2881 = vst [vmem:[%s2879] sm:$0xf] %v2880
  %s2882 = scalar_lea.vmem %s0, 32
  %v2883 = vld [vmem:[%s2882] sm:$0xf]
  %v2884 = vunpack.c.l.bf16 %v2883
  %v2885 = vunpack.c.h.bf16 %v2883
  %s2886 = scalar_lea.vmem %s1, 1952
  %v2887 = vpack.c.bf16 0.0, %v2884
  %2888 = vst [vmem:[%s2886] sm:$0xf] %v2887
  %s2889 = scalar_lea.vmem %s0, 1964
  %v2890 = vld [vmem:[%s2889] sm:$0xf]
  %v2891 = vunpack.c.l.bf16 %v2890
  %v2892 = vunpack.c.h.bf16 %v2890
  %s2893 = scalar_lea.vmem %s1, 44
  %v2894 = vpack.c.bf16 0.0, %v2891
  %2895 = vst [vmem:[%s2893] sm:$0xf] %v2894
  %s2896 = scalar_lea.vmem %s0, 1244
  %v2897 = vld [vmem:[%s2896] sm:$0xf]
  %v2898 = vunpack.c.l.bf16 %v2897
  %v2899 = vunpack.c.h.bf16 %v2897
  %s2900 = scalar_lea.vmem %s1, 764
  %v2901 = vpack.c.bf16 0.0, %v2898
  %2902 = vst [vmem:[%s2900] sm:$0xf] %v2901
  %s2903 = scalar_lea.vmem %s0, 524
  %v2904 = vld [vmem:[%s2903] sm:$0xf]
  %v2905 = vunpack.c.l.bf16 %v2904
  %v2906 = vunpack.c.h.bf16 %v2904
  %s2907 = scalar_lea.vmem %s1, 1484
  %v2908 = vpack.c.bf16 0.0, %v2905
  %2909 = vst [vmem:[%s2907] sm:$0xf] %v2908
  %s2910 = scalar_lea.vmem %s0, 1724
  %v2911 = vld [vmem:[%s2910] sm:$0xf]
  %v2912 = vunpack.c.l.bf16 %v2911
  %v2913 = vunpack.c.h.bf16 %v2911
  %s2914 = scalar_lea.vmem %s1, 284
  %v2915 = vpack.c.bf16 0.0, %v2912
  %2916 = vst [vmem:[%s2914] sm:$0xf] %v2915
  %s2917 = scalar_lea.vmem %s0, 1004
  %v2918 = vld [vmem:[%s2917] sm:$0xf]
  %v2919 = vunpack.c.l.bf16 %v2918
  %v2920 = vunpack.c.h.bf16 %v2918
  %s2921 = scalar_lea.vmem %s1, 1004
  %v2922 = vpack.c.bf16 0.0, %v2919
  %2923 = vst [vmem:[%s2921] sm:$0xf] %v2922
  %s2924 = scalar_lea.vmem %s0, 284
  %v2925 = vld [vmem:[%s2924] sm:$0xf]
  %v2926 = vunpack.c.l.bf16 %v2925
  %v2927 = vunpack.c.h.bf16 %v2925
  %s2928 = scalar_lea.vmem %s1, 1724
  %v2929 = vpack.c.bf16 0.0, %v2926
  %2930 = vst [vmem:[%s2928] sm:$0xf] %v2929
  %s2931 = scalar_lea.vmem %s0, 1484
  %v2932 = vld [vmem:[%s2931] sm:$0xf]
  %v2933 = vunpack.c.l.bf16 %v2932
  %v2934 = vunpack.c.h.bf16 %v2932
  %s2935 = scalar_lea.vmem %s1, 524
  %v2936 = vpack.c.bf16 0.0, %v2933
  %2937 = vst [vmem:[%s2935] sm:$0xf] %v2936
  %s2938 = scalar_lea.vmem %s0, 764
  %v2939 = vld [vmem:[%s2938] sm:$0xf]
  %v2940 = vunpack.c.l.bf16 %v2939
  %v2941 = vunpack.c.h.bf16 %v2939
  %s2942 = scalar_lea.vmem %s1, 1244
  %v2943 = vpack.c.bf16 0.0, %v2940
  %2944 = vst [vmem:[%s2942] sm:$0xf] %v2943
  %s2945 = scalar_lea.vmem %s0, 44
  %v2946 = vld [vmem:[%s2945] sm:$0xf]
  %v2947 = vunpack.c.l.bf16 %v2946
  %v2948 = vunpack.c.h.bf16 %v2946
  %s2949 = scalar_lea.vmem %s1, 1964
  %v2950 = vpack.c.bf16 0.0, %v2947
  %2951 = vst [vmem:[%s2949] sm:$0xf] %v2950
  %s2952 = scalar_lea.vmem %s0, 1976
  %v2953 = vld [vmem:[%s2952] sm:$0xf]
  %v2954 = vunpack.c.l.bf16 %v2953
  %v2955 = vunpack.c.h.bf16 %v2953
  %s2956 = scalar_lea.vmem %s1, 56
  %v2957 = vpack.c.bf16 0.0, %v2954
  %2958 = vst [vmem:[%s2956] sm:$0xf] %v2957
  %s2959 = scalar_lea.vmem %s0, 1256
  %v2960 = vld [vmem:[%s2959] sm:$0xf]
  %v2961 = vunpack.c.l.bf16 %v2960
  %v2962 = vunpack.c.h.bf16 %v2960
  %s2963 = scalar_lea.vmem %s1, 776
  %v2964 = vpack.c.bf16 0.0, %v2961
  %2965 = vst [vmem:[%s2963] sm:$0xf] %v2964
  %s2966 = scalar_lea.vmem %s0, 536
  %v2967 = vld [vmem:[%s2966] sm:$0xf]
  %v2968 = vunpack.c.l.bf16 %v2967
  %v2969 = vunpack.c.h.bf16 %v2967
  %s2970 = scalar_lea.vmem %s1, 1496
  %v2971 = vpack.c.bf16 0.0, %v2968
  %2972 = vst [vmem:[%s2970] sm:$0xf] %v2971
  %s2973 = scalar_lea.vmem %s0, 1736
  %v2974 = vld [vmem:[%s2973] sm:$0xf]
  %v2975 = vunpack.c.l.bf16 %v2974
  %v2976 = vunpack.c.h.bf16 %v2974
  %s2977 = scalar_lea.vmem %s1, 296
  %v2978 = vpack.c.bf16 0.0, %v2975
  %2979 = vst [vmem:[%s2977] sm:$0xf] %v2978
  %s2980 = scalar_lea.vmem %s0, 1016
  %v2981 = vld [vmem:[%s2980] sm:$0xf]
  %v2982 = vunpack.c.l.bf16 %v2981
  %v2983 = vunpack.c.h.bf16 %v2981
  %s2984 = scalar_lea.vmem %s1, 1016
  %v2985 = vpack.c.bf16 0.0, %v2982
  %2986 = vst [vmem:[%s2984] sm:$0xf] %v2985
  %s2987 = scalar_lea.vmem %s0, 296
  %v2988 = vld [vmem:[%s2987] sm:$0xf]
  %v2989 = vunpack.c.l.bf16 %v2988
  %v2990 = vunpack.c.h.bf16 %v2988
  %s2991 = scalar_lea.vmem %s1, 1736
  %v2992 = vpack.c.bf16 0.0, %v2989
  %2993 = vst [vmem:[%s2991] sm:$0xf] %v2992
  %s2994 = scalar_lea.vmem %s0, 1496
  %v2995 = vld [vmem:[%s2994] sm:$0xf]
  %v2996 = vunpack.c.l.bf16 %v2995
  %v2997 = vunpack.c.h.bf16 %v2995
  %s2998 = scalar_lea.vmem %s1, 536
  %v2999 = vpack.c.bf16 0.0, %v2996
  %3000 = vst [vmem:[%s2998] sm:$0xf] %v2999
  %s3001 = scalar_lea.vmem %s0, 776
  %v3002 = vld [vmem:[%s3001] sm:$0xf]
  %v3003 = vunpack.c.l.bf16 %v3002
  %v3004 = vunpack.c.h.bf16 %v3002
  %s3005 = scalar_lea.vmem %s1, 1256
  %v3006 = vpack.c.bf16 0.0, %v3003
  %3007 = vst [vmem:[%s3005] sm:$0xf] %v3006
  %s3008 = scalar_lea.vmem %s0, 56
  %v3009 = vld [vmem:[%s3008] sm:$0xf]
  %v3010 = vunpack.c.l.bf16 %v3009
  %v3011 = vunpack.c.h.bf16 %v3009
  %s3012 = scalar_lea.vmem %s1, 1976
  %v3013 = vpack.c.bf16 0.0, %v3010
  %3014 = vst [vmem:[%s3012] sm:$0xf] %v3013
  %s3015 = scalar_lea.vmem %s0, 1988
  %v3016 = vld [vmem:[%s3015] sm:$0xf]
  %v3017 = vunpack.c.l.bf16 %v3016
  %v3018 = vunpack.c.h.bf16 %v3016
  %s3019 = scalar_lea.vmem %s1, 68
  %v3020 = vpack.c.bf16 0.0, %v3017
  %3021 = vst [vmem:[%s3019] sm:$0xf] %v3020
  %s3022 = scalar_lea.vmem %s0, 1268
  %v3023 = vld [vmem:[%s3022] sm:$0xf]
  %v3024 = vunpack.c.l.bf16 %v3023
  %v3025 = vunpack.c.h.bf16 %v3023
  %s3026 = scalar_lea.vmem %s1, 788
  %v3027 = vpack.c.bf16 0.0, %v3024
  %3028 = vst [vmem:[%s3026] sm:$0xf] %v3027
  %s3029 = scalar_lea.vmem %s0, 548
  %v3030 = vld [vmem:[%s3029] sm:$0xf]
  %v3031 = vunpack.c.l.bf16 %v3030
  %v3032 = vunpack.c.h.bf16 %v3030
  %s3033 = scalar_lea.vmem %s1, 1508
  %v3034 = vpack.c.bf16 0.0, %v3031
  %3035 = vst [vmem:[%s3033] sm:$0xf] %v3034
  %s3036 = scalar_lea.vmem %s0, 1748
  %v3037 = vld [vmem:[%s3036] sm:$0xf]
  %v3038 = vunpack.c.l.bf16 %v3037
  %v3039 = vunpack.c.h.bf16 %v3037
  %s3040 = scalar_lea.vmem %s1, 308
  %v3041 = vpack.c.bf16 0.0, %v3038
  %3042 = vst [vmem:[%s3040] sm:$0xf] %v3041
  %s3043 = scalar_lea.vmem %s0, 1028
  %v3044 = vld [vmem:[%s3043] sm:$0xf]
  %v3045 = vunpack.c.l.bf16 %v3044
  %v3046 = vunpack.c.h.bf16 %v3044
  %s3047 = scalar_lea.vmem %s1, 1028
  %v3048 = vpack.c.bf16 0.0, %v3045
  %3049 = vst [vmem:[%s3047] sm:$0xf] %v3048
  %s3050 = scalar_lea.vmem %s0, 308
  %v3051 = vld [vmem:[%s3050] sm:$0xf]
  %v3052 = vunpack.c.l.bf16 %v3051
  %v3053 = vunpack.c.h.bf16 %v3051
  %s3054 = scalar_lea.vmem %s1, 1748
  %v3055 = vpack.c.bf16 0.0, %v3052
  %3056 = vst [vmem:[%s3054] sm:$0xf] %v3055
  %s3057 = scalar_lea.vmem %s0, 1508
  %v3058 = vld [vmem:[%s3057] sm:$0xf]
  %v3059 = vunpack.c.l.bf16 %v3058
  %v3060 = vunpack.c.h.bf16 %v3058
  %s3061 = scalar_lea.vmem %s1, 548
  %v3062 = vpack.c.bf16 0.0, %v3059
  %3063 = vst [vmem:[%s3061] sm:$0xf] %v3062
  %s3064 = scalar_lea.vmem %s0, 788
  %v3065 = vld [vmem:[%s3064] sm:$0xf]
  %v3066 = vunpack.c.l.bf16 %v3065
  %v3067 = vunpack.c.h.bf16 %v3065
  %s3068 = scalar_lea.vmem %s1, 1268
  %v3069 = vpack.c.bf16 0.0, %v3066
  %3070 = vst [vmem:[%s3068] sm:$0xf] %v3069
  %s3071 = scalar_lea.vmem %s0, 68
  %v3072 = vld [vmem:[%s3071] sm:$0xf]
  %v3073 = vunpack.c.l.bf16 %v3072
  %v3074 = vunpack.c.h.bf16 %v3072
  %s3075 = scalar_lea.vmem %s1, 1988
  %v3076 = vpack.c.bf16 0.0, %v3073
  %3077 = vst [vmem:[%s3075] sm:$0xf] %v3076
  %s3078 = scalar_lea.vmem %s0, 2000
  %v3079 = vld [vmem:[%s3078] sm:$0xf]
  %v3080 = vunpack.c.l.bf16 %v3079
  %v3081 = vunpack.c.h.bf16 %v3079
  %s3082 = scalar_lea.vmem %s1, 80
  %v3083 = vpack.c.bf16 0.0, %v3080
  %3084 = vst [vmem:[%s3082] sm:$0xf] %v3083
  %s3085 = scalar_lea.vmem %s0, 1280
  %v3086 = vld [vmem:[%s3085] sm:$0xf]
  %v3087 = vunpack.c.l.bf16 %v3086
  %v3088 = vunpack.c.h.bf16 %v3086
  %s3089 = scalar_lea.vmem %s1, 800
  %v3090 = vpack.c.bf16 0.0, %v3087
  %3091 = vst [vmem:[%s3089] sm:$0xf] %v3090
  %s3092 = scalar_lea.vmem %s0, 560
  %v3093 = vld [vmem:[%s3092] sm:$0xf]
  %v3094 = vunpack.c.l.bf16 %v3093
  %v3095 = vunpack.c.h.bf16 %v3093
  %s3096 = scalar_lea.vmem %s1, 1520
  %v3097 = vpack.c.bf16 0.0, %v3094
  %3098 = vst [vmem:[%s3096] sm:$0xf] %v3097
  %s3099 = scalar_lea.vmem %s0, 1760
  %v3100 = vld [vmem:[%s3099] sm:$0xf]
  %v3101 = vunpack.c.l.bf16 %v3100
  %v3102 = vunpack.c.h.bf16 %v3100
  %s3103 = scalar_lea.vmem %s1, 320
  %v3104 = vpack.c.bf16 0.0, %v3101
  %3105 = vst [vmem:[%s3103] sm:$0xf] %v3104
  %s3106 = scalar_lea.vmem %s0, 1040
  %v3107 = vld [vmem:[%s3106] sm:$0xf]
  %v3108 = vunpack.c.l.bf16 %v3107
  %v3109 = vunpack.c.h.bf16 %v3107
  %s3110 = scalar_lea.vmem %s1, 1040
  %v3111 = vpack.c.bf16 0.0, %v3108
  %3112 = vst [vmem:[%s3110] sm:$0xf] %v3111
  %s3113 = scalar_lea.vmem %s0, 320
  %v3114 = vld [vmem:[%s3113] sm:$0xf]
  %v3115 = vunpack.c.l.bf16 %v3114
  %v3116 = vunpack.c.h.bf16 %v3114
  %s3117 = scalar_lea.vmem %s1, 1760
  %v3118 = vpack.c.bf16 0.0, %v3115
  %3119 = vst [vmem:[%s3117] sm:$0xf] %v3118
  %s3120 = scalar_lea.vmem %s0, 1520
  %v3121 = vld [vmem:[%s3120] sm:$0xf]
  %v3122 = vunpack.c.l.bf16 %v3121
  %v3123 = vunpack.c.h.bf16 %v3121
  %s3124 = scalar_lea.vmem %s1, 560
  %v3125 = vpack.c.bf16 0.0, %v3122
  %3126 = vst [vmem:[%s3124] sm:$0xf] %v3125
  %s3127 = scalar_lea.vmem %s0, 800
  %v3128 = vld [vmem:[%s3127] sm:$0xf]
  %v3129 = vunpack.c.l.bf16 %v3128
  %v3130 = vunpack.c.h.bf16 %v3128
  %s3131 = scalar_lea.vmem %s1, 1280
  %v3132 = vpack.c.bf16 0.0, %v3129
  %3133 = vst [vmem:[%s3131] sm:$0xf] %v3132
  %s3134 = scalar_lea.vmem %s0, 80
  %v3135 = vld [vmem:[%s3134] sm:$0xf]
  %v3136 = vunpack.c.l.bf16 %v3135
  %v3137 = vunpack.c.h.bf16 %v3135
  %s3138 = scalar_lea.vmem %s1, 2000
  %v3139 = vpack.c.bf16 0.0, %v3136
  %3140 = vst [vmem:[%s3138] sm:$0xf] %v3139
  %s3141 = scalar_lea.vmem %s0, 2012
  %v3142 = vld [vmem:[%s3141] sm:$0xf]
  %v3143 = vunpack.c.l.bf16 %v3142
  %v3144 = vunpack.c.h.bf16 %v3142
  %s3145 = scalar_lea.vmem %s1, 92
  %v3146 = vpack.c.bf16 0.0, %v3143
  %3147 = vst [vmem:[%s3145] sm:$0xf] %v3146
  %s3148 = scalar_lea.vmem %s0, 1292
  %v3149 = vld [vmem:[%s3148] sm:$0xf]
  %v3150 = vunpack.c.l.bf16 %v3149
  %v3151 = vunpack.c.h.bf16 %v3149
  %s3152 = scalar_lea.vmem %s1, 812
  %v3153 = vpack.c.bf16 0.0, %v3150
  %3154 = vst [vmem:[%s3152] sm:$0xf] %v3153
  %s3155 = scalar_lea.vmem %s0, 572
  %v3156 = vld [vmem:[%s3155] sm:$0xf]
  %v3157 = vunpack.c.l.bf16 %v3156
  %v3158 = vunpack.c.h.bf16 %v3156
  %s3159 = scalar_lea.vmem %s1, 1532
  %v3160 = vpack.c.bf16 0.0, %v3157
  %3161 = vst [vmem:[%s3159] sm:$0xf] %v3160
  %s3162 = scalar_lea.vmem %s0, 1772
  %v3163 = vld [vmem:[%s3162] sm:$0xf]
  %v3164 = vunpack.c.l.bf16 %v3163
  %v3165 = vunpack.c.h.bf16 %v3163
  %s3166 = scalar_lea.vmem %s1, 332
  %v3167 = vpack.c.bf16 0.0, %v3164
  %3168 = vst [vmem:[%s3166] sm:$0xf] %v3167
  %s3169 = scalar_lea.vmem %s0, 1052
  %v3170 = vld [vmem:[%s3169] sm:$0xf]
  %v3171 = vunpack.c.l.bf16 %v3170
  %v3172 = vunpack.c.h.bf16 %v3170
  %s3173 = scalar_lea.vmem %s1, 1052
  %v3174 = vpack.c.bf16 0.0, %v3171
  %3175 = vst [vmem:[%s3173] sm:$0xf] %v3174
  %s3176 = scalar_lea.vmem %s0, 332
  %v3177 = vld [vmem:[%s3176] sm:$0xf]
  %v3178 = vunpack.c.l.bf16 %v3177
  %v3179 = vunpack.c.h.bf16 %v3177
  %s3180 = scalar_lea.vmem %s1, 1772
  %v3181 = vpack.c.bf16 0.0, %v3178
  %3182 = vst [vmem:[%s3180] sm:$0xf] %v3181
  %s3183 = scalar_lea.vmem %s0, 1532
  %v3184 = vld [vmem:[%s3183] sm:$0xf]
  %v3185 = vunpack.c.l.bf16 %v3184
  %v3186 = vunpack.c.h.bf16 %v3184
  %s3187 = scalar_lea.vmem %s1, 572
  %v3188 = vpack.c.bf16 0.0, %v3185
  %3189 = vst [vmem:[%s3187] sm:$0xf] %v3188
  %s3190 = scalar_lea.vmem %s0, 812
  %v3191 = vld [vmem:[%s3190] sm:$0xf]
  %v3192 = vunpack.c.l.bf16 %v3191
  %v3193 = vunpack.c.h.bf16 %v3191
  %s3194 = scalar_lea.vmem %s1, 1292
  %v3195 = vpack.c.bf16 0.0, %v3192
  %3196 = vst [vmem:[%s3194] sm:$0xf] %v3195
  %s3197 = scalar_lea.vmem %s0, 92
  %v3198 = vld [vmem:[%s3197] sm:$0xf]
  %v3199 = vunpack.c.l.bf16 %v3198
  %v3200 = vunpack.c.h.bf16 %v3198
  %s3201 = scalar_lea.vmem %s1, 2012
  %v3202 = vpack.c.bf16 0.0, %v3199
  %3203 = vst [vmem:[%s3201] sm:$0xf] %v3202
  %s3204 = scalar_lea.vmem %s0, 2024
  %v3205 = vld [vmem:[%s3204] sm:$0xf]
  %v3206 = vunpack.c.l.bf16 %v3205
  %v3207 = vunpack.c.h.bf16 %v3205
  %s3208 = scalar_lea.vmem %s1, 104
  %v3209 = vpack.c.bf16 0.0, %v3206
  %3210 = vst [vmem:[%s3208] sm:$0xf] %v3209
  %s3211 = scalar_lea.vmem %s0, 1304
  %v3212 = vld [vmem:[%s3211] sm:$0xf]
  %v3213 = vunpack.c.l.bf16 %v3212
  %v3214 = vunpack.c.h.bf16 %v3212
  %s3215 = scalar_lea.vmem %s1, 824
  %v3216 = vpack.c.bf16 0.0, %v3213
  %3217 = vst [vmem:[%s3215] sm:$0xf] %v3216
  %s3218 = scalar_lea.vmem %s0, 584
  %v3219 = vld [vmem:[%s3218] sm:$0xf]
  %v3220 = vunpack.c.l.bf16 %v3219
  %v3221 = vunpack.c.h.bf16 %v3219
  %s3222 = scalar_lea.vmem %s1, 1544
  %v3223 = vpack.c.bf16 0.0, %v3220
  %3224 = vst [vmem:[%s3222] sm:$0xf] %v3223
  %s3225 = scalar_lea.vmem %s0, 1784
  %v3226 = vld [vmem:[%s3225] sm:$0xf]
  %v3227 = vunpack.c.l.bf16 %v3226
  %v3228 = vunpack.c.h.bf16 %v3226
  %s3229 = scalar_lea.vmem %s1, 344
  %v3230 = vpack.c.bf16 0.0, %v3227
  %3231 = vst [vmem:[%s3229] sm:$0xf] %v3230
  %s3232 = scalar_lea.vmem %s0, 1064
  %v3233 = vld [vmem:[%s3232] sm:$0xf]
  %v3234 = vunpack.c.l.bf16 %v3233
  %v3235 = vunpack.c.h.bf16 %v3233
  %s3236 = scalar_lea.vmem %s1, 1064
  %v3237 = vpack.c.bf16 0.0, %v3234
  %3238 = vst [vmem:[%s3236] sm:$0xf] %v3237
  %s3239 = scalar_lea.vmem %s0, 344
  %v3240 = vld [vmem:[%s3239] sm:$0xf]
  %v3241 = vunpack.c.l.bf16 %v3240
  %v3242 = vunpack.c.h.bf16 %v3240
  %s3243 = scalar_lea.vmem %s1, 1784
  %v3244 = vpack.c.bf16 0.0, %v3241
  %3245 = vst [vmem:[%s3243] sm:$0xf] %v3244
  %s3246 = scalar_lea.vmem %s0, 1544
  %v3247 = vld [vmem:[%s3246] sm:$0xf]
  %v3248 = vunpack.c.l.bf16 %v3247
  %v3249 = vunpack.c.h.bf16 %v3247
  %s3250 = scalar_lea.vmem %s1, 584
  %v3251 = vpack.c.bf16 0.0, %v3248
  %3252 = vst [vmem:[%s3250] sm:$0xf] %v3251
  %s3253 = scalar_lea.vmem %s0, 824
  %v3254 = vld [vmem:[%s3253] sm:$0xf]
  %v3255 = vunpack.c.l.bf16 %v3254
  %v3256 = vunpack.c.h.bf16 %v3254
  %s3257 = scalar_lea.vmem %s1, 1304
  %v3258 = vpack.c.bf16 0.0, %v3255
  %3259 = vst [vmem:[%s3257] sm:$0xf] %v3258
  %s3260 = scalar_lea.vmem %s0, 104
  %v3261 = vld [vmem:[%s3260] sm:$0xf]
  %v3262 = vunpack.c.l.bf16 %v3261
  %v3263 = vunpack.c.h.bf16 %v3261
  %s3264 = scalar_lea.vmem %s1, 2024
  %v3265 = vpack.c.bf16 0.0, %v3262
  %3266 = vst [vmem:[%s3264] sm:$0xf] %v3265
  %s3267 = scalar_lea.vmem %s0, 2036
  %v3268 = vld [vmem:[%s3267] sm:$0xf]
  %v3269 = vunpack.c.l.bf16 %v3268
  %v3270 = vunpack.c.h.bf16 %v3268
  %s3271 = scalar_lea.vmem %s1, 116
  %v3272 = vpack.c.bf16 0.0, %v3269
  %3273 = vst [vmem:[%s3271] sm:$0xf] %v3272
  %s3274 = scalar_lea.vmem %s0, 1316
  %v3275 = vld [vmem:[%s3274] sm:$0xf]
  %v3276 = vunpack.c.l.bf16 %v3275
  %v3277 = vunpack.c.h.bf16 %v3275
  %s3278 = scalar_lea.vmem %s1, 836
  %v3279 = vpack.c.bf16 0.0, %v3276
  %3280 = vst [vmem:[%s3278] sm:$0xf] %v3279
  %s3281 = scalar_lea.vmem %s0, 596
  %v3282 = vld [vmem:[%s3281] sm:$0xf]
  %v3283 = vunpack.c.l.bf16 %v3282
  %v3284 = vunpack.c.h.bf16 %v3282
  %s3285 = scalar_lea.vmem %s1, 1556
  %v3286 = vpack.c.bf16 0.0, %v3283
  %3287 = vst [vmem:[%s3285] sm:$0xf] %v3286
  %s3288 = scalar_lea.vmem %s0, 1796
  %v3289 = vld [vmem:[%s3288] sm:$0xf]
  %v3290 = vunpack.c.l.bf16 %v3289
  %v3291 = vunpack.c.h.bf16 %v3289
  %s3292 = scalar_lea.vmem %s1, 356
  %v3293 = vpack.c.bf16 0.0, %v3290
  %3294 = vst [vmem:[%s3292] sm:$0xf] %v3293
  %s3295 = scalar_lea.vmem %s0, 1076
  %v3296 = vld [vmem:[%s3295] sm:$0xf]
  %v3297 = vunpack.c.l.bf16 %v3296
  %v3298 = vunpack.c.h.bf16 %v3296
  %s3299 = scalar_lea.vmem %s1, 1076
  %v3300 = vpack.c.bf16 0.0, %v3297
  %3301 = vst [vmem:[%s3299] sm:$0xf] %v3300
  %s3302 = scalar_lea.vmem %s0, 356
  %v3303 = vld [vmem:[%s3302] sm:$0xf]
  %v3304 = vunpack.c.l.bf16 %v3303
  %v3305 = vunpack.c.h.bf16 %v3303
  %s3306 = scalar_lea.vmem %s1, 1796
  %v3307 = vpack.c.bf16 0.0, %v3304
  %3308 = vst [vmem:[%s3306] sm:$0xf] %v3307
  %s3309 = scalar_lea.vmem %s0, 1556
  %v3310 = vld [vmem:[%s3309] sm:$0xf]
  %v3311 = vunpack.c.l.bf16 %v3310
  %v3312 = vunpack.c.h.bf16 %v3310
  %s3313 = scalar_lea.vmem %s1, 596
  %v3314 = vpack.c.bf16 0.0, %v3311
  %3315 = vst [vmem:[%s3313] sm:$0xf] %v3314
  %s3316 = scalar_lea.vmem %s0, 836
  %v3317 = vld [vmem:[%s3316] sm:$0xf]
  %v3318 = vunpack.c.l.bf16 %v3317
  %v3319 = vunpack.c.h.bf16 %v3317
  %s3320 = scalar_lea.vmem %s1, 1316
  %v3321 = vpack.c.bf16 0.0, %v3318
  %3322 = vst [vmem:[%s3320] sm:$0xf] %v3321
  %s3323 = scalar_lea.vmem %s0, 116
  %v3324 = vld [vmem:[%s3323] sm:$0xf]
  %v3325 = vunpack.c.l.bf16 %v3324
  %v3326 = vunpack.c.h.bf16 %v3324
  %s3327 = scalar_lea.vmem %s1, 2036
  %v3328 = vpack.c.bf16 0.0, %v3325
  %3329 = vst [vmem:[%s3327] sm:$0xf] %v3328
  %s3330 = scalar_lea.vmem %s0, 2048
  %v3331 = vld [vmem:[%s3330] sm:$0xf]
  %v3332 = vunpack.c.l.bf16 %v3331
  %v3333 = vunpack.c.h.bf16 %v3331
  %s3334 = scalar_lea.vmem %s1, 128
  %v3335 = vpack.c.bf16 0.0, %v3332
  %3336 = vst [vmem:[%s3334] sm:$0xf] %v3335
  %s3337 = scalar_lea.vmem %s0, 1328
  %v3338 = vld [vmem:[%s3337] sm:$0xf]
  %v3339 = vunpack.c.l.bf16 %v3338
  %v3340 = vunpack.c.h.bf16 %v3338
  %s3341 = scalar_lea.vmem %s1, 848
  %v3342 = vpack.c.bf16 0.0, %v3339
  %3343 = vst [vmem:[%s3341] sm:$0xf] %v3342
  %s3344 = scalar_lea.vmem %s0, 608
  %v3345 = vld [vmem:[%s3344] sm:$0xf]
  %v3346 = vunpack.c.l.bf16 %v3345
  %v3347 = vunpack.c.h.bf16 %v3345
  %s3348 = scalar_lea.vmem %s1, 1568
  %v3349 = vpack.c.bf16 0.0, %v3346
  %3350 = vst [vmem:[%s3348] sm:$0xf] %v3349
  %s3351 = scalar_lea.vmem %s0, 1808
  %v3352 = vld [vmem:[%s3351] sm:$0xf]
  %v3353 = vunpack.c.l.bf16 %v3352
  %v3354 = vunpack.c.h.bf16 %v3352
  %s3355 = scalar_lea.vmem %s1, 368
  %v3356 = vpack.c.bf16 0.0, %v3353
  %3357 = vst [vmem:[%s3355] sm:$0xf] %v3356
  %s3358 = scalar_lea.vmem %s0, 1088
  %v3359 = vld [vmem:[%s3358] sm:$0xf]
  %v3360 = vunpack.c.l.bf16 %v3359
  %v3361 = vunpack.c.h.bf16 %v3359
  %s3362 = scalar_lea.vmem %s1, 1088
  %v3363 = vpack.c.bf16 0.0, %v3360
  %3364 = vst [vmem:[%s3362] sm:$0xf] %v3363
  %s3365 = scalar_lea.vmem %s0, 368
  %v3366 = vld [vmem:[%s3365] sm:$0xf]
  %v3367 = vunpack.c.l.bf16 %v3366
  %v3368 = vunpack.c.h.bf16 %v3366
  %s3369 = scalar_lea.vmem %s1, 1808
  %v3370 = vpack.c.bf16 0.0, %v3367
  %3371 = vst [vmem:[%s3369] sm:$0xf] %v3370
  %s3372 = scalar_lea.vmem %s0, 1568
  %v3373 = vld [vmem:[%s3372] sm:$0xf]
  %v3374 = vunpack.c.l.bf16 %v3373
  %v3375 = vunpack.c.h.bf16 %v3373
  %s3376 = scalar_lea.vmem %s1, 608
  %v3377 = vpack.c.bf16 0.0, %v3374
  %3378 = vst [vmem:[%s3376] sm:$0xf] %v3377
  %s3379 = scalar_lea.vmem %s0, 848
  %v3380 = vld [vmem:[%s3379] sm:$0xf]
  %v3381 = vunpack.c.l.bf16 %v3380
  %v3382 = vunpack.c.h.bf16 %v3380
  %s3383 = scalar_lea.vmem %s1, 1328
  %v3384 = vpack.c.bf16 0.0, %v3381
  %3385 = vst [vmem:[%s3383] sm:$0xf] %v3384
  %s3386 = scalar_lea.vmem %s0, 128
  %v3387 = vld [vmem:[%s3386] sm:$0xf]
  %v3388 = vunpack.c.l.bf16 %v3387
  %v3389 = vunpack.c.h.bf16 %v3387
  %s3390 = scalar_lea.vmem %s1, 2048
  %v3391 = vpack.c.bf16 0.0, %v3388
  %3392 = vst [vmem:[%s3390] sm:$0xf] %v3391
  %s3393 = scalar_lea.vmem %s0, 2060
  %v3394 = vld [vmem:[%s3393] sm:$0xf]
  %v3395 = vunpack.c.l.bf16 %v3394
  %v3396 = vunpack.c.h.bf16 %v3394
  %s3397 = scalar_lea.vmem %s1, 140
  %v3398 = vpack.c.bf16 0.0, %v3395
  %3399 = vst [vmem:[%s3397] sm:$0xf] %v3398
  %s3400 = scalar_lea.vmem %s0, 1340
  %v3401 = vld [vmem:[%s3400] sm:$0xf]
  %v3402 = vunpack.c.l.bf16 %v3401
  %v3403 = vunpack.c.h.bf16 %v3401
  %s3404 = scalar_lea.vmem %s1, 860
  %v3405 = vpack.c.bf16 0.0, %v3402
  %3406 = vst [vmem:[%s3404] sm:$0xf] %v3405
  %s3407 = scalar_lea.vmem %s0, 620
  %v3408 = vld [vmem:[%s3407] sm:$0xf]
  %v3409 = vunpack.c.l.bf16 %v3408
  %v3410 = vunpack.c.h.bf16 %v3408
  %s3411 = scalar_lea.vmem %s1, 1580
  %v3412 = vpack.c.bf16 0.0, %v3409
  %3413 = vst [vmem:[%s3411] sm:$0xf] %v3412
  %s3414 = scalar_lea.vmem %s0, 1820
  %v3415 = vld [vmem:[%s3414] sm:$0xf]
  %v3416 = vunpack.c.l.bf16 %v3415
  %v3417 = vunpack.c.h.bf16 %v3415
  %s3418 = scalar_lea.vmem %s1, 380
  %v3419 = vpack.c.bf16 0.0, %v3416
  %3420 = vst [vmem:[%s3418] sm:$0xf] %v3419
  %s3421 = scalar_lea.vmem %s0, 1100
  %v3422 = vld [vmem:[%s3421] sm:$0xf]
  %v3423 = vunpack.c.l.bf16 %v3422
  %v3424 = vunpack.c.h.bf16 %v3422
  %s3425 = scalar_lea.vmem %s1, 1100
  %v3426 = vpack.c.bf16 0.0, %v3423
  %3427 = vst [vmem:[%s3425] sm:$0xf] %v3426
  %s3428 = scalar_lea.vmem %s0, 380
  %v3429 = vld [vmem:[%s3428] sm:$0xf]
  %v3430 = vunpack.c.l.bf16 %v3429
  %v3431 = vunpack.c.h.bf16 %v3429
  %s3432 = scalar_lea.vmem %s1, 1820
  %v3433 = vpack.c.bf16 0.0, %v3430
  %3434 = vst [vmem:[%s3432] sm:$0xf] %v3433
  %s3435 = scalar_lea.vmem %s0, 1580
  %v3436 = vld [vmem:[%s3435] sm:$0xf]
  %v3437 = vunpack.c.l.bf16 %v3436
  %v3438 = vunpack.c.h.bf16 %v3436
  %s3439 = scalar_lea.vmem %s1, 620
  %v3440 = vpack.c.bf16 0.0, %v3437
  %3441 = vst [vmem:[%s3439] sm:$0xf] %v3440
  %s3442 = scalar_lea.vmem %s0, 860
  %v3443 = vld [vmem:[%s3442] sm:$0xf]
  %v3444 = vunpack.c.l.bf16 %v3443
  %v3445 = vunpack.c.h.bf16 %v3443
  %s3446 = scalar_lea.vmem %s1, 1340
  %v3447 = vpack.c.bf16 0.0, %v3444
  %3448 = vst [vmem:[%s3446] sm:$0xf] %v3447
  %s3449 = scalar_lea.vmem %s0, 140
  %v3450 = vld [vmem:[%s3449] sm:$0xf]
  %v3451 = vunpack.c.l.bf16 %v3450
  %v3452 = vunpack.c.h.bf16 %v3450
  %s3453 = scalar_lea.vmem %s1, 2060
  %v3454 = vpack.c.bf16 0.0, %v3451
  %3455 = vst [vmem:[%s3453] sm:$0xf] %v3454
  %s3456 = scalar_lea.vmem %s0, 2072
  %v3457 = vld [vmem:[%s3456] sm:$0xf]
  %v3458 = vunpack.c.l.bf16 %v3457
  %v3459 = vunpack.c.h.bf16 %v3457
  %s3460 = scalar_lea.vmem %s1, 152
  %v3461 = vpack.c.bf16 0.0, %v3458
  %3462 = vst [vmem:[%s3460] sm:$0xf] %v3461
  %s3463 = scalar_lea.vmem %s0, 1352
  %v3464 = vld [vmem:[%s3463] sm:$0xf]
  %v3465 = vunpack.c.l.bf16 %v3464
  %v3466 = vunpack.c.h.bf16 %v3464
  %s3467 = scalar_lea.vmem %s1, 872
  %v3468 = vpack.c.bf16 0.0, %v3465
  %3469 = vst [vmem:[%s3467] sm:$0xf] %v3468
  %s3470 = scalar_lea.vmem %s0, 632
  %v3471 = vld [vmem:[%s3470] sm:$0xf]
  %v3472 = vunpack.c.l.bf16 %v3471
  %v3473 = vunpack.c.h.bf16 %v3471
  %s3474 = scalar_lea.vmem %s1, 1592
  %v3475 = vpack.c.bf16 0.0, %v3472
  %3476 = vst [vmem:[%s3474] sm:$0xf] %v3475
  %s3477 = scalar_lea.vmem %s0, 1832
  %v3478 = vld [vmem:[%s3477] sm:$0xf]
  %v3479 = vunpack.c.l.bf16 %v3478
  %v3480 = vunpack.c.h.bf16 %v3478
  %s3481 = scalar_lea.vmem %s1, 392
  %v3482 = vpack.c.bf16 0.0, %v3479
  %3483 = vst [vmem:[%s3481] sm:$0xf] %v3482
  %s3484 = scalar_lea.vmem %s0, 1112
  %v3485 = vld [vmem:[%s3484] sm:$0xf]
  %v3486 = vunpack.c.l.bf16 %v3485
  %v3487 = vunpack.c.h.bf16 %v3485
  %s3488 = scalar_lea.vmem %s1, 1112
  %v3489 = vpack.c.bf16 0.0, %v3486
  %3490 = vst [vmem:[%s3488] sm:$0xf] %v3489
  %s3491 = scalar_lea.vmem %s0, 392
  %v3492 = vld [vmem:[%s3491] sm:$0xf]
  %v3493 = vunpack.c.l.bf16 %v3492
  %v3494 = vunpack.c.h.bf16 %v3492
  %s3495 = scalar_lea.vmem %s1, 1832
  %v3496 = vpack.c.bf16 0.0, %v3493
  %3497 = vst [vmem:[%s3495] sm:$0xf] %v3496
  %s3498 = scalar_lea.vmem %s0, 1592
  %v3499 = vld [vmem:[%s3498] sm:$0xf]
  %v3500 = vunpack.c.l.bf16 %v3499
  %v3501 = vunpack.c.h.bf16 %v3499
  %s3502 = scalar_lea.vmem %s1, 632
  %v3503 = vpack.c.bf16 0.0, %v3500
  %3504 = vst [vmem:[%s3502] sm:$0xf] %v3503
  %s3505 = scalar_lea.vmem %s0, 872
  %v3506 = vld [vmem:[%s3505] sm:$0xf]
  %v3507 = vunpack.c.l.bf16 %v3506
  %v3508 = vunpack.c.h.bf16 %v3506
  %s3509 = scalar_lea.vmem %s1, 1352
  %v3510 = vpack.c.bf16 0.0, %v3507
  %3511 = vst [vmem:[%s3509] sm:$0xf] %v3510
  %s3512 = scalar_lea.vmem %s0, 152
  %v3513 = vld [vmem:[%s3512] sm:$0xf]
  %v3514 = vunpack.c.l.bf16 %v3513
  %v3515 = vunpack.c.h.bf16 %v3513
  %s3516 = scalar_lea.vmem %s1, 2072
  %v3517 = vpack.c.bf16 0.0, %v3514
  %3518 = vst [vmem:[%s3516] sm:$0xf] %v3517
  %s3519 = scalar_lea.vmem %s0, 2084
  %v3520 = vld [vmem:[%s3519] sm:$0xf]
  %v3521 = vunpack.c.l.bf16 %v3520
  %v3522 = vunpack.c.h.bf16 %v3520
  %s3523 = scalar_lea.vmem %s1, 164
  %v3524 = vpack.c.bf16 0.0, %v3521
  %3525 = vst [vmem:[%s3523] sm:$0xf] %v3524
  %s3526 = scalar_lea.vmem %s0, 1364
  %v3527 = vld [vmem:[%s3526] sm:$0xf]
  %v3528 = vunpack.c.l.bf16 %v3527
  %v3529 = vunpack.c.h.bf16 %v3527
  %s3530 = scalar_lea.vmem %s1, 884
  %v3531 = vpack.c.bf16 0.0, %v3528
  %3532 = vst [vmem:[%s3530] sm:$0xf] %v3531
  %s3533 = scalar_lea.vmem %s0, 644
  %v3534 = vld [vmem:[%s3533] sm:$0xf]
  %v3535 = vunpack.c.l.bf16 %v3534
  %v3536 = vunpack.c.h.bf16 %v3534
  %s3537 = scalar_lea.vmem %s1, 1604
  %v3538 = vpack.c.bf16 0.0, %v3535
  %3539 = vst [vmem:[%s3537] sm:$0xf] %v3538
  %s3540 = scalar_lea.vmem %s0, 1844
  %v3541 = vld [vmem:[%s3540] sm:$0xf]
  %v3542 = vunpack.c.l.bf16 %v3541
  %v3543 = vunpack.c.h.bf16 %v3541
  %s3544 = scalar_lea.vmem %s1, 404
  %v3545 = vpack.c.bf16 0.0, %v3542
  %3546 = vst [vmem:[%s3544] sm:$0xf] %v3545
  %s3547 = scalar_lea.vmem %s0, 1124
  %v3548 = vld [vmem:[%s3547] sm:$0xf]
  %v3549 = vunpack.c.l.bf16 %v3548
  %v3550 = vunpack.c.h.bf16 %v3548
  %s3551 = scalar_lea.vmem %s1, 1124
  %v3552 = vpack.c.bf16 0.0, %v3549
  %3553 = vst [vmem:[%s3551] sm:$0xf] %v3552
  %s3554 = scalar_lea.vmem %s0, 404
  %v3555 = vld [vmem:[%s3554] sm:$0xf]
  %v3556 = vunpack.c.l.bf16 %v3555
  %v3557 = vunpack.c.h.bf16 %v3555
  %s3558 = scalar_lea.vmem %s1, 1844
  %v3559 = vpack.c.bf16 0.0, %v3556
  %3560 = vst [vmem:[%s3558] sm:$0xf] %v3559
  %s3561 = scalar_lea.vmem %s0, 1604
  %v3562 = vld [vmem:[%s3561] sm:$0xf]
  %v3563 = vunpack.c.l.bf16 %v3562
  %v3564 = vunpack.c.h.bf16 %v3562
  %s3565 = scalar_lea.vmem %s1, 644
  %v3566 = vpack.c.bf16 0.0, %v3563
  %3567 = vst [vmem:[%s3565] sm:$0xf] %v3566
  %s3568 = scalar_lea.vmem %s0, 884
  %v3569 = vld [vmem:[%s3568] sm:$0xf]
  %v3570 = vunpack.c.l.bf16 %v3569
  %v3571 = vunpack.c.h.bf16 %v3569
  %s3572 = scalar_lea.vmem %s1, 1364
  %v3573 = vpack.c.bf16 0.0, %v3570
  %3574 = vst [vmem:[%s3572] sm:$0xf] %v3573
  %s3575 = scalar_lea.vmem %s0, 164
  %v3576 = vld [vmem:[%s3575] sm:$0xf]
  %v3577 = vunpack.c.l.bf16 %v3576
  %v3578 = vunpack.c.h.bf16 %v3576
  %s3579 = scalar_lea.vmem %s1, 2084
  %v3580 = vpack.c.bf16 0.0, %v3577
  %3581 = vst [vmem:[%s3579] sm:$0xf] %v3580
  %s3582 = scalar_lea.vmem %s0, 2096
  %v3583 = vld [vmem:[%s3582] sm:$0xf]
  %v3584 = vunpack.c.l.bf16 %v3583
  %v3585 = vunpack.c.h.bf16 %v3583
  %s3586 = scalar_lea.vmem %s1, 176
  %v3587 = vpack.c.bf16 0.0, %v3584
  %3588 = vst [vmem:[%s3586] sm:$0xf] %v3587
  %s3589 = scalar_lea.vmem %s0, 1376
  %v3590 = vld [vmem:[%s3589] sm:$0xf]
  %v3591 = vunpack.c.l.bf16 %v3590
  %v3592 = vunpack.c.h.bf16 %v3590
  %s3593 = scalar_lea.vmem %s1, 896
  %v3594 = vpack.c.bf16 0.0, %v3591
  %3595 = vst [vmem:[%s3593] sm:$0xf] %v3594
  %s3596 = scalar_lea.vmem %s0, 656
  %v3597 = vld [vmem:[%s3596] sm:$0xf]
  %v3598 = vunpack.c.l.bf16 %v3597
  %v3599 = vunpack.c.h.bf16 %v3597
  %s3600 = scalar_lea.vmem %s1, 1616
  %v3601 = vpack.c.bf16 0.0, %v3598
  %3602 = vst [vmem:[%s3600] sm:$0xf] %v3601
  %s3603 = scalar_lea.vmem %s0, 1856
  %v3604 = vld [vmem:[%s3603] sm:$0xf]
  %v3605 = vunpack.c.l.bf16 %v3604
  %v3606 = vunpack.c.h.bf16 %v3604
  %s3607 = scalar_lea.vmem %s1, 416
  %v3608 = vpack.c.bf16 0.0, %v3605
  %3609 = vst [vmem:[%s3607] sm:$0xf] %v3608
  %s3610 = scalar_lea.vmem %s0, 1136
  %v3611 = vld [vmem:[%s3610] sm:$0xf]
  %v3612 = vunpack.c.l.bf16 %v3611
  %v3613 = vunpack.c.h.bf16 %v3611
  %s3614 = scalar_lea.vmem %s1, 1136
  %v3615 = vpack.c.bf16 0.0, %v3612
  %3616 = vst [vmem:[%s3614] sm:$0xf] %v3615
  %s3617 = scalar_lea.vmem %s0, 416
  %v3618 = vld [vmem:[%s3617] sm:$0xf]
  %v3619 = vunpack.c.l.bf16 %v3618
  %v3620 = vunpack.c.h.bf16 %v3618
  %s3621 = scalar_lea.vmem %s1, 1856
  %v3622 = vpack.c.bf16 0.0, %v3619
  %3623 = vst [vmem:[%s3621] sm:$0xf] %v3622
  %s3624 = scalar_lea.vmem %s0, 1616
  %v3625 = vld [vmem:[%s3624] sm:$0xf]
  %v3626 = vunpack.c.l.bf16 %v3625
  %v3627 = vunpack.c.h.bf16 %v3625
  %s3628 = scalar_lea.vmem %s1, 656
  %v3629 = vpack.c.bf16 0.0, %v3626
  %3630 = vst [vmem:[%s3628] sm:$0xf] %v3629
  %s3631 = scalar_lea.vmem %s0, 896
  %v3632 = vld [vmem:[%s3631] sm:$0xf]
  %v3633 = vunpack.c.l.bf16 %v3632
  %v3634 = vunpack.c.h.bf16 %v3632
  %s3635 = scalar_lea.vmem %s1, 1376
  %v3636 = vpack.c.bf16 0.0, %v3633
  %3637 = vst [vmem:[%s3635] sm:$0xf] %v3636
  %s3638 = scalar_lea.vmem %s0, 176
  %v3639 = vld [vmem:[%s3638] sm:$0xf]
  %v3640 = vunpack.c.l.bf16 %v3639
  %v3641 = vunpack.c.h.bf16 %v3639
  %s3642 = scalar_lea.vmem %s1, 2096
  %v3643 = vpack.c.bf16 0.0, %v3640
  %3644 = vst [vmem:[%s3642] sm:$0xf] %v3643
  %s3645 = scalar_lea.vmem %s0, 2108
  %v3646 = vld [vmem:[%s3645] sm:$0xf]
  %v3647 = vunpack.c.l.bf16 %v3646
  %v3648 = vunpack.c.h.bf16 %v3646
  %s3649 = scalar_lea.vmem %s1, 188
  %v3650 = vpack.c.bf16 0.0, %v3647
  %3651 = vst [vmem:[%s3649] sm:$0xf] %v3650
  %s3652 = scalar_lea.vmem %s0, 1388
  %v3653 = vld [vmem:[%s3652] sm:$0xf]
  %v3654 = vunpack.c.l.bf16 %v3653
  %v3655 = vunpack.c.h.bf16 %v3653
  %s3656 = scalar_lea.vmem %s1, 908
  %v3657 = vpack.c.bf16 0.0, %v3654
  %3658 = vst [vmem:[%s3656] sm:$0xf] %v3657
  %s3659 = scalar_lea.vmem %s0, 668
  %v3660 = vld [vmem:[%s3659] sm:$0xf]
  %v3661 = vunpack.c.l.bf16 %v3660
  %v3662 = vunpack.c.h.bf16 %v3660
  %s3663 = scalar_lea.vmem %s1, 1628
  %v3664 = vpack.c.bf16 0.0, %v3661
  %3665 = vst [vmem:[%s3663] sm:$0xf] %v3664
  %s3666 = scalar_lea.vmem %s0, 1868
  %v3667 = vld [vmem:[%s3666] sm:$0xf]
  %v3668 = vunpack.c.l.bf16 %v3667
  %v3669 = vunpack.c.h.bf16 %v3667
  %s3670 = scalar_lea.vmem %s1, 428
  %v3671 = vpack.c.bf16 0.0, %v3668
  %3672 = vst [vmem:[%s3670] sm:$0xf] %v3671
  %s3673 = scalar_lea.vmem %s0, 1148
  %v3674 = vld [vmem:[%s3673] sm:$0xf]
  %v3675 = vunpack.c.l.bf16 %v3674
  %v3676 = vunpack.c.h.bf16 %v3674
  %s3677 = scalar_lea.vmem %s1, 1148
  %v3678 = vpack.c.bf16 0.0, %v3675
  %3679 = vst [vmem:[%s3677] sm:$0xf] %v3678
  %s3680 = scalar_lea.vmem %s0, 428
  %v3681 = vld [vmem:[%s3680] sm:$0xf]
  %v3682 = vunpack.c.l.bf16 %v3681
  %v3683 = vunpack.c.h.bf16 %v3681
  %s3684 = scalar_lea.vmem %s1, 1868
  %v3685 = vpack.c.bf16 0.0, %v3682
  %3686 = vst [vmem:[%s3684] sm:$0xf] %v3685
  %s3687 = scalar_lea.vmem %s0, 1628
  %v3688 = vld [vmem:[%s3687] sm:$0xf]
  %v3689 = vunpack.c.l.bf16 %v3688
  %v3690 = vunpack.c.h.bf16 %v3688
  %s3691 = scalar_lea.vmem %s1, 668
  %v3692 = vpack.c.bf16 0.0, %v3689
  %3693 = vst [vmem:[%s3691] sm:$0xf] %v3692
  %s3694 = scalar_lea.vmem %s0, 908
  %v3695 = vld [vmem:[%s3694] sm:$0xf]
  %v3696 = vunpack.c.l.bf16 %v3695
  %v3697 = vunpack.c.h.bf16 %v3695
  %s3698 = scalar_lea.vmem %s1, 1388
  %v3699 = vpack.c.bf16 0.0, %v3696
  %3700 = vst [vmem:[%s3698] sm:$0xf] %v3699
  %s3701 = scalar_lea.vmem %s0, 188
  %v3702 = vld [vmem:[%s3701] sm:$0xf]
  %v3703 = vunpack.c.l.bf16 %v3702
  %v3704 = vunpack.c.h.bf16 %v3702
  %s3705 = scalar_lea.vmem %s1, 2108
  %v3706 = vpack.c.bf16 0.0, %v3703
  %3707 = vst [vmem:[%s3705] sm:$0xf] %v3706
  %s3708 = scalar_lea.vmem %s0, 2120
  %v3709 = vld [vmem:[%s3708] sm:$0xf]
  %v3710 = vunpack.c.l.bf16 %v3709
  %v3711 = vunpack.c.h.bf16 %v3709
  %s3712 = scalar_lea.vmem %s1, 200
  %v3713 = vpack.c.bf16 0.0, %v3710
  %3714 = vst [vmem:[%s3712] sm:$0xf] %v3713
  %s3715 = scalar_lea.vmem %s0, 1400
  %v3716 = vld [vmem:[%s3715] sm:$0xf]
  %v3717 = vunpack.c.l.bf16 %v3716
  %v3718 = vunpack.c.h.bf16 %v3716
  %s3719 = scalar_lea.vmem %s1, 920
  %v3720 = vpack.c.bf16 0.0, %v3717
  %3721 = vst [vmem:[%s3719] sm:$0xf] %v3720
  %s3722 = scalar_lea.vmem %s0, 680
  %v3723 = vld [vmem:[%s3722] sm:$0xf]
  %v3724 = vunpack.c.l.bf16 %v3723
  %v3725 = vunpack.c.h.bf16 %v3723
  %s3726 = scalar_lea.vmem %s1, 1640
  %v3727 = vpack.c.bf16 0.0, %v3724
  %3728 = vst [vmem:[%s3726] sm:$0xf] %v3727
  %s3729 = scalar_lea.vmem %s0, 1880
  %v3730 = vld [vmem:[%s3729] sm:$0xf]
  %v3731 = vunpack.c.l.bf16 %v3730
  %v3732 = vunpack.c.h.bf16 %v3730
  %s3733 = scalar_lea.vmem %s1, 440
  %v3734 = vpack.c.bf16 0.0, %v3731
  %3735 = vst [vmem:[%s3733] sm:$0xf] %v3734
  %s3736 = scalar_lea.vmem %s0, 1160
  %v3737 = vld [vmem:[%s3736] sm:$0xf]
  %v3738 = vunpack.c.l.bf16 %v3737
  %v3739 = vunpack.c.h.bf16 %v3737
  %s3740 = scalar_lea.vmem %s1, 1160
  %v3741 = vpack.c.bf16 0.0, %v3738
  %3742 = vst [vmem:[%s3740] sm:$0xf] %v3741
  %s3743 = scalar_lea.vmem %s0, 440
  %v3744 = vld [vmem:[%s3743] sm:$0xf]
  %v3745 = vunpack.c.l.bf16 %v3744
  %v3746 = vunpack.c.h.bf16 %v3744
  %s3747 = scalar_lea.vmem %s1, 1880
  %v3748 = vpack.c.bf16 0.0, %v3745
  %3749 = vst [vmem:[%s3747] sm:$0xf] %v3748
  %s3750 = scalar_lea.vmem %s0, 1640
  %v3751 = vld [vmem:[%s3750] sm:$0xf]
  %v3752 = vunpack.c.l.bf16 %v3751
  %v3753 = vunpack.c.h.bf16 %v3751
  %s3754 = scalar_lea.vmem %s1, 680
  %v3755 = vpack.c.bf16 0.0, %v3752
  %3756 = vst [vmem:[%s3754] sm:$0xf] %v3755
  %s3757 = scalar_lea.vmem %s0, 920
  %v3758 = vld [vmem:[%s3757] sm:$0xf]
  %v3759 = vunpack.c.l.bf16 %v3758
  %v3760 = vunpack.c.h.bf16 %v3758
  %s3761 = scalar_lea.vmem %s1, 1400
  %v3762 = vpack.c.bf16 0.0, %v3759
  %3763 = vst [vmem:[%s3761] sm:$0xf] %v3762
  %s3764 = scalar_lea.vmem %s0, 200
  %v3765 = vld [vmem:[%s3764] sm:$0xf]
  %v3766 = vunpack.c.l.bf16 %v3765
  %v3767 = vunpack.c.h.bf16 %v3765
  %s3768 = scalar_lea.vmem %s1, 2120
  %v3769 = vpack.c.bf16 0.0, %v3766
  %3770 = vst [vmem:[%s3768] sm:$0xf] %v3769
  %s3771 = scalar_lea.vmem %s0, 2132
  %v3772 = vld [vmem:[%s3771] sm:$0xf]
  %v3773 = vunpack.c.l.bf16 %v3772
  %v3774 = vunpack.c.h.bf16 %v3772
  %s3775 = scalar_lea.vmem %s1, 212
  %v3776 = vpack.c.bf16 0.0, %v3773
  %3777 = vst [vmem:[%s3775] sm:$0xf] %v3776
  %s3778 = scalar_lea.vmem %s0, 1412
  %v3779 = vld [vmem:[%s3778] sm:$0xf]
  %v3780 = vunpack.c.l.bf16 %v3779
  %v3781 = vunpack.c.h.bf16 %v3779
  %s3782 = scalar_lea.vmem %s1, 932
  %v3783 = vpack.c.bf16 0.0, %v3780
  %3784 = vst [vmem:[%s3782] sm:$0xf] %v3783
  %s3785 = scalar_lea.vmem %s0, 692
  %v3786 = vld [vmem:[%s3785] sm:$0xf]
  %v3787 = vunpack.c.l.bf16 %v3786
  %v3788 = vunpack.c.h.bf16 %v3786
  %s3789 = scalar_lea.vmem %s1, 1652
  %v3790 = vpack.c.bf16 0.0, %v3787
  %3791 = vst [vmem:[%s3789] sm:$0xf] %v3790
  %s3792 = scalar_lea.vmem %s0, 1892
  %v3793 = vld [vmem:[%s3792] sm:$0xf]
  %v3794 = vunpack.c.l.bf16 %v3793
  %v3795 = vunpack.c.h.bf16 %v3793
  %s3796 = scalar_lea.vmem %s1, 452
  %v3797 = vpack.c.bf16 0.0, %v3794
  %3798 = vst [vmem:[%s3796] sm:$0xf] %v3797
  %s3799 = scalar_lea.vmem %s0, 1172
  %v3800 = vld [vmem:[%s3799] sm:$0xf]
  %v3801 = vunpack.c.l.bf16 %v3800
  %v3802 = vunpack.c.h.bf16 %v3800
  %s3803 = scalar_lea.vmem %s1, 1172
  %v3804 = vpack.c.bf16 0.0, %v3801
  %3805 = vst [vmem:[%s3803] sm:$0xf] %v3804
  %s3806 = scalar_lea.vmem %s0, 452
  %v3807 = vld [vmem:[%s3806] sm:$0xf]
  %v3808 = vunpack.c.l.bf16 %v3807
  %v3809 = vunpack.c.h.bf16 %v3807
  %s3810 = scalar_lea.vmem %s1, 1892
  %v3811 = vpack.c.bf16 0.0, %v3808
  %3812 = vst [vmem:[%s3810] sm:$0xf] %v3811
  %s3813 = scalar_lea.vmem %s0, 1652
  %v3814 = vld [vmem:[%s3813] sm:$0xf]
  %v3815 = vunpack.c.l.bf16 %v3814
  %v3816 = vunpack.c.h.bf16 %v3814
  %s3817 = scalar_lea.vmem %s1, 692
  %v3818 = vpack.c.bf16 0.0, %v3815
  %3819 = vst [vmem:[%s3817] sm:$0xf] %v3818
  %s3820 = scalar_lea.vmem %s0, 932
  %v3821 = vld [vmem:[%s3820] sm:$0xf]
  %v3822 = vunpack.c.l.bf16 %v3821
  %v3823 = vunpack.c.h.bf16 %v3821
  %s3824 = scalar_lea.vmem %s1, 1412
  %v3825 = vpack.c.bf16 0.0, %v3822
  %3826 = vst [vmem:[%s3824] sm:$0xf] %v3825
  %s3827 = scalar_lea.vmem %s0, 212
  %v3828 = vld [vmem:[%s3827] sm:$0xf]
  %v3829 = vunpack.c.l.bf16 %v3828
  %v3830 = vunpack.c.h.bf16 %v3828
  %s3831 = scalar_lea.vmem %s1, 2132
  %v3832 = vpack.c.bf16 0.0, %v3829
  %3833 = vst [vmem:[%s3831] sm:$0xf] %v3832
  %s3834 = scalar_lea.vmem %s0, 2144
  %v3835 = vld [vmem:[%s3834] sm:$0xf]
  %v3836 = vunpack.c.l.bf16 %v3835
  %v3837 = vunpack.c.h.bf16 %v3835
  %s3838 = scalar_lea.vmem %s1, 224
  %v3839 = vpack.c.bf16 0.0, %v3836
  %3840 = vst [vmem:[%s3838] sm:$0xf] %v3839
  %s3841 = scalar_lea.vmem %s0, 1424
  %v3842 = vld [vmem:[%s3841] sm:$0xf]
  %v3843 = vunpack.c.l.bf16 %v3842
  %v3844 = vunpack.c.h.bf16 %v3842
  %s3845 = scalar_lea.vmem %s1, 944
  %v3846 = vpack.c.bf16 0.0, %v3843
  %3847 = vst [vmem:[%s3845] sm:$0xf] %v3846
  %s3848 = scalar_lea.vmem %s0, 704
  %v3849 = vld [vmem:[%s3848] sm:$0xf]
  %v3850 = vunpack.c.l.bf16 %v3849
  %v3851 = vunpack.c.h.bf16 %v3849
  %s3852 = scalar_lea.vmem %s1, 1664
  %v3853 = vpack.c.bf16 0.0, %v3850
  %3854 = vst [vmem:[%s3852] sm:$0xf] %v3853
  %s3855 = scalar_lea.vmem %s0, 1904
  %v3856 = vld [vmem:[%s3855] sm:$0xf]
  %v3857 = vunpack.c.l.bf16 %v3856
  %v3858 = vunpack.c.h.bf16 %v3856
  %s3859 = scalar_lea.vmem %s1, 464
  %v3860 = vpack.c.bf16 0.0, %v3857
  %3861 = vst [vmem:[%s3859] sm:$0xf] %v3860
  %s3862 = scalar_lea.vmem %s0, 1184
  %v3863 = vld [vmem:[%s3862] sm:$0xf]
  %v3864 = vunpack.c.l.bf16 %v3863
  %v3865 = vunpack.c.h.bf16 %v3863
  %s3866 = scalar_lea.vmem %s1, 1184
  %v3867 = vpack.c.bf16 0.0, %v3864
  %3868 = vst [vmem:[%s3866] sm:$0xf] %v3867
  %s3869 = scalar_lea.vmem %s0, 464
  %v3870 = vld [vmem:[%s3869] sm:$0xf]
  %v3871 = vunpack.c.l.bf16 %v3870
  %v3872 = vunpack.c.h.bf16 %v3870
  %s3873 = scalar_lea.vmem %s1, 1904
  %v3874 = vpack.c.bf16 0.0, %v3871
  %3875 = vst [vmem:[%s3873] sm:$0xf] %v3874
  %s3876 = scalar_lea.vmem %s0, 1664
  %v3877 = vld [vmem:[%s3876] sm:$0xf]
  %v3878 = vunpack.c.l.bf16 %v3877
  %v3879 = vunpack.c.h.bf16 %v3877
  %s3880 = scalar_lea.vmem %s1, 704
  %v3881 = vpack.c.bf16 0.0, %v3878
  %3882 = vst [vmem:[%s3880] sm:$0xf] %v3881
  %s3883 = scalar_lea.vmem %s0, 944
  %v3884 = vld [vmem:[%s3883] sm:$0xf]
  %v3885 = vunpack.c.l.bf16 %v3884
  %v3886 = vunpack.c.h.bf16 %v3884
  %s3887 = scalar_lea.vmem %s1, 1424
  %v3888 = vpack.c.bf16 0.0, %v3885
  %3889 = vst [vmem:[%s3887] sm:$0xf] %v3888
  %s3890 = scalar_lea.vmem %s0, 224
  %v3891 = vld [vmem:[%s3890] sm:$0xf]
  %v3892 = vunpack.c.l.bf16 %v3891
  %v3893 = vunpack.c.h.bf16 %v3891
  %s3894 = scalar_lea.vmem %s1, 2144
  %v3895 = vpack.c.bf16 0.0, %v3892
  %3896 = vst [vmem:[%s3894] sm:$0xf] %v3895
  %s3897 = scalar_lea.vmem %s0, 2156
  %v3898 = vld [vmem:[%s3897] sm:$0xf]
  %v3899 = vunpack.c.l.bf16 %v3898
  %v3900 = vunpack.c.h.bf16 %v3898
  %s3901 = scalar_lea.vmem %s1, 236
  %v3902 = vpack.c.bf16 0.0, %v3899
  %3903 = vst [vmem:[%s3901] sm:$0xf] %v3902
  %s3904 = scalar_lea.vmem %s0, 1436
  %v3905 = vld [vmem:[%s3904] sm:$0xf]
  %v3906 = vunpack.c.l.bf16 %v3905
  %v3907 = vunpack.c.h.bf16 %v3905
  %s3908 = scalar_lea.vmem %s1, 956
  %v3909 = vpack.c.bf16 0.0, %v3906
  %3910 = vst [vmem:[%s3908] sm:$0xf] %v3909
  %s3911 = scalar_lea.vmem %s0, 716
  %v3912 = vld [vmem:[%s3911] sm:$0xf]
  %v3913 = vunpack.c.l.bf16 %v3912
  %v3914 = vunpack.c.h.bf16 %v3912
  %s3915 = scalar_lea.vmem %s1, 1676
  %v3916 = vpack.c.bf16 0.0, %v3913
  %3917 = vst [vmem:[%s3915] sm:$0xf] %v3916
  %s3918 = scalar_lea.vmem %s0, 1916
  %v3919 = vld [vmem:[%s3918] sm:$0xf]
  %v3920 = vunpack.c.l.bf16 %v3919
  %v3921 = vunpack.c.h.bf16 %v3919
  %s3922 = scalar_lea.vmem %s1, 476
  %v3923 = vpack.c.bf16 0.0, %v3920
  %3924 = vst [vmem:[%s3922] sm:$0xf] %v3923
  %s3925 = scalar_lea.vmem %s0, 1196
  %v3926 = vld [vmem:[%s3925] sm:$0xf]
  %v3927 = vunpack.c.l.bf16 %v3926
  %v3928 = vunpack.c.h.bf16 %v3926
  %s3929 = scalar_lea.vmem %s1, 1196
  %v3930 = vpack.c.bf16 0.0, %v3927
  %3931 = vst [vmem:[%s3929] sm:$0xf] %v3930
  %s3932 = scalar_lea.vmem %s0, 476
  %v3933 = vld [vmem:[%s3932] sm:$0xf]
  %v3934 = vunpack.c.l.bf16 %v3933
  %v3935 = vunpack.c.h.bf16 %v3933
  %s3936 = scalar_lea.vmem %s1, 1916
  %v3937 = vpack.c.bf16 0.0, %v3934
  %3938 = vst [vmem:[%s3936] sm:$0xf] %v3937
  %s3939 = scalar_lea.vmem %s0, 1676
  %v3940 = vld [vmem:[%s3939] sm:$0xf]
  %v3941 = vunpack.c.l.bf16 %v3940
  %v3942 = vunpack.c.h.bf16 %v3940
  %s3943 = scalar_lea.vmem %s1, 716
  %v3944 = vpack.c.bf16 0.0, %v3941
  %3945 = vst [vmem:[%s3943] sm:$0xf] %v3944
  %s3946 = scalar_lea.vmem %s0, 956
  %v3947 = vld [vmem:[%s3946] sm:$0xf]
  %v3948 = vunpack.c.l.bf16 %v3947
  %v3949 = vunpack.c.h.bf16 %v3947
  %s3950 = scalar_lea.vmem %s1, 1436
  %v3951 = vpack.c.bf16 0.0, %v3948
  %3952 = vst [vmem:[%s3950] sm:$0xf] %v3951
  %s3953 = scalar_lea.vmem %s0, 236
  %v3954 = vld [vmem:[%s3953] sm:$0xf]
  %v3955 = vunpack.c.l.bf16 %v3954
  %v3956 = vunpack.c.h.bf16 %v3954
  %s3957 = scalar_lea.vmem %s1, 2156
  %v3958 = vpack.c.bf16 0.0, %v3955
  %3959 = vst [vmem:[%s3957] sm:$0xf] %v3958

// kernel: reverse.1
$region0: #{reverse.1}
  #allocation0 [shape = 's32[1]{0}', space=sflag, size = 0x4, scoped, tag = 'scoped memory for reverse.1']
  %s0 = inlined_call_operand.vmem [shape: bf16[3,3,32,128], index: 0, kind: input, shape index: {}]
  %s1 = inlined_call_operand.vmem [shape: bf16[3,3,32,128], index: 1, kind: output, shape index: {}]
  %s2 = scalar_lea.vmem %s0, 128
  %v3 = vld [vmem:[%s2] sm:$0xf]
  %v4 = vunpack.c.l.bf16 %v3
  %v5 = vunpack.c.h.bf16 %v3
  %v6 = vpack.c.bf16 0.0, %v4
  %7 = vst [vmem:[%s1] sm:$0xf] %v6
  %s8 = scalar_lea.vmem %s0, 80
  %v9 = vld [vmem:[%s8] sm:$0xf]
  %v10 = vunpack.c.l.bf16 %v9
  %v11 = vunpack.c.h.bf16 %v9
  %s12 = scalar_lea.vmem %s1, 48
  %v13 = vpack.c.bf16 0.0, %v10
  %14 = vst [vmem:[%s12] sm:$0xf] %v13
  %s15 = scalar_lea.vmem %s0, 32
  %v16 = vld [vmem:[%s15] sm:$0xf]
  %v17 = vunpack.c.l.bf16 %v16
  %v18 = vunpack.c.h.bf16 %v16
  %s19 = scalar_lea.vmem %s1, 96
  %v20 = vpack.c.bf16 0.0, %v17
  %21 = vst [vmem:[%s19] sm:$0xf] %v20
  %s22 = scalar_lea.vmem %s0, 112
  %v23 = vld [vmem:[%s22] sm:$0xf]
  %v24 = vunpack.c.l.bf16 %v23
  %v25 = vunpack.c.h.bf16 %v23
  %s26 = scalar_lea.vmem %s1, 16
  %v27 = vpack.c.bf16 0.0, %v24
  %28 = vst [vmem:[%s26] sm:$0xf] %v27
  %s29 = scalar_lea.vmem %s0, 64
  %v30 = vld [vmem:[%s29] sm:$0xf]
  %v31 = vunpack.c.l.bf16 %v30
  %v32 = vunpack.c.h.bf16 %v30
  %s33 = scalar_lea.vmem %s1, 64
  %v34 = vpack.c.bf16 0.0, %v31
  %35 = vst [vmem:[%s33] sm:$0xf] %v34
  %s36 = scalar_lea.vmem %s0, 16
  %v37 = vld [vmem:[%s36] sm:$0xf]
  %v38 = vunpack.c.l.bf16 %v37
  %v39 = vunpack.c.h.bf16 %v37
  %s40 = scalar_lea.vmem %s1, 112
  %v41 = vpack.c.bf16 0.0, %v38
  %42 = vst [vmem:[%s40] sm:$0xf] %v41
  %s43 = scalar_lea.vmem %s0, 96
  %v44 = vld [vmem:[%s43] sm:$0xf]
  %v45 = vunpack.c.l.bf16 %v44
  %v46 = vunpack.c.h.bf16 %v44
  %s47 = scalar_lea.vmem %s1, 32
  %v48 = vpack.c.bf16 0.0, %v45
  %49 = vst [vmem:[%s47] sm:$0xf] %v48
  %s50 = scalar_lea.vmem %s0, 48
  %v51 = vld [vmem:[%s50] sm:$0xf]
  %v52 = vunpack.c.l.bf16 %v51
  %v53 = vunpack.c.h.bf16 %v51
  %s54 = scalar_lea.vmem %s1, 80
  %v55 = vpack.c.bf16 0.0, %v52
  %56 = vst [vmem:[%s54] sm:$0xf] %v55
  %v57 = vld [vmem:[%s0] sm:$0xf]
  %v58 = vunpack.c.l.bf16 %v57
  %v59 = vunpack.c.h.bf16 %v57
  %s60 = scalar_lea.vmem %s1, 128
  %v61 = vpack.c.bf16 0.0, %v58
  %62 = vst [vmem:[%s60] sm:$0xf] %v61
  %s63 = scalar_lea.vmem %s0, 132
  %v64 = vld [vmem:[%s63] sm:$0xf]
  %v65 = vunpack.c.l.bf16 %v64
  %v66 = vunpack.c.h.bf16 %v64
  %s67 = scalar_lea.vmem %s1, 4
  %v68 = vpack.c.bf16 0.0, %v65
  %69 = vst [vmem:[%s67] sm:$0xf] %v68
  %s70 = scalar_lea.vmem %s0, 84
  %v71 = vld [vmem:[%s70] sm:$0xf]
  %v72 = vunpack.c.l.bf16 %v71
  %v73 = vunpack.c.h.bf16 %v71
  %s74 = scalar_lea.vmem %s1, 52
  %v75 = vpack.c.bf16 0.0, %v72
  %76 = vst [vmem:[%s74] sm:$0xf] %v75
  %s77 = scalar_lea.vmem %s0, 36
  %v78 = vld [vmem:[%s77] sm:$0xf]
  %v79 = vunpack.c.l.bf16 %v78
  %v80 = vunpack.c.h.bf16 %v78
  %s81 = scalar_lea.vmem %s1, 100
  %v82 = vpack.c.bf16 0.0, %v79
  %83 = vst [vmem:[%s81] sm:$0xf] %v82
  %s84 = scalar_lea.vmem %s0, 116
  %v85 = vld [vmem:[%s84] sm:$0xf]
  %v86 = vunpack.c.l.bf16 %v85
  %v87 = vunpack.c.h.bf16 %v85
  %s88 = scalar_lea.vmem %s1, 20
  %v89 = vpack.c.bf16 0.0, %v86
  %90 = vst [vmem:[%s88] sm:$0xf] %v89
  %s91 = scalar_lea.vmem %s0, 68
  %v92 = vld [vmem:[%s91] sm:$0xf]
  %v93 = vunpack.c.l.bf16 %v92
  %v94 = vunpack.c.h.bf16 %v92
  %s95 = scalar_lea.vmem %s1, 68
  %v96 = vpack.c.bf16 0.0, %v93
  %97 = vst [vmem:[%s95] sm:$0xf] %v96
  %s98 = scalar_lea.vmem %s0, 20
  %v99 = vld [vmem:[%s98] sm:$0xf]
  %v100 = vunpack.c.l.bf16 %v99
  %v101 = vunpack.c.h.bf16 %v99
  %s102 = scalar_lea.vmem %s1, 116
  %v103 = vpack.c.bf16 0.0, %v100
  %104 = vst [vmem:[%s102] sm:$0xf] %v103
  %s105 = scalar_lea.vmem %s0, 100
  %v106 = vld [vmem:[%s105] sm:$0xf]
  %v107 = vunpack.c.l.bf16 %v106
  %v108 = vunpack.c.h.bf16 %v106
  %s109 = scalar_lea.vmem %s1, 36
  %v110 = vpack.c.bf16 0.0, %v107
  %111 = vst [vmem:[%s109] sm:$0xf] %v110
  %s112 = scalar_lea.vmem %s0, 52
  %v113 = vld [vmem:[%s112] sm:$0xf]
  %v114 = vunpack.c.l.bf16 %v113
  %v115 = vunpack.c.h.bf16 %v113
  %s116 = scalar_lea.vmem %s1, 84
  %v117 = vpack.c.bf16 0.0, %v114
  %118 = vst [vmem:[%s116] sm:$0xf] %v117
  %s119 = scalar_lea.vmem %s0, 4
  %v120 = vld [vmem:[%s119] sm:$0xf]
  %v121 = vunpack.c.l.bf16 %v120
  %v122 = vunpack.c.h.bf16 %v120
  %s123 = scalar_lea.vmem %s1, 132
  %v124 = vpack.c.bf16 0.0, %v121
  %125 = vst [vmem:[%s123] sm:$0xf] %v124
  %s126 = scalar_lea.vmem %s0, 136
  %v127 = vld [vmem:[%s126] sm:$0xf]
  %v128 = vunpack.c.l.bf16 %v127
  %v129 = vunpack.c.h.bf16 %v127
  %s130 = scalar_lea.vmem %s1, 8
  %v131 = vpack.c.bf16 0.0, %v128
  %132 = vst [vmem:[%s130] sm:$0xf] %v131
  %s133 = scalar_lea.vmem %s0, 88
  %v134 = vld [vmem:[%s133] sm:$0xf]
  %v135 = vunpack.c.l.bf16 %v134
  %v136 = vunpack.c.h.bf16 %v134
  %s137 = scalar_lea.vmem %s1, 56
  %v138 = vpack.c.bf16 0.0, %v135
  %139 = vst [vmem:[%s137] sm:$0xf] %v138
  %s140 = scalar_lea.vmem %s0, 40
  %v141 = vld [vmem:[%s140] sm:$0xf]
  %v142 = vunpack.c.l.bf16 %v141
  %v143 = vunpack.c.h.bf16 %v141
  %s144 = scalar_lea.vmem %s1, 104
  %v145 = vpack.c.bf16 0.0, %v142
  %146 = vst [vmem:[%s144] sm:$0xf] %v145
  %s147 = scalar_lea.vmem %s0, 120
  %v148 = vld [vmem:[%s147] sm:$0xf]
  %v149 = vunpack.c.l.bf16 %v148
  %v150 = vunpack.c.h.bf16 %v148
  %s151 = scalar_lea.vmem %s1, 24
  %v152 = vpack.c.bf16 0.0, %v149
  %153 = vst [vmem:[%s151] sm:$0xf] %v152
  %s154 = scalar_lea.vmem %s0, 72
  %v155 = vld [vmem:[%s154] sm:$0xf]
  %v156 = vunpack.c.l.bf16 %v155
  %v157 = vunpack.c.h.bf16 %v155
  %s158 = scalar_lea.vmem %s1, 72
  %v159 = vpack.c.bf16 0.0, %v156
  %160 = vst [vmem:[%s158] sm:$0xf] %v159
  %s161 = scalar_lea.vmem %s0, 24
  %v162 = vld [vmem:[%s161] sm:$0xf]
  %v163 = vunpack.c.l.bf16 %v162
  %v164 = vunpack.c.h.bf16 %v162
  %s165 = scalar_lea.vmem %s1, 120
  %v166 = vpack.c.bf16 0.0, %v163
  %167 = vst [vmem:[%s165] sm:$0xf] %v166
  %s168 = scalar_lea.vmem %s0, 104
  %v169 = vld [vmem:[%s168] sm:$0xf]
  %v170 = vunpack.c.l.bf16 %v169
  %v171 = vunpack.c.h.bf16 %v169
  %s172 = scalar_lea.vmem %s1, 40
  %v173 = vpack.c.bf16 0.0, %v170
  %174 = vst [vmem:[%s172] sm:$0xf] %v173
  %s175 = scalar_lea.vmem %s0, 56
  %v176 = vld [vmem:[%s175] sm:$0xf]
  %v177 = vunpack.c.l.bf16 %v176
  %v178 = vunpack.c.h.bf16 %v176
  %s179 = scalar_lea.vmem %s1, 88
  %v180 = vpack.c.bf16 0.0, %v177
  %181 = vst [vmem:[%s179] sm:$0xf] %v180
  %s182 = scalar_lea.vmem %s0, 8
  %v183 = vld [vmem:[%s182] sm:$0xf]
  %v184 = vunpack.c.l.bf16 %v183
  %v185 = vunpack.c.h.bf16 %v183
  %s186 = scalar_lea.vmem %s1, 136
  %v187 = vpack.c.bf16 0.0, %v184
  %188 = vst [vmem:[%s186] sm:$0xf] %v187
  %s189 = scalar_lea.vmem %s0, 140
  %v190 = vld [vmem:[%s189] sm:$0xf]
  %v191 = vunpack.c.l.bf16 %v190
  %v192 = vunpack.c.h.bf16 %v190
  %s193 = scalar_lea.vmem %s1, 12
  %v194 = vpack.c.bf16 0.0, %v191
  %195 = vst [vmem:[%s193] sm:$0xf] %v194
  %s196 = scalar_lea.vmem %s0, 92
  %v197 = vld [vmem:[%s196] sm:$0xf]
  %v198 = vunpack.c.l.bf16 %v197
  %v199 = vunpack.c.h.bf16 %v197
  %s200 = scalar_lea.vmem %s1, 60
  %v201 = vpack.c.bf16 0.0, %v198
  %202 = vst [vmem:[%s200] sm:$0xf] %v201
  %s203 = scalar_lea.vmem %s0, 44
  %v204 = vld [vmem:[%s203] sm:$0xf]
  %v205 = vunpack.c.l.bf16 %v204
  %v206 = vunpack.c.h.bf16 %v204
  %s207 = scalar_lea.vmem %s1, 108
  %v208 = vpack.c.bf16 0.0, %v205
  %209 = vst [vmem:[%s207] sm:$0xf] %v208
  %s210 = scalar_lea.vmem %s0, 124
  %v211 = vld [vmem:[%s210] sm:$0xf]
  %v212 = vunpack.c.l.bf16 %v211
  %v213 = vunpack.c.h.bf16 %v211
  %s214 = scalar_lea.vmem %s1, 28
  %v215 = vpack.c.bf16 0.0, %v212
  %216 = vst [vmem:[%s214] sm:$0xf] %v215
  %s217 = scalar_lea.vmem %s0, 76
  %v218 = vld [vmem:[%s217] sm:$0xf]
  %v219 = vunpack.c.l.bf16 %v218
  %v220 = vunpack.c.h.bf16 %v218
  %s221 = scalar_lea.vmem %s1, 76
  %v222 = vpack.c.bf16 0.0, %v219
  %223 = vst [vmem:[%s221] sm:$0xf] %v222
  %s224 = scalar_lea.vmem %s0, 28
  %v225 = vld [vmem:[%s224] sm:$0xf]
  %v226 = vunpack.c.l.bf16 %v225
  %v227 = vunpack.c.h.bf16 %v225
  %s228 = scalar_lea.vmem %s1, 124
  %v229 = vpack.c.bf16 0.0, %v226
  %230 = vst [vmem:[%s228] sm:$0xf] %v229
  %s231 = scalar_lea.vmem %s0, 108
  %v232 = vld [vmem:[%s231] sm:$0xf]
  %v233 = vunpack.c.l.bf16 %v232
  %v234 = vunpack.c.h.bf16 %v232
  %s235 = scalar_lea.vmem %s1, 44
  %v236 = vpack.c.bf16 0.0, %v233
  %237 = vst [vmem:[%s235] sm:$0xf] %v236
  %s238 = scalar_lea.vmem %s0, 60
  %v239 = vld [vmem:[%s238] sm:$0xf]
  %v240 = vunpack.c.l.bf16 %v239
  %v241 = vunpack.c.h.bf16 %v239
  %s242 = scalar_lea.vmem %s1, 92
  %v243 = vpack.c.bf16 0.0, %v240
  %244 = vst [vmem:[%s242] sm:$0xf] %v243
  %s245 = scalar_lea.vmem %s0, 12
  %v246 = vld [vmem:[%s245] sm:$0xf]
  %v247 = vunpack.c.l.bf16 %v246
  %v248 = vunpack.c.h.bf16 %v246
  %s249 = scalar_lea.vmem %s1, 140
  %v250 = vpack.c.bf16 0.0, %v247
  %251 = vst [vmem:[%s249] sm:$0xf] %v250

// kernel: reverse.2
$region0: #{reverse.2}
  #allocation0 [shape = 's32[1]{0}', space=sflag, size = 0x4, scoped, tag = 'scoped memory for reverse.2']
  %s0 = inlined_call_operand.vmem [shape: bf16[3,3,192,384], index: 0, kind: input, shape index: {}]
  %s1 = inlined_call_operand.vmem [shape: bf16[3,3,192,384], index: 1, kind: output, shape index: {}]
  %s2 = scalar_lea.vmem %s0, 2304
  %v3 = vld [vmem:[%s2] sm:$0xf]
  %v4 = vunpack.c.l.bf16 %v3
  %v5 = vunpack.c.h.bf16 %v3
  %s6 = scalar_lea.vmem %s0, 1440
  %v7 = vld [vmem:[%s6] sm:$0xf]
  %v8 = vunpack.c.l.bf16 %v7
  %v9 = vunpack.c.h.bf16 %v7
  %s10 = scalar_lea.vmem %s1, 864
  %s11 = scalar_lea.vmem %s0, 576
  %v12 = vld [vmem:[%s11] sm:$0xf]
  %v13 = vunpack.c.l.bf16 %v12
  %v14 = vunpack.c.h.bf16 %v12
  %s15 = scalar_lea.vmem %s1, 1728
  %s16 = scalar_lea.vmem %s0, 2016
  %v17 = vld [vmem:[%s16] sm:$0xf]
  %v18 = vunpack.c.l.bf16 %v17
  %v19 = vunpack.c.h.bf16 %v17
  %s20 = scalar_lea.vmem %s1, 288
  %s21 = scalar_lea.vmem %s0, 1152
  %v22 = vld [vmem:[%s21] sm:$0xf]
  %v23 = vunpack.c.l.bf16 %v22
  %v24 = vunpack.c.h.bf16 %v22
  %s25 = scalar_lea.vmem %s1, 1152
  %s26 = scalar_lea.vmem %s0, 288
  %v27 = vld [vmem:[%s26] sm:$0xf]
  %v28 = vunpack.c.l.bf16 %v27
  %v29 = vunpack.c.h.bf16 %v27
  %s30 = scalar_lea.vmem %s1, 2016
  %s31 = scalar_lea.vmem %s0, 1728
  %v32 = vld [vmem:[%s31] sm:$0xf]
  %v33 = vunpack.c.l.bf16 %v32
  %v34 = vunpack.c.h.bf16 %v32
  %s35 = scalar_lea.vmem %s1, 576
  %s36 = scalar_lea.vmem %s0, 864
  %v37 = vld [vmem:[%s36] sm:$0xf]
  %v38 = vunpack.c.l.bf16 %v37
  %v39 = vunpack.c.h.bf16 %v37
  %s40 = scalar_lea.vmem %s1, 1440
  %v41 = vld [vmem:[%s0] sm:$0xf]
  %v42 = vunpack.c.l.bf16 %v41
  %v43 = vunpack.c.h.bf16 %v41
  %s44 = scalar_lea.vmem %s1, 2304
  %s45 = scalar_lea.vmem %s0, 2316
  %v46 = vld [vmem:[%s45] sm:$0xf]
  %v47 = vunpack.c.l.bf16 %v46
  %v48 = vunpack.c.h.bf16 %v46
  %s49 = scalar_lea.vmem %s1, 12
  %s50 = scalar_lea.vmem %s0, 1452
  %v51 = vld [vmem:[%s50] sm:$0xf]
  %v52 = vunpack.c.l.bf16 %v51
  %v53 = vunpack.c.h.bf16 %v51
  %s54 = scalar_lea.vmem %s1, 876
  %s55 = scalar_lea.vmem %s0, 588
  %v56 = vld [vmem:[%s55] sm:$0xf]
  %v57 = vunpack.c.l.bf16 %v56
  %v58 = vunpack.c.h.bf16 %v56
  %s59 = scalar_lea.vmem %s1, 1740
  %s60 = scalar_lea.vmem %s0, 2028
  %v61 = vld [vmem:[%s60] sm:$0xf]
  %v62 = vunpack.c.l.bf16 %v61
  %v63 = vunpack.c.h.bf16 %v61
  %s64 = scalar_lea.vmem %s1, 300
  %s65 = scalar_lea.vmem %s0, 1164
  %v66 = vld [vmem:[%s65] sm:$0xf]
  %v67 = vunpack.c.l.bf16 %v66
  %v68 = vunpack.c.h.bf16 %v66
  %s69 = scalar_lea.vmem %s1, 1164
  %s70 = scalar_lea.vmem %s0, 300
  %v71 = vld [vmem:[%s70] sm:$0xf]
  %v72 = vunpack.c.l.bf16 %v71
  %v73 = vunpack.c.h.bf16 %v71
  %s74 = scalar_lea.vmem %s1, 2028
  %s75 = scalar_lea.vmem %s0, 1740
  %v76 = vld [vmem:[%s75] sm:$0xf]
  %v77 = vunpack.c.l.bf16 %v76
  %v78 = vunpack.c.h.bf16 %v76
  %s79 = scalar_lea.vmem %s1, 588
  %s80 = scalar_lea.vmem %s0, 876
  %v81 = vld [vmem:[%s80] sm:$0xf]
  %v82 = vunpack.c.l.bf16 %v81
  %v83 = vunpack.c.h.bf16 %v81
  %s84 = scalar_lea.vmem %s1, 1452
  %s85 = scalar_lea.vmem %s0, 12
  %v86 = vld [vmem:[%s85] sm:$0xf]
  %v87 = vunpack.c.l.bf16 %v86
  %v88 = vunpack.c.h.bf16 %v86
  %s89 = scalar_lea.vmem %s1, 2316
  %s90 = scalar_lea.vmem %s0, 2328
  %v91 = vld [vmem:[%s90] sm:$0xf]
  %v92 = vunpack.c.l.bf16 %v91
  %v93 = vunpack.c.h.bf16 %v91
  %s94 = scalar_lea.vmem %s1, 24
  %s95 = scalar_lea.vmem %s0, 1464
  %v96 = vld [vmem:[%s95] sm:$0xf]
  %v97 = vunpack.c.l.bf16 %v96
  %v98 = vunpack.c.h.bf16 %v96
  %s99 = scalar_lea.vmem %s1, 888
  %s100 = scalar_lea.vmem %s0, 600
  %v101 = vld [vmem:[%s100] sm:$0xf]
  %v102 = vunpack.c.l.bf16 %v101
  %v103 = vunpack.c.h.bf16 %v101
  %s104 = scalar_lea.vmem %s1, 1752
  %s105 = scalar_lea.vmem %s0, 2040
  %v106 = vld [vmem:[%s105] sm:$0xf]
  %v107 = vunpack.c.l.bf16 %v106
  %v108 = vunpack.c.h.bf16 %v106
  %s109 = scalar_lea.vmem %s1, 312
  %s110 = scalar_lea.vmem %s0, 1176
  %v111 = vld [vmem:[%s110] sm:$0xf]
  %v112 = vunpack.c.l.bf16 %v111
  %v113 = vunpack.c.h.bf16 %v111
  %s114 = scalar_lea.vmem %s1, 1176
  %s115 = scalar_lea.vmem %s0, 312
  %v116 = vld [vmem:[%s115] sm:$0xf]
  %v117 = vunpack.c.l.bf16 %v116
  %v118 = vunpack.c.h.bf16 %v116
  %s119 = scalar_lea.vmem %s1, 2040
  %s120 = scalar_lea.vmem %s0, 1752
  %v121 = vld [vmem:[%s120] sm:$0xf]
  %v122 = vunpack.c.l.bf16 %v121
  %v123 = vunpack.c.h.bf16 %v121
  %s124 = scalar_lea.vmem %s1, 600
  %s125 = scalar_lea.vmem %s0, 888
  %v126 = vld [vmem:[%s125] sm:$0xf]
  %v127 = vunpack.c.l.bf16 %v126
  %v128 = vunpack.c.h.bf16 %v126
  %s129 = scalar_lea.vmem %s1, 1464
  %s130 = scalar_lea.vmem %s0, 24
  %v131 = vld [vmem:[%s130] sm:$0xf]
  %v132 = vunpack.c.l.bf16 %v131
  %v133 = vunpack.c.h.bf16 %v131
  %s134 = scalar_lea.vmem %s1, 2328
  %s135 = scalar_lea.vmem %s0, 2340
  %v136 = vld [vmem:[%s135] sm:$0xf]
  %v137 = vunpack.c.l.bf16 %v136
  %v138 = vunpack.c.h.bf16 %v136
  %s139 = scalar_lea.vmem %s1, 36
  %s140 = scalar_lea.vmem %s0, 1476
  %v141 = vld [vmem:[%s140] sm:$0xf]
  %v142 = vunpack.c.l.bf16 %v141
  %v143 = vunpack.c.h.bf16 %v141
  %s144 = scalar_lea.vmem %s1, 900
  %s145 = scalar_lea.vmem %s0, 612
  %v146 = vld [vmem:[%s145] sm:$0xf]
  %v147 = vunpack.c.l.bf16 %v146
  %v148 = vunpack.c.h.bf16 %v146
  %s149 = scalar_lea.vmem %s1, 1764
  %s150 = scalar_lea.vmem %s0, 2052
  %v151 = vld [vmem:[%s150] sm:$0xf]
  %v152 = vunpack.c.l.bf16 %v151
  %v153 = vunpack.c.h.bf16 %v151
  %s154 = scalar_lea.vmem %s1, 324
  %s155 = scalar_lea.vmem %s0, 1188
  %v156 = vld [vmem:[%s155] sm:$0xf]
  %v157 = vunpack.c.l.bf16 %v156
  %v158 = vunpack.c.h.bf16 %v156
  %s159 = scalar_lea.vmem %s1, 1188
  %s160 = scalar_lea.vmem %s0, 324
  %v161 = vld [vmem:[%s160] sm:$0xf]
  %v162 = vunpack.c.l.bf16 %v161
  %v163 = vunpack.c.h.bf16 %v161
  %s164 = scalar_lea.vmem %s1, 2052
  %s165 = scalar_lea.vmem %s0, 1764
  %v166 = vld [vmem:[%s165] sm:$0xf]
  %v167 = vunpack.c.l.bf16 %v166
  %v168 = vunpack.c.h.bf16 %v166
  %s169 = scalar_lea.vmem %s1, 612
  %s170 = scalar_lea.vmem %s0, 900
  %v171 = vld [vmem:[%s170] sm:$0xf]
  %v172 = vunpack.c.l.bf16 %v171
  %v173 = vunpack.c.h.bf16 %v171
  %s174 = scalar_lea.vmem %s1, 1476
  %s175 = scalar_lea.vmem %s0, 36
  %v176 = vld [vmem:[%s175] sm:$0xf]
  %v177 = vunpack.c.l.bf16 %v176
  %v178 = vunpack.c.h.bf16 %v176
  %s179 = scalar_lea.vmem %s1, 2340
  %s180 = scalar_lea.vmem %s0, 2352
  %v181 = vld [vmem:[%s180] sm:$0xf]
  %v182 = vunpack.c.l.bf16 %v181
  %v183 = vunpack.c.h.bf16 %v181
  %s184 = scalar_lea.vmem %s1, 48
  %s185 = scalar_lea.vmem %s0, 1488
  %v186 = vld [vmem:[%s185] sm:$0xf]
  %v187 = vunpack.c.l.bf16 %v186
  %v188 = vunpack.c.h.bf16 %v186
  %s189 = scalar_lea.vmem %s1, 912
  %s190 = scalar_lea.vmem %s0, 624
  %v191 = vld [vmem:[%s190] sm:$0xf]
  %v192 = vunpack.c.l.bf16 %v191
  %v193 = vunpack.c.h.bf16 %v191
  %s194 = scalar_lea.vmem %s1, 1776
  %s195 = scalar_lea.vmem %s0, 2064
  %v196 = vld [vmem:[%s195] sm:$0xf]
  %v197 = vunpack.c.l.bf16 %v196
  %v198 = vunpack.c.h.bf16 %v196
  %s199 = scalar_lea.vmem %s1, 336
  %s200 = scalar_lea.vmem %s0, 1200
  %v201 = vld [vmem:[%s200] sm:$0xf]
  %v202 = vunpack.c.l.bf16 %v201
  %v203 = vunpack.c.h.bf16 %v201
  %s204 = scalar_lea.vmem %s1, 1200
  %s205 = scalar_lea.vmem %s0, 336
  %v206 = vld [vmem:[%s205] sm:$0xf]
  %v207 = vunpack.c.l.bf16 %v206
  %v208 = vunpack.c.h.bf16 %v206
  %s209 = scalar_lea.vmem %s1, 2064
  %s210 = scalar_lea.vmem %s0, 1776
  %v211 = vld [vmem:[%s210] sm:$0xf]
  %v212 = vunpack.c.l.bf16 %v211
  %v213 = vunpack.c.h.bf16 %v211
  %s214 = scalar_lea.vmem %s1, 624
  %s215 = scalar_lea.vmem %s0, 912
  %v216 = vld [vmem:[%s215] sm:$0xf]
  %v217 = vunpack.c.l.bf16 %v216
  %v218 = vunpack.c.h.bf16 %v216
  %s219 = scalar_lea.vmem %s1, 1488
  %s220 = scalar_lea.vmem %s0, 48
  %v221 = vld [vmem:[%s220] sm:$0xf]
  %v222 = vunpack.c.l.bf16 %v221
  %v223 = vunpack.c.h.bf16 %v221
  %s224 = scalar_lea.vmem %s1, 2352
  %s225 = scalar_lea.vmem %s0, 2364
  %v226 = vld [vmem:[%s225] sm:$0xf]
  %v227 = vunpack.c.l.bf16 %v226
  %v228 = vunpack.c.h.bf16 %v226
  %s229 = scalar_lea.vmem %s1, 60
  %s230 = scalar_lea.vmem %s0, 1500
  %v231 = vld [vmem:[%s230] sm:$0xf]
  %v232 = vunpack.c.l.bf16 %v231
  %v233 = vunpack.c.h.bf16 %v231
  %s234 = scalar_lea.vmem %s1, 924
  %s235 = scalar_lea.vmem %s0, 636
  %v236 = vld [vmem:[%s235] sm:$0xf]
  %v237 = vunpack.c.l.bf16 %v236
  %v238 = vunpack.c.h.bf16 %v236
  %s239 = scalar_lea.vmem %s1, 1788
  %s240 = scalar_lea.vmem %s0, 2076
  %v241 = vld [vmem:[%s240] sm:$0xf]
  %v242 = vunpack.c.l.bf16 %v241
  %v243 = vunpack.c.h.bf16 %v241
  %s244 = scalar_lea.vmem %s1, 348
  %s245 = scalar_lea.vmem %s0, 1212
  %v246 = vld [vmem:[%s245] sm:$0xf]
  %v247 = vunpack.c.l.bf16 %v246
  %v248 = vunpack.c.h.bf16 %v246
  %s249 = scalar_lea.vmem %s1, 1212
  %s250 = scalar_lea.vmem %s0, 348
  %v251 = vld [vmem:[%s250] sm:$0xf]
  %v252 = vunpack.c.l.bf16 %v251
  %v253 = vunpack.c.h.bf16 %v251
  %s254 = scalar_lea.vmem %s1, 2076
  %s255 = scalar_lea.vmem %s0, 1788
  %v256 = vld [vmem:[%s255] sm:$0xf]
  %v257 = vunpack.c.l.bf16 %v256
  %v258 = vunpack.c.h.bf16 %v256
  %s259 = scalar_lea.vmem %s1, 636
  %s260 = scalar_lea.vmem %s0, 924
  %v261 = vld [vmem:[%s260] sm:$0xf]
  %v262 = vunpack.c.l.bf16 %v261
  %v263 = vunpack.c.h.bf16 %v261
  %s264 = scalar_lea.vmem %s1, 1500
  %s265 = scalar_lea.vmem %s0, 60
  %v266 = vld [vmem:[%s265] sm:$0xf]
  %v267 = vunpack.c.l.bf16 %v266
  %v268 = vunpack.c.h.bf16 %v266
  %s269 = scalar_lea.vmem %s1, 2364
  %s270 = scalar_lea.vmem %s0, 2376
  %v271 = vld [vmem:[%s270] sm:$0xf]
  %v272 = vunpack.c.l.bf16 %v271
  %v273 = vunpack.c.h.bf16 %v271
  %s274 = scalar_lea.vmem %s1, 72
  %s275 = scalar_lea.vmem %s0, 1512
  %v276 = vld [vmem:[%s275] sm:$0xf]
  %v277 = vunpack.c.l.bf16 %v276
  %v278 = vunpack.c.h.bf16 %v276
  %s279 = scalar_lea.vmem %s1, 936
  %s280 = scalar_lea.vmem %s0, 648
  %v281 = vld [vmem:[%s280] sm:$0xf]
  %v282 = vunpack.c.l.bf16 %v281
  %v283 = vunpack.c.h.bf16 %v281
  %s284 = scalar_lea.vmem %s1, 1800
  %s285 = scalar_lea.vmem %s0, 2088
  %v286 = vld [vmem:[%s285] sm:$0xf]
  %v287 = vunpack.c.l.bf16 %v286
  %v288 = vunpack.c.h.bf16 %v286
  %s289 = scalar_lea.vmem %s1, 360
  %s290 = scalar_lea.vmem %s0, 1224
  %v291 = vld [vmem:[%s290] sm:$0xf]
  %v292 = vunpack.c.l.bf16 %v291
  %v293 = vunpack.c.h.bf16 %v291
  %s294 = scalar_lea.vmem %s1, 1224
  %s295 = scalar_lea.vmem %s0, 360
  %v296 = vld [vmem:[%s295] sm:$0xf]
  %v297 = vunpack.c.l.bf16 %v296
  %v298 = vunpack.c.h.bf16 %v296
  %s299 = scalar_lea.vmem %s1, 2088
  %s300 = scalar_lea.vmem %s0, 1800
  %v301 = vld [vmem:[%s300] sm:$0xf]
  %v302 = vunpack.c.l.bf16 %v301
  %v303 = vunpack.c.h.bf16 %v301
  %s304 = scalar_lea.vmem %s1, 648
  %s305 = scalar_lea.vmem %s0, 936
  %v306 = vld [vmem:[%s305] sm:$0xf]
  %v307 = vunpack.c.l.bf16 %v306
  %v308 = vunpack.c.h.bf16 %v306
  %s309 = scalar_lea.vmem %s1, 1512
  %s310 = scalar_lea.vmem %s0, 72
  %v311 = vld [vmem:[%s310] sm:$0xf]
  %v312 = vunpack.c.l.bf16 %v311
  %v313 = vunpack.c.h.bf16 %v311
  %s314 = scalar_lea.vmem %s1, 2376
  %s315 = scalar_lea.vmem %s0, 2388
  %v316 = vld [vmem:[%s315] sm:$0xf]
  %v317 = vunpack.c.l.bf16 %v316
  %v318 = vunpack.c.h.bf16 %v316
  %s319 = scalar_lea.vmem %s1, 84
  %s320 = scalar_lea.vmem %s0, 1524
  %v321 = vld [vmem:[%s320] sm:$0xf]
  %v322 = vunpack.c.l.bf16 %v321
  %v323 = vunpack.c.h.bf16 %v321
  %s324 = scalar_lea.vmem %s1, 948
  %s325 = scalar_lea.vmem %s0, 660
  %v326 = vld [vmem:[%s325] sm:$0xf]
  %v327 = vunpack.c.l.bf16 %v326
  %v328 = vunpack.c.h.bf16 %v326
  %s329 = scalar_lea.vmem %s1, 1812
  %s330 = scalar_lea.vmem %s0, 2100
  %v331 = vld [vmem:[%s330] sm:$0xf]
  %v332 = vunpack.c.l.bf16 %v331
  %v333 = vunpack.c.h.bf16 %v331
  %s334 = scalar_lea.vmem %s1, 372
  %s335 = scalar_lea.vmem %s0, 1236
  %v336 = vld [vmem:[%s335] sm:$0xf]
  %v337 = vunpack.c.l.bf16 %v336
  %v338 = vunpack.c.h.bf16 %v336
  %s339 = scalar_lea.vmem %s1, 1236
  %s340 = scalar_lea.vmem %s0, 372
  %v341 = vld [vmem:[%s340] sm:$0xf]
  %v342 = vunpack.c.l.bf16 %v341
  %v343 = vunpack.c.h.bf16 %v341
  %s344 = scalar_lea.vmem %s1, 2100
  %s345 = scalar_lea.vmem %s0, 1812
  %v346 = vld [vmem:[%s345] sm:$0xf]
  %v347 = vunpack.c.l.bf16 %v346
  %v348 = vunpack.c.h.bf16 %v346
  %s349 = scalar_lea.vmem %s1, 660
  %s350 = scalar_lea.vmem %s0, 948
  %v351 = vld [vmem:[%s350] sm:$0xf]
  %v352 = vunpack.c.l.bf16 %v351
  %v353 = vunpack.c.h.bf16 %v351
  %s354 = scalar_lea.vmem %s1, 1524
  %s355 = scalar_lea.vmem %s0, 84
  %v356 = vld [vmem:[%s355] sm:$0xf]
  %v357 = vunpack.c.l.bf16 %v356
  %v358 = vunpack.c.h.bf16 %v356
  %s359 = scalar_lea.vmem %s1, 2388
  %s360 = scalar_lea.vmem %s0, 2400
  %v361 = vld [vmem:[%s360] sm:$0xf]
  %v362 = vunpack.c.l.bf16 %v361
  %v363 = vunpack.c.h.bf16 %v361
  %s364 = scalar_lea.vmem %s1, 96
  %s365 = scalar_lea.vmem %s0, 1536
  %v366 = vld [vmem:[%s365] sm:$0xf]
  %v367 = vunpack.c.l.bf16 %v366
  %v368 = vunpack.c.h.bf16 %v366
  %s369 = scalar_lea.vmem %s1, 960
  %s370 = scalar_lea.vmem %s0, 672
  %v371 = vld [vmem:[%s370] sm:$0xf]
  %v372 = vunpack.c.l.bf16 %v371
  %v373 = vunpack.c.h.bf16 %v371
  %s374 = scalar_lea.vmem %s1, 1824
  %s375 = scalar_lea.vmem %s0, 2112
  %v376 = vld [vmem:[%s375] sm:$0xf]
  %v377 = vunpack.c.l.bf16 %v376
  %v378 = vunpack.c.h.bf16 %v376
  %s379 = scalar_lea.vmem %s1, 384
  %s380 = scalar_lea.vmem %s0, 1248
  %v381 = vld [vmem:[%s380] sm:$0xf]
  %v382 = vunpack.c.l.bf16 %v381
  %v383 = vunpack.c.h.bf16 %v381
  %s384 = scalar_lea.vmem %s1, 1248
  %s385 = scalar_lea.vmem %s0, 384
  %v386 = vld [vmem:[%s385] sm:$0xf]
  %v387 = vunpack.c.l.bf16 %v386
  %v388 = vunpack.c.h.bf16 %v386
  %s389 = scalar_lea.vmem %s1, 2112
  %s390 = scalar_lea.vmem %s0, 1824
  %v391 = vld [vmem:[%s390] sm:$0xf]
  %v392 = vunpack.c.l.bf16 %v391
  %v393 = vunpack.c.h.bf16 %v391
  %s394 = scalar_lea.vmem %s1, 672
  %s395 = scalar_lea.vmem %s0, 960
  %v396 = vld [vmem:[%s395] sm:$0xf]
  %v397 = vunpack.c.l.bf16 %v396
  %v398 = vunpack.c.h.bf16 %v396
  %s399 = scalar_lea.vmem %s1, 1536
  %s400 = scalar_lea.vmem %s0, 96
  %v401 = vld [vmem:[%s400] sm:$0xf]
  %v402 = vunpack.c.l.bf16 %v401
  %v403 = vunpack.c.h.bf16 %v401
  %s404 = scalar_lea.vmem %s1, 2400
  %s405 = scalar_lea.vmem %s0, 2412
  %v406 = vld [vmem:[%s405] sm:$0xf]
  %v407 = vunpack.c.l.bf16 %v406
  %v408 = vunpack.c.h.bf16 %v406
  %s409 = scalar_lea.vmem %s1, 108
  %s410 = scalar_lea.vmem %s0, 1548
  %v411 = vld [vmem:[%s410] sm:$0xf]
  %v412 = vunpack.c.l.bf16 %v411
  %v413 = vunpack.c.h.bf16 %v411
  %s414 = scalar_lea.vmem %s1, 972
  %s415 = scalar_lea.vmem %s0, 684
  %v416 = vld [vmem:[%s415] sm:$0xf]
  %v417 = vunpack.c.l.bf16 %v416
  %v418 = vunpack.c.h.bf16 %v416
  %s419 = scalar_lea.vmem %s1, 1836
  %s420 = scalar_lea.vmem %s0, 2124
  %v421 = vld [vmem:[%s420] sm:$0xf]
  %v422 = vunpack.c.l.bf16 %v421
  %v423 = vunpack.c.h.bf16 %v421
  %s424 = scalar_lea.vmem %s1, 396
  %s425 = scalar_lea.vmem %s0, 1260
  %v426 = vld [vmem:[%s425] sm:$0xf]
  %v427 = vunpack.c.l.bf16 %v426
  %v428 = vunpack.c.h.bf16 %v426
  %s429 = scalar_lea.vmem %s1, 1260
  %s430 = scalar_lea.vmem %s0, 396
  %v431 = vld [vmem:[%s430] sm:$0xf]
  %v432 = vunpack.c.l.bf16 %v431
  %v433 = vunpack.c.h.bf16 %v431
  %s434 = scalar_lea.vmem %s1, 2124
  %s435 = scalar_lea.vmem %s0, 1836
  %v436 = vld [vmem:[%s435] sm:$0xf]
  %v437 = vunpack.c.l.bf16 %v436
  %v438 = vunpack.c.h.bf16 %v436
  %s439 = scalar_lea.vmem %s1, 684
  %s440 = scalar_lea.vmem %s0, 972
  %v441 = vld [vmem:[%s440] sm:$0xf]
  %v442 = vunpack.c.l.bf16 %v441
  %v443 = vunpack.c.h.bf16 %v441
  %s444 = scalar_lea.vmem %s1, 1548
  %s445 = scalar_lea.vmem %s0, 108
  %v446 = vld [vmem:[%s445] sm:$0xf]
  %v447 = vunpack.c.l.bf16 %v446
  %v448 = vunpack.c.h.bf16 %v446
  %s449 = scalar_lea.vmem %s1, 2412
  %s450 = scalar_lea.vmem %s0, 2424
  %v451 = vld [vmem:[%s450] sm:$0xf]
  %v452 = vunpack.c.l.bf16 %v451
  %v453 = vunpack.c.h.bf16 %v451
  %s454 = scalar_lea.vmem %s1, 120
  %s455 = scalar_lea.vmem %s0, 1560
  %v456 = vld [vmem:[%s455] sm:$0xf]
  %v457 = vunpack.c.l.bf16 %v456
  %v458 = vunpack.c.h.bf16 %v456
  %s459 = scalar_lea.vmem %s1, 984
  %s460 = scalar_lea.vmem %s0, 696
  %v461 = vld [vmem:[%s460] sm:$0xf]
  %v462 = vunpack.c.l.bf16 %v461
  %v463 = vunpack.c.h.bf16 %v461
  %s464 = scalar_lea.vmem %s1, 1848
  %s465 = scalar_lea.vmem %s0, 2136
  %v466 = vld [vmem:[%s465] sm:$0xf]
  %v467 = vunpack.c.l.bf16 %v466
  %v468 = vunpack.c.h.bf16 %v466
  %s469 = scalar_lea.vmem %s1, 408
  %s470 = scalar_lea.vmem %s0, 1272
  %v471 = vld [vmem:[%s470] sm:$0xf]
  %v472 = vunpack.c.l.bf16 %v471
  %v473 = vunpack.c.h.bf16 %v471
  %s474 = scalar_lea.vmem %s1, 1272
  %s475 = scalar_lea.vmem %s0, 408
  %v476 = vld [vmem:[%s475] sm:$0xf]
  %v477 = vunpack.c.l.bf16 %v476
  %v478 = vunpack.c.h.bf16 %v476
  %s479 = scalar_lea.vmem %s1, 2136
  %s480 = scalar_lea.vmem %s0, 1848
  %v481 = vld [vmem:[%s480] sm:$0xf]
  %v482 = vunpack.c.l.bf16 %v481
  %v483 = vunpack.c.h.bf16 %v481
  %s484 = scalar_lea.vmem %s1, 696
  %s485 = scalar_lea.vmem %s0, 984
  %v486 = vld [vmem:[%s485] sm:$0xf]
  %v487 = vunpack.c.l.bf16 %v486
  %v488 = vunpack.c.h.bf16 %v486
  %s489 = scalar_lea.vmem %s1, 1560
  %s490 = scalar_lea.vmem %s0, 120
  %v491 = vld [vmem:[%s490] sm:$0xf]
  %v492 = vunpack.c.l.bf16 %v491
  %v493 = vunpack.c.h.bf16 %v491
  %s494 = scalar_lea.vmem %s1, 2424
  %s495 = scalar_lea.vmem %s0, 2436
  %v496 = vld [vmem:[%s495] sm:$0xf]
  %v497 = vunpack.c.l.bf16 %v496
  %v498 = vunpack.c.h.bf16 %v496
  %s499 = scalar_lea.vmem %s1, 132
  %s500 = scalar_lea.vmem %s0, 1572
  %v501 = vld [vmem:[%s500] sm:$0xf]
  %v502 = vunpack.c.l.bf16 %v501
  %v503 = vunpack.c.h.bf16 %v501
  %s504 = scalar_lea.vmem %s1, 996
  %s505 = scalar_lea.vmem %s0, 708
  %v506 = vld [vmem:[%s505] sm:$0xf]
  %v507 = vunpack.c.l.bf16 %v506
  %v508 = vunpack.c.h.bf16 %v506
  %s509 = scalar_lea.vmem %s1, 1860
  %s510 = scalar_lea.vmem %s0, 2148
  %v511 = vld [vmem:[%s510] sm:$0xf]
  %v512 = vunpack.c.l.bf16 %v511
  %v513 = vunpack.c.h.bf16 %v511
  %s514 = scalar_lea.vmem %s1, 420
  %s515 = scalar_lea.vmem %s0, 1284
  %v516 = vld [vmem:[%s515] sm:$0xf]
  %v517 = vunpack.c.l.bf16 %v516
  %v518 = vunpack.c.h.bf16 %v516
  %s519 = scalar_lea.vmem %s1, 1284
  %s520 = scalar_lea.vmem %s0, 420
  %v521 = vld [vmem:[%s520] sm:$0xf]
  %v522 = vunpack.c.l.bf16 %v521
  %v523 = vunpack.c.h.bf16 %v521
  %s524 = scalar_lea.vmem %s1, 2148
  %s525 = scalar_lea.vmem %s0, 1860
  %v526 = vld [vmem:[%s525] sm:$0xf]
  %v527 = vunpack.c.l.bf16 %v526
  %v528 = vunpack.c.h.bf16 %v526
  %s529 = scalar_lea.vmem %s1, 708
  %s530 = scalar_lea.vmem %s0, 996
  %v531 = vld [vmem:[%s530] sm:$0xf]
  %v532 = vunpack.c.l.bf16 %v531
  %v533 = vunpack.c.h.bf16 %v531
  %s534 = scalar_lea.vmem %s1, 1572
  %s535 = scalar_lea.vmem %s0, 132
  %v536 = vld [vmem:[%s535] sm:$0xf]
  %v537 = vunpack.c.l.bf16 %v536
  %v538 = vunpack.c.h.bf16 %v536
  %s539 = scalar_lea.vmem %s1, 2436
  %s540 = scalar_lea.vmem %s0, 2448
  %v541 = vld [vmem:[%s540] sm:$0xf]
  %v542 = vunpack.c.l.bf16 %v541
  %v543 = vunpack.c.h.bf16 %v541
  %s544 = scalar_lea.vmem %s1, 144
  %s545 = scalar_lea.vmem %s0, 1584
  %v546 = vld [vmem:[%s545] sm:$0xf]
  %v547 = vunpack.c.l.bf16 %v546
  %v548 = vunpack.c.h.bf16 %v546
  %s549 = scalar_lea.vmem %s1, 1008
  %s550 = scalar_lea.vmem %s0, 720
  %v551 = vld [vmem:[%s550] sm:$0xf]
  %v552 = vunpack.c.l.bf16 %v551
  %v553 = vunpack.c.h.bf16 %v551
  %s554 = scalar_lea.vmem %s1, 1872
  %s555 = scalar_lea.vmem %s0, 2160
  %v556 = vld [vmem:[%s555] sm:$0xf]
  %v557 = vunpack.c.l.bf16 %v556
  %v558 = vunpack.c.h.bf16 %v556
  %s559 = scalar_lea.vmem %s1, 432
  %s560 = scalar_lea.vmem %s0, 1296
  %v561 = vld [vmem:[%s560] sm:$0xf]
  %v562 = vunpack.c.l.bf16 %v561
  %v563 = vunpack.c.h.bf16 %v561
  %s564 = scalar_lea.vmem %s1, 1296
  %s565 = scalar_lea.vmem %s0, 432
  %v566 = vld [vmem:[%s565] sm:$0xf]
  %v567 = vunpack.c.l.bf16 %v566
  %v568 = vunpack.c.h.bf16 %v566
  %s569 = scalar_lea.vmem %s1, 2160
  %s570 = scalar_lea.vmem %s0, 1872
  %v571 = vld [vmem:[%s570] sm:$0xf]
  %v572 = vunpack.c.l.bf16 %v571
  %v573 = vunpack.c.h.bf16 %v571
  %s574 = scalar_lea.vmem %s1, 720
  %s575 = scalar_lea.vmem %s0, 1008
  %v576 = vld [vmem:[%s575] sm:$0xf]
  %v577 = vunpack.c.l.bf16 %v576
  %v578 = vunpack.c.h.bf16 %v576
  %s579 = scalar_lea.vmem %s1, 1584
  %s580 = scalar_lea.vmem %s0, 144
  %v581 = vld [vmem:[%s580] sm:$0xf]
  %v582 = vunpack.c.l.bf16 %v581
  %v583 = vunpack.c.h.bf16 %v581
  %s584 = scalar_lea.vmem %s1, 2448
  %s585 = scalar_lea.vmem %s0, 2460
  %v586 = vld [vmem:[%s585] sm:$0xf]
  %v587 = vunpack.c.l.bf16 %v586
  %v588 = vunpack.c.h.bf16 %v586
  %s589 = scalar_lea.vmem %s1, 156
  %s590 = scalar_lea.vmem %s0, 1596
  %v591 = vld [vmem:[%s590] sm:$0xf]
  %v592 = vunpack.c.l.bf16 %v591
  %v593 = vunpack.c.h.bf16 %v591
  %s594 = scalar_lea.vmem %s1, 1020
  %s595 = scalar_lea.vmem %s0, 732
  %v596 = vld [vmem:[%s595] sm:$0xf]
  %v597 = vunpack.c.l.bf16 %v596
  %v598 = vunpack.c.h.bf16 %v596
  %s599 = scalar_lea.vmem %s1, 1884
  %s600 = scalar_lea.vmem %s0, 2172
  %v601 = vld [vmem:[%s600] sm:$0xf]
  %v602 = vunpack.c.l.bf16 %v601
  %v603 = vunpack.c.h.bf16 %v601
  %s604 = scalar_lea.vmem %s1, 444
  %s605 = scalar_lea.vmem %s0, 1308
  %v606 = vld [vmem:[%s605] sm:$0xf]
  %v607 = vunpack.c.l.bf16 %v606
  %v608 = vunpack.c.h.bf16 %v606
  %s609 = scalar_lea.vmem %s1, 1308
  %s610 = scalar_lea.vmem %s0, 444
  %v611 = vld [vmem:[%s610] sm:$0xf]
  %v612 = vunpack.c.l.bf16 %v611
  %v613 = vunpack.c.h.bf16 %v611
  %s614 = scalar_lea.vmem %s1, 2172
  %s615 = scalar_lea.vmem %s0, 1884
  %v616 = vld [vmem:[%s615] sm:$0xf]
  %v617 = vunpack.c.l.bf16 %v616
  %v618 = vunpack.c.h.bf16 %v616
  %s619 = scalar_lea.vmem %s1, 732
  %s620 = scalar_lea.vmem %s0, 1020
  %v621 = vld [vmem:[%s620] sm:$0xf]
  %v622 = vunpack.c.l.bf16 %v621
  %v623 = vunpack.c.h.bf16 %v621
  %s624 = scalar_lea.vmem %s1, 1596
  %s625 = scalar_lea.vmem %s0, 156
  %v626 = vld [vmem:[%s625] sm:$0xf]
  %v627 = vunpack.c.l.bf16 %v626
  %v628 = vunpack.c.h.bf16 %v626
  %s629 = scalar_lea.vmem %s1, 2460
  %s630 = scalar_lea.vmem %s0, 2472
  %v631 = vld [vmem:[%s630] sm:$0xf]
  %v632 = vunpack.c.l.bf16 %v631
  %v633 = vunpack.c.h.bf16 %v631
  %s634 = scalar_lea.vmem %s1, 168
  %s635 = scalar_lea.vmem %s0, 1608
  %v636 = vld [vmem:[%s635] sm:$0xf]
  %v637 = vunpack.c.l.bf16 %v636
  %v638 = vunpack.c.h.bf16 %v636
  %s639 = scalar_lea.vmem %s1, 1032
  %s640 = scalar_lea.vmem %s0, 744
  %v641 = vld [vmem:[%s640] sm:$0xf]
  %v642 = vunpack.c.l.bf16 %v641
  %v643 = vunpack.c.h.bf16 %v641
  %s644 = scalar_lea.vmem %s1, 1896
  %s645 = scalar_lea.vmem %s0, 2184
  %v646 = vld [vmem:[%s645] sm:$0xf]
  %v647 = vunpack.c.l.bf16 %v646
  %v648 = vunpack.c.h.bf16 %v646
  %s649 = scalar_lea.vmem %s1, 456
  %s650 = scalar_lea.vmem %s0, 1320
  %v651 = vld [vmem:[%s650] sm:$0xf]
  %v652 = vunpack.c.l.bf16 %v651
  %v653 = vunpack.c.h.bf16 %v651
  %s654 = scalar_lea.vmem %s1, 1320
  %s655 = scalar_lea.vmem %s0, 456
  %v656 = vld [vmem:[%s655] sm:$0xf]
  %v657 = vunpack.c.l.bf16 %v656
  %v658 = vunpack.c.h.bf16 %v656
  %s659 = scalar_lea.vmem %s1, 2184
  %s660 = scalar_lea.vmem %s0, 1896
  %v661 = vld [vmem:[%s660] sm:$0xf]
  %v662 = vunpack.c.l.bf16 %v661
  %v663 = vunpack.c.h.bf16 %v661
  %s664 = scalar_lea.vmem %s1, 744
  %s665 = scalar_lea.vmem %s0, 1032
  %v666 = vld [vmem:[%s665] sm:$0xf]
  %v667 = vunpack.c.l.bf16 %v666
  %v668 = vunpack.c.h.bf16 %v666
  %s669 = scalar_lea.vmem %s1, 1608
  %s670 = scalar_lea.vmem %s0, 168
  %v671 = vld [vmem:[%s670] sm:$0xf]
  %v672 = vunpack.c.l.bf16 %v671
  %v673 = vunpack.c.h.bf16 %v671
  %s674 = scalar_lea.vmem %s1, 2472
  %s675 = scalar_lea.vmem %s0, 2484
  %v676 = vld [vmem:[%s675] sm:$0xf]
  %v677 = vunpack.c.l.bf16 %v676
  %v678 = vunpack.c.h.bf16 %v676
  %s679 = scalar_lea.vmem %s1, 180
  %s680 = scalar_lea.vmem %s0, 1620
  %v681 = vld [vmem:[%s680] sm:$0xf]
  %v682 = vunpack.c.l.bf16 %v681
  %v683 = vunpack.c.h.bf16 %v681
  %s684 = scalar_lea.vmem %s1, 1044
  %s685 = scalar_lea.vmem %s0, 756
  %v686 = vld [vmem:[%s685] sm:$0xf]
  %v687 = vunpack.c.l.bf16 %v686
  %v688 = vunpack.c.h.bf16 %v686
  %s689 = scalar_lea.vmem %s1, 1908
  %s690 = scalar_lea.vmem %s0, 2196
  %v691 = vld [vmem:[%s690] sm:$0xf]
  %v692 = vunpack.c.l.bf16 %v691
  %v693 = vunpack.c.h.bf16 %v691
  %s694 = scalar_lea.vmem %s1, 468
  %s695 = scalar_lea.vmem %s0, 1332
  %v696 = vld [vmem:[%s695] sm:$0xf]
  %v697 = vunpack.c.l.bf16 %v696
  %v698 = vunpack.c.h.bf16 %v696
  %s699 = scalar_lea.vmem %s1, 1332
  %s700 = scalar_lea.vmem %s0, 468
  %v701 = vld [vmem:[%s700] sm:$0xf]
  %v702 = vunpack.c.l.bf16 %v701
  %v703 = vunpack.c.h.bf16 %v701
  %s704 = scalar_lea.vmem %s1, 2196
  %s705 = scalar_lea.vmem %s0, 1908
  %v706 = vld [vmem:[%s705] sm:$0xf]
  %v707 = vunpack.c.l.bf16 %v706
  %v708 = vunpack.c.h.bf16 %v706
  %s709 = scalar_lea.vmem %s1, 756
  %s710 = scalar_lea.vmem %s0, 1044
  %v711 = vld [vmem:[%s710] sm:$0xf]
  %v712 = vunpack.c.l.bf16 %v711
  %v713 = vunpack.c.h.bf16 %v711
  %s714 = scalar_lea.vmem %s1, 1620
  %s715 = scalar_lea.vmem %s0, 180
  %v716 = vld [vmem:[%s715] sm:$0xf]
  %v717 = vunpack.c.l.bf16 %v716
  %v718 = vunpack.c.h.bf16 %v716
  %s719 = scalar_lea.vmem %s1, 2484
  %s720 = scalar_lea.vmem %s0, 2496
  %v721 = vld [vmem:[%s720] sm:$0xf]
  %v722 = vunpack.c.l.bf16 %v721
  %v723 = vunpack.c.h.bf16 %v721
  %s724 = scalar_lea.vmem %s1, 192
  %s725 = scalar_lea.vmem %s0, 1632
  %v726 = vld [vmem:[%s725] sm:$0xf]
  %v727 = vunpack.c.l.bf16 %v726
  %v728 = vunpack.c.h.bf16 %v726
  %s729 = scalar_lea.vmem %s1, 1056
  %s730 = scalar_lea.vmem %s0, 768
  %v731 = vld [vmem:[%s730] sm:$0xf]
  %v732 = vunpack.c.l.bf16 %v731
  %v733 = vunpack.c.h.bf16 %v731
  %s734 = scalar_lea.vmem %s1, 1920
  %s735 = scalar_lea.vmem %s0, 2208
  %v736 = vld [vmem:[%s735] sm:$0xf]
  %v737 = vunpack.c.l.bf16 %v736
  %v738 = vunpack.c.h.bf16 %v736
  %s739 = scalar_lea.vmem %s1, 480
  %s740 = scalar_lea.vmem %s0, 1344
  %v741 = vld [vmem:[%s740] sm:$0xf]
  %v742 = vunpack.c.l.bf16 %v741
  %v743 = vunpack.c.h.bf16 %v741
  %s744 = scalar_lea.vmem %s1, 1344
  %s745 = scalar_lea.vmem %s0, 480
  %v746 = vld [vmem:[%s745] sm:$0xf]
  %v747 = vunpack.c.l.bf16 %v746
  %v748 = vunpack.c.h.bf16 %v746
  %s749 = scalar_lea.vmem %s1, 2208
  %s750 = scalar_lea.vmem %s0, 1920
  %v751 = vld [vmem:[%s750] sm:$0xf]
  %v752 = vunpack.c.l.bf16 %v751
  %v753 = vunpack.c.h.bf16 %v751
  %s754 = scalar_lea.vmem %s1, 768
  %s755 = scalar_lea.vmem %s0, 1056
  %v756 = vld [vmem:[%s755] sm:$0xf]
  %v757 = vunpack.c.l.bf16 %v756
  %v758 = vunpack.c.h.bf16 %v756
  %s759 = scalar_lea.vmem %s1, 1632
  %s760 = scalar_lea.vmem %s0, 192
  %v761 = vld [vmem:[%s760] sm:$0xf]
  %v762 = vunpack.c.l.bf16 %v761
  %v763 = vunpack.c.h.bf16 %v761
  %s764 = scalar_lea.vmem %s1, 2496
  %s765 = scalar_lea.vmem %s0, 2508
  %v766 = vld [vmem:[%s765] sm:$0xf]
  %v767 = vunpack.c.l.bf16 %v766
  %v768 = vunpack.c.h.bf16 %v766
  %s769 = scalar_lea.vmem %s1, 204
  %s770 = scalar_lea.vmem %s0, 1644
  %v771 = vld [vmem:[%s770] sm:$0xf]
  %v772 = vunpack.c.l.bf16 %v771
  %v773 = vunpack.c.h.bf16 %v771
  %s774 = scalar_lea.vmem %s1, 1068
  %s775 = scalar_lea.vmem %s0, 780
  %v776 = vld [vmem:[%s775] sm:$0xf]
  %v777 = vunpack.c.l.bf16 %v776
  %v778 = vunpack.c.h.bf16 %v776
  %s779 = scalar_lea.vmem %s1, 1932
  %s780 = scalar_lea.vmem %s0, 2220
  %v781 = vld [vmem:[%s780] sm:$0xf]
  %v782 = vunpack.c.l.bf16 %v781
  %v783 = vunpack.c.h.bf16 %v781
  %s784 = scalar_lea.vmem %s1, 492
  %s785 = scalar_lea.vmem %s0, 1356
  %v786 = vld [vmem:[%s785] sm:$0xf]
  %v787 = vunpack.c.l.bf16 %v786
  %v788 = vunpack.c.h.bf16 %v786
  %s789 = scalar_lea.vmem %s1, 1356
  %s790 = scalar_lea.vmem %s0, 492
  %v791 = vld [vmem:[%s790] sm:$0xf]
  %v792 = vunpack.c.l.bf16 %v791
  %v793 = vunpack.c.h.bf16 %v791
  %s794 = scalar_lea.vmem %s1, 2220
  %s795 = scalar_lea.vmem %s0, 1932
  %v796 = vld [vmem:[%s795] sm:$0xf]
  %v797 = vunpack.c.l.bf16 %v796
  %v798 = vunpack.c.h.bf16 %v796
  %s799 = scalar_lea.vmem %s1, 780
  %s800 = scalar_lea.vmem %s0, 1068
  %v801 = vld [vmem:[%s800] sm:$0xf]
  %v802 = vunpack.c.l.bf16 %v801
  %v803 = vunpack.c.h.bf16 %v801
  %s804 = scalar_lea.vmem %s1, 1644
  %s805 = scalar_lea.vmem %s0, 204
  %v806 = vld [vmem:[%s805] sm:$0xf]
  %v807 = vunpack.c.l.bf16 %v806
  %v808 = vunpack.c.h.bf16 %v806
  %s809 = scalar_lea.vmem %s1, 2508
  %s810 = scalar_lea.vmem %s0, 2520
  %v811 = vld [vmem:[%s810] sm:$0xf]
  %v812 = vunpack.c.l.bf16 %v811
  %v813 = vunpack.c.h.bf16 %v811
  %s814 = scalar_lea.vmem %s1, 216
  %s815 = scalar_lea.vmem %s0, 1656
  %v816 = vld [vmem:[%s815] sm:$0xf]
  %v817 = vunpack.c.l.bf16 %v816
  %v818 = vunpack.c.h.bf16 %v816
  %s819 = scalar_lea.vmem %s1, 1080
  %s820 = scalar_lea.vmem %s0, 792
  %v821 = vld [vmem:[%s820] sm:$0xf]
  %v822 = vunpack.c.l.bf16 %v821
  %v823 = vunpack.c.h.bf16 %v821
  %s824 = scalar_lea.vmem %s1, 1944
  %s825 = scalar_lea.vmem %s0, 2232
  %v826 = vld [vmem:[%s825] sm:$0xf]
  %v827 = vunpack.c.l.bf16 %v826
  %v828 = vunpack.c.h.bf16 %v826
  %s829 = scalar_lea.vmem %s1, 504
  %s830 = scalar_lea.vmem %s0, 1368
  %v831 = vld [vmem:[%s830] sm:$0xf]
  %v832 = vunpack.c.l.bf16 %v831
  %v833 = vunpack.c.h.bf16 %v831
  %s834 = scalar_lea.vmem %s1, 1368
  %s835 = scalar_lea.vmem %s0, 504
  %v836 = vld [vmem:[%s835] sm:$0xf]
  %v837 = vunpack.c.l.bf16 %v836
  %v838 = vunpack.c.h.bf16 %v836
  %s839 = scalar_lea.vmem %s1, 2232
  %s840 = scalar_lea.vmem %s0, 1944
  %v841 = vld [vmem:[%s840] sm:$0xf]
  %v842 = vunpack.c.l.bf16 %v841
  %v843 = vunpack.c.h.bf16 %v841
  %s844 = scalar_lea.vmem %s1, 792
  %s845 = scalar_lea.vmem %s0, 1080
  %v846 = vld [vmem:[%s845] sm:$0xf]
  %v847 = vunpack.c.l.bf16 %v846
  %v848 = vunpack.c.h.bf16 %v846
  %s849 = scalar_lea.vmem %s1, 1656
  %s850 = scalar_lea.vmem %s0, 216
  %v851 = vld [vmem:[%s850] sm:$0xf]
  %v852 = vunpack.c.l.bf16 %v851
  %v853 = vunpack.c.h.bf16 %v851
  %s854 = scalar_lea.vmem %s1, 2520
  %s855 = scalar_lea.vmem %s0, 2532
  %v856 = vld [vmem:[%s855] sm:$0xf]
  %v857 = vunpack.c.l.bf16 %v856
  %v858 = vunpack.c.h.bf16 %v856
  %s859 = scalar_lea.vmem %s1, 228
  %s860 = scalar_lea.vmem %s0, 1668
  %v861 = vld [vmem:[%s860] sm:$0xf]
  %v862 = vunpack.c.l.bf16 %v861
  %v863 = vunpack.c.h.bf16 %v861
  %s864 = scalar_lea.vmem %s1, 1092
  %s865 = scalar_lea.vmem %s0, 804
  %v866 = vld [vmem:[%s865] sm:$0xf]
  %v867 = vunpack.c.l.bf16 %v866
  %v868 = vunpack.c.h.bf16 %v866
  %s869 = scalar_lea.vmem %s1, 1956
  %s870 = scalar_lea.vmem %s0, 2244
  %v871 = vld [vmem:[%s870] sm:$0xf]
  %v872 = vunpack.c.l.bf16 %v871
  %v873 = vunpack.c.h.bf16 %v871
  %s874 = scalar_lea.vmem %s1, 516
  %s875 = scalar_lea.vmem %s0, 1380
  %v876 = vld [vmem:[%s875] sm:$0xf]
  %v877 = vunpack.c.l.bf16 %v876
  %v878 = vunpack.c.h.bf16 %v876
  %s879 = scalar_lea.vmem %s1, 1380
  %s880 = scalar_lea.vmem %s0, 516
  %v881 = vld [vmem:[%s880] sm:$0xf]
  %v882 = vunpack.c.l.bf16 %v881
  %v883 = vunpack.c.h.bf16 %v881
  %s884 = scalar_lea.vmem %s1, 2244
  %s885 = scalar_lea.vmem %s0, 1956
  %v886 = vld [vmem:[%s885] sm:$0xf]
  %v887 = vunpack.c.l.bf16 %v886
  %v888 = vunpack.c.h.bf16 %v886
  %s889 = scalar_lea.vmem %s1, 804
  %s890 = scalar_lea.vmem %s0, 1092
  %v891 = vld [vmem:[%s890] sm:$0xf]
  %v892 = vunpack.c.l.bf16 %v891
  %v893 = vunpack.c.h.bf16 %v891
  %s894 = scalar_lea.vmem %s1, 1668
  %s895 = scalar_lea.vmem %s0, 228
  %v896 = vld [vmem:[%s895] sm:$0xf]
  %v897 = vunpack.c.l.bf16 %v896
  %v898 = vunpack.c.h.bf16 %v896
  %s899 = scalar_lea.vmem %s1, 2532
  %s900 = scalar_lea.vmem %s0, 2544
  %v901 = vld [vmem:[%s900] sm:$0xf]
  %v902 = vunpack.c.l.bf16 %v901
  %v903 = vunpack.c.h.bf16 %v901
  %s904 = scalar_lea.vmem %s1, 240
  %s905 = scalar_lea.vmem %s0, 1680
  %v906 = vld [vmem:[%s905] sm:$0xf]
  %v907 = vunpack.c.l.bf16 %v906
  %v908 = vunpack.c.h.bf16 %v906
  %s909 = scalar_lea.vmem %s1, 1104
  %s910 = scalar_lea.vmem %s0, 816
  %v911 = vld [vmem:[%s910] sm:$0xf]
  %v912 = vunpack.c.l.bf16 %v911
  %v913 = vunpack.c.h.bf16 %v911
  %s914 = scalar_lea.vmem %s1, 1968
  %s915 = scalar_lea.vmem %s0, 2256
  %v916 = vld [vmem:[%s915] sm:$0xf]
  %v917 = vunpack.c.l.bf16 %v916
  %v918 = vunpack.c.h.bf16 %v916
  %s919 = scalar_lea.vmem %s1, 528
  %s920 = scalar_lea.vmem %s0, 1392
  %v921 = vld [vmem:[%s920] sm:$0xf]
  %v922 = vunpack.c.l.bf16 %v921
  %v923 = vunpack.c.h.bf16 %v921
  %s924 = scalar_lea.vmem %s1, 1392
  %s925 = scalar_lea.vmem %s0, 528
  %v926 = vld [vmem:[%s925] sm:$0xf]
  %v927 = vunpack.c.l.bf16 %v926
  %v928 = vunpack.c.h.bf16 %v926
  %s929 = scalar_lea.vmem %s1, 2256
  %s930 = scalar_lea.vmem %s0, 1968
  %v931 = vld [vmem:[%s930] sm:$0xf]
  %v932 = vunpack.c.l.bf16 %v931
  %v933 = vunpack.c.h.bf16 %v931
  %s934 = scalar_lea.vmem %s1, 816
  %s935 = scalar_lea.vmem %s0, 1104
  %v936 = vld [vmem:[%s935] sm:$0xf]
  %v937 = vunpack.c.l.bf16 %v936
  %v938 = vunpack.c.h.bf16 %v936
  %s939 = scalar_lea.vmem %s1, 1680
  %s940 = scalar_lea.vmem %s0, 240
  %v941 = vld [vmem:[%s940] sm:$0xf]
  %v942 = vunpack.c.l.bf16 %v941
  %v943 = vunpack.c.h.bf16 %v941
  %s944 = scalar_lea.vmem %s1, 2544
  %s945 = scalar_lea.vmem %s0, 2556
  %v946 = vld [vmem:[%s945] sm:$0xf]
  %v947 = vunpack.c.l.bf16 %v946
  %v948 = vunpack.c.h.bf16 %v946
  %s949 = scalar_lea.vmem %s1, 252
  %s950 = scalar_lea.vmem %s0, 1692
  %v951 = vld [vmem:[%s950] sm:$0xf]
  %v952 = vunpack.c.l.bf16 %v951
  %v953 = vunpack.c.h.bf16 %v951
  %s954 = scalar_lea.vmem %s1, 1116
  %s955 = scalar_lea.vmem %s0, 828
  %v956 = vld [vmem:[%s955] sm:$0xf]
  %v957 = vunpack.c.l.bf16 %v956
  %v958 = vunpack.c.h.bf16 %v956
  %s959 = scalar_lea.vmem %s1, 1980
  %s960 = scalar_lea.vmem %s0, 2268
  %v961 = vld [vmem:[%s960] sm:$0xf]
  %v962 = vunpack.c.l.bf16 %v961
  %v963 = vunpack.c.h.bf16 %v961
  %s964 = scalar_lea.vmem %s1, 540
  %s965 = scalar_lea.vmem %s0, 1404
  %v966 = vld [vmem:[%s965] sm:$0xf]
  %v967 = vunpack.c.l.bf16 %v966
  %v968 = vunpack.c.h.bf16 %v966
  %s969 = scalar_lea.vmem %s1, 1404
  %s970 = scalar_lea.vmem %s0, 540
  %v971 = vld [vmem:[%s970] sm:$0xf]
  %v972 = vunpack.c.l.bf16 %v971
  %v973 = vunpack.c.h.bf16 %v971
  %s974 = scalar_lea.vmem %s1, 2268
  %s975 = scalar_lea.vmem %s0, 1980
  %v976 = vld [vmem:[%s975] sm:$0xf]
  %v977 = vunpack.c.l.bf16 %v976
  %v978 = vunpack.c.h.bf16 %v976
  %s979 = scalar_lea.vmem %s1, 828
  %s980 = scalar_lea.vmem %s0, 1116
  %v981 = vld [vmem:[%s980] sm:$0xf]
  %v982 = vunpack.c.l.bf16 %v981
  %v983 = vunpack.c.h.bf16 %v981
  %s984 = scalar_lea.vmem %s1, 1692
  %s985 = scalar_lea.vmem %s0, 252
  %v986 = vld [vmem:[%s985] sm:$0xf]
  %v987 = vunpack.c.l.bf16 %v986
  %v988 = vunpack.c.h.bf16 %v986
  %s989 = scalar_lea.vmem %s1, 2556
  %s990 = scalar_lea.vmem %s0, 2568
  %v991 = vld [vmem:[%s990] sm:$0xf]
  %v992 = vunpack.c.l.bf16 %v991
  %v993 = vunpack.c.h.bf16 %v991
  %s994 = scalar_lea.vmem %s1, 264
  %s995 = scalar_lea.vmem %s0, 1704
  %v996 = vld [vmem:[%s995] sm:$0xf]
  %v997 = vunpack.c.l.bf16 %v996
  %v998 = vunpack.c.h.bf16 %v996
  %s999 = scalar_lea.vmem %s1, 1128
  %s1000 = scalar_lea.vmem %s0, 840
  %v1001 = vld [vmem:[%s1000] sm:$0xf]
  %v1002 = vunpack.c.l.bf16 %v1001
  %v1003 = vunpack.c.h.bf16 %v1001
  %s1004 = scalar_lea.vmem %s1, 1992
  %s1005 = scalar_lea.vmem %s0, 2280
  %v1006 = vld [vmem:[%s1005] sm:$0xf]
  %v1007 = vunpack.c.l.bf16 %v1006
  %v1008 = vunpack.c.h.bf16 %v1006
  %s1009 = scalar_lea.vmem %s1, 552
  %s1010 = scalar_lea.vmem %s0, 1416
  %v1011 = vld [vmem:[%s1010] sm:$0xf]
  %v1012 = vunpack.c.l.bf16 %v1011
  %v1013 = vunpack.c.h.bf16 %v1011
  %s1014 = scalar_lea.vmem %s1, 1416
  %s1015 = scalar_lea.vmem %s0, 552
  %v1016 = vld [vmem:[%s1015] sm:$0xf]
  %v1017 = vunpack.c.l.bf16 %v1016
  %v1018 = vunpack.c.h.bf16 %v1016
  %s1019 = scalar_lea.vmem %s1, 2280
  %s1020 = scalar_lea.vmem %s0, 1992
  %v1021 = vld [vmem:[%s1020] sm:$0xf]
  %v1022 = vunpack.c.l.bf16 %v1021
  %v1023 = vunpack.c.h.bf16 %v1021
  %s1024 = scalar_lea.vmem %s1, 840
  %s1025 = scalar_lea.vmem %s0, 1128
  %v1026 = vld [vmem:[%s1025] sm:$0xf]
  %v1027 = vunpack.c.l.bf16 %v1026
  %v1028 = vunpack.c.h.bf16 %v1026
  %s1029 = scalar_lea.vmem %s1, 1704
  %s1030 = scalar_lea.vmem %s0, 264
  %v1031 = vld [vmem:[%s1030] sm:$0xf]
  %v1032 = vunpack.c.l.bf16 %v1031
  %v1033 = vunpack.c.h.bf16 %v1031
  %s1034 = scalar_lea.vmem %s1, 2568
  %s1035 = scalar_lea.vmem %s0, 2580
  %v1036 = vld [vmem:[%s1035] sm:$0xf]
  %v1037 = vunpack.c.l.bf16 %v1036
  %v1038 = vunpack.c.h.bf16 %v1036
  %s1039 = scalar_lea.vmem %s1, 276
  %s1040 = scalar_lea.vmem %s0, 1716
  %v1041 = vld [vmem:[%s1040] sm:$0xf]
  %v1042 = vunpack.c.l.bf16 %v1041
  %v1043 = vunpack.c.h.bf16 %v1041
  %s1044 = scalar_lea.vmem %s1, 1140
  %s1045 = scalar_lea.vmem %s0, 852
  %v1046 = vld [vmem:[%s1045] sm:$0xf]
  %v1047 = vunpack.c.l.bf16 %v1046
  %v1048 = vunpack.c.h.bf16 %v1046
  %s1049 = scalar_lea.vmem %s1, 2004
  %s1050 = scalar_lea.vmem %s0, 2292
  %v1051 = vld [vmem:[%s1050] sm:$0xf]
  %v1052 = vunpack.c.l.bf16 %v1051
  %v1053 = vunpack.c.h.bf16 %v1051
  %s1054 = scalar_lea.vmem %s1, 564
  %s1055 = scalar_lea.vmem %s0, 1428
  %v1056 = vld [vmem:[%s1055] sm:$0xf]
  %v1057 = vunpack.c.l.bf16 %v1056
  %v1058 = vunpack.c.h.bf16 %v1056
  %s1059 = scalar_lea.vmem %s1, 1428
  %s1060 = scalar_lea.vmem %s0, 564
  %v1061 = vld [vmem:[%s1060] sm:$0xf]
  %v1062 = vunpack.c.l.bf16 %v1061
  %v1063 = vunpack.c.h.bf16 %v1061
  %s1064 = scalar_lea.vmem %s1, 2292
  %s1065 = scalar_lea.vmem %s0, 2004
  %v1066 = vld [vmem:[%s1065] sm:$0xf]
  %v1067 = vunpack.c.l.bf16 %v1066
  %v1068 = vunpack.c.h.bf16 %v1066
  %s1069 = scalar_lea.vmem %s1, 852
  %s1070 = scalar_lea.vmem %s0, 1140
  %v1071 = vld [vmem:[%s1070] sm:$0xf]
  %v1072 = vunpack.c.l.bf16 %v1071
  %v1073 = vunpack.c.h.bf16 %v1071
  %s1074 = scalar_lea.vmem %s1, 1716
  %s1075 = scalar_lea.vmem %s0, 276
  %v1076 = vld [vmem:[%s1075] sm:$0xf]
  %v1077 = vunpack.c.l.bf16 %v1076
  %v1078 = vunpack.c.h.bf16 %v1076
  %s1079 = scalar_lea.vmem %s1, 2580
  %s1080 = scalar_lea.vmem %s0, 2308
  %v1081 = vld [vmem:[%s1080] sm:$0xf]
  %v1082 = vunpack.c.l.bf16 %v1081
  %v1083 = vunpack.c.h.bf16 %v1081
  %s1084 = scalar_lea.vmem %s1, 4
  %s1086 = ssub.s32 0, 4
  %s1087 = scalar_lea.vmem %s1084, %s1086
  %v1088 = vpack.c.bf16 %v1082, %v4
  %1089 = vst [vmem:[%s1087] sm:$0xff] %v1088
  %s1090 = scalar_lea.vmem %s0, 1444
  %v1091 = vld [vmem:[%s1090] sm:$0xf]
  %v1092 = vunpack.c.l.bf16 %v1091
  %v1093 = vunpack.c.h.bf16 %v1091
  %s1094 = scalar_lea.vmem %s1, 868
  %s1096 = ssub.s32 0, 4
  %s1097 = scalar_lea.vmem %s1094, %s1096
  %v1098 = vpack.c.bf16 %v1092, %v8
  %1099 = vst [vmem:[%s1097] sm:$0xff] %v1098
  %s1100 = scalar_lea.vmem %s0, 580
  %v1101 = vld [vmem:[%s1100] sm:$0xf]
  %v1102 = vunpack.c.l.bf16 %v1101
  %v1103 = vunpack.c.h.bf16 %v1101
  %s1104 = scalar_lea.vmem %s1, 1732
  %s1106 = ssub.s32 0, 4
  %s1107 = scalar_lea.vmem %s1104, %s1106
  %v1108 = vpack.c.bf16 %v1102, %v13
  %1109 = vst [vmem:[%s1107] sm:$0xff] %v1108
  %s1110 = scalar_lea.vmem %s0, 2020
  %v1111 = vld [vmem:[%s1110] sm:$0xf]
  %v1112 = vunpack.c.l.bf16 %v1111
  %v1113 = vunpack.c.h.bf16 %v1111
  %s1114 = scalar_lea.vmem %s1, 292
  %s1116 = ssub.s32 0, 4
  %s1117 = scalar_lea.vmem %s1114, %s1116
  %v1118 = vpack.c.bf16 %v1112, %v18
  %1119 = vst [vmem:[%s1117] sm:$0xff] %v1118
  %s1120 = scalar_lea.vmem %s0, 1156
  %v1121 = vld [vmem:[%s1120] sm:$0xf]
  %v1122 = vunpack.c.l.bf16 %v1121
  %v1123 = vunpack.c.h.bf16 %v1121
  %s1124 = scalar_lea.vmem %s1, 1156
  %s1126 = ssub.s32 0, 4
  %s1127 = scalar_lea.vmem %s1124, %s1126
  %v1128 = vpack.c.bf16 %v1122, %v23
  %1129 = vst [vmem:[%s1127] sm:$0xff] %v1128
  %s1130 = scalar_lea.vmem %s0, 292
  %v1131 = vld [vmem:[%s1130] sm:$0xf]
  %v1132 = vunpack.c.l.bf16 %v1131
  %v1133 = vunpack.c.h.bf16 %v1131
  %s1134 = scalar_lea.vmem %s1, 2020
  %s1136 = ssub.s32 0, 4
  %s1137 = scalar_lea.vmem %s1134, %s1136
  %v1138 = vpack.c.bf16 %v1132, %v28
  %1139 = vst [vmem:[%s1137] sm:$0xff] %v1138
  %s1140 = scalar_lea.vmem %s0, 1732
  %v1141 = vld [vmem:[%s1140] sm:$0xf]
  %v1142 = vunpack.c.l.bf16 %v1141
  %v1143 = vunpack.c.h.bf16 %v1141
  %s1144 = scalar_lea.vmem %s1, 580
  %s1146 = ssub.s32 0, 4
  %s1147 = scalar_lea.vmem %s1144, %s1146
  %v1148 = vpack.c.bf16 %v1142, %v33
  %1149 = vst [vmem:[%s1147] sm:$0xff] %v1148
  %s1150 = scalar_lea.vmem %s0, 868
  %v1151 = vld [vmem:[%s1150] sm:$0xf]
  %v1152 = vunpack.c.l.bf16 %v1151
  %v1153 = vunpack.c.h.bf16 %v1151
  %s1154 = scalar_lea.vmem %s1, 1444
  %s1156 = ssub.s32 0, 4
  %s1157 = scalar_lea.vmem %s1154, %s1156
  %v1158 = vpack.c.bf16 %v1152, %v38
  %1159 = vst [vmem:[%s1157] sm:$0xff] %v1158
  %s1160 = scalar_lea.vmem %s0, 4
  %v1161 = vld [vmem:[%s1160] sm:$0xf]
  %v1162 = vunpack.c.l.bf16 %v1161
  %v1163 = vunpack.c.h.bf16 %v1161
  %s1164 = scalar_lea.vmem %s1, 2308
  %s1166 = ssub.s32 0, 4
  %s1167 = scalar_lea.vmem %s1164, %s1166
  %v1168 = vpack.c.bf16 %v1162, %v42
  %1169 = vst [vmem:[%s1167] sm:$0xff] %v1168
  %s1170 = scalar_lea.vmem %s0, 2320
  %v1171 = vld [vmem:[%s1170] sm:$0xf]
  %v1172 = vunpack.c.l.bf16 %v1171
  %v1173 = vunpack.c.h.bf16 %v1171
  %s1174 = scalar_lea.vmem %s1, 16
  %s1176 = ssub.s32 0, 4
  %s1177 = scalar_lea.vmem %s1174, %s1176
  %v1178 = vpack.c.bf16 %v1172, %v47
  %1179 = vst [vmem:[%s1177] sm:$0xff] %v1178
  %s1180 = scalar_lea.vmem %s0, 1456
  %v1181 = vld [vmem:[%s1180] sm:$0xf]
  %v1182 = vunpack.c.l.bf16 %v1181
  %v1183 = vunpack.c.h.bf16 %v1181
  %s1184 = scalar_lea.vmem %s1, 880
  %s1186 = ssub.s32 0, 4
  %s1187 = scalar_lea.vmem %s1184, %s1186
  %v1188 = vpack.c.bf16 %v1182, %v52
  %1189 = vst [vmem:[%s1187] sm:$0xff] %v1188
  %s1190 = scalar_lea.vmem %s0, 592
  %v1191 = vld [vmem:[%s1190] sm:$0xf]
  %v1192 = vunpack.c.l.bf16 %v1191
  %v1193 = vunpack.c.h.bf16 %v1191
  %s1194 = scalar_lea.vmem %s1, 1744
  %s1196 = ssub.s32 0, 4
  %s1197 = scalar_lea.vmem %s1194, %s1196
  %v1198 = vpack.c.bf16 %v1192, %v57
  %1199 = vst [vmem:[%s1197] sm:$0xff] %v1198
  %s1200 = scalar_lea.vmem %s0, 2032
  %v1201 = vld [vmem:[%s1200] sm:$0xf]
  %v1202 = vunpack.c.l.bf16 %v1201
  %v1203 = vunpack.c.h.bf16 %v1201
  %s1204 = scalar_lea.vmem %s1, 304
  %s1206 = ssub.s32 0, 4
  %s1207 = scalar_lea.vmem %s1204, %s1206
  %v1208 = vpack.c.bf16 %v1202, %v62
  %1209 = vst [vmem:[%s1207] sm:$0xff] %v1208
  %s1210 = scalar_lea.vmem %s0, 1168
  %v1211 = vld [vmem:[%s1210] sm:$0xf]
  %v1212 = vunpack.c.l.bf16 %v1211
  %v1213 = vunpack.c.h.bf16 %v1211
  %s1214 = scalar_lea.vmem %s1, 1168
  %s1216 = ssub.s32 0, 4
  %s1217 = scalar_lea.vmem %s1214, %s1216
  %v1218 = vpack.c.bf16 %v1212, %v67
  %1219 = vst [vmem:[%s1217] sm:$0xff] %v1218
  %s1220 = scalar_lea.vmem %s0, 304
  %v1221 = vld [vmem:[%s1220] sm:$0xf]
  %v1222 = vunpack.c.l.bf16 %v1221
  %v1223 = vunpack.c.h.bf16 %v1221
  %s1224 = scalar_lea.vmem %s1, 2032
  %s1226 = ssub.s32 0, 4
  %s1227 = scalar_lea.vmem %s1224, %s1226
  %v1228 = vpack.c.bf16 %v1222, %v72
  %1229 = vst [vmem:[%s1227] sm:$0xff] %v1228
  %s1230 = scalar_lea.vmem %s0, 1744
  %v1231 = vld [vmem:[%s1230] sm:$0xf]
  %v1232 = vunpack.c.l.bf16 %v1231
  %v1233 = vunpack.c.h.bf16 %v1231
  %s1234 = scalar_lea.vmem %s1, 592
  %s1236 = ssub.s32 0, 4
  %s1237 = scalar_lea.vmem %s1234, %s1236
  %v1238 = vpack.c.bf16 %v1232, %v77
  %1239 = vst [vmem:[%s1237] sm:$0xff] %v1238
  %s1240 = scalar_lea.vmem %s0, 880
  %v1241 = vld [vmem:[%s1240] sm:$0xf]
  %v1242 = vunpack.c.l.bf16 %v1241
  %v1243 = vunpack.c.h.bf16 %v1241
  %s1244 = scalar_lea.vmem %s1, 1456
  %s1246 = ssub.s32 0, 4
  %s1247 = scalar_lea.vmem %s1244, %s1246
  %v1248 = vpack.c.bf16 %v1242, %v82
  %1249 = vst [vmem:[%s1247] sm:$0xff] %v1248
  %s1250 = scalar_lea.vmem %s0, 16
  %v1251 = vld [vmem:[%s1250] sm:$0xf]
  %v1252 = vunpack.c.l.bf16 %v1251
  %v1253 = vunpack.c.h.bf16 %v1251
  %s1254 = scalar_lea.vmem %s1, 2320
  %s1256 = ssub.s32 0, 4
  %s1257 = scalar_lea.vmem %s1254, %s1256
  %v1258 = vpack.c.bf16 %v1252, %v87
  %1259 = vst [vmem:[%s1257] sm:$0xff] %v1258
  %s1260 = scalar_lea.vmem %s0, 2332
  %v1261 = vld [vmem:[%s1260] sm:$0xf]
  %v1262 = vunpack.c.l.bf16 %v1261
  %v1263 = vunpack.c.h.bf16 %v1261
  %s1264 = scalar_lea.vmem %s1, 28
  %s1266 = ssub.s32 0, 4
  %s1267 = scalar_lea.vmem %s1264, %s1266
  %v1268 = vpack.c.bf16 %v1262, %v92
  %1269 = vst [vmem:[%s1267] sm:$0xff] %v1268
  %s1270 = scalar_lea.vmem %s0, 1468
  %v1271 = vld [vmem:[%s1270] sm:$0xf]
  %v1272 = vunpack.c.l.bf16 %v1271
  %v1273 = vunpack.c.h.bf16 %v1271
  %s1274 = scalar_lea.vmem %s1, 892
  %s1276 = ssub.s32 0, 4
  %s1277 = scalar_lea.vmem %s1274, %s1276
  %v1278 = vpack.c.bf16 %v1272, %v97
  %1279 = vst [vmem:[%s1277] sm:$0xff] %v1278
  %s1280 = scalar_lea.vmem %s0, 604
  %v1281 = vld [vmem:[%s1280] sm:$0xf]
  %v1282 = vunpack.c.l.bf16 %v1281
  %v1283 = vunpack.c.h.bf16 %v1281
  %s1284 = scalar_lea.vmem %s1, 1756
  %s1286 = ssub.s32 0, 4
  %s1287 = scalar_lea.vmem %s1284, %s1286
  %v1288 = vpack.c.bf16 %v1282, %v102
  %1289 = vst [vmem:[%s1287] sm:$0xff] %v1288
  %s1290 = scalar_lea.vmem %s0, 2044
  %v1291 = vld [vmem:[%s1290] sm:$0xf]
  %v1292 = vunpack.c.l.bf16 %v1291
  %v1293 = vunpack.c.h.bf16 %v1291
  %s1294 = scalar_lea.vmem %s1, 316
  %s1296 = ssub.s32 0, 4
  %s1297 = scalar_lea.vmem %s1294, %s1296
  %v1298 = vpack.c.bf16 %v1292, %v107
  %1299 = vst [vmem:[%s1297] sm:$0xff] %v1298
  %s1300 = scalar_lea.vmem %s0, 1180
  %v1301 = vld [vmem:[%s1300] sm:$0xf]
  %v1302 = vunpack.c.l.bf16 %v1301
  %v1303 = vunpack.c.h.bf16 %v1301
  %s1304 = scalar_lea.vmem %s1, 1180
  %s1306 = ssub.s32 0, 4
  %s1307 = scalar_lea.vmem %s1304, %s1306
  %v1308 = vpack.c.bf16 %v1302, %v112
  %1309 = vst [vmem:[%s1307] sm:$0xff] %v1308
  %s1310 = scalar_lea.vmem %s0, 316
  %v1311 = vld [vmem:[%s1310] sm:$0xf]
  %v1312 = vunpack.c.l.bf16 %v1311
  %v1313 = vunpack.c.h.bf16 %v1311
  %s1314 = scalar_lea.vmem %s1, 2044
  %s1316 = ssub.s32 0, 4
  %s1317 = scalar_lea.vmem %s1314, %s1316
  %v1318 = vpack.c.bf16 %v1312, %v117
  %1319 = vst [vmem:[%s1317] sm:$0xff] %v1318
  %s1320 = scalar_lea.vmem %s0, 1756
  %v1321 = vld [vmem:[%s1320] sm:$0xf]
  %v1322 = vunpack.c.l.bf16 %v1321
  %v1323 = vunpack.c.h.bf16 %v1321
  %s1324 = scalar_lea.vmem %s1, 604
  %s1326 = ssub.s32 0, 4
  %s1327 = scalar_lea.vmem %s1324, %s1326
  %v1328 = vpack.c.bf16 %v1322, %v122
  %1329 = vst [vmem:[%s1327] sm:$0xff] %v1328
  %s1330 = scalar_lea.vmem %s0, 892
  %v1331 = vld [vmem:[%s1330] sm:$0xf]
  %v1332 = vunpack.c.l.bf16 %v1331
  %v1333 = vunpack.c.h.bf16 %v1331
  %s1334 = scalar_lea.vmem %s1, 1468
  %s1336 = ssub.s32 0, 4
  %s1337 = scalar_lea.vmem %s1334, %s1336
  %v1338 = vpack.c.bf16 %v1332, %v127
  %1339 = vst [vmem:[%s1337] sm:$0xff] %v1338
  %s1340 = scalar_lea.vmem %s0, 28
  %v1341 = vld [vmem:[%s1340] sm:$0xf]
  %v1342 = vunpack.c.l.bf16 %v1341
  %v1343 = vunpack.c.h.bf16 %v1341
  %s1344 = scalar_lea.vmem %s1, 2332
  %s1346 = ssub.s32 0, 4
  %s1347 = scalar_lea.vmem %s1344, %s1346
  %v1348 = vpack.c.bf16 %v1342, %v132
  %1349 = vst [vmem:[%s1347] sm:$0xff] %v1348
  %s1350 = scalar_lea.vmem %s0, 2344
  %v1351 = vld [vmem:[%s1350] sm:$0xf]
  %v1352 = vunpack.c.l.bf16 %v1351
  %v1353 = vunpack.c.h.bf16 %v1351
  %s1354 = scalar_lea.vmem %s1, 40
  %s1356 = ssub.s32 0, 4
  %s1357 = scalar_lea.vmem %s1354, %s1356
  %v1358 = vpack.c.bf16 %v1352, %v137
  %1359 = vst [vmem:[%s1357] sm:$0xff] %v1358
  %s1360 = scalar_lea.vmem %s0, 1480
  %v1361 = vld [vmem:[%s1360] sm:$0xf]
  %v1362 = vunpack.c.l.bf16 %v1361
  %v1363 = vunpack.c.h.bf16 %v1361
  %s1364 = scalar_lea.vmem %s1, 904
  %s1366 = ssub.s32 0, 4
  %s1367 = scalar_lea.vmem %s1364, %s1366
  %v1368 = vpack.c.bf16 %v1362, %v142
  %1369 = vst [vmem:[%s1367] sm:$0xff] %v1368
  %s1370 = scalar_lea.vmem %s0, 616
  %v1371 = vld [vmem:[%s1370] sm:$0xf]
  %v1372 = vunpack.c.l.bf16 %v1371
  %v1373 = vunpack.c.h.bf16 %v1371
  %s1374 = scalar_lea.vmem %s1, 1768
  %s1376 = ssub.s32 0, 4
  %s1377 = scalar_lea.vmem %s1374, %s1376
  %v1378 = vpack.c.bf16 %v1372, %v147
  %1379 = vst [vmem:[%s1377] sm:$0xff] %v1378
  %s1380 = scalar_lea.vmem %s0, 2056
  %v1381 = vld [vmem:[%s1380] sm:$0xf]
  %v1382 = vunpack.c.l.bf16 %v1381
  %v1383 = vunpack.c.h.bf16 %v1381
  %s1384 = scalar_lea.vmem %s1, 328
  %s1386 = ssub.s32 0, 4
  %s1387 = scalar_lea.vmem %s1384, %s1386
  %v1388 = vpack.c.bf16 %v1382, %v152
  %1389 = vst [vmem:[%s1387] sm:$0xff] %v1388
  %s1390 = scalar_lea.vmem %s0, 1192
  %v1391 = vld [vmem:[%s1390] sm:$0xf]
  %v1392 = vunpack.c.l.bf16 %v1391
  %v1393 = vunpack.c.h.bf16 %v1391
  %s1394 = scalar_lea.vmem %s1, 1192
  %s1396 = ssub.s32 0, 4
  %s1397 = scalar_lea.vmem %s1394, %s1396
  %v1398 = vpack.c.bf16 %v1392, %v157
  %1399 = vst [vmem:[%s1397] sm:$0xff] %v1398
  %s1400 = scalar_lea.vmem %s0, 328
  %v1401 = vld [vmem:[%s1400] sm:$0xf]
  %v1402 = vunpack.c.l.bf16 %v1401
  %v1403 = vunpack.c.h.bf16 %v1401
  %s1404 = scalar_lea.vmem %s1, 2056
  %s1406 = ssub.s32 0, 4
  %s1407 = scalar_lea.vmem %s1404, %s1406
  %v1408 = vpack.c.bf16 %v1402, %v162
  %1409 = vst [vmem:[%s1407] sm:$0xff] %v1408
  %s1410 = scalar_lea.vmem %s0, 1768
  %v1411 = vld [vmem:[%s1410] sm:$0xf]
  %v1412 = vunpack.c.l.bf16 %v1411
  %v1413 = vunpack.c.h.bf16 %v1411
  %s1414 = scalar_lea.vmem %s1, 616
  %s1416 = ssub.s32 0, 4
  %s1417 = scalar_lea.vmem %s1414, %s1416
  %v1418 = vpack.c.bf16 %v1412, %v167
  %1419 = vst [vmem:[%s1417] sm:$0xff] %v1418
  %s1420 = scalar_lea.vmem %s0, 904
  %v1421 = vld [vmem:[%s1420] sm:$0xf]
  %v1422 = vunpack.c.l.bf16 %v1421
  %v1423 = vunpack.c.h.bf16 %v1421
  %s1424 = scalar_lea.vmem %s1, 1480
  %s1426 = ssub.s32 0, 4
  %s1427 = scalar_lea.vmem %s1424, %s1426
  %v1428 = vpack.c.bf16 %v1422, %v172
  %1429 = vst [vmem:[%s1427] sm:$0xff] %v1428
  %s1430 = scalar_lea.vmem %s0, 40
  %v1431 = vld [vmem:[%s1430] sm:$0xf]
  %v1432 = vunpack.c.l.bf16 %v1431
  %v1433 = vunpack.c.h.bf16 %v1431
  %s1434 = scalar_lea.vmem %s1, 2344
  %s1436 = ssub.s32 0, 4
  %s1437 = scalar_lea.vmem %s1434, %s1436
  %v1438 = vpack.c.bf16 %v1432, %v177
  %1439 = vst [vmem:[%s1437] sm:$0xff] %v1438
  %s1440 = scalar_lea.vmem %s0, 2356
  %v1441 = vld [vmem:[%s1440] sm:$0xf]
  %v1442 = vunpack.c.l.bf16 %v1441
  %v1443 = vunpack.c.h.bf16 %v1441
  %s1444 = scalar_lea.vmem %s1, 52
  %s1446 = ssub.s32 0, 4
  %s1447 = scalar_lea.vmem %s1444, %s1446
  %v1448 = vpack.c.bf16 %v1442, %v182
  %1449 = vst [vmem:[%s1447] sm:$0xff] %v1448
  %s1450 = scalar_lea.vmem %s0, 1492
  %v1451 = vld [vmem:[%s1450] sm:$0xf]
  %v1452 = vunpack.c.l.bf16 %v1451
  %v1453 = vunpack.c.h.bf16 %v1451
  %s1454 = scalar_lea.vmem %s1, 916
  %s1456 = ssub.s32 0, 4
  %s1457 = scalar_lea.vmem %s1454, %s1456
  %v1458 = vpack.c.bf16 %v1452, %v187
  %1459 = vst [vmem:[%s1457] sm:$0xff] %v1458
  %s1460 = scalar_lea.vmem %s0, 628
  %v1461 = vld [vmem:[%s1460] sm:$0xf]
  %v1462 = vunpack.c.l.bf16 %v1461
  %v1463 = vunpack.c.h.bf16 %v1461
  %s1464 = scalar_lea.vmem %s1, 1780
  %s1466 = ssub.s32 0, 4
  %s1467 = scalar_lea.vmem %s1464, %s1466
  %v1468 = vpack.c.bf16 %v1462, %v192
  %1469 = vst [vmem:[%s1467] sm:$0xff] %v1468
  %s1470 = scalar_lea.vmem %s0, 2068
  %v1471 = vld [vmem:[%s1470] sm:$0xf]
  %v1472 = vunpack.c.l.bf16 %v1471
  %v1473 = vunpack.c.h.bf16 %v1471
  %s1474 = scalar_lea.vmem %s1, 340
  %s1476 = ssub.s32 0, 4
  %s1477 = scalar_lea.vmem %s1474, %s1476
  %v1478 = vpack.c.bf16 %v1472, %v197
  %1479 = vst [vmem:[%s1477] sm:$0xff] %v1478
  %s1480 = scalar_lea.vmem %s0, 1204
  %v1481 = vld [vmem:[%s1480] sm:$0xf]
  %v1482 = vunpack.c.l.bf16 %v1481
  %v1483 = vunpack.c.h.bf16 %v1481
  %s1484 = scalar_lea.vmem %s1, 1204
  %s1486 = ssub.s32 0, 4
  %s1487 = scalar_lea.vmem %s1484, %s1486
  %v1488 = vpack.c.bf16 %v1482, %v202
  %1489 = vst [vmem:[%s1487] sm:$0xff] %v1488
  %s1490 = scalar_lea.vmem %s0, 340
  %v1491 = vld [vmem:[%s1490] sm:$0xf]
  %v1492 = vunpack.c.l.bf16 %v1491
  %v1493 = vunpack.c.h.bf16 %v1491
  %s1494 = scalar_lea.vmem %s1, 2068
  %s1496 = ssub.s32 0, 4
  %s1497 = scalar_lea.vmem %s1494, %s1496
  %v1498 = vpack.c.bf16 %v1492, %v207
  %1499 = vst [vmem:[%s1497] sm:$0xff] %v1498
  %s1500 = scalar_lea.vmem %s0, 1780
  %v1501 = vld [vmem:[%s1500] sm:$0xf]
  %v1502 = vunpack.c.l.bf16 %v1501
  %v1503 = vunpack.c.h.bf16 %v1501
  %s1504 = scalar_lea.vmem %s1, 628
  %s1506 = ssub.s32 0, 4
  %s1507 = scalar_lea.vmem %s1504, %s1506
  %v1508 = vpack.c.bf16 %v1502, %v212
  %1509 = vst [vmem:[%s1507] sm:$0xff] %v1508
  %s1510 = scalar_lea.vmem %s0, 916
  %v1511 = vld [vmem:[%s1510] sm:$0xf]
  %v1512 = vunpack.c.l.bf16 %v1511
  %v1513 = vunpack.c.h.bf16 %v1511
  %s1514 = scalar_lea.vmem %s1, 1492
  %s1516 = ssub.s32 0, 4
  %s1517 = scalar_lea.vmem %s1514, %s1516
  %v1518 = vpack.c.bf16 %v1512, %v217
  %1519 = vst [vmem:[%s1517] sm:$0xff] %v1518
  %s1520 = scalar_lea.vmem %s0, 52
  %v1521 = vld [vmem:[%s1520] sm:$0xf]
  %v1522 = vunpack.c.l.bf16 %v1521
  %v1523 = vunpack.c.h.bf16 %v1521
  %s1524 = scalar_lea.vmem %s1, 2356
  %s1526 = ssub.s32 0, 4
  %s1527 = scalar_lea.vmem %s1524, %s1526
  %v1528 = vpack.c.bf16 %v1522, %v222
  %1529 = vst [vmem:[%s1527] sm:$0xff] %v1528
  %s1530 = scalar_lea.vmem %s0, 2368
  %v1531 = vld [vmem:[%s1530] sm:$0xf]
  %v1532 = vunpack.c.l.bf16 %v1531
  %v1533 = vunpack.c.h.bf16 %v1531
  %s1534 = scalar_lea.vmem %s1, 64
  %s1536 = ssub.s32 0, 4
  %s1537 = scalar_lea.vmem %s1534, %s1536
  %v1538 = vpack.c.bf16 %v1532, %v227
  %1539 = vst [vmem:[%s1537] sm:$0xff] %v1538
  %s1540 = scalar_lea.vmem %s0, 1504
  %v1541 = vld [vmem:[%s1540] sm:$0xf]
  %v1542 = vunpack.c.l.bf16 %v1541
  %v1543 = vunpack.c.h.bf16 %v1541
  %s1544 = scalar_lea.vmem %s1, 928
  %s1546 = ssub.s32 0, 4
  %s1547 = scalar_lea.vmem %s1544, %s1546
  %v1548 = vpack.c.bf16 %v1542, %v232
  %1549 = vst [vmem:[%s1547] sm:$0xff] %v1548
  %s1550 = scalar_lea.vmem %s0, 640
  %v1551 = vld [vmem:[%s1550] sm:$0xf]
  %v1552 = vunpack.c.l.bf16 %v1551
  %v1553 = vunpack.c.h.bf16 %v1551
  %s1554 = scalar_lea.vmem %s1, 1792
  %s1556 = ssub.s32 0, 4
  %s1557 = scalar_lea.vmem %s1554, %s1556
  %v1558 = vpack.c.bf16 %v1552, %v237
  %1559 = vst [vmem:[%s1557] sm:$0xff] %v1558
  %s1560 = scalar_lea.vmem %s0, 2080
  %v1561 = vld [vmem:[%s1560] sm:$0xf]
  %v1562 = vunpack.c.l.bf16 %v1561
  %v1563 = vunpack.c.h.bf16 %v1561
  %s1564 = scalar_lea.vmem %s1, 352
  %s1566 = ssub.s32 0, 4
  %s1567 = scalar_lea.vmem %s1564, %s1566
  %v1568 = vpack.c.bf16 %v1562, %v242
  %1569 = vst [vmem:[%s1567] sm:$0xff] %v1568
  %s1570 = scalar_lea.vmem %s0, 1216
  %v1571 = vld [vmem:[%s1570] sm:$0xf]
  %v1572 = vunpack.c.l.bf16 %v1571
  %v1573 = vunpack.c.h.bf16 %v1571
  %s1574 = scalar_lea.vmem %s1, 1216
  %s1576 = ssub.s32 0, 4
  %s1577 = scalar_lea.vmem %s1574, %s1576
  %v1578 = vpack.c.bf16 %v1572, %v247
  %1579 = vst [vmem:[%s1577] sm:$0xff] %v1578
  %s1580 = scalar_lea.vmem %s0, 352
  %v1581 = vld [vmem:[%s1580] sm:$0xf]
  %v1582 = vunpack.c.l.bf16 %v1581
  %v1583 = vunpack.c.h.bf16 %v1581
  %s1584 = scalar_lea.vmem %s1, 2080
  %s1586 = ssub.s32 0, 4
  %s1587 = scalar_lea.vmem %s1584, %s1586
  %v1588 = vpack.c.bf16 %v1582, %v252
  %1589 = vst [vmem:[%s1587] sm:$0xff] %v1588
  %s1590 = scalar_lea.vmem %s0, 1792
  %v1591 = vld [vmem:[%s1590] sm:$0xf]
  %v1592 = vunpack.c.l.bf16 %v1591
  %v1593 = vunpack.c.h.bf16 %v1591
  %s1594 = scalar_lea.vmem %s1, 640
  %s1596 = ssub.s32 0, 4
  %s1597 = scalar_lea.vmem %s1594, %s1596
  %v1598 = vpack.c.bf16 %v1592, %v257
  %1599 = vst [vmem:[%s1597] sm:$0xff] %v1598
  %s1600 = scalar_lea.vmem %s0, 928
  %v1601 = vld [vmem:[%s1600] sm:$0xf]
  %v1602 = vunpack.c.l.bf16 %v1601
  %v1603 = vunpack.c.h.bf16 %v1601
  %s1604 = scalar_lea.vmem %s1, 1504
  %s1606 = ssub.s32 0, 4
  %s1607 = scalar_lea.vmem %s1604, %s1606
  %v1608 = vpack.c.bf16 %v1602, %v262
  %1609 = vst [vmem:[%s1607] sm:$0xff] %v1608
  %s1610 = scalar_lea.vmem %s0, 64
  %v1611 = vld [vmem:[%s1610] sm:$0xf]
  %v1612 = vunpack.c.l.bf16 %v1611
  %v1613 = vunpack.c.h.bf16 %v1611
  %s1614 = scalar_lea.vmem %s1, 2368
  %s1616 = ssub.s32 0, 4
  %s1617 = scalar_lea.vmem %s1614, %s1616
  %v1618 = vpack.c.bf16 %v1612, %v267
  %1619 = vst [vmem:[%s1617] sm:$0xff] %v1618
  %s1620 = scalar_lea.vmem %s0, 2380
  %v1621 = vld [vmem:[%s1620] sm:$0xf]
  %v1622 = vunpack.c.l.bf16 %v1621
  %v1623 = vunpack.c.h.bf16 %v1621
  %s1624 = scalar_lea.vmem %s1, 76
  %s1626 = ssub.s32 0, 4
  %s1627 = scalar_lea.vmem %s1624, %s1626
  %v1628 = vpack.c.bf16 %v1622, %v272
  %1629 = vst [vmem:[%s1627] sm:$0xff] %v1628
  %s1630 = scalar_lea.vmem %s0, 1516
  %v1631 = vld [vmem:[%s1630] sm:$0xf]
  %v1632 = vunpack.c.l.bf16 %v1631
  %v1633 = vunpack.c.h.bf16 %v1631
  %s1634 = scalar_lea.vmem %s1, 940
  %s1636 = ssub.s32 0, 4
  %s1637 = scalar_lea.vmem %s1634, %s1636
  %v1638 = vpack.c.bf16 %v1632, %v277
  %1639 = vst [vmem:[%s1637] sm:$0xff] %v1638
  %s1640 = scalar_lea.vmem %s0, 652
  %v1641 = vld [vmem:[%s1640] sm:$0xf]
  %v1642 = vunpack.c.l.bf16 %v1641
  %v1643 = vunpack.c.h.bf16 %v1641
  %s1644 = scalar_lea.vmem %s1, 1804
  %s1646 = ssub.s32 0, 4
  %s1647 = scalar_lea.vmem %s1644, %s1646
  %v1648 = vpack.c.bf16 %v1642, %v282
  %1649 = vst [vmem:[%s1647] sm:$0xff] %v1648
  %s1650 = scalar_lea.vmem %s0, 2092
  %v1651 = vld [vmem:[%s1650] sm:$0xf]
  %v1652 = vunpack.c.l.bf16 %v1651
  %v1653 = vunpack.c.h.bf16 %v1651
  %s1654 = scalar_lea.vmem %s1, 364
  %s1656 = ssub.s32 0, 4
  %s1657 = scalar_lea.vmem %s1654, %s1656
  %v1658 = vpack.c.bf16 %v1652, %v287
  %1659 = vst [vmem:[%s1657] sm:$0xff] %v1658
  %s1660 = scalar_lea.vmem %s0, 1228
  %v1661 = vld [vmem:[%s1660] sm:$0xf]
  %v1662 = vunpack.c.l.bf16 %v1661
  %v1663 = vunpack.c.h.bf16 %v1661
  %s1664 = scalar_lea.vmem %s1, 1228
  %s1666 = ssub.s32 0, 4
  %s1667 = scalar_lea.vmem %s1664, %s1666
  %v1668 = vpack.c.bf16 %v1662, %v292
  %1669 = vst [vmem:[%s1667] sm:$0xff] %v1668
  %s1670 = scalar_lea.vmem %s0, 364
  %v1671 = vld [vmem:[%s1670] sm:$0xf]
  %v1672 = vunpack.c.l.bf16 %v1671
  %v1673 = vunpack.c.h.bf16 %v1671
  %s1674 = scalar_lea.vmem %s1, 2092
  %s1676 = ssub.s32 0, 4
  %s1677 = scalar_lea.vmem %s1674, %s1676
  %v1678 = vpack.c.bf16 %v1672, %v297
  %1679 = vst [vmem:[%s1677] sm:$0xff] %v1678
  %s1680 = scalar_lea.vmem %s0, 1804
  %v1681 = vld [vmem:[%s1680] sm:$0xf]
  %v1682 = vunpack.c.l.bf16 %v1681
  %v1683 = vunpack.c.h.bf16 %v1681
  %s1684 = scalar_lea.vmem %s1, 652
  %s1686 = ssub.s32 0, 4
  %s1687 = scalar_lea.vmem %s1684, %s1686
  %v1688 = vpack.c.bf16 %v1682, %v302
  %1689 = vst [vmem:[%s1687] sm:$0xff] %v1688
  %s1690 = scalar_lea.vmem %s0, 940
  %v1691 = vld [vmem:[%s1690] sm:$0xf]
  %v1692 = vunpack.c.l.bf16 %v1691
  %v1693 = vunpack.c.h.bf16 %v1691
  %s1694 = scalar_lea.vmem %s1, 1516
  %s1696 = ssub.s32 0, 4
  %s1697 = scalar_lea.vmem %s1694, %s1696
  %v1698 = vpack.c.bf16 %v1692, %v307
  %1699 = vst [vmem:[%s1697] sm:$0xff] %v1698
  %s1700 = scalar_lea.vmem %s0, 76
  %v1701 = vld [vmem:[%s1700] sm:$0xf]
  %v1702 = vunpack.c.l.bf16 %v1701
  %v1703 = vunpack.c.h.bf16 %v1701
  %s1704 = scalar_lea.vmem %s1, 2380
  %s1706 = ssub.s32 0, 4
  %s1707 = scalar_lea.vmem %s1704, %s1706
  %v1708 = vpack.c.bf16 %v1702, %v312
  %1709 = vst [vmem:[%s1707] sm:$0xff] %v1708
  %s1710 = scalar_lea.vmem %s0, 2392
  %v1711 = vld [vmem:[%s1710] sm:$0xf]
  %v1712 = vunpack.c.l.bf16 %v1711
  %v1713 = vunpack.c.h.bf16 %v1711
  %s1714 = scalar_lea.vmem %s1, 88
  %s1716 = ssub.s32 0, 4
  %s1717 = scalar_lea.vmem %s1714, %s1716
  %v1718 = vpack.c.bf16 %v1712, %v317
  %1719 = vst [vmem:[%s1717] sm:$0xff] %v1718
  %s1720 = scalar_lea.vmem %s0, 1528
  %v1721 = vld [vmem:[%s1720] sm:$0xf]
  %v1722 = vunpack.c.l.bf16 %v1721
  %v1723 = vunpack.c.h.bf16 %v1721
  %s1724 = scalar_lea.vmem %s1, 952
  %s1726 = ssub.s32 0, 4
  %s1727 = scalar_lea.vmem %s1724, %s1726
  %v1728 = vpack.c.bf16 %v1722, %v322
  %1729 = vst [vmem:[%s1727] sm:$0xff] %v1728
  %s1730 = scalar_lea.vmem %s0, 664
  %v1731 = vld [vmem:[%s1730] sm:$0xf]
  %v1732 = vunpack.c.l.bf16 %v1731
  %v1733 = vunpack.c.h.bf16 %v1731
  %s1734 = scalar_lea.vmem %s1, 1816
  %s1736 = ssub.s32 0, 4
  %s1737 = scalar_lea.vmem %s1734, %s1736
  %v1738 = vpack.c.bf16 %v1732, %v327
  %1739 = vst [vmem:[%s1737] sm:$0xff] %v1738
  %s1740 = scalar_lea.vmem %s0, 2104
  %v1741 = vld [vmem:[%s1740] sm:$0xf]
  %v1742 = vunpack.c.l.bf16 %v1741
  %v1743 = vunpack.c.h.bf16 %v1741
  %s1744 = scalar_lea.vmem %s1, 376
  %s1746 = ssub.s32 0, 4
  %s1747 = scalar_lea.vmem %s1744, %s1746
  %v1748 = vpack.c.bf16 %v1742, %v332
  %1749 = vst [vmem:[%s1747] sm:$0xff] %v1748
  %s1750 = scalar_lea.vmem %s0, 1240
  %v1751 = vld [vmem:[%s1750] sm:$0xf]
  %v1752 = vunpack.c.l.bf16 %v1751
  %v1753 = vunpack.c.h.bf16 %v1751
  %s1754 = scalar_lea.vmem %s1, 1240
  %s1756 = ssub.s32 0, 4
  %s1757 = scalar_lea.vmem %s1754, %s1756
  %v1758 = vpack.c.bf16 %v1752, %v337
  %1759 = vst [vmem:[%s1757] sm:$0xff] %v1758
  %s1760 = scalar_lea.vmem %s0, 376
  %v1761 = vld [vmem:[%s1760] sm:$0xf]
  %v1762 = vunpack.c.l.bf16 %v1761
  %v1763 = vunpack.c.h.bf16 %v1761
  %s1764 = scalar_lea.vmem %s1, 2104
  %s1766 = ssub.s32 0, 4
  %s1767 = scalar_lea.vmem %s1764, %s1766
  %v1768 = vpack.c.bf16 %v1762, %v342
  %1769 = vst [vmem:[%s1767] sm:$0xff] %v1768
  %s1770 = scalar_lea.vmem %s0, 1816
  %v1771 = vld [vmem:[%s1770] sm:$0xf]
  %v1772 = vunpack.c.l.bf16 %v1771
  %v1773 = vunpack.c.h.bf16 %v1771
  %s1774 = scalar_lea.vmem %s1, 664
  %s1776 = ssub.s32 0, 4
  %s1777 = scalar_lea.vmem %s1774, %s1776
  %v1778 = vpack.c.bf16 %v1772, %v347
  %1779 = vst [vmem:[%s1777] sm:$0xff] %v1778
  %s1780 = scalar_lea.vmem %s0, 952
  %v1781 = vld [vmem:[%s1780] sm:$0xf]
  %v1782 = vunpack.c.l.bf16 %v1781
  %v1783 = vunpack.c.h.bf16 %v1781
  %s1784 = scalar_lea.vmem %s1, 1528
  %s1786 = ssub.s32 0, 4
  %s1787 = scalar_lea.vmem %s1784, %s1786
  %v1788 = vpack.c.bf16 %v1782, %v352
  %1789 = vst [vmem:[%s1787] sm:$0xff] %v1788
  %s1790 = scalar_lea.vmem %s0, 88
  %v1791 = vld [vmem:[%s1790] sm:$0xf]
  %v1792 = vunpack.c.l.bf16 %v1791
  %v1793 = vunpack.c.h.bf16 %v1791
  %s1794 = scalar_lea.vmem %s1, 2392
  %s1796 = ssub.s32 0, 4
  %s1797 = scalar_lea.vmem %s1794, %s1796
  %v1798 = vpack.c.bf16 %v1792, %v357
  %1799 = vst [vmem:[%s1797] sm:$0xff] %v1798
  %s1800 = scalar_lea.vmem %s0, 2404
  %v1801 = vld [vmem:[%s1800] sm:$0xf]
  %v1802 = vunpack.c.l.bf16 %v1801
  %v1803 = vunpack.c.h.bf16 %v1801
  %s1804 = scalar_lea.vmem %s1, 100
  %s1806 = ssub.s32 0, 4
  %s1807 = scalar_lea.vmem %s1804, %s1806
  %v1808 = vpack.c.bf16 %v1802, %v362
  %1809 = vst [vmem:[%s1807] sm:$0xff] %v1808
  %s1810 = scalar_lea.vmem %s0, 1540
  %v1811 = vld [vmem:[%s1810] sm:$0xf]
  %v1812 = vunpack.c.l.bf16 %v1811
  %v1813 = vunpack.c.h.bf16 %v1811
  %s1814 = scalar_lea.vmem %s1, 964
  %s1816 = ssub.s32 0, 4
  %s1817 = scalar_lea.vmem %s1814, %s1816
  %v1818 = vpack.c.bf16 %v1812, %v367
  %1819 = vst [vmem:[%s1817] sm:$0xff] %v1818
  %s1820 = scalar_lea.vmem %s0, 676
  %v1821 = vld [vmem:[%s1820] sm:$0xf]
  %v1822 = vunpack.c.l.bf16 %v1821
  %v1823 = vunpack.c.h.bf16 %v1821
  %s1824 = scalar_lea.vmem %s1, 1828
  %s1826 = ssub.s32 0, 4
  %s1827 = scalar_lea.vmem %s1824, %s1826
  %v1828 = vpack.c.bf16 %v1822, %v372
  %1829 = vst [vmem:[%s1827] sm:$0xff] %v1828
  %s1830 = scalar_lea.vmem %s0, 2116
  %v1831 = vld [vmem:[%s1830] sm:$0xf]
  %v1832 = vunpack.c.l.bf16 %v1831
  %v1833 = vunpack.c.h.bf16 %v1831
  %s1834 = scalar_lea.vmem %s1, 388
  %s1836 = ssub.s32 0, 4
  %s1837 = scalar_lea.vmem %s1834, %s1836
  %v1838 = vpack.c.bf16 %v1832, %v377
  %1839 = vst [vmem:[%s1837] sm:$0xff] %v1838
  %s1840 = scalar_lea.vmem %s0, 1252
  %v1841 = vld [vmem:[%s1840] sm:$0xf]
  %v1842 = vunpack.c.l.bf16 %v1841
  %v1843 = vunpack.c.h.bf16 %v1841
  %s1844 = scalar_lea.vmem %s1, 1252
  %s1846 = ssub.s32 0, 4
  %s1847 = scalar_lea.vmem %s1844, %s1846
  %v1848 = vpack.c.bf16 %v1842, %v382
  %1849 = vst [vmem:[%s1847] sm:$0xff] %v1848
  %s1850 = scalar_lea.vmem %s0, 388
  %v1851 = vld [vmem:[%s1850] sm:$0xf]
  %v1852 = vunpack.c.l.bf16 %v1851
  %v1853 = vunpack.c.h.bf16 %v1851
  %s1854 = scalar_lea.vmem %s1, 2116
  %s1856 = ssub.s32 0, 4
  %s1857 = scalar_lea.vmem %s1854, %s1856
  %v1858 = vpack.c.bf16 %v1852, %v387
  %1859 = vst [vmem:[%s1857] sm:$0xff] %v1858
  %s1860 = scalar_lea.vmem %s0, 1828
  %v1861 = vld [vmem:[%s1860] sm:$0xf]
  %v1862 = vunpack.c.l.bf16 %v1861
  %v1863 = vunpack.c.h.bf16 %v1861
  %s1864 = scalar_lea.vmem %s1, 676
  %s1866 = ssub.s32 0, 4
  %s1867 = scalar_lea.vmem %s1864, %s1866
  %v1868 = vpack.c.bf16 %v1862, %v392
  %1869 = vst [vmem:[%s1867] sm:$0xff] %v1868
  %s1870 = scalar_lea.vmem %s0, 964
  %v1871 = vld [vmem:[%s1870] sm:$0xf]
  %v1872 = vunpack.c.l.bf16 %v1871
  %v1873 = vunpack.c.h.bf16 %v1871
  %s1874 = scalar_lea.vmem %s1, 1540
  %s1876 = ssub.s32 0, 4
  %s1877 = scalar_lea.vmem %s1874, %s1876
  %v1878 = vpack.c.bf16 %v1872, %v397
  %1879 = vst [vmem:[%s1877] sm:$0xff] %v1878
  %s1880 = scalar_lea.vmem %s0, 100
  %v1881 = vld [vmem:[%s1880] sm:$0xf]
  %v1882 = vunpack.c.l.bf16 %v1881
  %v1883 = vunpack.c.h.bf16 %v1881
  %s1884 = scalar_lea.vmem %s1, 2404
  %s1886 = ssub.s32 0, 4
  %s1887 = scalar_lea.vmem %s1884, %s1886
  %v1888 = vpack.c.bf16 %v1882, %v402
  %1889 = vst [vmem:[%s1887] sm:$0xff] %v1888
  %s1890 = scalar_lea.vmem %s0, 2416
  %v1891 = vld [vmem:[%s1890] sm:$0xf]
  %v1892 = vunpack.c.l.bf16 %v1891
  %v1893 = vunpack.c.h.bf16 %v1891
  %s1894 = scalar_lea.vmem %s1, 112
  %s1896 = ssub.s32 0, 4
  %s1897 = scalar_lea.vmem %s1894, %s1896
  %v1898 = vpack.c.bf16 %v1892, %v407
  %1899 = vst [vmem:[%s1897] sm:$0xff] %v1898
  %s1900 = scalar_lea.vmem %s0, 1552
  %v1901 = vld [vmem:[%s1900] sm:$0xf]
  %v1902 = vunpack.c.l.bf16 %v1901
  %v1903 = vunpack.c.h.bf16 %v1901
  %s1904 = scalar_lea.vmem %s1, 976
  %s1906 = ssub.s32 0, 4
  %s1907 = scalar_lea.vmem %s1904, %s1906
  %v1908 = vpack.c.bf16 %v1902, %v412
  %1909 = vst [vmem:[%s1907] sm:$0xff] %v1908
  %s1910 = scalar_lea.vmem %s0, 688
  %v1911 = vld [vmem:[%s1910] sm:$0xf]
  %v1912 = vunpack.c.l.bf16 %v1911
  %v1913 = vunpack.c.h.bf16 %v1911
  %s1914 = scalar_lea.vmem %s1, 1840
  %s1916 = ssub.s32 0, 4
  %s1917 = scalar_lea.vmem %s1914, %s1916
  %v1918 = vpack.c.bf16 %v1912, %v417
  %1919 = vst [vmem:[%s1917] sm:$0xff] %v1918
  %s1920 = scalar_lea.vmem %s0, 2128
  %v1921 = vld [vmem:[%s1920] sm:$0xf]
  %v1922 = vunpack.c.l.bf16 %v1921
  %v1923 = vunpack.c.h.bf16 %v1921
  %s1924 = scalar_lea.vmem %s1, 400
  %s1926 = ssub.s32 0, 4
  %s1927 = scalar_lea.vmem %s1924, %s1926
  %v1928 = vpack.c.bf16 %v1922, %v422
  %1929 = vst [vmem:[%s1927] sm:$0xff] %v1928
  %s1930 = scalar_lea.vmem %s0, 1264
  %v1931 = vld [vmem:[%s1930] sm:$0xf]
  %v1932 = vunpack.c.l.bf16 %v1931
  %v1933 = vunpack.c.h.bf16 %v1931
  %s1934 = scalar_lea.vmem %s1, 1264
  %s1936 = ssub.s32 0, 4
  %s1937 = scalar_lea.vmem %s1934, %s1936
  %v1938 = vpack.c.bf16 %v1932, %v427
  %1939 = vst [vmem:[%s1937] sm:$0xff] %v1938
  %s1940 = scalar_lea.vmem %s0, 400
  %v1941 = vld [vmem:[%s1940] sm:$0xf]
  %v1942 = vunpack.c.l.bf16 %v1941
  %v1943 = vunpack.c.h.bf16 %v1941
  %s1944 = scalar_lea.vmem %s1, 2128
  %s1946 = ssub.s32 0, 4
  %s1947 = scalar_lea.vmem %s1944, %s1946
  %v1948 = vpack.c.bf16 %v1942, %v432
  %1949 = vst [vmem:[%s1947] sm:$0xff] %v1948
  %s1950 = scalar_lea.vmem %s0, 1840
  %v1951 = vld [vmem:[%s1950] sm:$0xf]
  %v1952 = vunpack.c.l.bf16 %v1951
  %v1953 = vunpack.c.h.bf16 %v1951
  %s1954 = scalar_lea.vmem %s1, 688
  %s1956 = ssub.s32 0, 4
  %s1957 = scalar_lea.vmem %s1954, %s1956
  %v1958 = vpack.c.bf16 %v1952, %v437
  %1959 = vst [vmem:[%s1957] sm:$0xff] %v1958
  %s1960 = scalar_lea.vmem %s0, 976
  %v1961 = vld [vmem:[%s1960] sm:$0xf]
  %v1962 = vunpack.c.l.bf16 %v1961
  %v1963 = vunpack.c.h.bf16 %v1961
  %s1964 = scalar_lea.vmem %s1, 1552
  %s1966 = ssub.s32 0, 4
  %s1967 = scalar_lea.vmem %s1964, %s1966
  %v1968 = vpack.c.bf16 %v1962, %v442
  %1969 = vst [vmem:[%s1967] sm:$0xff] %v1968
  %s1970 = scalar_lea.vmem %s0, 112
  %v1971 = vld [vmem:[%s1970] sm:$0xf]
  %v1972 = vunpack.c.l.bf16 %v1971
  %v1973 = vunpack.c.h.bf16 %v1971
  %s1974 = scalar_lea.vmem %s1, 2416
  %s1976 = ssub.s32 0, 4
  %s1977 = scalar_lea.vmem %s1974, %s1976
  %v1978 = vpack.c.bf16 %v1972, %v447
  %1979 = vst [vmem:[%s1977] sm:$0xff] %v1978
  %s1980 = scalar_lea.vmem %s0, 2428
  %v1981 = vld [vmem:[%s1980] sm:$0xf]
  %v1982 = vunpack.c.l.bf16 %v1981
  %v1983 = vunpack.c.h.bf16 %v1981
  %s1984 = scalar_lea.vmem %s1, 124
  %s1986 = ssub.s32 0, 4
  %s1987 = scalar_lea.vmem %s1984, %s1986
  %v1988 = vpack.c.bf16 %v1982, %v452
  %1989 = vst [vmem:[%s1987] sm:$0xff] %v1988
  %s1990 = scalar_lea.vmem %s0, 1564
  %v1991 = vld [vmem:[%s1990] sm:$0xf]
  %v1992 = vunpack.c.l.bf16 %v1991
  %v1993 = vunpack.c.h.bf16 %v1991
  %s1994 = scalar_lea.vmem %s1, 988
  %s1996 = ssub.s32 0, 4
  %s1997 = scalar_lea.vmem %s1994, %s1996
  %v1998 = vpack.c.bf16 %v1992, %v457
  %1999 = vst [vmem:[%s1997] sm:$0xff] %v1998
  %s2000 = scalar_lea.vmem %s0, 700
  %v2001 = vld [vmem:[%s2000] sm:$0xf]
  %v2002 = vunpack.c.l.bf16 %v2001
  %v2003 = vunpack.c.h.bf16 %v2001
  %s2004 = scalar_lea.vmem %s1, 1852
  %s2006 = ssub.s32 0, 4
  %s2007 = scalar_lea.vmem %s2004, %s2006
  %v2008 = vpack.c.bf16 %v2002, %v462
  %2009 = vst [vmem:[%s2007] sm:$0xff] %v2008
  %s2010 = scalar_lea.vmem %s0, 2140
  %v2011 = vld [vmem:[%s2010] sm:$0xf]
  %v2012 = vunpack.c.l.bf16 %v2011
  %v2013 = vunpack.c.h.bf16 %v2011
  %s2014 = scalar_lea.vmem %s1, 412
  %s2016 = ssub.s32 0, 4
  %s2017 = scalar_lea.vmem %s2014, %s2016
  %v2018 = vpack.c.bf16 %v2012, %v467
  %2019 = vst [vmem:[%s2017] sm:$0xff] %v2018
  %s2020 = scalar_lea.vmem %s0, 1276
  %v2021 = vld [vmem:[%s2020] sm:$0xf]
  %v2022 = vunpack.c.l.bf16 %v2021
  %v2023 = vunpack.c.h.bf16 %v2021
  %s2024 = scalar_lea.vmem %s1, 1276
  %s2026 = ssub.s32 0, 4
  %s2027 = scalar_lea.vmem %s2024, %s2026
  %v2028 = vpack.c.bf16 %v2022, %v472
  %2029 = vst [vmem:[%s2027] sm:$0xff] %v2028
  %s2030 = scalar_lea.vmem %s0, 412
  %v2031 = vld [vmem:[%s2030] sm:$0xf]
  %v2032 = vunpack.c.l.bf16 %v2031
  %v2033 = vunpack.c.h.bf16 %v2031
  %s2034 = scalar_lea.vmem %s1, 2140
  %s2036 = ssub.s32 0, 4
  %s2037 = scalar_lea.vmem %s2034, %s2036
  %v2038 = vpack.c.bf16 %v2032, %v477
  %2039 = vst [vmem:[%s2037] sm:$0xff] %v2038
  %s2040 = scalar_lea.vmem %s0, 1852
  %v2041 = vld [vmem:[%s2040] sm:$0xf]
  %v2042 = vunpack.c.l.bf16 %v2041
  %v2043 = vunpack.c.h.bf16 %v2041
  %s2044 = scalar_lea.vmem %s1, 700
  %s2046 = ssub.s32 0, 4
  %s2047 = scalar_lea.vmem %s2044, %s2046
  %v2048 = vpack.c.bf16 %v2042, %v482
  %2049 = vst [vmem:[%s2047] sm:$0xff] %v2048
  %s2050 = scalar_lea.vmem %s0, 988
  %v2051 = vld [vmem:[%s2050] sm:$0xf]
  %v2052 = vunpack.c.l.bf16 %v2051
  %v2053 = vunpack.c.h.bf16 %v2051
  %s2054 = scalar_lea.vmem %s1, 1564
  %s2056 = ssub.s32 0, 4
  %s2057 = scalar_lea.vmem %s2054, %s2056
  %v2058 = vpack.c.bf16 %v2052, %v487
  %2059 = vst [vmem:[%s2057] sm:$0xff] %v2058
  %s2060 = scalar_lea.vmem %s0, 124
  %v2061 = vld [vmem:[%s2060] sm:$0xf]
  %v2062 = vunpack.c.l.bf16 %v2061
  %v2063 = vunpack.c.h.bf16 %v2061
  %s2064 = scalar_lea.vmem %s1, 2428
  %s2066 = ssub.s32 0, 4
  %s2067 = scalar_lea.vmem %s2064, %s2066
  %v2068 = vpack.c.bf16 %v2062, %v492
  %2069 = vst [vmem:[%s2067] sm:$0xff] %v2068
  %s2070 = scalar_lea.vmem %s0, 2440
  %v2071 = vld [vmem:[%s2070] sm:$0xf]
  %v2072 = vunpack.c.l.bf16 %v2071
  %v2073 = vunpack.c.h.bf16 %v2071
  %s2074 = scalar_lea.vmem %s1, 136
  %s2076 = ssub.s32 0, 4
  %s2077 = scalar_lea.vmem %s2074, %s2076
  %v2078 = vpack.c.bf16 %v2072, %v497
  %2079 = vst [vmem:[%s2077] sm:$0xff] %v2078
  %s2080 = scalar_lea.vmem %s0, 1576
  %v2081 = vld [vmem:[%s2080] sm:$0xf]
  %v2082 = vunpack.c.l.bf16 %v2081
  %v2083 = vunpack.c.h.bf16 %v2081
  %s2084 = scalar_lea.vmem %s1, 1000
  %s2086 = ssub.s32 0, 4
  %s2087 = scalar_lea.vmem %s2084, %s2086
  %v2088 = vpack.c.bf16 %v2082, %v502
  %2089 = vst [vmem:[%s2087] sm:$0xff] %v2088
  %s2090 = scalar_lea.vmem %s0, 712
  %v2091 = vld [vmem:[%s2090] sm:$0xf]
  %v2092 = vunpack.c.l.bf16 %v2091
  %v2093 = vunpack.c.h.bf16 %v2091
  %s2094 = scalar_lea.vmem %s1, 1864
  %s2096 = ssub.s32 0, 4
  %s2097 = scalar_lea.vmem %s2094, %s2096
  %v2098 = vpack.c.bf16 %v2092, %v507
  %2099 = vst [vmem:[%s2097] sm:$0xff] %v2098
  %s2100 = scalar_lea.vmem %s0, 2152
  %v2101 = vld [vmem:[%s2100] sm:$0xf]
  %v2102 = vunpack.c.l.bf16 %v2101
  %v2103 = vunpack.c.h.bf16 %v2101
  %s2104 = scalar_lea.vmem %s1, 424
  %s2106 = ssub.s32 0, 4
  %s2107 = scalar_lea.vmem %s2104, %s2106
  %v2108 = vpack.c.bf16 %v2102, %v512
  %2109 = vst [vmem:[%s2107] sm:$0xff] %v2108
  %s2110 = scalar_lea.vmem %s0, 1288
  %v2111 = vld [vmem:[%s2110] sm:$0xf]
  %v2112 = vunpack.c.l.bf16 %v2111
  %v2113 = vunpack.c.h.bf16 %v2111
  %s2114 = scalar_lea.vmem %s1, 1288
  %s2116 = ssub.s32 0, 4
  %s2117 = scalar_lea.vmem %s2114, %s2116
  %v2118 = vpack.c.bf16 %v2112, %v517
  %2119 = vst [vmem:[%s2117] sm:$0xff] %v2118
  %s2120 = scalar_lea.vmem %s0, 424
  %v2121 = vld [vmem:[%s2120] sm:$0xf]
  %v2122 = vunpack.c.l.bf16 %v2121
  %v2123 = vunpack.c.h.bf16 %v2121
  %s2124 = scalar_lea.vmem %s1, 2152
  %s2126 = ssub.s32 0, 4
  %s2127 = scalar_lea.vmem %s2124, %s2126
  %v2128 = vpack.c.bf16 %v2122, %v522
  %2129 = vst [vmem:[%s2127] sm:$0xff] %v2128
  %s2130 = scalar_lea.vmem %s0, 1864
  %v2131 = vld [vmem:[%s2130] sm:$0xf]
  %v2132 = vunpack.c.l.bf16 %v2131
  %v2133 = vunpack.c.h.bf16 %v2131
  %s2134 = scalar_lea.vmem %s1, 712
  %s2136 = ssub.s32 0, 4
  %s2137 = scalar_lea.vmem %s2134, %s2136
  %v2138 = vpack.c.bf16 %v2132, %v527
  %2139 = vst [vmem:[%s2137] sm:$0xff] %v2138
  %s2140 = scalar_lea.vmem %s0, 1000
  %v2141 = vld [vmem:[%s2140] sm:$0xf]
  %v2142 = vunpack.c.l.bf16 %v2141
  %v2143 = vunpack.c.h.bf16 %v2141
  %s2144 = scalar_lea.vmem %s1, 1576
  %s2146 = ssub.s32 0, 4
  %s2147 = scalar_lea.vmem %s2144, %s2146
  %v2148 = vpack.c.bf16 %v2142, %v532
  %2149 = vst [vmem:[%s2147] sm:$0xff] %v2148
  %s2150 = scalar_lea.vmem %s0, 136
  %v2151 = vld [vmem:[%s2150] sm:$0xf]
  %v2152 = vunpack.c.l.bf16 %v2151
  %v2153 = vunpack.c.h.bf16 %v2151
  %s2154 = scalar_lea.vmem %s1, 2440
  %s2156 = ssub.s32 0, 4
  %s2157 = scalar_lea.vmem %s2154, %s2156
  %v2158 = vpack.c.bf16 %v2152, %v537
  %2159 = vst [vmem:[%s2157] sm:$0xff] %v2158
  %s2160 = scalar_lea.vmem %s0, 2452
  %v2161 = vld [vmem:[%s2160] sm:$0xf]
  %v2162 = vunpack.c.l.bf16 %v2161
  %v2163 = vunpack.c.h.bf16 %v2161
  %s2164 = scalar_lea.vmem %s1, 148
  %s2166 = ssub.s32 0, 4
  %s2167 = scalar_lea.vmem %s2164, %s2166
  %v2168 = vpack.c.bf16 %v2162, %v542
  %2169 = vst [vmem:[%s2167] sm:$0xff] %v2168
  %s2170 = scalar_lea.vmem %s0, 1588
  %v2171 = vld [vmem:[%s2170] sm:$0xf]
  %v2172 = vunpack.c.l.bf16 %v2171
  %v2173 = vunpack.c.h.bf16 %v2171
  %s2174 = scalar_lea.vmem %s1, 1012
  %s2176 = ssub.s32 0, 4
  %s2177 = scalar_lea.vmem %s2174, %s2176
  %v2178 = vpack.c.bf16 %v2172, %v547
  %2179 = vst [vmem:[%s2177] sm:$0xff] %v2178
  %s2180 = scalar_lea.vmem %s0, 724
  %v2181 = vld [vmem:[%s2180] sm:$0xf]
  %v2182 = vunpack.c.l.bf16 %v2181
  %v2183 = vunpack.c.h.bf16 %v2181
  %s2184 = scalar_lea.vmem %s1, 1876
  %s2186 = ssub.s32 0, 4
  %s2187 = scalar_lea.vmem %s2184, %s2186
  %v2188 = vpack.c.bf16 %v2182, %v552
  %2189 = vst [vmem:[%s2187] sm:$0xff] %v2188
  %s2190 = scalar_lea.vmem %s0, 2164
  %v2191 = vld [vmem:[%s2190] sm:$0xf]
  %v2192 = vunpack.c.l.bf16 %v2191
  %v2193 = vunpack.c.h.bf16 %v2191
  %s2194 = scalar_lea.vmem %s1, 436
  %s2196 = ssub.s32 0, 4
  %s2197 = scalar_lea.vmem %s2194, %s2196
  %v2198 = vpack.c.bf16 %v2192, %v557
  %2199 = vst [vmem:[%s2197] sm:$0xff] %v2198
  %s2200 = scalar_lea.vmem %s0, 1300
  %v2201 = vld [vmem:[%s2200] sm:$0xf]
  %v2202 = vunpack.c.l.bf16 %v2201
  %v2203 = vunpack.c.h.bf16 %v2201
  %s2204 = scalar_lea.vmem %s1, 1300
  %s2206 = ssub.s32 0, 4
  %s2207 = scalar_lea.vmem %s2204, %s2206
  %v2208 = vpack.c.bf16 %v2202, %v562
  %2209 = vst [vmem:[%s2207] sm:$0xff] %v2208
  %s2210 = scalar_lea.vmem %s0, 436
  %v2211 = vld [vmem:[%s2210] sm:$0xf]
  %v2212 = vunpack.c.l.bf16 %v2211
  %v2213 = vunpack.c.h.bf16 %v2211
  %s2214 = scalar_lea.vmem %s1, 2164
  %s2216 = ssub.s32 0, 4
  %s2217 = scalar_lea.vmem %s2214, %s2216
  %v2218 = vpack.c.bf16 %v2212, %v567
  %2219 = vst [vmem:[%s2217] sm:$0xff] %v2218
  %s2220 = scalar_lea.vmem %s0, 1876
  %v2221 = vld [vmem:[%s2220] sm:$0xf]
  %v2222 = vunpack.c.l.bf16 %v2221
  %v2223 = vunpack.c.h.bf16 %v2221
  %s2224 = scalar_lea.vmem %s1, 724
  %s2226 = ssub.s32 0, 4
  %s2227 = scalar_lea.vmem %s2224, %s2226
  %v2228 = vpack.c.bf16 %v2222, %v572
  %2229 = vst [vmem:[%s2227] sm:$0xff] %v2228
  %s2230 = scalar_lea.vmem %s0, 1012
  %v2231 = vld [vmem:[%s2230] sm:$0xf]
  %v2232 = vunpack.c.l.bf16 %v2231
  %v2233 = vunpack.c.h.bf16 %v2231
  %s2234 = scalar_lea.vmem %s1, 1588
  %s2236 = ssub.s32 0, 4
  %s2237 = scalar_lea.vmem %s2234, %s2236
  %v2238 = vpack.c.bf16 %v2232, %v577
  %2239 = vst [vmem:[%s2237] sm:$0xff] %v2238
  %s2240 = scalar_lea.vmem %s0, 148
  %v2241 = vld [vmem:[%s2240] sm:$0xf]
  %v2242 = vunpack.c.l.bf16 %v2241
  %v2243 = vunpack.c.h.bf16 %v2241
  %s2244 = scalar_lea.vmem %s1, 2452
  %s2246 = ssub.s32 0, 4
  %s2247 = scalar_lea.vmem %s2244, %s2246
  %v2248 = vpack.c.bf16 %v2242, %v582
  %2249 = vst [vmem:[%s2247] sm:$0xff] %v2248
  %s2250 = scalar_lea.vmem %s0, 2464
  %v2251 = vld [vmem:[%s2250] sm:$0xf]
  %v2252 = vunpack.c.l.bf16 %v2251
  %v2253 = vunpack.c.h.bf16 %v2251
  %s2254 = scalar_lea.vmem %s1, 160
  %s2256 = ssub.s32 0, 4
  %s2257 = scalar_lea.vmem %s2254, %s2256
  %v2258 = vpack.c.bf16 %v2252, %v587
  %2259 = vst [vmem:[%s2257] sm:$0xff] %v2258
  %s2260 = scalar_lea.vmem %s0, 1600
  %v2261 = vld [vmem:[%s2260] sm:$0xf]
  %v2262 = vunpack.c.l.bf16 %v2261
  %v2263 = vunpack.c.h.bf16 %v2261
  %s2264 = scalar_lea.vmem %s1, 1024
  %s2266 = ssub.s32 0, 4
  %s2267 = scalar_lea.vmem %s2264, %s2266
  %v2268 = vpack.c.bf16 %v2262, %v592
  %2269 = vst [vmem:[%s2267] sm:$0xff] %v2268
  %s2270 = scalar_lea.vmem %s0, 736
  %v2271 = vld [vmem:[%s2270] sm:$0xf]
  %v2272 = vunpack.c.l.bf16 %v2271
  %v2273 = vunpack.c.h.bf16 %v2271
  %s2274 = scalar_lea.vmem %s1, 1888
  %s2276 = ssub.s32 0, 4
  %s2277 = scalar_lea.vmem %s2274, %s2276
  %v2278 = vpack.c.bf16 %v2272, %v597
  %2279 = vst [vmem:[%s2277] sm:$0xff] %v2278
  %s2280 = scalar_lea.vmem %s0, 2176
  %v2281 = vld [vmem:[%s2280] sm:$0xf]
  %v2282 = vunpack.c.l.bf16 %v2281
  %v2283 = vunpack.c.h.bf16 %v2281
  %s2284 = scalar_lea.vmem %s1, 448
  %s2286 = ssub.s32 0, 4
  %s2287 = scalar_lea.vmem %s2284, %s2286
  %v2288 = vpack.c.bf16 %v2282, %v602
  %2289 = vst [vmem:[%s2287] sm:$0xff] %v2288
  %s2290 = scalar_lea.vmem %s0, 1312
  %v2291 = vld [vmem:[%s2290] sm:$0xf]
  %v2292 = vunpack.c.l.bf16 %v2291
  %v2293 = vunpack.c.h.bf16 %v2291
  %s2294 = scalar_lea.vmem %s1, 1312
  %s2296 = ssub.s32 0, 4
  %s2297 = scalar_lea.vmem %s2294, %s2296
  %v2298 = vpack.c.bf16 %v2292, %v607
  %2299 = vst [vmem:[%s2297] sm:$0xff] %v2298
  %s2300 = scalar_lea.vmem %s0, 448
  %v2301 = vld [vmem:[%s2300] sm:$0xf]
  %v2302 = vunpack.c.l.bf16 %v2301
  %v2303 = vunpack.c.h.bf16 %v2301
  %s2304 = scalar_lea.vmem %s1, 2176
  %s2306 = ssub.s32 0, 4
  %s2307 = scalar_lea.vmem %s2304, %s2306
  %v2308 = vpack.c.bf16 %v2302, %v612
  %2309 = vst [vmem:[%s2307] sm:$0xff] %v2308
  %s2310 = scalar_lea.vmem %s0, 1888
  %v2311 = vld [vmem:[%s2310] sm:$0xf]
  %v2312 = vunpack.c.l.bf16 %v2311
  %v2313 = vunpack.c.h.bf16 %v2311
  %s2314 = scalar_lea.vmem %s1, 736
  %s2316 = ssub.s32 0, 4
  %s2317 = scalar_lea.vmem %s2314, %s2316
  %v2318 = vpack.c.bf16 %v2312, %v617
  %2319 = vst [vmem:[%s2317] sm:$0xff] %v2318
  %s2320 = scalar_lea.vmem %s0, 1024
  %v2321 = vld [vmem:[%s2320] sm:$0xf]
  %v2322 = vunpack.c.l.bf16 %v2321
  %v2323 = vunpack.c.h.bf16 %v2321
  %s2324 = scalar_lea.vmem %s1, 1600
  %s2326 = ssub.s32 0, 4
  %s2327 = scalar_lea.vmem %s2324, %s2326
  %v2328 = vpack.c.bf16 %v2322, %v622
  %2329 = vst [vmem:[%s2327] sm:$0xff] %v2328
  %s2330 = scalar_lea.vmem %s0, 160
  %v2331 = vld [vmem:[%s2330] sm:$0xf]
  %v2332 = vunpack.c.l.bf16 %v2331
  %v2333 = vunpack.c.h.bf16 %v2331
  %s2334 = scalar_lea.vmem %s1, 2464
  %s2336 = ssub.s32 0, 4
  %s2337 = scalar_lea.vmem %s2334, %s2336
  %v2338 = vpack.c.bf16 %v2332, %v627
  %2339 = vst [vmem:[%s2337] sm:$0xff] %v2338
  %s2340 = scalar_lea.vmem %s0, 2476
  %v2341 = vld [vmem:[%s2340] sm:$0xf]
  %v2342 = vunpack.c.l.bf16 %v2341
  %v2343 = vunpack.c.h.bf16 %v2341
  %s2344 = scalar_lea.vmem %s1, 172
  %s2346 = ssub.s32 0, 4
  %s2347 = scalar_lea.vmem %s2344, %s2346
  %v2348 = vpack.c.bf16 %v2342, %v632
  %2349 = vst [vmem:[%s2347] sm:$0xff] %v2348
  %s2350 = scalar_lea.vmem %s0, 1612
  %v2351 = vld [vmem:[%s2350] sm:$0xf]
  %v2352 = vunpack.c.l.bf16 %v2351
  %v2353 = vunpack.c.h.bf16 %v2351
  %s2354 = scalar_lea.vmem %s1, 1036
  %s2356 = ssub.s32 0, 4
  %s2357 = scalar_lea.vmem %s2354, %s2356
  %v2358 = vpack.c.bf16 %v2352, %v637
  %2359 = vst [vmem:[%s2357] sm:$0xff] %v2358
  %s2360 = scalar_lea.vmem %s0, 748
  %v2361 = vld [vmem:[%s2360] sm:$0xf]
  %v2362 = vunpack.c.l.bf16 %v2361
  %v2363 = vunpack.c.h.bf16 %v2361
  %s2364 = scalar_lea.vmem %s1, 1900
  %s2366 = ssub.s32 0, 4
  %s2367 = scalar_lea.vmem %s2364, %s2366
  %v2368 = vpack.c.bf16 %v2362, %v642
  %2369 = vst [vmem:[%s2367] sm:$0xff] %v2368
  %s2370 = scalar_lea.vmem %s0, 2188
  %v2371 = vld [vmem:[%s2370] sm:$0xf]
  %v2372 = vunpack.c.l.bf16 %v2371
  %v2373 = vunpack.c.h.bf16 %v2371
  %s2374 = scalar_lea.vmem %s1, 460
  %s2376 = ssub.s32 0, 4
  %s2377 = scalar_lea.vmem %s2374, %s2376
  %v2378 = vpack.c.bf16 %v2372, %v647
  %2379 = vst [vmem:[%s2377] sm:$0xff] %v2378
  %s2380 = scalar_lea.vmem %s0, 1324
  %v2381 = vld [vmem:[%s2380] sm:$0xf]
  %v2382 = vunpack.c.l.bf16 %v2381
  %v2383 = vunpack.c.h.bf16 %v2381
  %s2384 = scalar_lea.vmem %s1, 1324
  %s2386 = ssub.s32 0, 4
  %s2387 = scalar_lea.vmem %s2384, %s2386
  %v2388 = vpack.c.bf16 %v2382, %v652
  %2389 = vst [vmem:[%s2387] sm:$0xff] %v2388
  %s2390 = scalar_lea.vmem %s0, 460
  %v2391 = vld [vmem:[%s2390] sm:$0xf]
  %v2392 = vunpack.c.l.bf16 %v2391
  %v2393 = vunpack.c.h.bf16 %v2391
  %s2394 = scalar_lea.vmem %s1, 2188
  %s2396 = ssub.s32 0, 4
  %s2397 = scalar_lea.vmem %s2394, %s2396
  %v2398 = vpack.c.bf16 %v2392, %v657
  %2399 = vst [vmem:[%s2397] sm:$0xff] %v2398
  %s2400 = scalar_lea.vmem %s0, 1900
  %v2401 = vld [vmem:[%s2400] sm:$0xf]
  %v2402 = vunpack.c.l.bf16 %v2401
  %v2403 = vunpack.c.h.bf16 %v2401
  %s2404 = scalar_lea.vmem %s1, 748
  %s2406 = ssub.s32 0, 4
  %s2407 = scalar_lea.vmem %s2404, %s2406
  %v2408 = vpack.c.bf16 %v2402, %v662
  %2409 = vst [vmem:[%s2407] sm:$0xff] %v2408
  %s2410 = scalar_lea.vmem %s0, 1036
  %v2411 = vld [vmem:[%s2410] sm:$0xf]
  %v2412 = vunpack.c.l.bf16 %v2411
  %v2413 = vunpack.c.h.bf16 %v2411
  %s2414 = scalar_lea.vmem %s1, 1612
  %s2416 = ssub.s32 0, 4
  %s2417 = scalar_lea.vmem %s2414, %s2416
  %v2418 = vpack.c.bf16 %v2412, %v667
  %2419 = vst [vmem:[%s2417] sm:$0xff] %v2418
  %s2420 = scalar_lea.vmem %s0, 172
  %v2421 = vld [vmem:[%s2420] sm:$0xf]
  %v2422 = vunpack.c.l.bf16 %v2421
  %v2423 = vunpack.c.h.bf16 %v2421
  %s2424 = scalar_lea.vmem %s1, 2476
  %s2426 = ssub.s32 0, 4
  %s2427 = scalar_lea.vmem %s2424, %s2426
  %v2428 = vpack.c.bf16 %v2422, %v672
  %2429 = vst [vmem:[%s2427] sm:$0xff] %v2428
  %s2430 = scalar_lea.vmem %s0, 2488
  %v2431 = vld [vmem:[%s2430] sm:$0xf]
  %v2432 = vunpack.c.l.bf16 %v2431
  %v2433 = vunpack.c.h.bf16 %v2431
  %s2434 = scalar_lea.vmem %s1, 184
  %s2436 = ssub.s32 0, 4
  %s2437 = scalar_lea.vmem %s2434, %s2436
  %v2438 = vpack.c.bf16 %v2432, %v677
  %2439 = vst [vmem:[%s2437] sm:$0xff] %v2438
  %s2440 = scalar_lea.vmem %s0, 1624
  %v2441 = vld [vmem:[%s2440] sm:$0xf]
  %v2442 = vunpack.c.l.bf16 %v2441
  %v2443 = vunpack.c.h.bf16 %v2441
  %s2444 = scalar_lea.vmem %s1, 1048
  %s2446 = ssub.s32 0, 4
  %s2447 = scalar_lea.vmem %s2444, %s2446
  %v2448 = vpack.c.bf16 %v2442, %v682
  %2449 = vst [vmem:[%s2447] sm:$0xff] %v2448
  %s2450 = scalar_lea.vmem %s0, 760
  %v2451 = vld [vmem:[%s2450] sm:$0xf]
  %v2452 = vunpack.c.l.bf16 %v2451
  %v2453 = vunpack.c.h.bf16 %v2451
  %s2454 = scalar_lea.vmem %s1, 1912
  %s2456 = ssub.s32 0, 4
  %s2457 = scalar_lea.vmem %s2454, %s2456
  %v2458 = vpack.c.bf16 %v2452, %v687
  %2459 = vst [vmem:[%s2457] sm:$0xff] %v2458
  %s2460 = scalar_lea.vmem %s0, 2200
  %v2461 = vld [vmem:[%s2460] sm:$0xf]
  %v2462 = vunpack.c.l.bf16 %v2461
  %v2463 = vunpack.c.h.bf16 %v2461
  %s2464 = scalar_lea.vmem %s1, 472
  %s2466 = ssub.s32 0, 4
  %s2467 = scalar_lea.vmem %s2464, %s2466
  %v2468 = vpack.c.bf16 %v2462, %v692
  %2469 = vst [vmem:[%s2467] sm:$0xff] %v2468
  %s2470 = scalar_lea.vmem %s0, 1336
  %v2471 = vld [vmem:[%s2470] sm:$0xf]
  %v2472 = vunpack.c.l.bf16 %v2471
  %v2473 = vunpack.c.h.bf16 %v2471
  %s2474 = scalar_lea.vmem %s1, 1336
  %s2476 = ssub.s32 0, 4
  %s2477 = scalar_lea.vmem %s2474, %s2476
  %v2478 = vpack.c.bf16 %v2472, %v697
  %2479 = vst [vmem:[%s2477] sm:$0xff] %v2478
  %s2480 = scalar_lea.vmem %s0, 472
  %v2481 = vld [vmem:[%s2480] sm:$0xf]
  %v2482 = vunpack.c.l.bf16 %v2481
  %v2483 = vunpack.c.h.bf16 %v2481
  %s2484 = scalar_lea.vmem %s1, 2200
  %s2486 = ssub.s32 0, 4
  %s2487 = scalar_lea.vmem %s2484, %s2486
  %v2488 = vpack.c.bf16 %v2482, %v702
  %2489 = vst [vmem:[%s2487] sm:$0xff] %v2488
  %s2490 = scalar_lea.vmem %s0, 1912
  %v2491 = vld [vmem:[%s2490] sm:$0xf]
  %v2492 = vunpack.c.l.bf16 %v2491
  %v2493 = vunpack.c.h.bf16 %v2491
  %s2494 = scalar_lea.vmem %s1, 760
  %s2496 = ssub.s32 0, 4
  %s2497 = scalar_lea.vmem %s2494, %s2496
  %v2498 = vpack.c.bf16 %v2492, %v707
  %2499 = vst [vmem:[%s2497] sm:$0xff] %v2498
  %s2500 = scalar_lea.vmem %s0, 1048
  %v2501 = vld [vmem:[%s2500] sm:$0xf]
  %v2502 = vunpack.c.l.bf16 %v2501
  %v2503 = vunpack.c.h.bf16 %v2501
  %s2504 = scalar_lea.vmem %s1, 1624
  %s2506 = ssub.s32 0, 4
  %s2507 = scalar_lea.vmem %s2504, %s2506
  %v2508 = vpack.c.bf16 %v2502, %v712
  %2509 = vst [vmem:[%s2507] sm:$0xff] %v2508
  %s2510 = scalar_lea.vmem %s0, 184
  %v2511 = vld [vmem:[%s2510] sm:$0xf]
  %v2512 = vunpack.c.l.bf16 %v2511
  %v2513 = vunpack.c.h.bf16 %v2511
  %s2514 = scalar_lea.vmem %s1, 2488
  %s2516 = ssub.s32 0, 4
  %s2517 = scalar_lea.vmem %s2514, %s2516
  %v2518 = vpack.c.bf16 %v2512, %v717
  %2519 = vst [vmem:[%s2517] sm:$0xff] %v2518
  %s2520 = scalar_lea.vmem %s0, 2500
  %v2521 = vld [vmem:[%s2520] sm:$0xf]
  %v2522 = vunpack.c.l.bf16 %v2521
  %v2523 = vunpack.c.h.bf16 %v2521
  %s2524 = scalar_lea.vmem %s1, 196
  %s2526 = ssub.s32 0, 4
  %s2527 = scalar_lea.vmem %s2524, %s2526
  %v2528 = vpack.c.bf16 %v2522, %v722
  %2529 = vst [vmem:[%s2527] sm:$0xff] %v2528
  %s2530 = scalar_lea.vmem %s0, 1636
  %v2531 = vld [vmem:[%s2530] sm:$0xf]
  %v2532 = vunpack.c.l.bf16 %v2531
  %v2533 = vunpack.c.h.bf16 %v2531
  %s2534 = scalar_lea.vmem %s1, 1060
  %s2536 = ssub.s32 0, 4
  %s2537 = scalar_lea.vmem %s2534, %s2536
  %v2538 = vpack.c.bf16 %v2532, %v727
  %2539 = vst [vmem:[%s2537] sm:$0xff] %v2538
  %s2540 = scalar_lea.vmem %s0, 772
  %v2541 = vld [vmem:[%s2540] sm:$0xf]
  %v2542 = vunpack.c.l.bf16 %v2541
  %v2543 = vunpack.c.h.bf16 %v2541
  %s2544 = scalar_lea.vmem %s1, 1924
  %s2546 = ssub.s32 0, 4
  %s2547 = scalar_lea.vmem %s2544, %s2546
  %v2548 = vpack.c.bf16 %v2542, %v732
  %2549 = vst [vmem:[%s2547] sm:$0xff] %v2548
  %s2550 = scalar_lea.vmem %s0, 2212
  %v2551 = vld [vmem:[%s2550] sm:$0xf]
  %v2552 = vunpack.c.l.bf16 %v2551
  %v2553 = vunpack.c.h.bf16 %v2551
  %s2554 = scalar_lea.vmem %s1, 484
  %s2556 = ssub.s32 0, 4
  %s2557 = scalar_lea.vmem %s2554, %s2556
  %v2558 = vpack.c.bf16 %v2552, %v737
  %2559 = vst [vmem:[%s2557] sm:$0xff] %v2558
  %s2560 = scalar_lea.vmem %s0, 1348
  %v2561 = vld [vmem:[%s2560] sm:$0xf]
  %v2562 = vunpack.c.l.bf16 %v2561
  %v2563 = vunpack.c.h.bf16 %v2561
  %s2564 = scalar_lea.vmem %s1, 1348
  %s2566 = ssub.s32 0, 4
  %s2567 = scalar_lea.vmem %s2564, %s2566
  %v2568 = vpack.c.bf16 %v2562, %v742
  %2569 = vst [vmem:[%s2567] sm:$0xff] %v2568
  %s2570 = scalar_lea.vmem %s0, 484
  %v2571 = vld [vmem:[%s2570] sm:$0xf]
  %v2572 = vunpack.c.l.bf16 %v2571
  %v2573 = vunpack.c.h.bf16 %v2571
  %s2574 = scalar_lea.vmem %s1, 2212
  %s2576 = ssub.s32 0, 4
  %s2577 = scalar_lea.vmem %s2574, %s2576
  %v2578 = vpack.c.bf16 %v2572, %v747
  %2579 = vst [vmem:[%s2577] sm:$0xff] %v2578
  %s2580 = scalar_lea.vmem %s0, 1924
  %v2581 = vld [vmem:[%s2580] sm:$0xf]
  %v2582 = vunpack.c.l.bf16 %v2581
  %v2583 = vunpack.c.h.bf16 %v2581
  %s2584 = scalar_lea.vmem %s1, 772
  %s2586 = ssub.s32 0, 4
  %s2587 = scalar_lea.vmem %s2584, %s2586
  %v2588 = vpack.c.bf16 %v2582, %v752
  %2589 = vst [vmem:[%s2587] sm:$0xff] %v2588
  %s2590 = scalar_lea.vmem %s0, 1060
  %v2591 = vld [vmem:[%s2590] sm:$0xf]
  %v2592 = vunpack.c.l.bf16 %v2591
  %v2593 = vunpack.c.h.bf16 %v2591
  %s2594 = scalar_lea.vmem %s1, 1636
  %s2596 = ssub.s32 0, 4
  %s2597 = scalar_lea.vmem %s2594, %s2596
  %v2598 = vpack.c.bf16 %v2592, %v757
  %2599 = vst [vmem:[%s2597] sm:$0xff] %v2598
  %s2600 = scalar_lea.vmem %s0, 196
  %v2601 = vld [vmem:[%s2600] sm:$0xf]
  %v2602 = vunpack.c.l.bf16 %v2601
  %v2603 = vunpack.c.h.bf16 %v2601
  %s2604 = scalar_lea.vmem %s1, 2500
  %s2606 = ssub.s32 0, 4
  %s2607 = scalar_lea.vmem %s2604, %s2606
  %v2608 = vpack.c.bf16 %v2602, %v762
  %2609 = vst [vmem:[%s2607] sm:$0xff] %v2608
  %s2610 = scalar_lea.vmem %s0, 2512
  %v2611 = vld [vmem:[%s2610] sm:$0xf]
  %v2612 = vunpack.c.l.bf16 %v2611
  %v2613 = vunpack.c.h.bf16 %v2611
  %s2614 = scalar_lea.vmem %s1, 208
  %s2616 = ssub.s32 0, 4
  %s2617 = scalar_lea.vmem %s2614, %s2616
  %v2618 = vpack.c.bf16 %v2612, %v767
  %2619 = vst [vmem:[%s2617] sm:$0xff] %v2618
  %s2620 = scalar_lea.vmem %s0, 1648
  %v2621 = vld [vmem:[%s2620] sm:$0xf]
  %v2622 = vunpack.c.l.bf16 %v2621
  %v2623 = vunpack.c.h.bf16 %v2621
  %s2624 = scalar_lea.vmem %s1, 1072
  %s2626 = ssub.s32 0, 4
  %s2627 = scalar_lea.vmem %s2624, %s2626
  %v2628 = vpack.c.bf16 %v2622, %v772
  %2629 = vst [vmem:[%s2627] sm:$0xff] %v2628
  %s2630 = scalar_lea.vmem %s0, 784
  %v2631 = vld [vmem:[%s2630] sm:$0xf]
  %v2632 = vunpack.c.l.bf16 %v2631
  %v2633 = vunpack.c.h.bf16 %v2631
  %s2634 = scalar_lea.vmem %s1, 1936
  %s2636 = ssub.s32 0, 4
  %s2637 = scalar_lea.vmem %s2634, %s2636
  %v2638 = vpack.c.bf16 %v2632, %v777
  %2639 = vst [vmem:[%s2637] sm:$0xff] %v2638
  %s2640 = scalar_lea.vmem %s0, 2224
  %v2641 = vld [vmem:[%s2640] sm:$0xf]
  %v2642 = vunpack.c.l.bf16 %v2641
  %v2643 = vunpack.c.h.bf16 %v2641
  %s2644 = scalar_lea.vmem %s1, 496
  %s2646 = ssub.s32 0, 4
  %s2647 = scalar_lea.vmem %s2644, %s2646
  %v2648 = vpack.c.bf16 %v2642, %v782
  %2649 = vst [vmem:[%s2647] sm:$0xff] %v2648
  %s2650 = scalar_lea.vmem %s0, 1360
  %v2651 = vld [vmem:[%s2650] sm:$0xf]
  %v2652 = vunpack.c.l.bf16 %v2651
  %v2653 = vunpack.c.h.bf16 %v2651
  %s2654 = scalar_lea.vmem %s1, 1360
  %s2656 = ssub.s32 0, 4
  %s2657 = scalar_lea.vmem %s2654, %s2656
  %v2658 = vpack.c.bf16 %v2652, %v787
  %2659 = vst [vmem:[%s2657] sm:$0xff] %v2658
  %s2660 = scalar_lea.vmem %s0, 496
  %v2661 = vld [vmem:[%s2660] sm:$0xf]
  %v2662 = vunpack.c.l.bf16 %v2661
  %v2663 = vunpack.c.h.bf16 %v2661
  %s2664 = scalar_lea.vmem %s1, 2224
  %s2666 = ssub.s32 0, 4
  %s2667 = scalar_lea.vmem %s2664, %s2666
  %v2668 = vpack.c.bf16 %v2662, %v792
  %2669 = vst [vmem:[%s2667] sm:$0xff] %v2668
  %s2670 = scalar_lea.vmem %s0, 1936
  %v2671 = vld [vmem:[%s2670] sm:$0xf]
  %v2672 = vunpack.c.l.bf16 %v2671
  %v2673 = vunpack.c.h.bf16 %v2671
  %s2674 = scalar_lea.vmem %s1, 784
  %s2676 = ssub.s32 0, 4
  %s2677 = scalar_lea.vmem %s2674, %s2676
  %v2678 = vpack.c.bf16 %v2672, %v797
  %2679 = vst [vmem:[%s2677] sm:$0xff] %v2678
  %s2680 = scalar_lea.vmem %s0, 1072
  %v2681 = vld [vmem:[%s2680] sm:$0xf]
  %v2682 = vunpack.c.l.bf16 %v2681
  %v2683 = vunpack.c.h.bf16 %v2681
  %s2684 = scalar_lea.vmem %s1, 1648
  %s2686 = ssub.s32 0, 4
  %s2687 = scalar_lea.vmem %s2684, %s2686
  %v2688 = vpack.c.bf16 %v2682, %v802
  %2689 = vst [vmem:[%s2687] sm:$0xff] %v2688
  %s2690 = scalar_lea.vmem %s0, 208
  %v2691 = vld [vmem:[%s2690] sm:$0xf]
  %v2692 = vunpack.c.l.bf16 %v2691
  %v2693 = vunpack.c.h.bf16 %v2691
  %s2694 = scalar_lea.vmem %s1, 2512
  %s2696 = ssub.s32 0, 4
  %s2697 = scalar_lea.vmem %s2694, %s2696
  %v2698 = vpack.c.bf16 %v2692, %v807
  %2699 = vst [vmem:[%s2697] sm:$0xff] %v2698
  %s2700 = scalar_lea.vmem %s0, 2524
  %v2701 = vld [vmem:[%s2700] sm:$0xf]
  %v2702 = vunpack.c.l.bf16 %v2701
  %v2703 = vunpack.c.h.bf16 %v2701
  %s2704 = scalar_lea.vmem %s1, 220
  %s2706 = ssub.s32 0, 4
  %s2707 = scalar_lea.vmem %s2704, %s2706
  %v2708 = vpack.c.bf16 %v2702, %v812
  %2709 = vst [vmem:[%s2707] sm:$0xff] %v2708
  %s2710 = scalar_lea.vmem %s0, 1660
  %v2711 = vld [vmem:[%s2710] sm:$0xf]
  %v2712 = vunpack.c.l.bf16 %v2711
  %v2713 = vunpack.c.h.bf16 %v2711
  %s2714 = scalar_lea.vmem %s1, 1084
  %s2716 = ssub.s32 0, 4
  %s2717 = scalar_lea.vmem %s2714, %s2716
  %v2718 = vpack.c.bf16 %v2712, %v817
  %2719 = vst [vmem:[%s2717] sm:$0xff] %v2718
  %s2720 = scalar_lea.vmem %s0, 796
  %v2721 = vld [vmem:[%s2720] sm:$0xf]
  %v2722 = vunpack.c.l.bf16 %v2721
  %v2723 = vunpack.c.h.bf16 %v2721
  %s2724 = scalar_lea.vmem %s1, 1948
  %s2726 = ssub.s32 0, 4
  %s2727 = scalar_lea.vmem %s2724, %s2726
  %v2728 = vpack.c.bf16 %v2722, %v822
  %2729 = vst [vmem:[%s2727] sm:$0xff] %v2728
  %s2730 = scalar_lea.vmem %s0, 2236
  %v2731 = vld [vmem:[%s2730] sm:$0xf]
  %v2732 = vunpack.c.l.bf16 %v2731
  %v2733 = vunpack.c.h.bf16 %v2731
  %s2734 = scalar_lea.vmem %s1, 508
  %s2736 = ssub.s32 0, 4
  %s2737 = scalar_lea.vmem %s2734, %s2736
  %v2738 = vpack.c.bf16 %v2732, %v827
  %2739 = vst [vmem:[%s2737] sm:$0xff] %v2738
  %s2740 = scalar_lea.vmem %s0, 1372
  %v2741 = vld [vmem:[%s2740] sm:$0xf]
  %v2742 = vunpack.c.l.bf16 %v2741
  %v2743 = vunpack.c.h.bf16 %v2741
  %s2744 = scalar_lea.vmem %s1, 1372
  %s2746 = ssub.s32 0, 4
  %s2747 = scalar_lea.vmem %s2744, %s2746
  %v2748 = vpack.c.bf16 %v2742, %v832
  %2749 = vst [vmem:[%s2747] sm:$0xff] %v2748
  %s2750 = scalar_lea.vmem %s0, 508
  %v2751 = vld [vmem:[%s2750] sm:$0xf]
  %v2752 = vunpack.c.l.bf16 %v2751
  %v2753 = vunpack.c.h.bf16 %v2751
  %s2754 = scalar_lea.vmem %s1, 2236
  %s2756 = ssub.s32 0, 4
  %s2757 = scalar_lea.vmem %s2754, %s2756
  %v2758 = vpack.c.bf16 %v2752, %v837
  %2759 = vst [vmem:[%s2757] sm:$0xff] %v2758
  %s2760 = scalar_lea.vmem %s0, 1948
  %v2761 = vld [vmem:[%s2760] sm:$0xf]
  %v2762 = vunpack.c.l.bf16 %v2761
  %v2763 = vunpack.c.h.bf16 %v2761
  %s2764 = scalar_lea.vmem %s1, 796
  %s2766 = ssub.s32 0, 4
  %s2767 = scalar_lea.vmem %s2764, %s2766
  %v2768 = vpack.c.bf16 %v2762, %v842
  %2769 = vst [vmem:[%s2767] sm:$0xff] %v2768
  %s2770 = scalar_lea.vmem %s0, 1084
  %v2771 = vld [vmem:[%s2770] sm:$0xf]
  %v2772 = vunpack.c.l.bf16 %v2771
  %v2773 = vunpack.c.h.bf16 %v2771
  %s2774 = scalar_lea.vmem %s1, 1660
  %s2776 = ssub.s32 0, 4
  %s2777 = scalar_lea.vmem %s2774, %s2776
  %v2778 = vpack.c.bf16 %v2772, %v847
  %2779 = vst [vmem:[%s2777] sm:$0xff] %v2778
  %s2780 = scalar_lea.vmem %s0, 220
  %v2781 = vld [vmem:[%s2780] sm:$0xf]
  %v2782 = vunpack.c.l.bf16 %v2781
  %v2783 = vunpack.c.h.bf16 %v2781
  %s2784 = scalar_lea.vmem %s1, 2524
  %s2786 = ssub.s32 0, 4
  %s2787 = scalar_lea.vmem %s2784, %s2786
  %v2788 = vpack.c.bf16 %v2782, %v852
  %2789 = vst [vmem:[%s2787] sm:$0xff] %v2788
  %s2790 = scalar_lea.vmem %s0, 2536
  %v2791 = vld [vmem:[%s2790] sm:$0xf]
  %v2792 = vunpack.c.l.bf16 %v2791
  %v2793 = vunpack.c.h.bf16 %v2791
  %s2794 = scalar_lea.vmem %s1, 232
  %s2796 = ssub.s32 0, 4
  %s2797 = scalar_lea.vmem %s2794, %s2796
  %v2798 = vpack.c.bf16 %v2792, %v857
  %2799 = vst [vmem:[%s2797] sm:$0xff] %v2798
  %s2800 = scalar_lea.vmem %s0, 1672
  %v2801 = vld [vmem:[%s2800] sm:$0xf]
  %v2802 = vunpack.c.l.bf16 %v2801
  %v2803 = vunpack.c.h.bf16 %v2801
  %s2804 = scalar_lea.vmem %s1, 1096
  %s2806 = ssub.s32 0, 4
  %s2807 = scalar_lea.vmem %s2804, %s2806
  %v2808 = vpack.c.bf16 %v2802, %v862
  %2809 = vst [vmem:[%s2807] sm:$0xff] %v2808
  %s2810 = scalar_lea.vmem %s0, 808
  %v2811 = vld [vmem:[%s2810] sm:$0xf]
  %v2812 = vunpack.c.l.bf16 %v2811
  %v2813 = vunpack.c.h.bf16 %v2811
  %s2814 = scalar_lea.vmem %s1, 1960
  %s2816 = ssub.s32 0, 4
  %s2817 = scalar_lea.vmem %s2814, %s2816
  %v2818 = vpack.c.bf16 %v2812, %v867
  %2819 = vst [vmem:[%s2817] sm:$0xff] %v2818
  %s2820 = scalar_lea.vmem %s0, 2248
  %v2821 = vld [vmem:[%s2820] sm:$0xf]
  %v2822 = vunpack.c.l.bf16 %v2821
  %v2823 = vunpack.c.h.bf16 %v2821
  %s2824 = scalar_lea.vmem %s1, 520
  %s2826 = ssub.s32 0, 4
  %s2827 = scalar_lea.vmem %s2824, %s2826
  %v2828 = vpack.c.bf16 %v2822, %v872
  %2829 = vst [vmem:[%s2827] sm:$0xff] %v2828
  %s2830 = scalar_lea.vmem %s0, 1384
  %v2831 = vld [vmem:[%s2830] sm:$0xf]
  %v2832 = vunpack.c.l.bf16 %v2831
  %v2833 = vunpack.c.h.bf16 %v2831
  %s2834 = scalar_lea.vmem %s1, 1384
  %s2836 = ssub.s32 0, 4
  %s2837 = scalar_lea.vmem %s2834, %s2836
  %v2838 = vpack.c.bf16 %v2832, %v877
  %2839 = vst [vmem:[%s2837] sm:$0xff] %v2838
  %s2840 = scalar_lea.vmem %s0, 520
  %v2841 = vld [vmem:[%s2840] sm:$0xf]
  %v2842 = vunpack.c.l.bf16 %v2841
  %v2843 = vunpack.c.h.bf16 %v2841
  %s2844 = scalar_lea.vmem %s1, 2248
  %s2846 = ssub.s32 0, 4
  %s2847 = scalar_lea.vmem %s2844, %s2846
  %v2848 = vpack.c.bf16 %v2842, %v882
  %2849 = vst [vmem:[%s2847] sm:$0xff] %v2848
  %s2850 = scalar_lea.vmem %s0, 1960
  %v2851 = vld [vmem:[%s2850] sm:$0xf]
  %v2852 = vunpack.c.l.bf16 %v2851
  %v2853 = vunpack.c.h.bf16 %v2851
  %s2854 = scalar_lea.vmem %s1, 808
  %s2856 = ssub.s32 0, 4
  %s2857 = scalar_lea.vmem %s2854, %s2856
  %v2858 = vpack.c.bf16 %v2852, %v887
  %2859 = vst [vmem:[%s2857] sm:$0xff] %v2858
  %s2860 = scalar_lea.vmem %s0, 1096
  %v2861 = vld [vmem:[%s2860] sm:$0xf]
  %v2862 = vunpack.c.l.bf16 %v2861
  %v2863 = vunpack.c.h.bf16 %v2861
  %s2864 = scalar_lea.vmem %s1, 1672
  %s2866 = ssub.s32 0, 4
  %s2867 = scalar_lea.vmem %s2864, %s2866
  %v2868 = vpack.c.bf16 %v2862, %v892
  %2869 = vst [vmem:[%s2867] sm:$0xff] %v2868
  %s2870 = scalar_lea.vmem %s0, 232
  %v2871 = vld [vmem:[%s2870] sm:$0xf]
  %v2872 = vunpack.c.l.bf16 %v2871
  %v2873 = vunpack.c.h.bf16 %v2871
  %s2874 = scalar_lea.vmem %s1, 2536
  %s2876 = ssub.s32 0, 4
  %s2877 = scalar_lea.vmem %s2874, %s2876
  %v2878 = vpack.c.bf16 %v2872, %v897
  %2879 = vst [vmem:[%s2877] sm:$0xff] %v2878
  %s2880 = scalar_lea.vmem %s0, 2548
  %v2881 = vld [vmem:[%s2880] sm:$0xf]
  %v2882 = vunpack.c.l.bf16 %v2881
  %v2883 = vunpack.c.h.bf16 %v2881
  %s2884 = scalar_lea.vmem %s1, 244
  %s2886 = ssub.s32 0, 4
  %s2887 = scalar_lea.vmem %s2884, %s2886
  %v2888 = vpack.c.bf16 %v2882, %v902
  %2889 = vst [vmem:[%s2887] sm:$0xff] %v2888
  %s2890 = scalar_lea.vmem %s0, 1684
  %v2891 = vld [vmem:[%s2890] sm:$0xf]
  %v2892 = vunpack.c.l.bf16 %v2891
  %v2893 = vunpack.c.h.bf16 %v2891
  %s2894 = scalar_lea.vmem %s1, 1108
  %s2896 = ssub.s32 0, 4
  %s2897 = scalar_lea.vmem %s2894, %s2896
  %v2898 = vpack.c.bf16 %v2892, %v907
  %2899 = vst [vmem:[%s2897] sm:$0xff] %v2898
  %s2900 = scalar_lea.vmem %s0, 820
  %v2901 = vld [vmem:[%s2900] sm:$0xf]
  %v2902 = vunpack.c.l.bf16 %v2901
  %v2903 = vunpack.c.h.bf16 %v2901
  %s2904 = scalar_lea.vmem %s1, 1972
  %s2906 = ssub.s32 0, 4
  %s2907 = scalar_lea.vmem %s2904, %s2906
  %v2908 = vpack.c.bf16 %v2902, %v912
  %2909 = vst [vmem:[%s2907] sm:$0xff] %v2908
  %s2910 = scalar_lea.vmem %s0, 2260
  %v2911 = vld [vmem:[%s2910] sm:$0xf]
  %v2912 = vunpack.c.l.bf16 %v2911
  %v2913 = vunpack.c.h.bf16 %v2911
  %s2914 = scalar_lea.vmem %s1, 532
  %s2916 = ssub.s32 0, 4
  %s2917 = scalar_lea.vmem %s2914, %s2916
  %v2918 = vpack.c.bf16 %v2912, %v917
  %2919 = vst [vmem:[%s2917] sm:$0xff] %v2918
  %s2920 = scalar_lea.vmem %s0, 1396
  %v2921 = vld [vmem:[%s2920] sm:$0xf]
  %v2922 = vunpack.c.l.bf16 %v2921
  %v2923 = vunpack.c.h.bf16 %v2921
  %s2924 = scalar_lea.vmem %s1, 1396
  %s2926 = ssub.s32 0, 4
  %s2927 = scalar_lea.vmem %s2924, %s2926
  %v2928 = vpack.c.bf16 %v2922, %v922
  %2929 = vst [vmem:[%s2927] sm:$0xff] %v2928
  %s2930 = scalar_lea.vmem %s0, 532
  %v2931 = vld [vmem:[%s2930] sm:$0xf]
  %v2932 = vunpack.c.l.bf16 %v2931
  %v2933 = vunpack.c.h.bf16 %v2931
  %s2934 = scalar_lea.vmem %s1, 2260
  %s2936 = ssub.s32 0, 4
  %s2937 = scalar_lea.vmem %s2934, %s2936
  %v2938 = vpack.c.bf16 %v2932, %v927
  %2939 = vst [vmem:[%s2937] sm:$0xff] %v2938
  %s2940 = scalar_lea.vmem %s0, 1972
  %v2941 = vld [vmem:[%s2940] sm:$0xf]
  %v2942 = vunpack.c.l.bf16 %v2941
  %v2943 = vunpack.c.h.bf16 %v2941
  %s2944 = scalar_lea.vmem %s1, 820
  %s2946 = ssub.s32 0, 4
  %s2947 = scalar_lea.vmem %s2944, %s2946
  %v2948 = vpack.c.bf16 %v2942, %v932
  %2949 = vst [vmem:[%s2947] sm:$0xff] %v2948
  %s2950 = scalar_lea.vmem %s0, 1108
  %v2951 = vld [vmem:[%s2950] sm:$0xf]
  %v2952 = vunpack.c.l.bf16 %v2951
  %v2953 = vunpack.c.h.bf16 %v2951
  %s2954 = scalar_lea.vmem %s1, 1684
  %s2956 = ssub.s32 0, 4
  %s2957 = scalar_lea.vmem %s2954, %s2956
  %v2958 = vpack.c.bf16 %v2952, %v937
  %2959 = vst [vmem:[%s2957] sm:$0xff] %v2958
  %s2960 = scalar_lea.vmem %s0, 244
  %v2961 = vld [vmem:[%s2960] sm:$0xf]
  %v2962 = vunpack.c.l.bf16 %v2961
  %v2963 = vunpack.c.h.bf16 %v2961
  %s2964 = scalar_lea.vmem %s1, 2548
  %s2966 = ssub.s32 0, 4
  %s2967 = scalar_lea.vmem %s2964, %s2966
  %v2968 = vpack.c.bf16 %v2962, %v942
  %2969 = vst [vmem:[%s2967] sm:$0xff] %v2968
  %s2970 = scalar_lea.vmem %s0, 2560
  %v2971 = vld [vmem:[%s2970] sm:$0xf]
  %v2972 = vunpack.c.l.bf16 %v2971
  %v2973 = vunpack.c.h.bf16 %v2971
  %s2974 = scalar_lea.vmem %s1, 256
  %s2976 = ssub.s32 0, 4
  %s2977 = scalar_lea.vmem %s2974, %s2976
  %v2978 = vpack.c.bf16 %v2972, %v947
  %2979 = vst [vmem:[%s2977] sm:$0xff] %v2978
  %s2980 = scalar_lea.vmem %s0, 1696
  %v2981 = vld [vmem:[%s2980] sm:$0xf]
  %v2982 = vunpack.c.l.bf16 %v2981
  %v2983 = vunpack.c.h.bf16 %v2981
  %s2984 = scalar_lea.vmem %s1, 1120
  %s2986 = ssub.s32 0, 4
  %s2987 = scalar_lea.vmem %s2984, %s2986
  %v2988 = vpack.c.bf16 %v2982, %v952
  %2989 = vst [vmem:[%s2987] sm:$0xff] %v2988
  %s2990 = scalar_lea.vmem %s0, 832
  %v2991 = vld [vmem:[%s2990] sm:$0xf]
  %v2992 = vunpack.c.l.bf16 %v2991
  %v2993 = vunpack.c.h.bf16 %v2991
  %s2994 = scalar_lea.vmem %s1, 1984
  %s2996 = ssub.s32 0, 4
  %s2997 = scalar_lea.vmem %s2994, %s2996
  %v2998 = vpack.c.bf16 %v2992, %v957
  %2999 = vst [vmem:[%s2997] sm:$0xff] %v2998
  %s3000 = scalar_lea.vmem %s0, 2272
  %v3001 = vld [vmem:[%s3000] sm:$0xf]
  %v3002 = vunpack.c.l.bf16 %v3001
  %v3003 = vunpack.c.h.bf16 %v3001
  %s3004 = scalar_lea.vmem %s1, 544
  %s3006 = ssub.s32 0, 4
  %s3007 = scalar_lea.vmem %s3004, %s3006
  %v3008 = vpack.c.bf16 %v3002, %v962
  %3009 = vst [vmem:[%s3007] sm:$0xff] %v3008
  %s3010 = scalar_lea.vmem %s0, 1408
  %v3011 = vld [vmem:[%s3010] sm:$0xf]
  %v3012 = vunpack.c.l.bf16 %v3011
  %v3013 = vunpack.c.h.bf16 %v3011
  %s3014 = scalar_lea.vmem %s1, 1408
  %s3016 = ssub.s32 0, 4
  %s3017 = scalar_lea.vmem %s3014, %s3016
  %v3018 = vpack.c.bf16 %v3012, %v967
  %3019 = vst [vmem:[%s3017] sm:$0xff] %v3018
  %s3020 = scalar_lea.vmem %s0, 544
  %v3021 = vld [vmem:[%s3020] sm:$0xf]
  %v3022 = vunpack.c.l.bf16 %v3021
  %v3023 = vunpack.c.h.bf16 %v3021
  %s3024 = scalar_lea.vmem %s1, 2272
  %s3026 = ssub.s32 0, 4
  %s3027 = scalar_lea.vmem %s3024, %s3026
  %v3028 = vpack.c.bf16 %v3022, %v972
  %3029 = vst [vmem:[%s3027] sm:$0xff] %v3028
  %s3030 = scalar_lea.vmem %s0, 1984
  %v3031 = vld [vmem:[%s3030] sm:$0xf]
  %v3032 = vunpack.c.l.bf16 %v3031
  %v3033 = vunpack.c.h.bf16 %v3031
  %s3034 = scalar_lea.vmem %s1, 832
  %s3036 = ssub.s32 0, 4
  %s3037 = scalar_lea.vmem %s3034, %s3036
  %v3038 = vpack.c.bf16 %v3032, %v977
  %3039 = vst [vmem:[%s3037] sm:$0xff] %v3038
  %s3040 = scalar_lea.vmem %s0, 1120
  %v3041 = vld [vmem:[%s3040] sm:$0xf]
  %v3042 = vunpack.c.l.bf16 %v3041
  %v3043 = vunpack.c.h.bf16 %v3041
  %s3044 = scalar_lea.vmem %s1, 1696
  %s3046 = ssub.s32 0, 4
  %s3047 = scalar_lea.vmem %s3044, %s3046
  %v3048 = vpack.c.bf16 %v3042, %v982
  %3049 = vst [vmem:[%s3047] sm:$0xff] %v3048
  %s3050 = scalar_lea.vmem %s0, 256
  %v3051 = vld [vmem:[%s3050] sm:$0xf]
  %v3052 = vunpack.c.l.bf16 %v3051
  %v3053 = vunpack.c.h.bf16 %v3051
  %s3054 = scalar_lea.vmem %s1, 2560
  %s3056 = ssub.s32 0, 4
  %s3057 = scalar_lea.vmem %s3054, %s3056
  %v3058 = vpack.c.bf16 %v3052, %v987
  %3059 = vst [vmem:[%s3057] sm:$0xff] %v3058
  %s3060 = scalar_lea.vmem %s0, 2572
  %v3061 = vld [vmem:[%s3060] sm:$0xf]
  %v3062 = vunpack.c.l.bf16 %v3061
  %v3063 = vunpack.c.h.bf16 %v3061
  %s3064 = scalar_lea.vmem %s1, 268
  %s3066 = ssub.s32 0, 4
  %s3067 = scalar_lea.vmem %s3064, %s3066
  %v3068 = vpack.c.bf16 %v3062, %v992
  %3069 = vst [vmem:[%s3067] sm:$0xff] %v3068
  %s3070 = scalar_lea.vmem %s0, 1708
  %v3071 = vld [vmem:[%s3070] sm:$0xf]
  %v3072 = vunpack.c.l.bf16 %v3071
  %v3073 = vunpack.c.h.bf16 %v3071
  %s3074 = scalar_lea.vmem %s1, 1132
  %s3076 = ssub.s32 0, 4
  %s3077 = scalar_lea.vmem %s3074, %s3076
  %v3078 = vpack.c.bf16 %v3072, %v997
  %3079 = vst [vmem:[%s3077] sm:$0xff] %v3078
  %s3080 = scalar_lea.vmem %s0, 844
  %v3081 = vld [vmem:[%s3080] sm:$0xf]
  %v3082 = vunpack.c.l.bf16 %v3081
  %v3083 = vunpack.c.h.bf16 %v3081
  %s3084 = scalar_lea.vmem %s1, 1996
  %s3086 = ssub.s32 0, 4
  %s3087 = scalar_lea.vmem %s3084, %s3086
  %v3088 = vpack.c.bf16 %v3082, %v1002
  %3089 = vst [vmem:[%s3087] sm:$0xff] %v3088
  %s3090 = scalar_lea.vmem %s0, 2284
  %v3091 = vld [vmem:[%s3090] sm:$0xf]
  %v3092 = vunpack.c.l.bf16 %v3091
  %v3093 = vunpack.c.h.bf16 %v3091
  %s3094 = scalar_lea.vmem %s1, 556
  %s3096 = ssub.s32 0, 4
  %s3097 = scalar_lea.vmem %s3094, %s3096
  %v3098 = vpack.c.bf16 %v3092, %v1007
  %3099 = vst [vmem:[%s3097] sm:$0xff] %v3098
  %s3100 = scalar_lea.vmem %s0, 1420
  %v3101 = vld [vmem:[%s3100] sm:$0xf]
  %v3102 = vunpack.c.l.bf16 %v3101
  %v3103 = vunpack.c.h.bf16 %v3101
  %s3104 = scalar_lea.vmem %s1, 1420
  %s3106 = ssub.s32 0, 4
  %s3107 = scalar_lea.vmem %s3104, %s3106
  %v3108 = vpack.c.bf16 %v3102, %v1012
  %3109 = vst [vmem:[%s3107] sm:$0xff] %v3108
  %s3110 = scalar_lea.vmem %s0, 556
  %v3111 = vld [vmem:[%s3110] sm:$0xf]
  %v3112 = vunpack.c.l.bf16 %v3111
  %v3113 = vunpack.c.h.bf16 %v3111
  %s3114 = scalar_lea.vmem %s1, 2284
  %s3116 = ssub.s32 0, 4
  %s3117 = scalar_lea.vmem %s3114, %s3116
  %v3118 = vpack.c.bf16 %v3112, %v1017
  %3119 = vst [vmem:[%s3117] sm:$0xff] %v3118
  %s3120 = scalar_lea.vmem %s0, 1996
  %v3121 = vld [vmem:[%s3120] sm:$0xf]
  %v3122 = vunpack.c.l.bf16 %v3121
  %v3123 = vunpack.c.h.bf16 %v3121
  %s3124 = scalar_lea.vmem %s1, 844
  %s3126 = ssub.s32 0, 4
  %s3127 = scalar_lea.vmem %s3124, %s3126
  %v3128 = vpack.c.bf16 %v3122, %v1022
  %3129 = vst [vmem:[%s3127] sm:$0xff] %v3128
  %s3130 = scalar_lea.vmem %s0, 1132
  %v3131 = vld [vmem:[%s3130] sm:$0xf]
  %v3132 = vunpack.c.l.bf16 %v3131
  %v3133 = vunpack.c.h.bf16 %v3131
  %s3134 = scalar_lea.vmem %s1, 1708
  %s3136 = ssub.s32 0, 4
  %s3137 = scalar_lea.vmem %s3134, %s3136
  %v3138 = vpack.c.bf16 %v3132, %v1027
  %3139 = vst [vmem:[%s3137] sm:$0xff] %v3138
  %s3140 = scalar_lea.vmem %s0, 268
  %v3141 = vld [vmem:[%s3140] sm:$0xf]
  %v3142 = vunpack.c.l.bf16 %v3141
  %v3143 = vunpack.c.h.bf16 %v3141
  %s3144 = scalar_lea.vmem %s1, 2572
  %s3146 = ssub.s32 0, 4
  %s3147 = scalar_lea.vmem %s3144, %s3146
  %v3148 = vpack.c.bf16 %v3142, %v1032
  %3149 = vst [vmem:[%s3147] sm:$0xff] %v3148
  %s3150 = scalar_lea.vmem %s0, 2584
  %v3151 = vld [vmem:[%s3150] sm:$0xf]
  %v3152 = vunpack.c.l.bf16 %v3151
  %v3153 = vunpack.c.h.bf16 %v3151
  %s3154 = scalar_lea.vmem %s1, 280
  %s3156 = ssub.s32 0, 4
  %s3157 = scalar_lea.vmem %s3154, %s3156
  %v3158 = vpack.c.bf16 %v3152, %v1037
  %3159 = vst [vmem:[%s3157] sm:$0xff] %v3158
  %s3160 = scalar_lea.vmem %s0, 1720
  %v3161 = vld [vmem:[%s3160] sm:$0xf]
  %v3162 = vunpack.c.l.bf16 %v3161
  %v3163 = vunpack.c.h.bf16 %v3161
  %s3164 = scalar_lea.vmem %s1, 1144
  %s3166 = ssub.s32 0, 4
  %s3167 = scalar_lea.vmem %s3164, %s3166
  %v3168 = vpack.c.bf16 %v3162, %v1042
  %3169 = vst [vmem:[%s3167] sm:$0xff] %v3168
  %s3170 = scalar_lea.vmem %s0, 856
  %v3171 = vld [vmem:[%s3170] sm:$0xf]
  %v3172 = vunpack.c.l.bf16 %v3171
  %v3173 = vunpack.c.h.bf16 %v3171
  %s3174 = scalar_lea.vmem %s1, 2008
  %s3176 = ssub.s32 0, 4
  %s3177 = scalar_lea.vmem %s3174, %s3176
  %v3178 = vpack.c.bf16 %v3172, %v1047
  %3179 = vst [vmem:[%s3177] sm:$0xff] %v3178
  %s3180 = scalar_lea.vmem %s0, 2296
  %v3181 = vld [vmem:[%s3180] sm:$0xf]
  %v3182 = vunpack.c.l.bf16 %v3181
  %v3183 = vunpack.c.h.bf16 %v3181
  %s3184 = scalar_lea.vmem %s1, 568
  %s3186 = ssub.s32 0, 4
  %s3187 = scalar_lea.vmem %s3184, %s3186
  %v3188 = vpack.c.bf16 %v3182, %v1052
  %3189 = vst [vmem:[%s3187] sm:$0xff] %v3188
  %s3190 = scalar_lea.vmem %s0, 1432
  %v3191 = vld [vmem:[%s3190] sm:$0xf]
  %v3192 = vunpack.c.l.bf16 %v3191
  %v3193 = vunpack.c.h.bf16 %v3191
  %s3194 = scalar_lea.vmem %s1, 1432
  %s3196 = ssub.s32 0, 4
  %s3197 = scalar_lea.vmem %s3194, %s3196
  %v3198 = vpack.c.bf16 %v3192, %v1057
  %3199 = vst [vmem:[%s3197] sm:$0xff] %v3198
  %s3200 = scalar_lea.vmem %s0, 568
  %v3201 = vld [vmem:[%s3200] sm:$0xf]
  %v3202 = vunpack.c.l.bf16 %v3201
  %v3203 = vunpack.c.h.bf16 %v3201
  %s3204 = scalar_lea.vmem %s1, 2296
  %s3206 = ssub.s32 0, 4
  %s3207 = scalar_lea.vmem %s3204, %s3206
  %v3208 = vpack.c.bf16 %v3202, %v1062
  %3209 = vst [vmem:[%s3207] sm:$0xff] %v3208
  %s3210 = scalar_lea.vmem %s0, 2008
  %v3211 = vld [vmem:[%s3210] sm:$0xf]
  %v3212 = vunpack.c.l.bf16 %v3211
  %v3213 = vunpack.c.h.bf16 %v3211
  %s3214 = scalar_lea.vmem %s1, 856
  %s3216 = ssub.s32 0, 4
  %s3217 = scalar_lea.vmem %s3214, %s3216
  %v3218 = vpack.c.bf16 %v3212, %v1067
  %3219 = vst [vmem:[%s3217] sm:$0xff] %v3218
  %s3220 = scalar_lea.vmem %s0, 1144
  %v3221 = vld [vmem:[%s3220] sm:$0xf]
  %v3222 = vunpack.c.l.bf16 %v3221
  %v3223 = vunpack.c.h.bf16 %v3221
  %s3224 = scalar_lea.vmem %s1, 1720
  %s3226 = ssub.s32 0, 4
  %s3227 = scalar_lea.vmem %s3224, %s3226
  %v3228 = vpack.c.bf16 %v3222, %v1072
  %3229 = vst [vmem:[%s3227] sm:$0xff] %v3228
  %s3230 = scalar_lea.vmem %s0, 280
  %v3231 = vld [vmem:[%s3230] sm:$0xf]
  %v3232 = vunpack.c.l.bf16 %v3231
  %v3233 = vunpack.c.h.bf16 %v3231
  %s3234 = scalar_lea.vmem %s1, 2584
  %s3236 = ssub.s32 0, 4
  %s3237 = scalar_lea.vmem %s3234, %s3236
  %v3238 = vpack.c.bf16 %v3232, %v1077
  %3239 = vst [vmem:[%s3237] sm:$0xff] %v3238
  %s3240 = scalar_lea.vmem %s0, 2312
  %v3241 = vld [vmem:[%s3240] sm:$0xf]
  %v3242 = vunpack.c.l.bf16 %v3241
  %v3243 = vunpack.c.h.bf16 %v3241
  %s3244 = scalar_lea.vmem %s1, 8
  %v3245 = vpack.c.bf16 0.0, %v3242
  %3246 = vst [vmem:[%s3244] sm:$0xf] %v3245
  %s3247 = scalar_lea.vmem %s0, 1448
  %v3248 = vld [vmem:[%s3247] sm:$0xf]
  %v3249 = vunpack.c.l.bf16 %v3248
  %v3250 = vunpack.c.h.bf16 %v3248
  %s3251 = scalar_lea.vmem %s1, 872
  %v3252 = vpack.c.bf16 0.0, %v3249
  %3253 = vst [vmem:[%s3251] sm:$0xf] %v3252
  %s3254 = scalar_lea.vmem %s0, 584
  %v3255 = vld [vmem:[%s3254] sm:$0xf]
  %v3256 = vunpack.c.l.bf16 %v3255
  %v3257 = vunpack.c.h.bf16 %v3255
  %s3258 = scalar_lea.vmem %s1, 1736
  %v3259 = vpack.c.bf16 0.0, %v3256
  %3260 = vst [vmem:[%s3258] sm:$0xf] %v3259
  %s3261 = scalar_lea.vmem %s0, 2024
  %v3262 = vld [vmem:[%s3261] sm:$0xf]
  %v3263 = vunpack.c.l.bf16 %v3262
  %v3264 = vunpack.c.h.bf16 %v3262
  %s3265 = scalar_lea.vmem %s1, 296
  %v3266 = vpack.c.bf16 0.0, %v3263
  %3267 = vst [vmem:[%s3265] sm:$0xf] %v3266
  %s3268 = scalar_lea.vmem %s0, 1160
  %v3269 = vld [vmem:[%s3268] sm:$0xf]
  %v3270 = vunpack.c.l.bf16 %v3269
  %v3271 = vunpack.c.h.bf16 %v3269
  %s3272 = scalar_lea.vmem %s1, 1160
  %v3273 = vpack.c.bf16 0.0, %v3270
  %3274 = vst [vmem:[%s3272] sm:$0xf] %v3273
  %s3275 = scalar_lea.vmem %s0, 296
  %v3276 = vld [vmem:[%s3275] sm:$0xf]
  %v3277 = vunpack.c.l.bf16 %v3276
  %v3278 = vunpack.c.h.bf16 %v3276
  %s3279 = scalar_lea.vmem %s1, 2024
  %v3280 = vpack.c.bf16 0.0, %v3277
  %3281 = vst [vmem:[%s3279] sm:$0xf] %v3280
  %s3282 = scalar_lea.vmem %s0, 1736
  %v3283 = vld [vmem:[%s3282] sm:$0xf]
  %v3284 = vunpack.c.l.bf16 %v3283
  %v3285 = vunpack.c.h.bf16 %v3283
  %s3286 = scalar_lea.vmem %s1, 584
  %v3287 = vpack.c.bf16 0.0, %v3284
  %3288 = vst [vmem:[%s3286] sm:$0xf] %v3287
  %s3289 = scalar_lea.vmem %s0, 872
  %v3290 = vld [vmem:[%s3289] sm:$0xf]
  %v3291 = vunpack.c.l.bf16 %v3290
  %v3292 = vunpack.c.h.bf16 %v3290
  %s3293 = scalar_lea.vmem %s1, 1448
  %v3294 = vpack.c.bf16 0.0, %v3291
  %3295 = vst [vmem:[%s3293] sm:$0xf] %v3294
  %s3296 = scalar_lea.vmem %s0, 8
  %v3297 = vld [vmem:[%s3296] sm:$0xf]
  %v3298 = vunpack.c.l.bf16 %v3297
  %v3299 = vunpack.c.h.bf16 %v3297
  %s3300 = scalar_lea.vmem %s1, 2312
  %v3301 = vpack.c.bf16 0.0, %v3298
  %3302 = vst [vmem:[%s3300] sm:$0xf] %v3301
  %s3303 = scalar_lea.vmem %s0, 2324
  %v3304 = vld [vmem:[%s3303] sm:$0xf]
  %v3305 = vunpack.c.l.bf16 %v3304
  %v3306 = vunpack.c.h.bf16 %v3304
  %s3307 = scalar_lea.vmem %s1, 20
  %v3308 = vpack.c.bf16 0.0, %v3305
  %3309 = vst [vmem:[%s3307] sm:$0xf] %v3308
  %s3310 = scalar_lea.vmem %s0, 1460
  %v3311 = vld [vmem:[%s3310] sm:$0xf]
  %v3312 = vunpack.c.l.bf16 %v3311
  %v3313 = vunpack.c.h.bf16 %v3311
  %s3314 = scalar_lea.vmem %s1, 884
  %v3315 = vpack.c.bf16 0.0, %v3312
  %3316 = vst [vmem:[%s3314] sm:$0xf] %v3315
  %s3317 = scalar_lea.vmem %s0, 596
  %v3318 = vld [vmem:[%s3317] sm:$0xf]
  %v3319 = vunpack.c.l.bf16 %v3318
  %v3320 = vunpack.c.h.bf16 %v3318
  %s3321 = scalar_lea.vmem %s1, 1748
  %v3322 = vpack.c.bf16 0.0, %v3319
  %3323 = vst [vmem:[%s3321] sm:$0xf] %v3322
  %s3324 = scalar_lea.vmem %s0, 2036
  %v3325 = vld [vmem:[%s3324] sm:$0xf]
  %v3326 = vunpack.c.l.bf16 %v3325
  %v3327 = vunpack.c.h.bf16 %v3325
  %s3328 = scalar_lea.vmem %s1, 308
  %v3329 = vpack.c.bf16 0.0, %v3326
  %3330 = vst [vmem:[%s3328] sm:$0xf] %v3329
  %s3331 = scalar_lea.vmem %s0, 1172
  %v3332 = vld [vmem:[%s3331] sm:$0xf]
  %v3333 = vunpack.c.l.bf16 %v3332
  %v3334 = vunpack.c.h.bf16 %v3332
  %s3335 = scalar_lea.vmem %s1, 1172
  %v3336 = vpack.c.bf16 0.0, %v3333
  %3337 = vst [vmem:[%s3335] sm:$0xf] %v3336
  %s3338 = scalar_lea.vmem %s0, 308
  %v3339 = vld [vmem:[%s3338] sm:$0xf]
  %v3340 = vunpack.c.l.bf16 %v3339
  %v3341 = vunpack.c.h.bf16 %v3339
  %s3342 = scalar_lea.vmem %s1, 2036
  %v3343 = vpack.c.bf16 0.0, %v3340
  %3344 = vst [vmem:[%s3342] sm:$0xf] %v3343
  %s3345 = scalar_lea.vmem %s0, 1748
  %v3346 = vld [vmem:[%s3345] sm:$0xf]
  %v3347 = vunpack.c.l.bf16 %v3346
  %v3348 = vunpack.c.h.bf16 %v3346
  %s3349 = scalar_lea.vmem %s1, 596
  %v3350 = vpack.c.bf16 0.0, %v3347
  %3351 = vst [vmem:[%s3349] sm:$0xf] %v3350
  %s3352 = scalar_lea.vmem %s0, 884
  %v3353 = vld [vmem:[%s3352] sm:$0xf]
  %v3354 = vunpack.c.l.bf16 %v3353
  %v3355 = vunpack.c.h.bf16 %v3353
  %s3356 = scalar_lea.vmem %s1, 1460
  %v3357 = vpack.c.bf16 0.0, %v3354
  %3358 = vst [vmem:[%s3356] sm:$0xf] %v3357
  %s3359 = scalar_lea.vmem %s0, 20
  %v3360 = vld [vmem:[%s3359] sm:$0xf]
  %v3361 = vunpack.c.l.bf16 %v3360
  %v3362 = vunpack.c.h.bf16 %v3360
  %s3363 = scalar_lea.vmem %s1, 2324
  %v3364 = vpack.c.bf16 0.0, %v3361
  %3365 = vst [vmem:[%s3363] sm:$0xf] %v3364
  %s3366 = scalar_lea.vmem %s0, 2336
  %v3367 = vld [vmem:[%s3366] sm:$0xf]
  %v3368 = vunpack.c.l.bf16 %v3367
  %v3369 = vunpack.c.h.bf16 %v3367
  %s3370 = scalar_lea.vmem %s1, 32
  %v3371 = vpack.c.bf16 0.0, %v3368
  %3372 = vst [vmem:[%s3370] sm:$0xf] %v3371
  %s3373 = scalar_lea.vmem %s0, 1472
  %v3374 = vld [vmem:[%s3373] sm:$0xf]
  %v3375 = vunpack.c.l.bf16 %v3374
  %v3376 = vunpack.c.h.bf16 %v3374
  %s3377 = scalar_lea.vmem %s1, 896
  %v3378 = vpack.c.bf16 0.0, %v3375
  %3379 = vst [vmem:[%s3377] sm:$0xf] %v3378
  %s3380 = scalar_lea.vmem %s0, 608
  %v3381 = vld [vmem:[%s3380] sm:$0xf]
  %v3382 = vunpack.c.l.bf16 %v3381
  %v3383 = vunpack.c.h.bf16 %v3381
  %s3384 = scalar_lea.vmem %s1, 1760
  %v3385 = vpack.c.bf16 0.0, %v3382
  %3386 = vst [vmem:[%s3384] sm:$0xf] %v3385
  %s3387 = scalar_lea.vmem %s0, 2048
  %v3388 = vld [vmem:[%s3387] sm:$0xf]
  %v3389 = vunpack.c.l.bf16 %v3388
  %v3390 = vunpack.c.h.bf16 %v3388
  %s3391 = scalar_lea.vmem %s1, 320
  %v3392 = vpack.c.bf16 0.0, %v3389
  %3393 = vst [vmem:[%s3391] sm:$0xf] %v3392
  %s3394 = scalar_lea.vmem %s0, 1184
  %v3395 = vld [vmem:[%s3394] sm:$0xf]
  %v3396 = vunpack.c.l.bf16 %v3395
  %v3397 = vunpack.c.h.bf16 %v3395
  %s3398 = scalar_lea.vmem %s1, 1184
  %v3399 = vpack.c.bf16 0.0, %v3396
  %3400 = vst [vmem:[%s3398] sm:$0xf] %v3399
  %s3401 = scalar_lea.vmem %s0, 320
  %v3402 = vld [vmem:[%s3401] sm:$0xf]
  %v3403 = vunpack.c.l.bf16 %v3402
  %v3404 = vunpack.c.h.bf16 %v3402
  %s3405 = scalar_lea.vmem %s1, 2048
  %v3406 = vpack.c.bf16 0.0, %v3403
  %3407 = vst [vmem:[%s3405] sm:$0xf] %v3406
  %s3408 = scalar_lea.vmem %s0, 1760
  %v3409 = vld [vmem:[%s3408] sm:$0xf]
  %v3410 = vunpack.c.l.bf16 %v3409
  %v3411 = vunpack.c.h.bf16 %v3409
  %s3412 = scalar_lea.vmem %s1, 608
  %v3413 = vpack.c.bf16 0.0, %v3410
  %3414 = vst [vmem:[%s3412] sm:$0xf] %v3413
  %s3415 = scalar_lea.vmem %s0, 896
  %v3416 = vld [vmem:[%s3415] sm:$0xf]
  %v3417 = vunpack.c.l.bf16 %v3416
  %v3418 = vunpack.c.h.bf16 %v3416
  %s3419 = scalar_lea.vmem %s1, 1472
  %v3420 = vpack.c.bf16 0.0, %v3417
  %3421 = vst [vmem:[%s3419] sm:$0xf] %v3420
  %s3422 = scalar_lea.vmem %s0, 32
  %v3423 = vld [vmem:[%s3422] sm:$0xf]
  %v3424 = vunpack.c.l.bf16 %v3423
  %v3425 = vunpack.c.h.bf16 %v3423
  %s3426 = scalar_lea.vmem %s1, 2336
  %v3427 = vpack.c.bf16 0.0, %v3424
  %3428 = vst [vmem:[%s3426] sm:$0xf] %v3427
  %s3429 = scalar_lea.vmem %s0, 2348
  %v3430 = vld [vmem:[%s3429] sm:$0xf]
  %v3431 = vunpack.c.l.bf16 %v3430
  %v3432 = vunpack.c.h.bf16 %v3430
  %s3433 = scalar_lea.vmem %s1, 44
  %v3434 = vpack.c.bf16 0.0, %v3431
  %3435 = vst [vmem:[%s3433] sm:$0xf] %v3434
  %s3436 = scalar_lea.vmem %s0, 1484
  %v3437 = vld [vmem:[%s3436] sm:$0xf]
  %v3438 = vunpack.c.l.bf16 %v3437
  %v3439 = vunpack.c.h.bf16 %v3437
  %s3440 = scalar_lea.vmem %s1, 908
  %v3441 = vpack.c.bf16 0.0, %v3438
  %3442 = vst [vmem:[%s3440] sm:$0xf] %v3441
  %s3443 = scalar_lea.vmem %s0, 620
  %v3444 = vld [vmem:[%s3443] sm:$0xf]
  %v3445 = vunpack.c.l.bf16 %v3444
  %v3446 = vunpack.c.h.bf16 %v3444
  %s3447 = scalar_lea.vmem %s1, 1772
  %v3448 = vpack.c.bf16 0.0, %v3445
  %3449 = vst [vmem:[%s3447] sm:$0xf] %v3448
  %s3450 = scalar_lea.vmem %s0, 2060
  %v3451 = vld [vmem:[%s3450] sm:$0xf]
  %v3452 = vunpack.c.l.bf16 %v3451
  %v3453 = vunpack.c.h.bf16 %v3451
  %s3454 = scalar_lea.vmem %s1, 332
  %v3455 = vpack.c.bf16 0.0, %v3452
  %3456 = vst [vmem:[%s3454] sm:$0xf] %v3455
  %s3457 = scalar_lea.vmem %s0, 1196
  %v3458 = vld [vmem:[%s3457] sm:$0xf]
  %v3459 = vunpack.c.l.bf16 %v3458
  %v3460 = vunpack.c.h.bf16 %v3458
  %s3461 = scalar_lea.vmem %s1, 1196
  %v3462 = vpack.c.bf16 0.0, %v3459
  %3463 = vst [vmem:[%s3461] sm:$0xf] %v3462
  %s3464 = scalar_lea.vmem %s0, 332
  %v3465 = vld [vmem:[%s3464] sm:$0xf]
  %v3466 = vunpack.c.l.bf16 %v3465
  %v3467 = vunpack.c.h.bf16 %v3465
  %s3468 = scalar_lea.vmem %s1, 2060
  %v3469 = vpack.c.bf16 0.0, %v3466
  %3470 = vst [vmem:[%s3468] sm:$0xf] %v3469
  %s3471 = scalar_lea.vmem %s0, 1772
  %v3472 = vld [vmem:[%s3471] sm:$0xf]
  %v3473 = vunpack.c.l.bf16 %v3472
  %v3474 = vunpack.c.h.bf16 %v3472
  %s3475 = scalar_lea.vmem %s1, 620
  %v3476 = vpack.c.bf16 0.0, %v3473
  %3477 = vst [vmem:[%s3475] sm:$0xf] %v3476
  %s3478 = scalar_lea.vmem %s0, 908
  %v3479 = vld [vmem:[%s3478] sm:$0xf]
  %v3480 = vunpack.c.l.bf16 %v3479
  %v3481 = vunpack.c.h.bf16 %v3479
  %s3482 = scalar_lea.vmem %s1, 1484
  %v3483 = vpack.c.bf16 0.0, %v3480
  %3484 = vst [vmem:[%s3482] sm:$0xf] %v3483
  %s3485 = scalar_lea.vmem %s0, 44
  %v3486 = vld [vmem:[%s3485] sm:$0xf]
  %v3487 = vunpack.c.l.bf16 %v3486
  %v3488 = vunpack.c.h.bf16 %v3486
  %s3489 = scalar_lea.vmem %s1, 2348
  %v3490 = vpack.c.bf16 0.0, %v3487
  %3491 = vst [vmem:[%s3489] sm:$0xf] %v3490
  %s3492 = scalar_lea.vmem %s0, 2360
  %v3493 = vld [vmem:[%s3492] sm:$0xf]
  %v3494 = vunpack.c.l.bf16 %v3493
  %v3495 = vunpack.c.h.bf16 %v3493
  %s3496 = scalar_lea.vmem %s1, 56
  %v3497 = vpack.c.bf16 0.0, %v3494
  %3498 = vst [vmem:[%s3496] sm:$0xf] %v3497
  %s3499 = scalar_lea.vmem %s0, 1496
  %v3500 = vld [vmem:[%s3499] sm:$0xf]
  %v3501 = vunpack.c.l.bf16 %v3500
  %v3502 = vunpack.c.h.bf16 %v3500
  %s3503 = scalar_lea.vmem %s1, 920
  %v3504 = vpack.c.bf16 0.0, %v3501
  %3505 = vst [vmem:[%s3503] sm:$0xf] %v3504
  %s3506 = scalar_lea.vmem %s0, 632
  %v3507 = vld [vmem:[%s3506] sm:$0xf]
  %v3508 = vunpack.c.l.bf16 %v3507
  %v3509 = vunpack.c.h.bf16 %v3507
  %s3510 = scalar_lea.vmem %s1, 1784
  %v3511 = vpack.c.bf16 0.0, %v3508
  %3512 = vst [vmem:[%s3510] sm:$0xf] %v3511
  %s3513 = scalar_lea.vmem %s0, 2072
  %v3514 = vld [vmem:[%s3513] sm:$0xf]
  %v3515 = vunpack.c.l.bf16 %v3514
  %v3516 = vunpack.c.h.bf16 %v3514
  %s3517 = scalar_lea.vmem %s1, 344
  %v3518 = vpack.c.bf16 0.0, %v3515
  %3519 = vst [vmem:[%s3517] sm:$0xf] %v3518
  %s3520 = scalar_lea.vmem %s0, 1208
  %v3521 = vld [vmem:[%s3520] sm:$0xf]
  %v3522 = vunpack.c.l.bf16 %v3521
  %v3523 = vunpack.c.h.bf16 %v3521
  %s3524 = scalar_lea.vmem %s1, 1208
  %v3525 = vpack.c.bf16 0.0, %v3522
  %3526 = vst [vmem:[%s3524] sm:$0xf] %v3525
  %s3527 = scalar_lea.vmem %s0, 344
  %v3528 = vld [vmem:[%s3527] sm:$0xf]
  %v3529 = vunpack.c.l.bf16 %v3528
  %v3530 = vunpack.c.h.bf16 %v3528
  %s3531 = scalar_lea.vmem %s1, 2072
  %v3532 = vpack.c.bf16 0.0, %v3529
  %3533 = vst [vmem:[%s3531] sm:$0xf] %v3532
  %s3534 = scalar_lea.vmem %s0, 1784
  %v3535 = vld [vmem:[%s3534] sm:$0xf]
  %v3536 = vunpack.c.l.bf16 %v3535
  %v3537 = vunpack.c.h.bf16 %v3535
  %s3538 = scalar_lea.vmem %s1, 632
  %v3539 = vpack.c.bf16 0.0, %v3536
  %3540 = vst [vmem:[%s3538] sm:$0xf] %v3539
  %s3541 = scalar_lea.vmem %s0, 920
  %v3542 = vld [vmem:[%s3541] sm:$0xf]
  %v3543 = vunpack.c.l.bf16 %v3542
  %v3544 = vunpack.c.h.bf16 %v3542
  %s3545 = scalar_lea.vmem %s1, 1496
  %v3546 = vpack.c.bf16 0.0, %v3543
  %3547 = vst [vmem:[%s3545] sm:$0xf] %v3546
  %s3548 = scalar_lea.vmem %s0, 56
  %v3549 = vld [vmem:[%s3548] sm:$0xf]
  %v3550 = vunpack.c.l.bf16 %v3549
  %v3551 = vunpack.c.h.bf16 %v3549
  %s3552 = scalar_lea.vmem %s1, 2360
  %v3553 = vpack.c.bf16 0.0, %v3550
  %3554 = vst [vmem:[%s3552] sm:$0xf] %v3553
  %s3555 = scalar_lea.vmem %s0, 2372
  %v3556 = vld [vmem:[%s3555] sm:$0xf]
  %v3557 = vunpack.c.l.bf16 %v3556
  %v3558 = vunpack.c.h.bf16 %v3556
  %s3559 = scalar_lea.vmem %s1, 68
  %v3560 = vpack.c.bf16 0.0, %v3557
  %3561 = vst [vmem:[%s3559] sm:$0xf] %v3560
  %s3562 = scalar_lea.vmem %s0, 1508
  %v3563 = vld [vmem:[%s3562] sm:$0xf]
  %v3564 = vunpack.c.l.bf16 %v3563
  %v3565 = vunpack.c.h.bf16 %v3563
  %s3566 = scalar_lea.vmem %s1, 932
  %v3567 = vpack.c.bf16 0.0, %v3564
  %3568 = vst [vmem:[%s3566] sm:$0xf] %v3567
  %s3569 = scalar_lea.vmem %s0, 644
  %v3570 = vld [vmem:[%s3569] sm:$0xf]
  %v3571 = vunpack.c.l.bf16 %v3570
  %v3572 = vunpack.c.h.bf16 %v3570
  %s3573 = scalar_lea.vmem %s1, 1796
  %v3574 = vpack.c.bf16 0.0, %v3571
  %3575 = vst [vmem:[%s3573] sm:$0xf] %v3574
  %s3576 = scalar_lea.vmem %s0, 2084
  %v3577 = vld [vmem:[%s3576] sm:$0xf]
  %v3578 = vunpack.c.l.bf16 %v3577
  %v3579 = vunpack.c.h.bf16 %v3577
  %s3580 = scalar_lea.vmem %s1, 356
  %v3581 = vpack.c.bf16 0.0, %v3578
  %3582 = vst [vmem:[%s3580] sm:$0xf] %v3581
  %s3583 = scalar_lea.vmem %s0, 1220
  %v3584 = vld [vmem:[%s3583] sm:$0xf]
  %v3585 = vunpack.c.l.bf16 %v3584
  %v3586 = vunpack.c.h.bf16 %v3584
  %s3587 = scalar_lea.vmem %s1, 1220
  %v3588 = vpack.c.bf16 0.0, %v3585
  %3589 = vst [vmem:[%s3587] sm:$0xf] %v3588
  %s3590 = scalar_lea.vmem %s0, 356
  %v3591 = vld [vmem:[%s3590] sm:$0xf]
  %v3592 = vunpack.c.l.bf16 %v3591
  %v3593 = vunpack.c.h.bf16 %v3591
  %s3594 = scalar_lea.vmem %s1, 2084
  %v3595 = vpack.c.bf16 0.0, %v3592
  %3596 = vst [vmem:[%s3594] sm:$0xf] %v3595
  %s3597 = scalar_lea.vmem %s0, 1796
  %v3598 = vld [vmem:[%s3597] sm:$0xf]
  %v3599 = vunpack.c.l.bf16 %v3598
  %v3600 = vunpack.c.h.bf16 %v3598
  %s3601 = scalar_lea.vmem %s1, 644
  %v3602 = vpack.c.bf16 0.0, %v3599
  %3603 = vst [vmem:[%s3601] sm:$0xf] %v3602
  %s3604 = scalar_lea.vmem %s0, 932
  %v3605 = vld [vmem:[%s3604] sm:$0xf]
  %v3606 = vunpack.c.l.bf16 %v3605
  %v3607 = vunpack.c.h.bf16 %v3605
  %s3608 = scalar_lea.vmem %s1, 1508
  %v3609 = vpack.c.bf16 0.0, %v3606
  %3610 = vst [vmem:[%s3608] sm:$0xf] %v3609
  %s3611 = scalar_lea.vmem %s0, 68
  %v3612 = vld [vmem:[%s3611] sm:$0xf]
  %v3613 = vunpack.c.l.bf16 %v3612
  %v3614 = vunpack.c.h.bf16 %v3612
  %s3615 = scalar_lea.vmem %s1, 2372
  %v3616 = vpack.c.bf16 0.0, %v3613
  %3617 = vst [vmem:[%s3615] sm:$0xf] %v3616
  %s3618 = scalar_lea.vmem %s0, 2384
  %v3619 = vld [vmem:[%s3618] sm:$0xf]
  %v3620 = vunpack.c.l.bf16 %v3619
  %v3621 = vunpack.c.h.bf16 %v3619
  %s3622 = scalar_lea.vmem %s1, 80
  %v3623 = vpack.c.bf16 0.0, %v3620
  %3624 = vst [vmem:[%s3622] sm:$0xf] %v3623
  %s3625 = scalar_lea.vmem %s0, 1520
  %v3626 = vld [vmem:[%s3625] sm:$0xf]
  %v3627 = vunpack.c.l.bf16 %v3626
  %v3628 = vunpack.c.h.bf16 %v3626
  %s3629 = scalar_lea.vmem %s1, 944
  %v3630 = vpack.c.bf16 0.0, %v3627
  %3631 = vst [vmem:[%s3629] sm:$0xf] %v3630
  %s3632 = scalar_lea.vmem %s0, 656
  %v3633 = vld [vmem:[%s3632] sm:$0xf]
  %v3634 = vunpack.c.l.bf16 %v3633
  %v3635 = vunpack.c.h.bf16 %v3633
  %s3636 = scalar_lea.vmem %s1, 1808
  %v3637 = vpack.c.bf16 0.0, %v3634
  %3638 = vst [vmem:[%s3636] sm:$0xf] %v3637
  %s3639 = scalar_lea.vmem %s0, 2096
  %v3640 = vld [vmem:[%s3639] sm:$0xf]
  %v3641 = vunpack.c.l.bf16 %v3640
  %v3642 = vunpack.c.h.bf16 %v3640
  %s3643 = scalar_lea.vmem %s1, 368
  %v3644 = vpack.c.bf16 0.0, %v3641
  %3645 = vst [vmem:[%s3643] sm:$0xf] %v3644
  %s3646 = scalar_lea.vmem %s0, 1232
  %v3647 = vld [vmem:[%s3646] sm:$0xf]
  %v3648 = vunpack.c.l.bf16 %v3647
  %v3649 = vunpack.c.h.bf16 %v3647
  %s3650 = scalar_lea.vmem %s1, 1232
  %v3651 = vpack.c.bf16 0.0, %v3648
  %3652 = vst [vmem:[%s3650] sm:$0xf] %v3651
  %s3653 = scalar_lea.vmem %s0, 368
  %v3654 = vld [vmem:[%s3653] sm:$0xf]
  %v3655 = vunpack.c.l.bf16 %v3654
  %v3656 = vunpack.c.h.bf16 %v3654
  %s3657 = scalar_lea.vmem %s1, 2096
  %v3658 = vpack.c.bf16 0.0, %v3655
  %3659 = vst [vmem:[%s3657] sm:$0xf] %v3658
  %s3660 = scalar_lea.vmem %s0, 1808
  %v3661 = vld [vmem:[%s3660] sm:$0xf]
  %v3662 = vunpack.c.l.bf16 %v3661
  %v3663 = vunpack.c.h.bf16 %v3661
  %s3664 = scalar_lea.vmem %s1, 656
  %v3665 = vpack.c.bf16 0.0, %v3662
  %3666 = vst [vmem:[%s3664] sm:$0xf] %v3665
  %s3667 = scalar_lea.vmem %s0, 944
  %v3668 = vld [vmem:[%s3667] sm:$0xf]
  %v3669 = vunpack.c.l.bf16 %v3668
  %v3670 = vunpack.c.h.bf16 %v3668
  %s3671 = scalar_lea.vmem %s1, 1520
  %v3672 = vpack.c.bf16 0.0, %v3669
  %3673 = vst [vmem:[%s3671] sm:$0xf] %v3672
  %s3674 = scalar_lea.vmem %s0, 80
  %v3675 = vld [vmem:[%s3674] sm:$0xf]
  %v3676 = vunpack.c.l.bf16 %v3675
  %v3677 = vunpack.c.h.bf16 %v3675
  %s3678 = scalar_lea.vmem %s1, 2384
  %v3679 = vpack.c.bf16 0.0, %v3676
  %3680 = vst [vmem:[%s3678] sm:$0xf] %v3679
  %s3681 = scalar_lea.vmem %s0, 2396
  %v3682 = vld [vmem:[%s3681] sm:$0xf]
  %v3683 = vunpack.c.l.bf16 %v3682
  %v3684 = vunpack.c.h.bf16 %v3682
  %s3685 = scalar_lea.vmem %s1, 92
  %v3686 = vpack.c.bf16 0.0, %v3683
  %3687 = vst [vmem:[%s3685] sm:$0xf] %v3686
  %s3688 = scalar_lea.vmem %s0, 1532
  %v3689 = vld [vmem:[%s3688] sm:$0xf]
  %v3690 = vunpack.c.l.bf16 %v3689
  %v3691 = vunpack.c.h.bf16 %v3689
  %s3692 = scalar_lea.vmem %s1, 956
  %v3693 = vpack.c.bf16 0.0, %v3690
  %3694 = vst [vmem:[%s3692] sm:$0xf] %v3693
  %s3695 = scalar_lea.vmem %s0, 668
  %v3696 = vld [vmem:[%s3695] sm:$0xf]
  %v3697 = vunpack.c.l.bf16 %v3696
  %v3698 = vunpack.c.h.bf16 %v3696
  %s3699 = scalar_lea.vmem %s1, 1820
  %v3700 = vpack.c.bf16 0.0, %v3697
  %3701 = vst [vmem:[%s3699] sm:$0xf] %v3700
  %s3702 = scalar_lea.vmem %s0, 2108
  %v3703 = vld [vmem:[%s3702] sm:$0xf]
  %v3704 = vunpack.c.l.bf16 %v3703
  %v3705 = vunpack.c.h.bf16 %v3703
  %s3706 = scalar_lea.vmem %s1, 380
  %v3707 = vpack.c.bf16 0.0, %v3704
  %3708 = vst [vmem:[%s3706] sm:$0xf] %v3707
  %s3709 = scalar_lea.vmem %s0, 1244
  %v3710 = vld [vmem:[%s3709] sm:$0xf]
  %v3711 = vunpack.c.l.bf16 %v3710
  %v3712 = vunpack.c.h.bf16 %v3710
  %s3713 = scalar_lea.vmem %s1, 1244
  %v3714 = vpack.c.bf16 0.0, %v3711
  %3715 = vst [vmem:[%s3713] sm:$0xf] %v3714
  %s3716 = scalar_lea.vmem %s0, 380
  %v3717 = vld [vmem:[%s3716] sm:$0xf]
  %v3718 = vunpack.c.l.bf16 %v3717
  %v3719 = vunpack.c.h.bf16 %v3717
  %s3720 = scalar_lea.vmem %s1, 2108
  %v3721 = vpack.c.bf16 0.0, %v3718
  %3722 = vst [vmem:[%s3720] sm:$0xf] %v3721
  %s3723 = scalar_lea.vmem %s0, 1820
  %v3724 = vld [vmem:[%s3723] sm:$0xf]
  %v3725 = vunpack.c.l.bf16 %v3724
  %v3726 = vunpack.c.h.bf16 %v3724
  %s3727 = scalar_lea.vmem %s1, 668
  %v3728 = vpack.c.bf16 0.0, %v3725
  %3729 = vst [vmem:[%s3727] sm:$0xf] %v3728
  %s3730 = scalar_lea.vmem %s0, 956
  %v3731 = vld [vmem:[%s3730] sm:$0xf]
  %v3732 = vunpack.c.l.bf16 %v3731
  %v3733 = vunpack.c.h.bf16 %v3731
  %s3734 = scalar_lea.vmem %s1, 1532
  %v3735 = vpack.c.bf16 0.0, %v3732
  %3736 = vst [vmem:[%s3734] sm:$0xf] %v3735
  %s3737 = scalar_lea.vmem %s0, 92
  %v3738 = vld [vmem:[%s3737] sm:$0xf]
  %v3739 = vunpack.c.l.bf16 %v3738
  %v3740 = vunpack.c.h.bf16 %v3738
  %s3741 = scalar_lea.vmem %s1, 2396
  %v3742 = vpack.c.bf16 0.0, %v3739
  %3743 = vst [vmem:[%s3741] sm:$0xf] %v3742
  %s3744 = scalar_lea.vmem %s0, 2408
  %v3745 = vld [vmem:[%s3744] sm:$0xf]
  %v3746 = vunpack.c.l.bf16 %v3745
  %v3747 = vunpack.c.h.bf16 %v3745
  %s3748 = scalar_lea.vmem %s1, 104
  %v3749 = vpack.c.bf16 0.0, %v3746
  %3750 = vst [vmem:[%s3748] sm:$0xf] %v3749
  %s3751 = scalar_lea.vmem %s0, 1544
  %v3752 = vld [vmem:[%s3751] sm:$0xf]
  %v3753 = vunpack.c.l.bf16 %v3752
  %v3754 = vunpack.c.h.bf16 %v3752
  %s3755 = scalar_lea.vmem %s1, 968
  %v3756 = vpack.c.bf16 0.0, %v3753
  %3757 = vst [vmem:[%s3755] sm:$0xf] %v3756
  %s3758 = scalar_lea.vmem %s0, 680
  %v3759 = vld [vmem:[%s3758] sm:$0xf]
  %v3760 = vunpack.c.l.bf16 %v3759
  %v3761 = vunpack.c.h.bf16 %v3759
  %s3762 = scalar_lea.vmem %s1, 1832
  %v3763 = vpack.c.bf16 0.0, %v3760
  %3764 = vst [vmem:[%s3762] sm:$0xf] %v3763
  %s3765 = scalar_lea.vmem %s0, 2120
  %v3766 = vld [vmem:[%s3765] sm:$0xf]
  %v3767 = vunpack.c.l.bf16 %v3766
  %v3768 = vunpack.c.h.bf16 %v3766
  %s3769 = scalar_lea.vmem %s1, 392
  %v3770 = vpack.c.bf16 0.0, %v3767
  %3771 = vst [vmem:[%s3769] sm:$0xf] %v3770
  %s3772 = scalar_lea.vmem %s0, 1256
  %v3773 = vld [vmem:[%s3772] sm:$0xf]
  %v3774 = vunpack.c.l.bf16 %v3773
  %v3775 = vunpack.c.h.bf16 %v3773
  %s3776 = scalar_lea.vmem %s1, 1256
  %v3777 = vpack.c.bf16 0.0, %v3774
  %3778 = vst [vmem:[%s3776] sm:$0xf] %v3777
  %s3779 = scalar_lea.vmem %s0, 392
  %v3780 = vld [vmem:[%s3779] sm:$0xf]
  %v3781 = vunpack.c.l.bf16 %v3780
  %v3782 = vunpack.c.h.bf16 %v3780
  %s3783 = scalar_lea.vmem %s1, 2120
  %v3784 = vpack.c.bf16 0.0, %v3781
  %3785 = vst [vmem:[%s3783] sm:$0xf] %v3784
  %s3786 = scalar_lea.vmem %s0, 1832
  %v3787 = vld [vmem:[%s3786] sm:$0xf]
  %v3788 = vunpack.c.l.bf16 %v3787
  %v3789 = vunpack.c.h.bf16 %v3787
  %s3790 = scalar_lea.vmem %s1, 680
  %v3791 = vpack.c.bf16 0.0, %v3788
  %3792 = vst [vmem:[%s3790] sm:$0xf] %v3791
  %s3793 = scalar_lea.vmem %s0, 968
  %v3794 = vld [vmem:[%s3793] sm:$0xf]
  %v3795 = vunpack.c.l.bf16 %v3794
  %v3796 = vunpack.c.h.bf16 %v3794
  %s3797 = scalar_lea.vmem %s1, 1544
  %v3798 = vpack.c.bf16 0.0, %v3795
  %3799 = vst [vmem:[%s3797] sm:$0xf] %v3798
  %s3800 = scalar_lea.vmem %s0, 104
  %v3801 = vld [vmem:[%s3800] sm:$0xf]
  %v3802 = vunpack.c.l.bf16 %v3801
  %v3803 = vunpack.c.h.bf16 %v3801
  %s3804 = scalar_lea.vmem %s1, 2408
  %v3805 = vpack.c.bf16 0.0, %v3802
  %3806 = vst [vmem:[%s3804] sm:$0xf] %v3805
  %s3807 = scalar_lea.vmem %s0, 2420
  %v3808 = vld [vmem:[%s3807] sm:$0xf]
  %v3809 = vunpack.c.l.bf16 %v3808
  %v3810 = vunpack.c.h.bf16 %v3808
  %s3811 = scalar_lea.vmem %s1, 116
  %v3812 = vpack.c.bf16 0.0, %v3809
  %3813 = vst [vmem:[%s3811] sm:$0xf] %v3812
  %s3814 = scalar_lea.vmem %s0, 1556
  %v3815 = vld [vmem:[%s3814] sm:$0xf]
  %v3816 = vunpack.c.l.bf16 %v3815
  %v3817 = vunpack.c.h.bf16 %v3815
  %s3818 = scalar_lea.vmem %s1, 980
  %v3819 = vpack.c.bf16 0.0, %v3816
  %3820 = vst [vmem:[%s3818] sm:$0xf] %v3819
  %s3821 = scalar_lea.vmem %s0, 692
  %v3822 = vld [vmem:[%s3821] sm:$0xf]
  %v3823 = vunpack.c.l.bf16 %v3822
  %v3824 = vunpack.c.h.bf16 %v3822
  %s3825 = scalar_lea.vmem %s1, 1844
  %v3826 = vpack.c.bf16 0.0, %v3823
  %3827 = vst [vmem:[%s3825] sm:$0xf] %v3826
  %s3828 = scalar_lea.vmem %s0, 2132
  %v3829 = vld [vmem:[%s3828] sm:$0xf]
  %v3830 = vunpack.c.l.bf16 %v3829
  %v3831 = vunpack.c.h.bf16 %v3829
  %s3832 = scalar_lea.vmem %s1, 404
  %v3833 = vpack.c.bf16 0.0, %v3830
  %3834 = vst [vmem:[%s3832] sm:$0xf] %v3833
  %s3835 = scalar_lea.vmem %s0, 1268
  %v3836 = vld [vmem:[%s3835] sm:$0xf]
  %v3837 = vunpack.c.l.bf16 %v3836
  %v3838 = vunpack.c.h.bf16 %v3836
  %s3839 = scalar_lea.vmem %s1, 1268
  %v3840 = vpack.c.bf16 0.0, %v3837
  %3841 = vst [vmem:[%s3839] sm:$0xf] %v3840
  %s3842 = scalar_lea.vmem %s0, 404
  %v3843 = vld [vmem:[%s3842] sm:$0xf]
  %v3844 = vunpack.c.l.bf16 %v3843
  %v3845 = vunpack.c.h.bf16 %v3843
  %s3846 = scalar_lea.vmem %s1, 2132
  %v3847 = vpack.c.bf16 0.0, %v3844
  %3848 = vst [vmem:[%s3846] sm:$0xf] %v3847
  %s3849 = scalar_lea.vmem %s0, 1844
  %v3850 = vld [vmem:[%s3849] sm:$0xf]
  %v3851 = vunpack.c.l.bf16 %v3850
  %v3852 = vunpack.c.h.bf16 %v3850
  %s3853 = scalar_lea.vmem %s1, 692
  %v3854 = vpack.c.bf16 0.0, %v3851
  %3855 = vst [vmem:[%s3853] sm:$0xf] %v3854
  %s3856 = scalar_lea.vmem %s0, 980
  %v3857 = vld [vmem:[%s3856] sm:$0xf]
  %v3858 = vunpack.c.l.bf16 %v3857
  %v3859 = vunpack.c.h.bf16 %v3857
  %s3860 = scalar_lea.vmem %s1, 1556
  %v3861 = vpack.c.bf16 0.0, %v3858
  %3862 = vst [vmem:[%s3860] sm:$0xf] %v3861
  %s3863 = scalar_lea.vmem %s0, 116
  %v3864 = vld [vmem:[%s3863] sm:$0xf]
  %v3865 = vunpack.c.l.bf16 %v3864
  %v3866 = vunpack.c.h.bf16 %v3864
  %s3867 = scalar_lea.vmem %s1, 2420
  %v3868 = vpack.c.bf16 0.0, %v3865
  %3869 = vst [vmem:[%s3867] sm:$0xf] %v3868
  %s3870 = scalar_lea.vmem %s0, 2432
  %v3871 = vld [vmem:[%s3870] sm:$0xf]
  %v3872 = vunpack.c.l.bf16 %v3871
  %v3873 = vunpack.c.h.bf16 %v3871
  %s3874 = scalar_lea.vmem %s1, 128
  %v3875 = vpack.c.bf16 0.0, %v3872
  %3876 = vst [vmem:[%s3874] sm:$0xf] %v3875
  %s3877 = scalar_lea.vmem %s0, 1568
  %v3878 = vld [vmem:[%s3877] sm:$0xf]
  %v3879 = vunpack.c.l.bf16 %v3878
  %v3880 = vunpack.c.h.bf16 %v3878
  %s3881 = scalar_lea.vmem %s1, 992
  %v3882 = vpack.c.bf16 0.0, %v3879
  %3883 = vst [vmem:[%s3881] sm:$0xf] %v3882
  %s3884 = scalar_lea.vmem %s0, 704
  %v3885 = vld [vmem:[%s3884] sm:$0xf]
  %v3886 = vunpack.c.l.bf16 %v3885
  %v3887 = vunpack.c.h.bf16 %v3885
  %s3888 = scalar_lea.vmem %s1, 1856
  %v3889 = vpack.c.bf16 0.0, %v3886
  %3890 = vst [vmem:[%s3888] sm:$0xf] %v3889
  %s3891 = scalar_lea.vmem %s0, 2144
  %v3892 = vld [vmem:[%s3891] sm:$0xf]
  %v3893 = vunpack.c.l.bf16 %v3892
  %v3894 = vunpack.c.h.bf16 %v3892
  %s3895 = scalar_lea.vmem %s1, 416
  %v3896 = vpack.c.bf16 0.0, %v3893
  %3897 = vst [vmem:[%s3895] sm:$0xf] %v3896
  %s3898 = scalar_lea.vmem %s0, 1280
  %v3899 = vld [vmem:[%s3898] sm:$0xf]
  %v3900 = vunpack.c.l.bf16 %v3899
  %v3901 = vunpack.c.h.bf16 %v3899
  %s3902 = scalar_lea.vmem %s1, 1280
  %v3903 = vpack.c.bf16 0.0, %v3900
  %3904 = vst [vmem:[%s3902] sm:$0xf] %v3903
  %s3905 = scalar_lea.vmem %s0, 416
  %v3906 = vld [vmem:[%s3905] sm:$0xf]
  %v3907 = vunpack.c.l.bf16 %v3906
  %v3908 = vunpack.c.h.bf16 %v3906
  %s3909 = scalar_lea.vmem %s1, 2144
  %v3910 = vpack.c.bf16 0.0, %v3907
  %3911 = vst [vmem:[%s3909] sm:$0xf] %v3910
  %s3912 = scalar_lea.vmem %s0, 1856
  %v3913 = vld [vmem:[%s3912] sm:$0xf]
  %v3914 = vunpack.c.l.bf16 %v3913
  %v3915 = vunpack.c.h.bf16 %v3913
  %s3916 = scalar_lea.vmem %s1, 704
  %v3917 = vpack.c.bf16 0.0, %v3914
  %3918 = vst [vmem:[%s3916] sm:$0xf] %v3917
  %s3919 = scalar_lea.vmem %s0, 992
  %v3920 = vld [vmem:[%s3919] sm:$0xf]
  %v3921 = vunpack.c.l.bf16 %v3920
  %v3922 = vunpack.c.h.bf16 %v3920
  %s3923 = scalar_lea.vmem %s1, 1568
  %v3924 = vpack.c.bf16 0.0, %v3921
  %3925 = vst [vmem:[%s3923] sm:$0xf] %v3924
  %s3926 = scalar_lea.vmem %s0, 128
  %v3927 = vld [vmem:[%s3926] sm:$0xf]
  %v3928 = vunpack.c.l.bf16 %v3927
  %v3929 = vunpack.c.h.bf16 %v3927
  %s3930 = scalar_lea.vmem %s1, 2432
  %v3931 = vpack.c.bf16 0.0, %v3928
  %3932 = vst [vmem:[%s3930] sm:$0xf] %v3931
  %s3933 = scalar_lea.vmem %s0, 2444
  %v3934 = vld [vmem:[%s3933] sm:$0xf]
  %v3935 = vunpack.c.l.bf16 %v3934
  %v3936 = vunpack.c.h.bf16 %v3934
  %s3937 = scalar_lea.vmem %s1, 140
  %v3938 = vpack.c.bf16 0.0, %v3935
  %3939 = vst [vmem:[%s3937] sm:$0xf] %v3938
  %s3940 = scalar_lea.vmem %s0, 1580
  %v3941 = vld [vmem:[%s3940] sm:$0xf]
  %v3942 = vunpack.c.l.bf16 %v3941
  %v3943 = vunpack.c.h.bf16 %v3941
  %s3944 = scalar_lea.vmem %s1, 1004
  %v3945 = vpack.c.bf16 0.0, %v3942
  %3946 = vst [vmem:[%s3944] sm:$0xf] %v3945
  %s3947 = scalar_lea.vmem %s0, 716
  %v3948 = vld [vmem:[%s3947] sm:$0xf]
  %v3949 = vunpack.c.l.bf16 %v3948
  %v3950 = vunpack.c.h.bf16 %v3948
  %s3951 = scalar_lea.vmem %s1, 1868
  %v3952 = vpack.c.bf16 0.0, %v3949
  %3953 = vst [vmem:[%s3951] sm:$0xf] %v3952
  %s3954 = scalar_lea.vmem %s0, 2156
  %v3955 = vld [vmem:[%s3954] sm:$0xf]
  %v3956 = vunpack.c.l.bf16 %v3955
  %v3957 = vunpack.c.h.bf16 %v3955
  %s3958 = scalar_lea.vmem %s1, 428
  %v3959 = vpack.c.bf16 0.0, %v3956
  %3960 = vst [vmem:[%s3958] sm:$0xf] %v3959
  %s3961 = scalar_lea.vmem %s0, 1292
  %v3962 = vld [vmem:[%s3961] sm:$0xf]
  %v3963 = vunpack.c.l.bf16 %v3962
  %v3964 = vunpack.c.h.bf16 %v3962
  %s3965 = scalar_lea.vmem %s1, 1292
  %v3966 = vpack.c.bf16 0.0, %v3963
  %3967 = vst [vmem:[%s3965] sm:$0xf] %v3966
  %s3968 = scalar_lea.vmem %s0, 428
  %v3969 = vld [vmem:[%s3968] sm:$0xf]
  %v3970 = vunpack.c.l.bf16 %v3969
  %v3971 = vunpack.c.h.bf16 %v3969
  %s3972 = scalar_lea.vmem %s1, 2156
  %v3973 = vpack.c.bf16 0.0, %v3970
  %3974 = vst [vmem:[%s3972] sm:$0xf] %v3973
  %s3975 = scalar_lea.vmem %s0, 1868
  %v3976 = vld [vmem:[%s3975] sm:$0xf]
  %v3977 = vunpack.c.l.bf16 %v3976
  %v3978 = vunpack.c.h.bf16 %v3976
  %s3979 = scalar_lea.vmem %s1, 716
  %v3980 = vpack.c.bf16 0.0, %v3977
  %3981 = vst [vmem:[%s3979] sm:$0xf] %v3980
  %s3982 = scalar_lea.vmem %s0, 1004
  %v3983 = vld [vmem:[%s3982] sm:$0xf]
  %v3984 = vunpack.c.l.bf16 %v3983
  %v3985 = vunpack.c.h.bf16 %v3983
  %s3986 = scalar_lea.vmem %s1, 1580
  %v3987 = vpack.c.bf16 0.0, %v3984
  %3988 = vst [vmem:[%s3986] sm:$0xf] %v3987
  %s3989 = scalar_lea.vmem %s0, 140
  %v3990 = vld [vmem:[%s3989] sm:$0xf]
  %v3991 = vunpack.c.l.bf16 %v3990
  %v3992 = vunpack.c.h.bf16 %v3990
  %s3993 = scalar_lea.vmem %s1, 2444
  %v3994 = vpack.c.bf16 0.0, %v3991
  %3995 = vst [vmem:[%s3993] sm:$0xf] %v3994
  %s3996 = scalar_lea.vmem %s0, 2456
  %v3997 = vld [vmem:[%s3996] sm:$0xf]
  %v3998 = vunpack.c.l.bf16 %v3997
  %v3999 = vunpack.c.h.bf16 %v3997
  %s4000 = scalar_lea.vmem %s1, 152
  %v4001 = vpack.c.bf16 0.0, %v3998
  %4002 = vst [vmem:[%s4000] sm:$0xf] %v4001
  %s4003 = scalar_lea.vmem %s0, 1592
  %v4004 = vld [vmem:[%s4003] sm:$0xf]
  %v4005 = vunpack.c.l.bf16 %v4004
  %v4006 = vunpack.c.h.bf16 %v4004
  %s4007 = scalar_lea.vmem %s1, 1016
  %v4008 = vpack.c.bf16 0.0, %v4005
  %4009 = vst [vmem:[%s4007] sm:$0xf] %v4008
  %s4010 = scalar_lea.vmem %s0, 728
  %v4011 = vld [vmem:[%s4010] sm:$0xf]
  %v4012 = vunpack.c.l.bf16 %v4011
  %v4013 = vunpack.c.h.bf16 %v4011
  %s4014 = scalar_lea.vmem %s1, 1880
  %v4015 = vpack.c.bf16 0.0, %v4012
  %4016 = vst [vmem:[%s4014] sm:$0xf] %v4015
  %s4017 = scalar_lea.vmem %s0, 2168
  %v4018 = vld [vmem:[%s4017] sm:$0xf]
  %v4019 = vunpack.c.l.bf16 %v4018
  %v4020 = vunpack.c.h.bf16 %v4018
  %s4021 = scalar_lea.vmem %s1, 440
  %v4022 = vpack.c.bf16 0.0, %v4019
  %4023 = vst [vmem:[%s4021] sm:$0xf] %v4022
  %s4024 = scalar_lea.vmem %s0, 1304
  %v4025 = vld [vmem:[%s4024] sm:$0xf]
  %v4026 = vunpack.c.l.bf16 %v4025
  %v4027 = vunpack.c.h.bf16 %v4025
  %s4028 = scalar_lea.vmem %s1, 1304
  %v4029 = vpack.c.bf16 0.0, %v4026
  %4030 = vst [vmem:[%s4028] sm:$0xf] %v4029
  %s4031 = scalar_lea.vmem %s0, 440
  %v4032 = vld [vmem:[%s4031] sm:$0xf]
  %v4033 = vunpack.c.l.bf16 %v4032
  %v4034 = vunpack.c.h.bf16 %v4032
  %s4035 = scalar_lea.vmem %s1, 2168
  %v4036 = vpack.c.bf16 0.0, %v4033
  %4037 = vst [vmem:[%s4035] sm:$0xf] %v4036
  %s4038 = scalar_lea.vmem %s0, 1880
  %v4039 = vld [vmem:[%s4038] sm:$0xf]
  %v4040 = vunpack.c.l.bf16 %v4039
  %v4041 = vunpack.c.h.bf16 %v4039
  %s4042 = scalar_lea.vmem %s1, 728
  %v4043 = vpack.c.bf16 0.0, %v4040
  %4044 = vst [vmem:[%s4042] sm:$0xf] %v4043
  %s4045 = scalar_lea.vmem %s0, 1016
  %v4046 = vld [vmem:[%s4045] sm:$0xf]
  %v4047 = vunpack.c.l.bf16 %v4046
  %v4048 = vunpack.c.h.bf16 %v4046
  %s4049 = scalar_lea.vmem %s1, 1592
  %v4050 = vpack.c.bf16 0.0, %v4047
  %4051 = vst [vmem:[%s4049] sm:$0xf] %v4050
  %s4052 = scalar_lea.vmem %s0, 152
  %v4053 = vld [vmem:[%s4052] sm:$0xf]
  %v4054 = vunpack.c.l.bf16 %v4053
  %v4055 = vunpack.c.h.bf16 %v4053
  %s4056 = scalar_lea.vmem %s1, 2456
  %v4057 = vpack.c.bf16 0.0, %v4054
  %4058 = vst [vmem:[%s4056] sm:$0xf] %v4057
  %s4059 = scalar_lea.vmem %s0, 2468
  %v4060 = vld [vmem:[%s4059] sm:$0xf]
  %v4061 = vunpack.c.l.bf16 %v4060
  %v4062 = vunpack.c.h.bf16 %v4060
  %s4063 = scalar_lea.vmem %s1, 164
  %v4064 = vpack.c.bf16 0.0, %v4061
  %4065 = vst [vmem:[%s4063] sm:$0xf] %v4064
  %s4066 = scalar_lea.vmem %s0, 1604
  %v4067 = vld [vmem:[%s4066] sm:$0xf]
  %v4068 = vunpack.c.l.bf16 %v4067
  %v4069 = vunpack.c.h.bf16 %v4067
  %s4070 = scalar_lea.vmem %s1, 1028
  %v4071 = vpack.c.bf16 0.0, %v4068
  %4072 = vst [vmem:[%s4070] sm:$0xf] %v4071
  %s4073 = scalar_lea.vmem %s0, 740
  %v4074 = vld [vmem:[%s4073] sm:$0xf]
  %v4075 = vunpack.c.l.bf16 %v4074
  %v4076 = vunpack.c.h.bf16 %v4074
  %s4077 = scalar_lea.vmem %s1, 1892
  %v4078 = vpack.c.bf16 0.0, %v4075
  %4079 = vst [vmem:[%s4077] sm:$0xf] %v4078
  %s4080 = scalar_lea.vmem %s0, 2180
  %v4081 = vld [vmem:[%s4080] sm:$0xf]
  %v4082 = vunpack.c.l.bf16 %v4081
  %v4083 = vunpack.c.h.bf16 %v4081
  %s4084 = scalar_lea.vmem %s1, 452
  %v4085 = vpack.c.bf16 0.0, %v4082
  %4086 = vst [vmem:[%s4084] sm:$0xf] %v4085
  %s4087 = scalar_lea.vmem %s0, 1316
  %v4088 = vld [vmem:[%s4087] sm:$0xf]
  %v4089 = vunpack.c.l.bf16 %v4088
  %v4090 = vunpack.c.h.bf16 %v4088
  %s4091 = scalar_lea.vmem %s1, 1316
  %v4092 = vpack.c.bf16 0.0, %v4089
  %4093 = vst [vmem:[%s4091] sm:$0xf] %v4092
  %s4094 = scalar_lea.vmem %s0, 452
  %v4095 = vld [vmem:[%s4094] sm:$0xf]
  %v4096 = vunpack.c.l.bf16 %v4095
  %v4097 = vunpack.c.h.bf16 %v4095
  %s4098 = scalar_lea.vmem %s1, 2180
  %v4099 = vpack.c.bf16 0.0, %v4096
  %4100 = vst [vmem:[%s4098] sm:$0xf] %v4099
  %s4101 = scalar_lea.vmem %s0, 1892
  %v4102 = vld [vmem:[%s4101] sm:$0xf]
  %v4103 = vunpack.c.l.bf16 %v4102
  %v4104 = vunpack.c.h.bf16 %v4102
  %s4105 = scalar_lea.vmem %s1, 740
  %v4106 = vpack.c.bf16 0.0, %v4103
  %4107 = vst [vmem:[%s4105] sm:$0xf] %v4106
  %s4108 = scalar_lea.vmem %s0, 1028
  %v4109 = vld [vmem:[%s4108] sm:$0xf]
  %v4110 = vunpack.c.l.bf16 %v4109
  %v4111 = vunpack.c.h.bf16 %v4109
  %s4112 = scalar_lea.vmem %s1, 1604
  %v4113 = vpack.c.bf16 0.0, %v4110
  %4114 = vst [vmem:[%s4112] sm:$0xf] %v4113
  %s4115 = scalar_lea.vmem %s0, 164
  %v4116 = vld [vmem:[%s4115] sm:$0xf]
  %v4117 = vunpack.c.l.bf16 %v4116
  %v4118 = vunpack.c.h.bf16 %v4116
  %s4119 = scalar_lea.vmem %s1, 2468
  %v4120 = vpack.c.bf16 0.0, %v4117
  %4121 = vst [vmem:[%s4119] sm:$0xf] %v4120
  %s4122 = scalar_lea.vmem %s0, 2480
  %v4123 = vld [vmem:[%s4122] sm:$0xf]
  %v4124 = vunpack.c.l.bf16 %v4123
  %v4125 = vunpack.c.h.bf16 %v4123
  %s4126 = scalar_lea.vmem %s1, 176
  %v4127 = vpack.c.bf16 0.0, %v4124
  %4128 = vst [vmem:[%s4126] sm:$0xf] %v4127
  %s4129 = scalar_lea.vmem %s0, 1616
  %v4130 = vld [vmem:[%s4129] sm:$0xf]
  %v4131 = vunpack.c.l.bf16 %v4130
  %v4132 = vunpack.c.h.bf16 %v4130
  %s4133 = scalar_lea.vmem %s1, 1040
  %v4134 = vpack.c.bf16 0.0, %v4131
  %4135 = vst [vmem:[%s4133] sm:$0xf] %v4134
  %s4136 = scalar_lea.vmem %s0, 752
  %v4137 = vld [vmem:[%s4136] sm:$0xf]
  %v4138 = vunpack.c.l.bf16 %v4137
  %v4139 = vunpack.c.h.bf16 %v4137
  %s4140 = scalar_lea.vmem %s1, 1904
  %v4141 = vpack.c.bf16 0.0, %v4138
  %4142 = vst [vmem:[%s4140] sm:$0xf] %v4141
  %s4143 = scalar_lea.vmem %s0, 2192
  %v4144 = vld [vmem:[%s4143] sm:$0xf]
  %v4145 = vunpack.c.l.bf16 %v4144
  %v4146 = vunpack.c.h.bf16 %v4144
  %s4147 = scalar_lea.vmem %s1, 464
  %v4148 = vpack.c.bf16 0.0, %v4145
  %4149 = vst [vmem:[%s4147] sm:$0xf] %v4148
  %s4150 = scalar_lea.vmem %s0, 1328
  %v4151 = vld [vmem:[%s4150] sm:$0xf]
  %v4152 = vunpack.c.l.bf16 %v4151
  %v4153 = vunpack.c.h.bf16 %v4151
  %s4154 = scalar_lea.vmem %s1, 1328
  %v4155 = vpack.c.bf16 0.0, %v4152
  %4156 = vst [vmem:[%s4154] sm:$0xf] %v4155
  %s4157 = scalar_lea.vmem %s0, 464
  %v4158 = vld [vmem:[%s4157] sm:$0xf]
  %v4159 = vunpack.c.l.bf16 %v4158
  %v4160 = vunpack.c.h.bf16 %v4158
  %s4161 = scalar_lea.vmem %s1, 2192
  %v4162 = vpack.c.bf16 0.0, %v4159
  %4163 = vst [vmem:[%s4161] sm:$0xf] %v4162
  %s4164 = scalar_lea.vmem %s0, 1904
  %v4165 = vld [vmem:[%s4164] sm:$0xf]
  %v4166 = vunpack.c.l.bf16 %v4165
  %v4167 = vunpack.c.h.bf16 %v4165
  %s4168 = scalar_lea.vmem %s1, 752
  %v4169 = vpack.c.bf16 0.0, %v4166
  %4170 = vst [vmem:[%s4168] sm:$0xf] %v4169
  %s4171 = scalar_lea.vmem %s0, 1040
  %v4172 = vld [vmem:[%s4171] sm:$0xf]
  %v4173 = vunpack.c.l.bf16 %v4172
  %v4174 = vunpack.c.h.bf16 %v4172
  %s4175 = scalar_lea.vmem %s1, 1616
  %v4176 = vpack.c.bf16 0.0, %v4173
  %4177 = vst [vmem:[%s4175] sm:$0xf] %v4176
  %s4178 = scalar_lea.vmem %s0, 176
  %v4179 = vld [vmem:[%s4178] sm:$0xf]
  %v4180 = vunpack.c.l.bf16 %v4179
  %v4181 = vunpack.c.h.bf16 %v4179
  %s4182 = scalar_lea.vmem %s1, 2480
  %v4183 = vpack.c.bf16 0.0, %v4180
  %4184 = vst [vmem:[%s4182] sm:$0xf] %v4183
  %s4185 = scalar_lea.vmem %s0, 2492
  %v4186 = vld [vmem:[%s4185] sm:$0xf]
  %v4187 = vunpack.c.l.bf16 %v4186
  %v4188 = vunpack.c.h.bf16 %v4186
  %s4189 = scalar_lea.vmem %s1, 188
  %v4190 = vpack.c.bf16 0.0, %v4187
  %4191 = vst [vmem:[%s4189] sm:$0xf] %v4190
  %s4192 = scalar_lea.vmem %s0, 1628
  %v4193 = vld [vmem:[%s4192] sm:$0xf]
  %v4194 = vunpack.c.l.bf16 %v4193
  %v4195 = vunpack.c.h.bf16 %v4193
  %s4196 = scalar_lea.vmem %s1, 1052
  %v4197 = vpack.c.bf16 0.0, %v4194
  %4198 = vst [vmem:[%s4196] sm:$0xf] %v4197
  %s4199 = scalar_lea.vmem %s0, 764
  %v4200 = vld [vmem:[%s4199] sm:$0xf]
  %v4201 = vunpack.c.l.bf16 %v4200
  %v4202 = vunpack.c.h.bf16 %v4200
  %s4203 = scalar_lea.vmem %s1, 1916
  %v4204 = vpack.c.bf16 0.0, %v4201
  %4205 = vst [vmem:[%s4203] sm:$0xf] %v4204
  %s4206 = scalar_lea.vmem %s0, 2204
  %v4207 = vld [vmem:[%s4206] sm:$0xf]
  %v4208 = vunpack.c.l.bf16 %v4207
  %v4209 = vunpack.c.h.bf16 %v4207
  %s4210 = scalar_lea.vmem %s1, 476
  %v4211 = vpack.c.bf16 0.0, %v4208
  %4212 = vst [vmem:[%s4210] sm:$0xf] %v4211
  %s4213 = scalar_lea.vmem %s0, 1340
  %v4214 = vld [vmem:[%s4213] sm:$0xf]
  %v4215 = vunpack.c.l.bf16 %v4214
  %v4216 = vunpack.c.h.bf16 %v4214
  %s4217 = scalar_lea.vmem %s1, 1340
  %v4218 = vpack.c.bf16 0.0, %v4215
  %4219 = vst [vmem:[%s4217] sm:$0xf] %v4218
  %s4220 = scalar_lea.vmem %s0, 476
  %v4221 = vld [vmem:[%s4220] sm:$0xf]
  %v4222 = vunpack.c.l.bf16 %v4221
  %v4223 = vunpack.c.h.bf16 %v4221
  %s4224 = scalar_lea.vmem %s1, 2204
  %v4225 = vpack.c.bf16 0.0, %v4222
  %4226 = vst [vmem:[%s4224] sm:$0xf] %v4225
  %s4227 = scalar_lea.vmem %s0, 1916
  %v4228 = vld [vmem:[%s4227] sm:$0xf]
  %v4229 = vunpack.c.l.bf16 %v4228
  %v4230 = vunpack.c.h.bf16 %v4228
  %s4231 = scalar_lea.vmem %s1, 764
  %v4232 = vpack.c.bf16 0.0, %v4229
  %4233 = vst [vmem:[%s4231] sm:$0xf] %v4232
  %s4234 = scalar_lea.vmem %s0, 1052
  %v4235 = vld [vmem:[%s4234] sm:$0xf]
  %v4236 = vunpack.c.l.bf16 %v4235
  %v4237 = vunpack.c.h.bf16 %v4235
  %s4238 = scalar_lea.vmem %s1, 1628
  %v4239 = vpack.c.bf16 0.0, %v4236
  %4240 = vst [vmem:[%s4238] sm:$0xf] %v4239
  %s4241 = scalar_lea.vmem %s0, 188
  %v4242 = vld [vmem:[%s4241] sm:$0xf]
  %v4243 = vunpack.c.l.bf16 %v4242
  %v4244 = vunpack.c.h.bf16 %v4242
  %s4245 = scalar_lea.vmem %s1, 2492
  %v4246 = vpack.c.bf16 0.0, %v4243
  %4247 = vst [vmem:[%s4245] sm:$0xf] %v4246
  %s4248 = scalar_lea.vmem %s0, 2504
  %v4249 = vld [vmem:[%s4248] sm:$0xf]
  %v4250 = vunpack.c.l.bf16 %v4249
  %v4251 = vunpack.c.h.bf16 %v4249
  %s4252 = scalar_lea.vmem %s1, 200
  %v4253 = vpack.c.bf16 0.0, %v4250
  %4254 = vst [vmem:[%s4252] sm:$0xf] %v4253
  %s4255 = scalar_lea.vmem %s0, 1640
  %v4256 = vld [vmem:[%s4255] sm:$0xf]
  %v4257 = vunpack.c.l.bf16 %v4256
  %v4258 = vunpack.c.h.bf16 %v4256
  %s4259 = scalar_lea.vmem %s1, 1064
  %v4260 = vpack.c.bf16 0.0, %v4257
  %4261 = vst [vmem:[%s4259] sm:$0xf] %v4260
  %s4262 = scalar_lea.vmem %s0, 776
  %v4263 = vld [vmem:[%s4262] sm:$0xf]
  %v4264 = vunpack.c.l.bf16 %v4263
  %v4265 = vunpack.c.h.bf16 %v4263
  %s4266 = scalar_lea.vmem %s1, 1928
  %v4267 = vpack.c.bf16 0.0, %v4264
  %4268 = vst [vmem:[%s4266] sm:$0xf] %v4267
  %s4269 = scalar_lea.vmem %s0, 2216
  %v4270 = vld [vmem:[%s4269] sm:$0xf]
  %v4271 = vunpack.c.l.bf16 %v4270
  %v4272 = vunpack.c.h.bf16 %v4270
  %s4273 = scalar_lea.vmem %s1, 488
  %v4274 = vpack.c.bf16 0.0, %v4271
  %4275 = vst [vmem:[%s4273] sm:$0xf] %v4274
  %s4276 = scalar_lea.vmem %s0, 1352
  %v4277 = vld [vmem:[%s4276] sm:$0xf]
  %v4278 = vunpack.c.l.bf16 %v4277
  %v4279 = vunpack.c.h.bf16 %v4277
  %s4280 = scalar_lea.vmem %s1, 1352
  %v4281 = vpack.c.bf16 0.0, %v4278
  %4282 = vst [vmem:[%s4280] sm:$0xf] %v4281
  %s4283 = scalar_lea.vmem %s0, 488
  %v4284 = vld [vmem:[%s4283] sm:$0xf]
  %v4285 = vunpack.c.l.bf16 %v4284
  %v4286 = vunpack.c.h.bf16 %v4284
  %s4287 = scalar_lea.vmem %s1, 2216
  %v4288 = vpack.c.bf16 0.0, %v4285
  %4289 = vst [vmem:[%s4287] sm:$0xf] %v4288
  %s4290 = scalar_lea.vmem %s0, 1928
  %v4291 = vld [vmem:[%s4290] sm:$0xf]
  %v4292 = vunpack.c.l.bf16 %v4291
  %v4293 = vunpack.c.h.bf16 %v4291
  %s4294 = scalar_lea.vmem %s1, 776
  %v4295 = vpack.c.bf16 0.0, %v4292
  %4296 = vst [vmem:[%s4294] sm:$0xf] %v4295
  %s4297 = scalar_lea.vmem %s0, 1064
  %v4298 = vld [vmem:[%s4297] sm:$0xf]
  %v4299 = vunpack.c.l.bf16 %v4298
  %v4300 = vunpack.c.h.bf16 %v4298
  %s4301 = scalar_lea.vmem %s1, 1640
  %v4302 = vpack.c.bf16 0.0, %v4299
  %4303 = vst [vmem:[%s4301] sm:$0xf] %v4302
  %s4304 = scalar_lea.vmem %s0, 200
  %v4305 = vld [vmem:[%s4304] sm:$0xf]
  %v4306 = vunpack.c.l.bf16 %v4305
  %v4307 = vunpack.c.h.bf16 %v4305
  %s4308 = scalar_lea.vmem %s1, 2504
  %v4309 = vpack.c.bf16 0.0, %v4306
  %4310 = vst [vmem:[%s4308] sm:$0xf] %v4309
  %s4311 = scalar_lea.vmem %s0, 2516
  %v4312 = vld [vmem:[%s4311] sm:$0xf]
  %v4313 = vunpack.c.l.bf16 %v4312
  %v4314 = vunpack.c.h.bf16 %v4312
  %s4315 = scalar_lea.vmem %s1, 212
  %v4316 = vpack.c.bf16 0.0, %v4313
  %4317 = vst [vmem:[%s4315] sm:$0xf] %v4316
  %s4318 = scalar_lea.vmem %s0, 1652
  %v4319 = vld [vmem:[%s4318] sm:$0xf]
  %v4320 = vunpack.c.l.bf16 %v4319
  %v4321 = vunpack.c.h.bf16 %v4319
  %s4322 = scalar_lea.vmem %s1, 1076
  %v4323 = vpack.c.bf16 0.0, %v4320
  %4324 = vst [vmem:[%s4322] sm:$0xf] %v4323
  %s4325 = scalar_lea.vmem %s0, 788
  %v4326 = vld [vmem:[%s4325] sm:$0xf]
  %v4327 = vunpack.c.l.bf16 %v4326
  %v4328 = vunpack.c.h.bf16 %v4326
  %s4329 = scalar_lea.vmem %s1, 1940
  %v4330 = vpack.c.bf16 0.0, %v4327
  %4331 = vst [vmem:[%s4329] sm:$0xf] %v4330
  %s4332 = scalar_lea.vmem %s0, 2228
  %v4333 = vld [vmem:[%s4332] sm:$0xf]
  %v4334 = vunpack.c.l.bf16 %v4333
  %v4335 = vunpack.c.h.bf16 %v4333
  %s4336 = scalar_lea.vmem %s1, 500
  %v4337 = vpack.c.bf16 0.0, %v4334
  %4338 = vst [vmem:[%s4336] sm:$0xf] %v4337
  %s4339 = scalar_lea.vmem %s0, 1364
  %v4340 = vld [vmem:[%s4339] sm:$0xf]
  %v4341 = vunpack.c.l.bf16 %v4340
  %v4342 = vunpack.c.h.bf16 %v4340
  %s4343 = scalar_lea.vmem %s1, 1364
  %v4344 = vpack.c.bf16 0.0, %v4341
  %4345 = vst [vmem:[%s4343] sm:$0xf] %v4344
  %s4346 = scalar_lea.vmem %s0, 500
  %v4347 = vld [vmem:[%s4346] sm:$0xf]
  %v4348 = vunpack.c.l.bf16 %v4347
  %v4349 = vunpack.c.h.bf16 %v4347
  %s4350 = scalar_lea.vmem %s1, 2228
  %v4351 = vpack.c.bf16 0.0, %v4348
  %4352 = vst [vmem:[%s4350] sm:$0xf] %v4351
  %s4353 = scalar_lea.vmem %s0, 1940
  %v4354 = vld [vmem:[%s4353] sm:$0xf]
  %v4355 = vunpack.c.l.bf16 %v4354
  %v4356 = vunpack.c.h.bf16 %v4354
  %s4357 = scalar_lea.vmem %s1, 788
  %v4358 = vpack.c.bf16 0.0, %v4355
  %4359 = vst [vmem:[%s4357] sm:$0xf] %v4358
  %s4360 = scalar_lea.vmem %s0, 1076
  %v4361 = vld [vmem:[%s4360] sm:$0xf]
  %v4362 = vunpack.c.l.bf16 %v4361
  %v4363 = vunpack.c.h.bf16 %v4361
  %s4364 = scalar_lea.vmem %s1, 1652
  %v4365 = vpack.c.bf16 0.0, %v4362
  %4366 = vst [vmem:[%s4364] sm:$0xf] %v4365
  %s4367 = scalar_lea.vmem %s0, 212
  %v4368 = vld [vmem:[%s4367] sm:$0xf]
  %v4369 = vunpack.c.l.bf16 %v4368
  %v4370 = vunpack.c.h.bf16 %v4368
  %s4371 = scalar_lea.vmem %s1, 2516
  %v4372 = vpack.c.bf16 0.0, %v4369
  %4373 = vst [vmem:[%s4371] sm:$0xf] %v4372
  %s4374 = scalar_lea.vmem %s0, 2528
  %v4375 = vld [vmem:[%s4374] sm:$0xf]
  %v4376 = vunpack.c.l.bf16 %v4375
  %v4377 = vunpack.c.h.bf16 %v4375
  %s4378 = scalar_lea.vmem %s1, 224
  %v4379 = vpack.c.bf16 0.0, %v4376
  %4380 = vst [vmem:[%s4378] sm:$0xf] %v4379
  %s4381 = scalar_lea.vmem %s0, 1664
  %v4382 = vld [vmem:[%s4381] sm:$0xf]
  %v4383 = vunpack.c.l.bf16 %v4382
  %v4384 = vunpack.c.h.bf16 %v4382
  %s4385 = scalar_lea.vmem %s1, 1088
  %v4386 = vpack.c.bf16 0.0, %v4383
  %4387 = vst [vmem:[%s4385] sm:$0xf] %v4386
  %s4388 = scalar_lea.vmem %s0, 800
  %v4389 = vld [vmem:[%s4388] sm:$0xf]
  %v4390 = vunpack.c.l.bf16 %v4389
  %v4391 = vunpack.c.h.bf16 %v4389
  %s4392 = scalar_lea.vmem %s1, 1952
  %v4393 = vpack.c.bf16 0.0, %v4390
  %4394 = vst [vmem:[%s4392] sm:$0xf] %v4393
  %s4395 = scalar_lea.vmem %s0, 2240
  %v4396 = vld [vmem:[%s4395] sm:$0xf]
  %v4397 = vunpack.c.l.bf16 %v4396
  %v4398 = vunpack.c.h.bf16 %v4396
  %s4399 = scalar_lea.vmem %s1, 512
  %v4400 = vpack.c.bf16 0.0, %v4397
  %4401 = vst [vmem:[%s4399] sm:$0xf] %v4400
  %s4402 = scalar_lea.vmem %s0, 1376
  %v4403 = vld [vmem:[%s4402] sm:$0xf]
  %v4404 = vunpack.c.l.bf16 %v4403
  %v4405 = vunpack.c.h.bf16 %v4403
  %s4406 = scalar_lea.vmem %s1, 1376
  %v4407 = vpack.c.bf16 0.0, %v4404
  %4408 = vst [vmem:[%s4406] sm:$0xf] %v4407
  %s4409 = scalar_lea.vmem %s0, 512
  %v4410 = vld [vmem:[%s4409] sm:$0xf]
  %v4411 = vunpack.c.l.bf16 %v4410
  %v4412 = vunpack.c.h.bf16 %v4410
  %s4413 = scalar_lea.vmem %s1, 2240
  %v4414 = vpack.c.bf16 0.0, %v4411
  %4415 = vst [vmem:[%s4413] sm:$0xf] %v4414
  %s4416 = scalar_lea.vmem %s0, 1952
  %v4417 = vld [vmem:[%s4416] sm:$0xf]
  %v4418 = vunpack.c.l.bf16 %v4417
  %v4419 = vunpack.c.h.bf16 %v4417
  %s4420 = scalar_lea.vmem %s1, 800
  %v4421 = vpack.c.bf16 0.0, %v4418
  %4422 = vst [vmem:[%s4420] sm:$0xf] %v4421
  %s4423 = scalar_lea.vmem %s0, 1088
  %v4424 = vld [vmem:[%s4423] sm:$0xf]
  %v4425 = vunpack.c.l.bf16 %v4424
  %v4426 = vunpack.c.h.bf16 %v4424
  %s4427 = scalar_lea.vmem %s1, 1664
  %v4428 = vpack.c.bf16 0.0, %v4425
  %4429 = vst [vmem:[%s4427] sm:$0xf] %v4428
  %s4430 = scalar_lea.vmem %s0, 224
  %v4431 = vld [vmem:[%s4430] sm:$0xf]
  %v4432 = vunpack.c.l.bf16 %v4431
  %v4433 = vunpack.c.h.bf16 %v4431
  %s4434 = scalar_lea.vmem %s1, 2528
  %v4435 = vpack.c.bf16 0.0, %v4432
  %4436 = vst [vmem:[%s4434] sm:$0xf] %v4435
  %s4437 = scalar_lea.vmem %s0, 2540
  %v4438 = vld [vmem:[%s4437] sm:$0xf]
  %v4439 = vunpack.c.l.bf16 %v4438
  %v4440 = vunpack.c.h.bf16 %v4438
  %s4441 = scalar_lea.vmem %s1, 236
  %v4442 = vpack.c.bf16 0.0, %v4439
  %4443 = vst [vmem:[%s4441] sm:$0xf] %v4442
  %s4444 = scalar_lea.vmem %s0, 1676
  %v4445 = vld [vmem:[%s4444] sm:$0xf]
  %v4446 = vunpack.c.l.bf16 %v4445
  %v4447 = vunpack.c.h.bf16 %v4445
  %s4448 = scalar_lea.vmem %s1, 1100
  %v4449 = vpack.c.bf16 0.0, %v4446
  %4450 = vst [vmem:[%s4448] sm:$0xf] %v4449
  %s4451 = scalar_lea.vmem %s0, 812
  %v4452 = vld [vmem:[%s4451] sm:$0xf]
  %v4453 = vunpack.c.l.bf16 %v4452
  %v4454 = vunpack.c.h.bf16 %v4452
  %s4455 = scalar_lea.vmem %s1, 1964
  %v4456 = vpack.c.bf16 0.0, %v4453
  %4457 = vst [vmem:[%s4455] sm:$0xf] %v4456
  %s4458 = scalar_lea.vmem %s0, 2252
  %v4459 = vld [vmem:[%s4458] sm:$0xf]
  %v4460 = vunpack.c.l.bf16 %v4459
  %v4461 = vunpack.c.h.bf16 %v4459
  %s4462 = scalar_lea.vmem %s1, 524
  %v4463 = vpack.c.bf16 0.0, %v4460
  %4464 = vst [vmem:[%s4462] sm:$0xf] %v4463
  %s4465 = scalar_lea.vmem %s0, 1388
  %v4466 = vld [vmem:[%s4465] sm:$0xf]
  %v4467 = vunpack.c.l.bf16 %v4466
  %v4468 = vunpack.c.h.bf16 %v4466
  %s4469 = scalar_lea.vmem %s1, 1388
  %v4470 = vpack.c.bf16 0.0, %v4467
  %4471 = vst [vmem:[%s4469] sm:$0xf] %v4470
  %s4472 = scalar_lea.vmem %s0, 524
  %v4473 = vld [vmem:[%s4472] sm:$0xf]
  %v4474 = vunpack.c.l.bf16 %v4473
  %v4475 = vunpack.c.h.bf16 %v4473
  %s4476 = scalar_lea.vmem %s1, 2252
  %v4477 = vpack.c.bf16 0.0, %v4474
  %4478 = vst [vmem:[%s4476] sm:$0xf] %v4477
  %s4479 = scalar_lea.vmem %s0, 1964
  %v4480 = vld [vmem:[%s4479] sm:$0xf]
  %v4481 = vunpack.c.l.bf16 %v4480
  %v4482 = vunpack.c.h.bf16 %v4480
  %s4483 = scalar_lea.vmem %s1, 812
  %v4484 = vpack.c.bf16 0.0, %v4481
  %4485 = vst [vmem:[%s4483] sm:$0xf] %v4484
  %s4486 = scalar_lea.vmem %s0, 1100
  %v4487 = vld [vmem:[%s4486] sm:$0xf]
  %v4488 = vunpack.c.l.bf16 %v4487
  %v4489 = vunpack.c.h.bf16 %v4487
  %s4490 = scalar_lea.vmem %s1, 1676
  %v4491 = vpack.c.bf16 0.0, %v4488
  %4492 = vst [vmem:[%s4490] sm:$0xf] %v4491
  %s4493 = scalar_lea.vmem %s0, 236
  %v4494 = vld [vmem:[%s4493] sm:$0xf]
  %v4495 = vunpack.c.l.bf16 %v4494
  %v4496 = vunpack.c.h.bf16 %v4494
  %s4497 = scalar_lea.vmem %s1, 2540
  %v4498 = vpack.c.bf16 0.0, %v4495
  %4499 = vst [vmem:[%s4497] sm:$0xf] %v4498
  %s4500 = scalar_lea.vmem %s0, 2552
  %v4501 = vld [vmem:[%s4500] sm:$0xf]
  %v4502 = vunpack.c.l.bf16 %v4501
  %v4503 = vunpack.c.h.bf16 %v4501
  %s4504 = scalar_lea.vmem %s1, 248
  %v4505 = vpack.c.bf16 0.0, %v4502
  %4506 = vst [vmem:[%s4504] sm:$0xf] %v4505
  %s4507 = scalar_lea.vmem %s0, 1688
  %v4508 = vld [vmem:[%s4507] sm:$0xf]
  %v4509 = vunpack.c.l.bf16 %v4508
  %v4510 = vunpack.c.h.bf16 %v4508
  %s4511 = scalar_lea.vmem %s1, 1112
  %v4512 = vpack.c.bf16 0.0, %v4509
  %4513 = vst [vmem:[%s4511] sm:$0xf] %v4512
  %s4514 = scalar_lea.vmem %s0, 824
  %v4515 = vld [vmem:[%s4514] sm:$0xf]
  %v4516 = vunpack.c.l.bf16 %v4515
  %v4517 = vunpack.c.h.bf16 %v4515
  %s4518 = scalar_lea.vmem %s1, 1976
  %v4519 = vpack.c.bf16 0.0, %v4516
  %4520 = vst [vmem:[%s4518] sm:$0xf] %v4519
  %s4521 = scalar_lea.vmem %s0, 2264
  %v4522 = vld [vmem:[%s4521] sm:$0xf]
  %v4523 = vunpack.c.l.bf16 %v4522
  %v4524 = vunpack.c.h.bf16 %v4522
  %s4525 = scalar_lea.vmem %s1, 536
  %v4526 = vpack.c.bf16 0.0, %v4523
  %4527 = vst [vmem:[%s4525] sm:$0xf] %v4526
  %s4528 = scalar_lea.vmem %s0, 1400
  %v4529 = vld [vmem:[%s4528] sm:$0xf]
  %v4530 = vunpack.c.l.bf16 %v4529
  %v4531 = vunpack.c.h.bf16 %v4529
  %s4532 = scalar_lea.vmem %s1, 1400
  %v4533 = vpack.c.bf16 0.0, %v4530
  %4534 = vst [vmem:[%s4532] sm:$0xf] %v4533
  %s4535 = scalar_lea.vmem %s0, 536
  %v4536 = vld [vmem:[%s4535] sm:$0xf]
  %v4537 = vunpack.c.l.bf16 %v4536
  %v4538 = vunpack.c.h.bf16 %v4536
  %s4539 = scalar_lea.vmem %s1, 2264
  %v4540 = vpack.c.bf16 0.0, %v4537
  %4541 = vst [vmem:[%s4539] sm:$0xf] %v4540
  %s4542 = scalar_lea.vmem %s0, 1976
  %v4543 = vld [vmem:[%s4542] sm:$0xf]
  %v4544 = vunpack.c.l.bf16 %v4543
  %v4545 = vunpack.c.h.bf16 %v4543
  %s4546 = scalar_lea.vmem %s1, 824
  %v4547 = vpack.c.bf16 0.0, %v4544
  %4548 = vst [vmem:[%s4546] sm:$0xf] %v4547
  %s4549 = scalar_lea.vmem %s0, 1112
  %v4550 = vld [vmem:[%s4549] sm:$0xf]
  %v4551 = vunpack.c.l.bf16 %v4550
  %v4552 = vunpack.c.h.bf16 %v4550
  %s4553 = scalar_lea.vmem %s1, 1688
  %v4554 = vpack.c.bf16 0.0, %v4551
  %4555 = vst [vmem:[%s4553] sm:$0xf] %v4554
  %s4556 = scalar_lea.vmem %s0, 248
  %v4557 = vld [vmem:[%s4556] sm:$0xf]
  %v4558 = vunpack.c.l.bf16 %v4557
  %v4559 = vunpack.c.h.bf16 %v4557
  %s4560 = scalar_lea.vmem %s1, 2552
  %v4561 = vpack.c.bf16 0.0, %v4558
  %4562 = vst [vmem:[%s4560] sm:$0xf] %v4561
  %s4563 = scalar_lea.vmem %s0, 2564
  %v4564 = vld [vmem:[%s4563] sm:$0xf]
  %v4565 = vunpack.c.l.bf16 %v4564
  %v4566 = vunpack.c.h.bf16 %v4564
  %s4567 = scalar_lea.vmem %s1, 260
  %v4568 = vpack.c.bf16 0.0, %v4565
  %4569 = vst [vmem:[%s4567] sm:$0xf] %v4568
  %s4570 = scalar_lea.vmem %s0, 1700
  %v4571 = vld [vmem:[%s4570] sm:$0xf]
  %v4572 = vunpack.c.l.bf16 %v4571
  %v4573 = vunpack.c.h.bf16 %v4571
  %s4574 = scalar_lea.vmem %s1, 1124
  %v4575 = vpack.c.bf16 0.0, %v4572
  %4576 = vst [vmem:[%s4574] sm:$0xf] %v4575
  %s4577 = scalar_lea.vmem %s0, 836
  %v4578 = vld [vmem:[%s4577] sm:$0xf]
  %v4579 = vunpack.c.l.bf16 %v4578
  %v4580 = vunpack.c.h.bf16 %v4578
  %s4581 = scalar_lea.vmem %s1, 1988
  %v4582 = vpack.c.bf16 0.0, %v4579
  %4583 = vst [vmem:[%s4581] sm:$0xf] %v4582
  %s4584 = scalar_lea.vmem %s0, 2276
  %v4585 = vld [vmem:[%s4584] sm:$0xf]
  %v4586 = vunpack.c.l.bf16 %v4585
  %v4587 = vunpack.c.h.bf16 %v4585
  %s4588 = scalar_lea.vmem %s1, 548
  %v4589 = vpack.c.bf16 0.0, %v4586
  %4590 = vst [vmem:[%s4588] sm:$0xf] %v4589
  %s4591 = scalar_lea.vmem %s0, 1412
  %v4592 = vld [vmem:[%s4591] sm:$0xf]
  %v4593 = vunpack.c.l.bf16 %v4592
  %v4594 = vunpack.c.h.bf16 %v4592
  %s4595 = scalar_lea.vmem %s1, 1412
  %v4596 = vpack.c.bf16 0.0, %v4593
  %4597 = vst [vmem:[%s4595] sm:$0xf] %v4596
  %s4598 = scalar_lea.vmem %s0, 548
  %v4599 = vld [vmem:[%s4598] sm:$0xf]
  %v4600 = vunpack.c.l.bf16 %v4599
  %v4601 = vunpack.c.h.bf16 %v4599
  %s4602 = scalar_lea.vmem %s1, 2276
  %v4603 = vpack.c.bf16 0.0, %v4600
  %4604 = vst [vmem:[%s4602] sm:$0xf] %v4603
  %s4605 = scalar_lea.vmem %s0, 1988
  %v4606 = vld [vmem:[%s4605] sm:$0xf]
  %v4607 = vunpack.c.l.bf16 %v4606
  %v4608 = vunpack.c.h.bf16 %v4606
  %s4609 = scalar_lea.vmem %s1, 836
  %v4610 = vpack.c.bf16 0.0, %v4607
  %4611 = vst [vmem:[%s4609] sm:$0xf] %v4610
  %s4612 = scalar_lea.vmem %s0, 1124
  %v4613 = vld [vmem:[%s4612] sm:$0xf]
  %v4614 = vunpack.c.l.bf16 %v4613
  %v4615 = vunpack.c.h.bf16 %v4613
  %s4616 = scalar_lea.vmem %s1, 1700
  %v4617 = vpack.c.bf16 0.0, %v4614
  %4618 = vst [vmem:[%s4616] sm:$0xf] %v4617
  %s4619 = scalar_lea.vmem %s0, 260
  %v4620 = vld [vmem:[%s4619] sm:$0xf]
  %v4621 = vunpack.c.l.bf16 %v4620
  %v4622 = vunpack.c.h.bf16 %v4620
  %s4623 = scalar_lea.vmem %s1, 2564
  %v4624 = vpack.c.bf16 0.0, %v4621
  %4625 = vst [vmem:[%s4623] sm:$0xf] %v4624
  %s4626 = scalar_lea.vmem %s0, 2576
  %v4627 = vld [vmem:[%s4626] sm:$0xf]
  %v4628 = vunpack.c.l.bf16 %v4627
  %v4629 = vunpack.c.h.bf16 %v4627
  %s4630 = scalar_lea.vmem %s1, 272
  %v4631 = vpack.c.bf16 0.0, %v4628
  %4632 = vst [vmem:[%s4630] sm:$0xf] %v4631
  %s4633 = scalar_lea.vmem %s0, 1712
  %v4634 = vld [vmem:[%s4633] sm:$0xf]
  %v4635 = vunpack.c.l.bf16 %v4634
  %v4636 = vunpack.c.h.bf16 %v4634
  %s4637 = scalar_lea.vmem %s1, 1136
  %v4638 = vpack.c.bf16 0.0, %v4635
  %4639 = vst [vmem:[%s4637] sm:$0xf] %v4638
  %s4640 = scalar_lea.vmem %s0, 848
  %v4641 = vld [vmem:[%s4640] sm:$0xf]
  %v4642 = vunpack.c.l.bf16 %v4641
  %v4643 = vunpack.c.h.bf16 %v4641
  %s4644 = scalar_lea.vmem %s1, 2000
  %v4645 = vpack.c.bf16 0.0, %v4642
  %4646 = vst [vmem:[%s4644] sm:$0xf] %v4645
  %s4647 = scalar_lea.vmem %s0, 2288
  %v4648 = vld [vmem:[%s4647] sm:$0xf]
  %v4649 = vunpack.c.l.bf16 %v4648
  %v4650 = vunpack.c.h.bf16 %v4648
  %s4651 = scalar_lea.vmem %s1, 560
  %v4652 = vpack.c.bf16 0.0, %v4649
  %4653 = vst [vmem:[%s4651] sm:$0xf] %v4652
  %s4654 = scalar_lea.vmem %s0, 1424
  %v4655 = vld [vmem:[%s4654] sm:$0xf]
  %v4656 = vunpack.c.l.bf16 %v4655
  %v4657 = vunpack.c.h.bf16 %v4655
  %s4658 = scalar_lea.vmem %s1, 1424
  %v4659 = vpack.c.bf16 0.0, %v4656
  %4660 = vst [vmem:[%s4658] sm:$0xf] %v4659
  %s4661 = scalar_lea.vmem %s0, 560
  %v4662 = vld [vmem:[%s4661] sm:$0xf]
  %v4663 = vunpack.c.l.bf16 %v4662
  %v4664 = vunpack.c.h.bf16 %v4662
  %s4665 = scalar_lea.vmem %s1, 2288
  %v4666 = vpack.c.bf16 0.0, %v4663
  %4667 = vst [vmem:[%s4665] sm:$0xf] %v4666
  %s4668 = scalar_lea.vmem %s0, 2000
  %v4669 = vld [vmem:[%s4668] sm:$0xf]
  %v4670 = vunpack.c.l.bf16 %v4669
  %v4671 = vunpack.c.h.bf16 %v4669
  %s4672 = scalar_lea.vmem %s1, 848
  %v4673 = vpack.c.bf16 0.0, %v4670
  %4674 = vst [vmem:[%s4672] sm:$0xf] %v4673
  %s4675 = scalar_lea.vmem %s0, 1136
  %v4676 = vld [vmem:[%s4675] sm:$0xf]
  %v4677 = vunpack.c.l.bf16 %v4676
  %v4678 = vunpack.c.h.bf16 %v4676
  %s4679 = scalar_lea.vmem %s1, 1712
  %v4680 = vpack.c.bf16 0.0, %v4677
  %4681 = vst [vmem:[%s4679] sm:$0xf] %v4680
  %s4682 = scalar_lea.vmem %s0, 272
  %v4683 = vld [vmem:[%s4682] sm:$0xf]
  %v4684 = vunpack.c.l.bf16 %v4683
  %v4685 = vunpack.c.h.bf16 %v4683
  %s4686 = scalar_lea.vmem %s1, 2576
  %v4687 = vpack.c.bf16 0.0, %v4684
  %4688 = vst [vmem:[%s4686] sm:$0xf] %v4687
  %s4689 = scalar_lea.vmem %s0, 2588
  %v4690 = vld [vmem:[%s4689] sm:$0xf]
  %v4691 = vunpack.c.l.bf16 %v4690
  %v4692 = vunpack.c.h.bf16 %v4690
  %s4693 = scalar_lea.vmem %s1, 284
  %v4694 = vpack.c.bf16 0.0, %v4691
  %4695 = vst [vmem:[%s4693] sm:$0xf] %v4694
  %s4696 = scalar_lea.vmem %s0, 1724
  %v4697 = vld [vmem:[%s4696] sm:$0xf]
  %v4698 = vunpack.c.l.bf16 %v4697
  %v4699 = vunpack.c.h.bf16 %v4697
  %s4700 = scalar_lea.vmem %s1, 1148
  %v4701 = vpack.c.bf16 0.0, %v4698
  %4702 = vst [vmem:[%s4700] sm:$0xf] %v4701
  %s4703 = scalar_lea.vmem %s0, 860
  %v4704 = vld [vmem:[%s4703] sm:$0xf]
  %v4705 = vunpack.c.l.bf16 %v4704
  %v4706 = vunpack.c.h.bf16 %v4704
  %s4707 = scalar_lea.vmem %s1, 2012
  %v4708 = vpack.c.bf16 0.0, %v4705
  %4709 = vst [vmem:[%s4707] sm:$0xf] %v4708
  %s4710 = scalar_lea.vmem %s0, 2300
  %v4711 = vld [vmem:[%s4710] sm:$0xf]
  %v4712 = vunpack.c.l.bf16 %v4711
  %v4713 = vunpack.c.h.bf16 %v4711
  %s4714 = scalar_lea.vmem %s1, 572
  %v4715 = vpack.c.bf16 0.0, %v4712
  %4716 = vst [vmem:[%s4714] sm:$0xf] %v4715
  %s4717 = scalar_lea.vmem %s0, 1436
  %v4718 = vld [vmem:[%s4717] sm:$0xf]
  %v4719 = vunpack.c.l.bf16 %v4718
  %v4720 = vunpack.c.h.bf16 %v4718
  %s4721 = scalar_lea.vmem %s1, 1436
  %v4722 = vpack.c.bf16 0.0, %v4719
  %4723 = vst [vmem:[%s4721] sm:$0xf] %v4722
  %s4724 = scalar_lea.vmem %s0, 572
  %v4725 = vld [vmem:[%s4724] sm:$0xf]
  %v4726 = vunpack.c.l.bf16 %v4725
  %v4727 = vunpack.c.h.bf16 %v4725
  %s4728 = scalar_lea.vmem %s1, 2300
  %v4729 = vpack.c.bf16 0.0, %v4726
  %4730 = vst [vmem:[%s4728] sm:$0xf] %v4729
  %s4731 = scalar_lea.vmem %s0, 2012
  %v4732 = vld [vmem:[%s4731] sm:$0xf]
  %v4733 = vunpack.c.l.bf16 %v4732
  %v4734 = vunpack.c.h.bf16 %v4732
  %s4735 = scalar_lea.vmem %s1, 860
  %v4736 = vpack.c.bf16 0.0, %v4733
  %4737 = vst [vmem:[%s4735] sm:$0xf] %v4736
  %s4738 = scalar_lea.vmem %s0, 1148
  %v4739 = vld [vmem:[%s4738] sm:$0xf]
  %v4740 = vunpack.c.l.bf16 %v4739
  %v4741 = vunpack.c.h.bf16 %v4739
  %s4742 = scalar_lea.vmem %s1, 1724
  %v4743 = vpack.c.bf16 0.0, %v4740
  %4744 = vst [vmem:[%s4742] sm:$0xf] %v4743
  %s4745 = scalar_lea.vmem %s0, 284
  %v4746 = vld [vmem:[%s4745] sm:$0xf]
  %v4747 = vunpack.c.l.bf16 %v4746
  %v4748 = vunpack.c.h.bf16 %v4746
  %s4749 = scalar_lea.vmem %s1, 2588
  %v4750 = vpack.c.bf16 0.0, %v4747
  %4751 = vst [vmem:[%s4749] sm:$0xf] %v4750

// kernel: reverse.3
$region0: #{reverse.3}
  #allocation0 [shape = 's32[1]{0}', space=sflag, size = 0x4, scoped, tag = 'scoped memory for reverse.3']
  %s0 = inlined_call_operand.vmem [shape: bf16[3,3,48,128], index: 0, kind: input, shape index: {}]
  %s1 = inlined_call_operand.vmem [shape: bf16[3,3,48,128], index: 1, kind: output, shape index: {}]
  %s2 = scalar_lea.vmem %s0, 192
  %v3 = vld [vmem:[%s2] sm:$0xf]
  %v4 = vunpack.c.l.bf16 %v3
  %v5 = vunpack.c.h.bf16 %v3
  %v6 = vpack.c.bf16 0.0, %v4
  %7 = vst [vmem:[%s1] sm:$0xf] %v6
  %s8 = scalar_lea.vmem %s0, 120
  %v9 = vld [vmem:[%s8] sm:$0xf]
  %v10 = vunpack.c.l.bf16 %v9
  %v11 = vunpack.c.h.bf16 %v9
  %s12 = scalar_lea.vmem %s1, 72
  %v13 = vpack.c.bf16 0.0, %v10
  %14 = vst [vmem:[%s12] sm:$0xf] %v13
  %s15 = scalar_lea.vmem %s0, 48
  %v16 = vld [vmem:[%s15] sm:$0xf]
  %v17 = vunpack.c.l.bf16 %v16
  %v18 = vunpack.c.h.bf16 %v16
  %s19 = scalar_lea.vmem %s1, 144
  %v20 = vpack.c.bf16 0.0, %v17
  %21 = vst [vmem:[%s19] sm:$0xf] %v20
  %s22 = scalar_lea.vmem %s0, 168
  %v23 = vld [vmem:[%s22] sm:$0xf]
  %v24 = vunpack.c.l.bf16 %v23
  %v25 = vunpack.c.h.bf16 %v23
  %s26 = scalar_lea.vmem %s1, 24
  %v27 = vpack.c.bf16 0.0, %v24
  %28 = vst [vmem:[%s26] sm:$0xf] %v27
  %s29 = scalar_lea.vmem %s0, 96
  %v30 = vld [vmem:[%s29] sm:$0xf]
  %v31 = vunpack.c.l.bf16 %v30
  %v32 = vunpack.c.h.bf16 %v30
  %s33 = scalar_lea.vmem %s1, 96
  %v34 = vpack.c.bf16 0.0, %v31
  %35 = vst [vmem:[%s33] sm:$0xf] %v34
  %s36 = scalar_lea.vmem %s0, 24
  %v37 = vld [vmem:[%s36] sm:$0xf]
  %v38 = vunpack.c.l.bf16 %v37
  %v39 = vunpack.c.h.bf16 %v37
  %s40 = scalar_lea.vmem %s1, 168
  %v41 = vpack.c.bf16 0.0, %v38
  %42 = vst [vmem:[%s40] sm:$0xf] %v41
  %s43 = scalar_lea.vmem %s0, 144
  %v44 = vld [vmem:[%s43] sm:$0xf]
  %v45 = vunpack.c.l.bf16 %v44
  %v46 = vunpack.c.h.bf16 %v44
  %s47 = scalar_lea.vmem %s1, 48
  %v48 = vpack.c.bf16 0.0, %v45
  %49 = vst [vmem:[%s47] sm:$0xf] %v48
  %s50 = scalar_lea.vmem %s0, 72
  %v51 = vld [vmem:[%s50] sm:$0xf]
  %v52 = vunpack.c.l.bf16 %v51
  %v53 = vunpack.c.h.bf16 %v51
  %s54 = scalar_lea.vmem %s1, 120
  %v55 = vpack.c.bf16 0.0, %v52
  %56 = vst [vmem:[%s54] sm:$0xf] %v55
  %v57 = vld [vmem:[%s0] sm:$0xf]
  %v58 = vunpack.c.l.bf16 %v57
  %v59 = vunpack.c.h.bf16 %v57
  %s60 = scalar_lea.vmem %s1, 192
  %v61 = vpack.c.bf16 0.0, %v58
  %62 = vst [vmem:[%s60] sm:$0xf] %v61
  %s63 = scalar_lea.vmem %s0, 196
  %v64 = vld [vmem:[%s63] sm:$0xf]
  %v65 = vunpack.c.l.bf16 %v64
  %v66 = vunpack.c.h.bf16 %v64
  %s67 = scalar_lea.vmem %s1, 4
  %v68 = vpack.c.bf16 0.0, %v65
  %69 = vst [vmem:[%s67] sm:$0xf] %v68
  %s70 = scalar_lea.vmem %s0, 124
  %v71 = vld [vmem:[%s70] sm:$0xf]
  %v72 = vunpack.c.l.bf16 %v71
  %v73 = vunpack.c.h.bf16 %v71
  %s74 = scalar_lea.vmem %s1, 76
  %v75 = vpack.c.bf16 0.0, %v72
  %76 = vst [vmem:[%s74] sm:$0xf] %v75
  %s77 = scalar_lea.vmem %s0, 52
  %v78 = vld [vmem:[%s77] sm:$0xf]
  %v79 = vunpack.c.l.bf16 %v78
  %v80 = vunpack.c.h.bf16 %v78
  %s81 = scalar_lea.vmem %s1, 148
  %v82 = vpack.c.bf16 0.0, %v79
  %83 = vst [vmem:[%s81] sm:$0xf] %v82
  %s84 = scalar_lea.vmem %s0, 172
  %v85 = vld [vmem:[%s84] sm:$0xf]
  %v86 = vunpack.c.l.bf16 %v85
  %v87 = vunpack.c.h.bf16 %v85
  %s88 = scalar_lea.vmem %s1, 28
  %v89 = vpack.c.bf16 0.0, %v86
  %90 = vst [vmem:[%s88] sm:$0xf] %v89
  %s91 = scalar_lea.vmem %s0, 100
  %v92 = vld [vmem:[%s91] sm:$0xf]
  %v93 = vunpack.c.l.bf16 %v92
  %v94 = vunpack.c.h.bf16 %v92
  %s95 = scalar_lea.vmem %s1, 100
  %v96 = vpack.c.bf16 0.0, %v93
  %97 = vst [vmem:[%s95] sm:$0xf] %v96
  %s98 = scalar_lea.vmem %s0, 28
  %v99 = vld [vmem:[%s98] sm:$0xf]
  %v100 = vunpack.c.l.bf16 %v99
  %v101 = vunpack.c.h.bf16 %v99
  %s102 = scalar_lea.vmem %s1, 172
  %v103 = vpack.c.bf16 0.0, %v100
  %104 = vst [vmem:[%s102] sm:$0xf] %v103
  %s105 = scalar_lea.vmem %s0, 148
  %v106 = vld [vmem:[%s105] sm:$0xf]
  %v107 = vunpack.c.l.bf16 %v106
  %v108 = vunpack.c.h.bf16 %v106
  %s109 = scalar_lea.vmem %s1, 52
  %v110 = vpack.c.bf16 0.0, %v107
  %111 = vst [vmem:[%s109] sm:$0xf] %v110
  %s112 = scalar_lea.vmem %s0, 76
  %v113 = vld [vmem:[%s112] sm:$0xf]
  %v114 = vunpack.c.l.bf16 %v113
  %v115 = vunpack.c.h.bf16 %v113
  %s116 = scalar_lea.vmem %s1, 124
  %v117 = vpack.c.bf16 0.0, %v114
  %118 = vst [vmem:[%s116] sm:$0xf] %v117
  %s119 = scalar_lea.vmem %s0, 4
  %v120 = vld [vmem:[%s119] sm:$0xf]
  %v121 = vunpack.c.l.bf16 %v120
  %v122 = vunpack.c.h.bf16 %v120
  %s123 = scalar_lea.vmem %s1, 196
  %v124 = vpack.c.bf16 0.0, %v121
  %125 = vst [vmem:[%s123] sm:$0xf] %v124
  %s126 = scalar_lea.vmem %s0, 200
  %v127 = vld [vmem:[%s126] sm:$0xf]
  %v128 = vunpack.c.l.bf16 %v127
  %v129 = vunpack.c.h.bf16 %v127
  %s130 = scalar_lea.vmem %s1, 8
  %v131 = vpack.c.bf16 0.0, %v128
  %132 = vst [vmem:[%s130] sm:$0xf] %v131
  %s133 = scalar_lea.vmem %s0, 128
  %v134 = vld [vmem:[%s133] sm:$0xf]
  %v135 = vunpack.c.l.bf16 %v134
  %v136 = vunpack.c.h.bf16 %v134
  %s137 = scalar_lea.vmem %s1, 80
  %v138 = vpack.c.bf16 0.0, %v135
  %139 = vst [vmem:[%s137] sm:$0xf] %v138
  %s140 = scalar_lea.vmem %s0, 56
  %v141 = vld [vmem:[%s140] sm:$0xf]
  %v142 = vunpack.c.l.bf16 %v141
  %v143 = vunpack.c.h.bf16 %v141
  %s144 = scalar_lea.vmem %s1, 152
  %v145 = vpack.c.bf16 0.0, %v142
  %146 = vst [vmem:[%s144] sm:$0xf] %v145
  %s147 = scalar_lea.vmem %s0, 176
  %v148 = vld [vmem:[%s147] sm:$0xf]
  %v149 = vunpack.c.l.bf16 %v148
  %v150 = vunpack.c.h.bf16 %v148
  %s151 = scalar_lea.vmem %s1, 32
  %v152 = vpack.c.bf16 0.0, %v149
  %153 = vst [vmem:[%s151] sm:$0xf] %v152
  %s154 = scalar_lea.vmem %s0, 104
  %v155 = vld [vmem:[%s154] sm:$0xf]
  %v156 = vunpack.c.l.bf16 %v155
  %v157 = vunpack.c.h.bf16 %v155
  %s158 = scalar_lea.vmem %s1, 104
  %v159 = vpack.c.bf16 0.0, %v156
  %160 = vst [vmem:[%s158] sm:$0xf] %v159
  %s161 = scalar_lea.vmem %s0, 32
  %v162 = vld [vmem:[%s161] sm:$0xf]
  %v163 = vunpack.c.l.bf16 %v162
  %v164 = vunpack.c.h.bf16 %v162
  %s165 = scalar_lea.vmem %s1, 176
  %v166 = vpack.c.bf16 0.0, %v163
  %167 = vst [vmem:[%s165] sm:$0xf] %v166
  %s168 = scalar_lea.vmem %s0, 152
  %v169 = vld [vmem:[%s168] sm:$0xf]
  %v170 = vunpack.c.l.bf16 %v169
  %v171 = vunpack.c.h.bf16 %v169
  %s172 = scalar_lea.vmem %s1, 56
  %v173 = vpack.c.bf16 0.0, %v170
  %174 = vst [vmem:[%s172] sm:$0xf] %v173
  %s175 = scalar_lea.vmem %s0, 80
  %v176 = vld [vmem:[%s175] sm:$0xf]
  %v177 = vunpack.c.l.bf16 %v176
  %v178 = vunpack.c.h.bf16 %v176
  %s179 = scalar_lea.vmem %s1, 128
  %v180 = vpack.c.bf16 0.0, %v177
  %181 = vst [vmem:[%s179] sm:$0xf] %v180
  %s182 = scalar_lea.vmem %s0, 8
  %v183 = vld [vmem:[%s182] sm:$0xf]
  %v184 = vunpack.c.l.bf16 %v183
  %v185 = vunpack.c.h.bf16 %v183
  %s186 = scalar_lea.vmem %s1, 200
  %v187 = vpack.c.bf16 0.0, %v184
  %188 = vst [vmem:[%s186] sm:$0xf] %v187
  %s189 = scalar_lea.vmem %s0, 204
  %v190 = vld [vmem:[%s189] sm:$0xf]
  %v191 = vunpack.c.l.bf16 %v190
  %v192 = vunpack.c.h.bf16 %v190
  %s193 = scalar_lea.vmem %s1, 12
  %v194 = vpack.c.bf16 0.0, %v191
  %195 = vst [vmem:[%s193] sm:$0xf] %v194
  %s196 = scalar_lea.vmem %s0, 132
  %v197 = vld [vmem:[%s196] sm:$0xf]
  %v198 = vunpack.c.l.bf16 %v197
  %v199 = vunpack.c.h.bf16 %v197
  %s200 = scalar_lea.vmem %s1, 84
  %v201 = vpack.c.bf16 0.0, %v198
  %202 = vst [vmem:[%s200] sm:$0xf] %v201
  %s203 = scalar_lea.vmem %s0, 60
  %v204 = vld [vmem:[%s203] sm:$0xf]
  %v205 = vunpack.c.l.bf16 %v204
  %v206 = vunpack.c.h.bf16 %v204
  %s207 = scalar_lea.vmem %s1, 156
  %v208 = vpack.c.bf16 0.0, %v205
  %209 = vst [vmem:[%s207] sm:$0xf] %v208
  %s210 = scalar_lea.vmem %s0, 180
  %v211 = vld [vmem:[%s210] sm:$0xf]
  %v212 = vunpack.c.l.bf16 %v211
  %v213 = vunpack.c.h.bf16 %v211
  %s214 = scalar_lea.vmem %s1, 36
  %v215 = vpack.c.bf16 0.0, %v212
  %216 = vst [vmem:[%s214] sm:$0xf] %v215
  %s217 = scalar_lea.vmem %s0, 108
  %v218 = vld [vmem:[%s217] sm:$0xf]
  %v219 = vunpack.c.l.bf16 %v218
  %v220 = vunpack.c.h.bf16 %v218
  %s221 = scalar_lea.vmem %s1, 108
  %v222 = vpack.c.bf16 0.0, %v219
  %223 = vst [vmem:[%s221] sm:$0xf] %v222
  %s224 = scalar_lea.vmem %s0, 36
  %v225 = vld [vmem:[%s224] sm:$0xf]
  %v226 = vunpack.c.l.bf16 %v225
  %v227 = vunpack.c.h.bf16 %v225
  %s228 = scalar_lea.vmem %s1, 180
  %v229 = vpack.c.bf16 0.0, %v226
  %230 = vst [vmem:[%s228] sm:$0xf] %v229
  %s231 = scalar_lea.vmem %s0, 156
  %v232 = vld [vmem:[%s231] sm:$0xf]
  %v233 = vunpack.c.l.bf16 %v232
  %v234 = vunpack.c.h.bf16 %v232
  %s235 = scalar_lea.vmem %s1, 60
  %v236 = vpack.c.bf16 0.0, %v233
  %237 = vst [vmem:[%s235] sm:$0xf] %v236
  %s238 = scalar_lea.vmem %s0, 84
  %v239 = vld [vmem:[%s238] sm:$0xf]
  %v240 = vunpack.c.l.bf16 %v239
  %v241 = vunpack.c.h.bf16 %v239
  %s242 = scalar_lea.vmem %s1, 132
  %v243 = vpack.c.bf16 0.0, %v240
  %244 = vst [vmem:[%s242] sm:$0xf] %v243
  %s245 = scalar_lea.vmem %s0, 12
  %v246 = vld [vmem:[%s245] sm:$0xf]
  %v247 = vunpack.c.l.bf16 %v246
  %v248 = vunpack.c.h.bf16 %v246
  %s249 = scalar_lea.vmem %s1, 204
  %v250 = vpack.c.bf16 0.0, %v247
  %251 = vst [vmem:[%s249] sm:$0xf] %v250
  %s252 = scalar_lea.vmem %s0, 208
  %v253 = vld [vmem:[%s252] sm:$0xf]
  %v254 = vunpack.c.l.bf16 %v253
  %v255 = vunpack.c.h.bf16 %v253
  %s256 = scalar_lea.vmem %s1, 16
  %v257 = vpack.c.bf16 0.0, %v254
  %258 = vst [vmem:[%s256] sm:$0xf] %v257
  %s259 = scalar_lea.vmem %s0, 136
  %v260 = vld [vmem:[%s259] sm:$0xf]
  %v261 = vunpack.c.l.bf16 %v260
  %v262 = vunpack.c.h.bf16 %v260
  %s263 = scalar_lea.vmem %s1, 88
  %v264 = vpack.c.bf16 0.0, %v261
  %265 = vst [vmem:[%s263] sm:$0xf] %v264
  %s266 = scalar_lea.vmem %s0, 64
  %v267 = vld [vmem:[%s266] sm:$0xf]
  %v268 = vunpack.c.l.bf16 %v267
  %v269 = vunpack.c.h.bf16 %v267
  %s270 = scalar_lea.vmem %s1, 160
  %v271 = vpack.c.bf16 0.0, %v268
  %272 = vst [vmem:[%s270] sm:$0xf] %v271
  %s273 = scalar_lea.vmem %s0, 184
  %v274 = vld [vmem:[%s273] sm:$0xf]
  %v275 = vunpack.c.l.bf16 %v274
  %v276 = vunpack.c.h.bf16 %v274
  %s277 = scalar_lea.vmem %s1, 40
  %v278 = vpack.c.bf16 0.0, %v275
  %279 = vst [vmem:[%s277] sm:$0xf] %v278
  %s280 = scalar_lea.vmem %s0, 112
  %v281 = vld [vmem:[%s280] sm:$0xf]
  %v282 = vunpack.c.l.bf16 %v281
  %v283 = vunpack.c.h.bf16 %v281
  %s284 = scalar_lea.vmem %s1, 112
  %v285 = vpack.c.bf16 0.0, %v282
  %286 = vst [vmem:[%s284] sm:$0xf] %v285
  %s287 = scalar_lea.vmem %s0, 40
  %v288 = vld [vmem:[%s287] sm:$0xf]
  %v289 = vunpack.c.l.bf16 %v288
  %v290 = vunpack.c.h.bf16 %v288
  %s291 = scalar_lea.vmem %s1, 184
  %v292 = vpack.c.bf16 0.0, %v289
  %293 = vst [vmem:[%s291] sm:$0xf] %v292
  %s294 = scalar_lea.vmem %s0, 160
  %v295 = vld [vmem:[%s294] sm:$0xf]
  %v296 = vunpack.c.l.bf16 %v295
  %v297 = vunpack.c.h.bf16 %v295
  %s298 = scalar_lea.vmem %s1, 64
  %v299 = vpack.c.bf16 0.0, %v296
  %300 = vst [vmem:[%s298] sm:$0xf] %v299
  %s301 = scalar_lea.vmem %s0, 88
  %v302 = vld [vmem:[%s301] sm:$0xf]
  %v303 = vunpack.c.l.bf16 %v302
  %v304 = vunpack.c.h.bf16 %v302
  %s305 = scalar_lea.vmem %s1, 136
  %v306 = vpack.c.bf16 0.0, %v303
  %307 = vst [vmem:[%s305] sm:$0xf] %v306
  %s308 = scalar_lea.vmem %s0, 16
  %v309 = vld [vmem:[%s308] sm:$0xf]
  %v310 = vunpack.c.l.bf16 %v309
  %v311 = vunpack.c.h.bf16 %v309
  %s312 = scalar_lea.vmem %s1, 208
  %v313 = vpack.c.bf16 0.0, %v310
  %314 = vst [vmem:[%s312] sm:$0xf] %v313
  %s315 = scalar_lea.vmem %s0, 212
  %v316 = vld [vmem:[%s315] sm:$0xf]
  %v317 = vunpack.c.l.bf16 %v316
  %v318 = vunpack.c.h.bf16 %v316
  %s319 = scalar_lea.vmem %s1, 20
  %v320 = vpack.c.bf16 0.0, %v317
  %321 = vst [vmem:[%s319] sm:$0xf] %v320
  %s322 = scalar_lea.vmem %s0, 140
  %v323 = vld [vmem:[%s322] sm:$0xf]
  %v324 = vunpack.c.l.bf16 %v323
  %v325 = vunpack.c.h.bf16 %v323
  %s326 = scalar_lea.vmem %s1, 92
  %v327 = vpack.c.bf16 0.0, %v324
  %328 = vst [vmem:[%s326] sm:$0xf] %v327
  %s329 = scalar_lea.vmem %s0, 68
  %v330 = vld [vmem:[%s329] sm:$0xf]
  %v331 = vunpack.c.l.bf16 %v330
  %v332 = vunpack.c.h.bf16 %v330
  %s333 = scalar_lea.vmem %s1, 164
  %v334 = vpack.c.bf16 0.0, %v331
  %335 = vst [vmem:[%s333] sm:$0xf] %v334
  %s336 = scalar_lea.vmem %s0, 188
  %v337 = vld [vmem:[%s336] sm:$0xf]
  %v338 = vunpack.c.l.bf16 %v337
  %v339 = vunpack.c.h.bf16 %v337
  %s340 = scalar_lea.vmem %s1, 44
  %v341 = vpack.c.bf16 0.0, %v338
  %342 = vst [vmem:[%s340] sm:$0xf] %v341
  %s343 = scalar_lea.vmem %s0, 116
  %v344 = vld [vmem:[%s343] sm:$0xf]
  %v345 = vunpack.c.l.bf16 %v344
  %v346 = vunpack.c.h.bf16 %v344
  %s347 = scalar_lea.vmem %s1, 116
  %v348 = vpack.c.bf16 0.0, %v345
  %349 = vst [vmem:[%s347] sm:$0xf] %v348
  %s350 = scalar_lea.vmem %s0, 44
  %v351 = vld [vmem:[%s350] sm:$0xf]
  %v352 = vunpack.c.l.bf16 %v351
  %v353 = vunpack.c.h.bf16 %v351
  %s354 = scalar_lea.vmem %s1, 188
  %v355 = vpack.c.bf16 0.0, %v352
  %356 = vst [vmem:[%s354] sm:$0xf] %v355
  %s357 = scalar_lea.vmem %s0, 164
  %v358 = vld [vmem:[%s357] sm:$0xf]
  %v359 = vunpack.c.l.bf16 %v358
  %v360 = vunpack.c.h.bf16 %v358
  %s361 = scalar_lea.vmem %s1, 68
  %v362 = vpack.c.bf16 0.0, %v359
  %363 = vst [vmem:[%s361] sm:$0xf] %v362
  %s364 = scalar_lea.vmem %s0, 92
  %v365 = vld [vmem:[%s364] sm:$0xf]
  %v366 = vunpack.c.l.bf16 %v365
  %v367 = vunpack.c.h.bf16 %v365
  %s368 = scalar_lea.vmem %s1, 140
  %v369 = vpack.c.bf16 0.0, %v366
  %370 = vst [vmem:[%s368] sm:$0xf] %v369
  %s371 = scalar_lea.vmem %s0, 20
  %v372 = vld [vmem:[%s371] sm:$0xf]
  %v373 = vunpack.c.l.bf16 %v372
  %v374 = vunpack.c.h.bf16 %v372
  %s375 = scalar_lea.vmem %s1, 212
  %v376 = vpack.c.bf16 0.0, %v373
  %377 = vst [vmem:[%s375] sm:$0xf] %v376

// kernel: model_forward.1
$region0: #{model_forward.1}
  #allocation0 [shape = 'u32[]', space=smem, size = 0x4, offset = 0x4, fixed_abs, tag = 'smem constant byte address 0x4 - core index']
  #allocation1 [shape = 'u32[144,128]{1,0:T(1,128)}', space=vmem, size = 0x12000, scoped, tag = 'internal scratch']
  %s0 = inlined_call_operand.vmem [shape: bf16[2,4,1024], index: 0, kind: input, shape index: {}]
  %s1 = inlined_call_operand.vmem [shape: bf16[1024,128], index: 1, kind: input, shape index: {}]
  %s2 = inlined_call_operand.vmem [shape: f32[1,128], index: 2, kind: input, shape index: {}]
  %s3 = inlined_call_operand.hbm [shape: f32[2,128], index: 3, kind: output, shape index: {}]
  %s4 = sld [smem:[#allocation0]]
  $region22: #{model_forward.1} parent=0
    _
  %s6 = ssub.s32 1, %s4
  %s7 = scalar_select 0, %s6, %s4
  $region1: #{model_forward.1} parent=0
    #allocation2 [shape = 'u8[1024]{0}', space=vmem, size = 0x400, scoped, tag = 'output window, operand 0, single buffered']
    #allocation3 [shape = 's32[1]{0}', space=sflag, size = 0x4, scoped, tag = 'scoped memory for model_forward.1']
    %8 = vsyncpa [#allocation3], 0
    // Predicated region
    $region2: #{model_forward.1} parent=1 // pred_check
      _
    $region3: #{model_forward.1} parent=1 // pred_check_branch
      %10 = sbr.rel (0) target = $region5
    $region4: #{model_forward.1} parent=1 // pred_region
      _
    $region5: #{model_forward.1} parent=1 // pred_fallthru
      _
    // Predicated region
    $region6: #{model_forward.1} parent=1 // pred_check
      _
    $region7: #{model_forward.1} parent=1 // pred_check_branch
      %12 = sbr.rel (0) target = $region9
    $region8: #{model_forward.1} parent=1 // pred_region
      _
    $region9: #{model_forward.1} parent=1 // pred_fallthru
      _
    // Predicated region
    $region10: #{model_forward.1} parent=1 // pred_check
      _
    $region11: #{model_forward.1} parent=1 // pred_check_branch
      %14 = sbr.rel (0) target = $region13
    $region12: #{model_forward.1} parent=1 // pred_region
      _
    $region13: #{model_forward.1} parent=1 // pred_fallthru
      _
    %v16 = vld [vmem:[%s0] sm:$0xff]
    %v17 = vld [vmem:[%s0 + $0x8] sm:$0xff]
    %v18 = vld [vmem:[%s0 + $0x10] sm:$0xff]
    %v19 = vld [vmem:[%s0 + $0x18] sm:$0xff]
    %v20 = vunpack.c.l.bf16 %v16
    %v21 = vunpack.c.h.bf16 %v16
    %v22 = vunpack.c.l.bf16 %v17
    %v23 = vunpack.c.h.bf16 %v17
    %v24 = vunpack.c.l.bf16 %v18
    %v25 = vunpack.c.h.bf16 %v18
    %v26 = vunpack.c.l.bf16 %v19
    %v27 = vunpack.c.h.bf16 %v19
    %v36 = vcombine.high %v20, %v20
    %v37 = vcombine.high %v21, %v21
    %v38 = vcombine.high %v22, %v22
    %v39 = vcombine.high %v23, %v23
    %v40 = vcombine.high %v24, %v24
    %v41 = vcombine.high %v25, %v25
    %v42 = vcombine.high %v26, %v26
    %v43 = vcombine.high %v27, %v27
    %vm52 = vcmask 1043456
    %v53 = vsel %vm52, %v20, 0.0
    %v54 = vrot.slane %v53, 4
    %v55 = vadd.f32 %v53, %v54
    %v56 = vrot.slane %v55, 2
    %v57 = vadd.f32 %v55, %v56
    %v58 = vrot.slane %v57, 1
    %v59 = vadd.f32 %v57, %v58
    %v60 = vsel %vm52, %v36, 0.0
    %v61 = vrot.slane %v60, 4
    %v62 = vadd.f32 %v60, %v61
    %v63 = vrot.slane %v62, 2
    %v64 = vadd.f32 %v62, %v63
    %v65 = vrot.slane %v64, 1
    %v66 = vadd.f32 %v64, %v65
    %v67 = vsel %vm52, %v21, 0.0
    %v68 = vrot.slane %v67, 4
    %v69 = vadd.f32 %v67, %v68
    %v70 = vrot.slane %v69, 2
    %v71 = vadd.f32 %v69, %v70
    %v72 = vrot.slane %v71, 1
    %v73 = vadd.f32 %v71, %v72
    %v74 = vsel %vm52, %v37, 0.0
    %v75 = vrot.slane %v74, 4
    %v76 = vadd.f32 %v74, %v75
    %v77 = vrot.slane %v76, 2
    %v78 = vadd.f32 %v76, %v77
    %v79 = vrot.slane %v78, 1
    %v80 = vadd.f32 %v78, %v79
    %v81 = vsel %vm52, %v22, 0.0
    %v82 = vrot.slane %v81, 4
    %v83 = vadd.f32 %v81, %v82
    %v84 = vrot.slane %v83, 2
    %v85 = vadd.f32 %v83, %v84
    %v86 = vrot.slane %v85, 1
    %v87 = vadd.f32 %v85, %v86
    %v88 = vsel %vm52, %v38, 0.0
    %v89 = vrot.slane %v88, 4
    %v90 = vadd.f32 %v88, %v89
    %v91 = vrot.slane %v90, 2
    %v92 = vadd.f32 %v90, %v91
    %v93 = vrot.slane %v92, 1
    %v94 = vadd.f32 %v92, %v93
    %v95 = vsel %vm52, %v23, 0.0
    %v96 = vrot.slane %v95, 4
    %v97 = vadd.f32 %v95, %v96
    %v98 = vrot.slane %v97, 2
    %v99 = vadd.f32 %v97, %v98
    %v100 = vrot.slane %v99, 1
    %v101 = vadd.f32 %v99, %v100
    %v102 = vsel %vm52, %v39, 0.0
    %v103 = vrot.slane %v102, 4
    %v104 = vadd.f32 %v102, %v103
    %v105 = vrot.slane %v104, 2
    %v106 = vadd.f32 %v104, %v105
    %v107 = vrot.slane %v106, 1
    %v108 = vadd.f32 %v106, %v107
    %v109 = vsel %vm52, %v24, 0.0
    %v110 = vrot.slane %v109, 4
    %v111 = vadd.f32 %v109, %v110
    %v112 = vrot.slane %v111, 2
    %v113 = vadd.f32 %v111, %v112
    %v114 = vrot.slane %v113, 1
    %v115 = vadd.f32 %v113, %v114
    %v116 = vsel %vm52, %v40, 0.0
    %v117 = vrot.slane %v116, 4
    %v118 = vadd.f32 %v116, %v117
    %v119 = vrot.slane %v118, 2
    %v120 = vadd.f32 %v118, %v119
    %v121 = vrot.slane %v120, 1
    %v122 = vadd.f32 %v120, %v121
    %v123 = vsel %vm52, %v25, 0.0
    %v124 = vrot.slane %v123, 4
    %v125 = vadd.f32 %v123, %v124
    %v126 = vrot.slane %v125, 2
    %v127 = vadd.f32 %v125, %v126
    %v128 = vrot.slane %v127, 1
    %v129 = vadd.f32 %v127, %v128
    %v130 = vsel %vm52, %v41, 0.0
    %v131 = vrot.slane %v130, 4
    %v132 = vadd.f32 %v130, %v131
    %v133 = vrot.slane %v132, 2
    %v134 = vadd.f32 %v132, %v133
    %v135 = vrot.slane %v134, 1
    %v136 = vadd.f32 %v134, %v135
    %v137 = vsel %vm52, %v26, 0.0
    %v138 = vrot.slane %v137, 4
    %v139 = vadd.f32 %v137, %v138
    %v140 = vrot.slane %v139, 2
    %v141 = vadd.f32 %v139, %v140
    %v142 = vrot.slane %v141, 1
    %v143 = vadd.f32 %v141, %v142
    %v144 = vsel %vm52, %v42, 0.0
    %v145 = vrot.slane %v144, 4
    %v146 = vadd.f32 %v144, %v145
    %v147 = vrot.slane %v146, 2
    %v148 = vadd.f32 %v146, %v147
    %v149 = vrot.slane %v148, 1
    %v150 = vadd.f32 %v148, %v149
    %v151 = vsel %vm52, %v27, 0.0
    %v152 = vrot.slane %v151, 4
    %v153 = vadd.f32 %v151, %v152
    %v154 = vrot.slane %v153, 2
    %v155 = vadd.f32 %v153, %v154
    %v156 = vrot.slane %v155, 1
    %v157 = vadd.f32 %v155, %v156
    %v158 = vsel %vm52, %v43, 0.0
    %v159 = vrot.slane %v158, 4
    %v160 = vadd.f32 %v158, %v159
    %v161 = vrot.slane %v160, 2
    %v162 = vadd.f32 %v160, %v161
    %v163 = vrot.slane %v162, 1
    %v164 = vadd.f32 %v162, %v163
    %v165 = vrcp.pop 4.0
    %v166 = vmul.f32 %v59, %v165
    %v167 = vmul.f32 %v66, %v165
    %v168 = vmul.f32 %v73, %v165
    %v169 = vmul.f32 %v80, %v165
    %v170 = vmul.f32 %v87, %v165
    %v171 = vmul.f32 %v94, %v165
    %v172 = vmul.f32 %v101, %v165
    %v173 = vmul.f32 %v108, %v165
    %v174 = vmul.f32 %v115, %v165
    %v175 = vmul.f32 %v122, %v165
    %v176 = vmul.f32 %v129, %v165
    %v177 = vmul.f32 %v136, %v165
    %v178 = vmul.f32 %v143, %v165
    %v179 = vmul.f32 %v150, %v165
    %v180 = vmul.f32 %v157, %v165
    %v181 = vmul.f32 %v164, %v165
    %v182 = vpack.c.bf16 %v166, %v166
    %v183 = vpack.c.bf16 %v167, %v167
    %v184 = vpack.c.bf16 %v168, %v168
    %v185 = vpack.c.bf16 %v169, %v169
    %v186 = vpack.c.bf16 %v170, %v170
    %v187 = vpack.c.bf16 %v171, %v171
    %v188 = vpack.c.bf16 %v172, %v172
    %v189 = vpack.c.bf16 %v173, %v173
    %v190 = vpack.c.bf16 %v174, %v174
    %v191 = vpack.c.bf16 %v175, %v175
    %v192 = vpack.c.bf16 %v176, %v176
    %v193 = vpack.c.bf16 %v177, %v177
    %v194 = vpack.c.bf16 %v178, %v178
    %v195 = vpack.c.bf16 %v179, %v179
    %v196 = vpack.c.bf16 %v180, %v180
    %v197 = vpack.c.bf16 %v181, %v181
    %v198 = vld [vmem:[%s1] sm:$0xf]
    %v199 = vld [vmem:[%s1 + $0x4] sm:$0xf]
    %v200 = vld [vmem:[%s1 + $0x8] sm:$0xf]
    %v201 = vld [vmem:[%s1 + $0xc] sm:$0xf]
    %v202 = vld [vmem:[%s1 + $0x10] sm:$0xf]
    %v203 = vld [vmem:[%s1 + $0x14] sm:$0xf]
    %v204 = vld [vmem:[%s1 + $0x18] sm:$0xf]
    %v205 = vld [vmem:[%s1 + $0x1c] sm:$0xf]
    %v206 = vld [vmem:[%s1 + $0x20] sm:$0xf]
    %v207 = vld [vmem:[%s1 + $0x24] sm:$0xf]
    %v208 = vld [vmem:[%s1 + $0x28] sm:$0xf]
    %v209 = vld [vmem:[%s1 + $0x2c] sm:$0xf]
    %v210 = vld [vmem:[%s1 + $0x30] sm:$0xf]
    %v211 = vld [vmem:[%s1 + $0x34] sm:$0xf]
    %v212 = vld [vmem:[%s1 + $0x38] sm:$0xf]
    %v213 = vld [vmem:[%s1 + $0x3c] sm:$0xf]
    %v214 = vld [vmem:[%s1 + $0x40] sm:$0xf]
    %v215 = vld [vmem:[%s1 + $0x44] sm:$0xf]
    %v216 = vld [vmem:[%s1 + $0x48] sm:$0xf]
    %v217 = vld [vmem:[%s1 + $0x4c] sm:$0xf]
    %v218 = vld [vmem:[%s1 + $0x50] sm:$0xf]
    %v219 = vld [vmem:[%s1 + $0x54] sm:$0xf]
    %v220 = vld [vmem:[%s1 + $0x58] sm:$0xf]
    %v221 = vld [vmem:[%s1 + $0x5c] sm:$0xf]
    %v222 = vld [vmem:[%s1 + $0x60] sm:$0xf]
    %v223 = vld [vmem:[%s1 + $0x64] sm:$0xf]
    %v224 = vld [vmem:[%s1 + $0x68] sm:$0xf]
    %v225 = vld [vmem:[%s1 + $0x6c] sm:$0xf]
    %v226 = vld [vmem:[%s1 + $0x70] sm:$0xf]
    %v227 = vld [vmem:[%s1 + $0x74] sm:$0xf]
    %v228 = vld [vmem:[%s1 + $0x78] sm:$0xf]
    %v229 = vld [vmem:[%s1 + $0x7c] sm:$0xf]
    %v230 = vld [vmem:[%s1 + $0x80] sm:$0xf]
    %v231 = vld [vmem:[%s1 + $0x84] sm:$0xf]
    %v232 = vld [vmem:[%s1 + $0x88] sm:$0xf]
    %v233 = vld [vmem:[%s1 + $0x8c] sm:$0xf]
    %v234 = vld [vmem:[%s1 + $0x90] sm:$0xf]
    %v235 = vld [vmem:[%s1 + $0x94] sm:$0xf]
    %v236 = vld [vmem:[%s1 + $0x98] sm:$0xf]
    %v237 = vld [vmem:[%s1 + $0x9c] sm:$0xf]
    %v238 = vld [vmem:[%s1 + $0xa0] sm:$0xf]
    %v239 = vld [vmem:[%s1 + $0xa4] sm:$0xf]
    %v240 = vld [vmem:[%s1 + $0xa8] sm:$0xf]
    %v241 = vld [vmem:[%s1 + $0xac] sm:$0xf]
    %v242 = vld [vmem:[%s1 + $0xb0] sm:$0xf]
    %v243 = vld [vmem:[%s1 + $0xb4] sm:$0xf]
    %v244 = vld [vmem:[%s1 + $0xb8] sm:$0xf]
    %v245 = vld [vmem:[%s1 + $0xbc] sm:$0xf]
    %v246 = vld [vmem:[%s1 + $0xc0] sm:$0xf]
    %v247 = vld [vmem:[%s1 + $0xc4] sm:$0xf]
    %v248 = vld [vmem:[%s1 + $0xc8] sm:$0xf]
    %v249 = vld [vmem:[%s1 + $0xcc] sm:$0xf]
    %v250 = vld [vmem:[%s1 + $0xd0] sm:$0xf]
    %v251 = vld [vmem:[%s1 + $0xd4] sm:$0xf]
    %v252 = vld [vmem:[%s1 + $0xd8] sm:$0xf]
    %v253 = vld [vmem:[%s1 + $0xdc] sm:$0xf]
    %v254 = vld [vmem:[%s1 + $0xe0] sm:$0xf]
    %v255 = vld [vmem:[%s1 + $0xe4] sm:$0xf]
    %v256 = vld [vmem:[%s1 + $0xe8] sm:$0xf]
    %v257 = vld [vmem:[%s1 + $0xec] sm:$0xf]
    %v258 = vld [vmem:[%s1 + $0xf0] sm:$0xf]
    %v259 = vld [vmem:[%s1 + $0xf4] sm:$0xf]
    %v260 = vld [vmem:[%s1 + $0xf8] sm:$0xf]
    %v261 = vld [vmem:[%s1 + $0xfc] sm:$0xf]
    %v262 = vld [vmem:[%s1 + $0x100] sm:$0xf]
    %v263 = vld [vmem:[%s1 + $0x104] sm:$0xf]
    %v264 = vld [vmem:[%s1 + $0x108] sm:$0xf]
    %v265 = vld [vmem:[%s1 + $0x10c] sm:$0xf]
    %v266 = vld [vmem:[%s1 + $0x110] sm:$0xf]
    %v267 = vld [vmem:[%s1 + $0x114] sm:$0xf]
    %v268 = vld [vmem:[%s1 + $0x118] sm:$0xf]
    %v269 = vld [vmem:[%s1 + $0x11c] sm:$0xf]
    %v270 = vld [vmem:[%s1 + $0x120] sm:$0xf]
    %v271 = vld [vmem:[%s1 + $0x124] sm:$0xf]
    %v272 = vld [vmem:[%s1 + $0x128] sm:$0xf]
    %v273 = vld [vmem:[%s1 + $0x12c] sm:$0xf]
    %v274 = vld [vmem:[%s1 + $0x130] sm:$0xf]
    %v275 = vld [vmem:[%s1 + $0x134] sm:$0xf]
    %v276 = vld [vmem:[%s1 + $0x138] sm:$0xf]
    %v277 = vld [vmem:[%s1 + $0x13c] sm:$0xf]
    %v278 = vld [vmem:[%s1 + $0x140] sm:$0xf]
    %v279 = vld [vmem:[%s1 + $0x144] sm:$0xf]
    %v280 = vld [vmem:[%s1 + $0x148] sm:$0xf]
    %v281 = vld [vmem:[%s1 + $0x14c] sm:$0xf]
    %v282 = vld [vmem:[%s1 + $0x150] sm:$0xf]
    %v283 = vld [vmem:[%s1 + $0x154] sm:$0xf]
    %v284 = vld [vmem:[%s1 + $0x158] sm:$0xf]
    %v285 = vld [vmem:[%s1 + $0x15c] sm:$0xf]
    %v286 = vld [vmem:[%s1 + $0x160] sm:$0xf]
    %v287 = vld [vmem:[%s1 + $0x164] sm:$0xf]
    %v288 = vld [vmem:[%s1 + $0x168] sm:$0xf]
    %v289 = vld [vmem:[%s1 + $0x16c] sm:$0xf]
    %v290 = vld [vmem:[%s1 + $0x170] sm:$0xf]
    %v291 = vld [vmem:[%s1 + $0x174] sm:$0xf]
    %v292 = vld [vmem:[%s1 + $0x178] sm:$0xf]
    %v293 = vld [vmem:[%s1 + $0x17c] sm:$0xf]
    %v294 = vld [vmem:[%s1 + $0x180] sm:$0xf]
    %v295 = vld [vmem:[%s1 + $0x184] sm:$0xf]
    %v296 = vld [vmem:[%s1 + $0x188] sm:$0xf]
    %v297 = vld [vmem:[%s1 + $0x18c] sm:$0xf]
    %v298 = vld [vmem:[%s1 + $0x190] sm:$0xf]
    %v299 = vld [vmem:[%s1 + $0x194] sm:$0xf]
    %v300 = vld [vmem:[%s1 + $0x198] sm:$0xf]
    %v301 = vld [vmem:[%s1 + $0x19c] sm:$0xf]
    %v302 = vld [vmem:[%s1 + $0x1a0] sm:$0xf]
    %v303 = vld [vmem:[%s1 + $0x1a4] sm:$0xf]
    %v304 = vld [vmem:[%s1 + $0x1a8] sm:$0xf]
    %v305 = vld [vmem:[%s1 + $0x1ac] sm:$0xf]
    %v306 = vld [vmem:[%s1 + $0x1b0] sm:$0xf]
    %v307 = vld [vmem:[%s1 + $0x1b4] sm:$0xf]
    %v308 = vld [vmem:[%s1 + $0x1b8] sm:$0xf]
    %v309 = vld [vmem:[%s1 + $0x1bc] sm:$0xf]
    %v310 = vld [vmem:[%s1 + $0x1c0] sm:$0xf]
    %v311 = vld [vmem:[%s1 + $0x1c4] sm:$0xf]
    %v312 = vld [vmem:[%s1 + $0x1c8] sm:$0xf]
    %v313 = vld [vmem:[%s1 + $0x1cc] sm:$0xf]
    %v314 = vld [vmem:[%s1 + $0x1d0] sm:$0xf]
    %v315 = vld [vmem:[%s1 + $0x1d4] sm:$0xf]
    %v316 = vld [vmem:[%s1 + $0x1d8] sm:$0xf]
    %v317 = vld [vmem:[%s1 + $0x1dc] sm:$0xf]
    %v318 = vld [vmem:[%s1 + $0x1e0] sm:$0xf]
    %v319 = vld [vmem:[%s1 + $0x1e4] sm:$0xf]
    %v320 = vld [vmem:[%s1 + $0x1e8] sm:$0xf]
    %v321 = vld [vmem:[%s1 + $0x1ec] sm:$0xf]
    %v322 = vld [vmem:[%s1 + $0x1f0] sm:$0xf]
    %v323 = vld [vmem:[%s1 + $0x1f4] sm:$0xf]
    %v324 = vld [vmem:[%s1 + $0x1f8] sm:$0xf]
    %v325 = vld [vmem:[%s1 + $0x1fc] sm:$0xf]
    %v326 = vld [vmem:[%s2] sm:$0x1]
    %v328 = vlaneseq
    %v329 = vshrl.u32 %v328, 7
    %v330 = vsub.s32 0, %v329
    %v331 = vrot.slane %v326, %v330
    %v349 = vunpack.c.l.b16 %v182
    %v350 = vunpack.c.l.b16 %v183
    %v351 = vunpack.c.l.b16 %v184
    %v352 = vunpack.c.l.b16 %v185
    %v353 = vunpack.c.l.b16 %v186
    %v354 = vunpack.c.l.b16 %v187
    %v355 = vunpack.c.l.b16 %v188
    %v356 = vunpack.c.l.b16 %v189
    %v357 = vunpack.c.l.b16 %v190
    %v358 = vunpack.c.l.b16 %v191
    %v359 = vunpack.c.l.b16 %v192
    %v360 = vunpack.c.l.b16 %v193
    %v361 = vunpack.c.l.b16 %v194
    %v362 = vunpack.c.l.b16 %v195
    %v363 = vunpack.c.l.b16 %v196
    %v364 = vunpack.c.l.b16 %v197
    %vm365 = vcmask 1041409
    %v366 = vsel %vm365, %v357, %v349
    %v367 = vsel %vm365, %v358, %v350
    %v368 = vsel %vm365, %v359, %v351
    %v369 = vsel %vm365, %v360, %v352
    %v370 = vsel %vm365, %v361, %v353
    %v371 = vsel %vm365, %v362, %v354
    %v372 = vsel %vm365, %v363, %v355
    %v373 = vsel %vm365, %v364, %v356
    %v374 = vpack.c.b16 %v366, %v366
    %v375 = vpack.c.b16 %v367, %v367
    %v376 = vpack.c.b16 %v368, %v368
    %v377 = vpack.c.b16 %v369, %v369
    %v378 = vpack.c.b16 %v370, %v370
    %v379 = vpack.c.b16 %v371, %v371
    %v380 = vpack.c.b16 %v372, %v372
    %v381 = vpack.c.b16 %v373, %v373
    %v518 = vunpack.c.l.b16 %v198
    %v519 = vunpack.c.l.b16 %v199
    %v520 = vunpack.c.l.b16 %v200
    %v521 = vunpack.c.l.b16 %v201
    %v522 = vunpack.c.l.b16 %v202
    %v523 = vunpack.c.l.b16 %v203
    %v524 = vunpack.c.l.b16 %v204
    %v525 = vunpack.c.l.b16 %v205
    %v526 = vunpack.c.l.b16 %v206
    %v527 = vunpack.c.l.b16 %v207
    %v528 = vunpack.c.l.b16 %v208
    %v529 = vunpack.c.l.b16 %v209
    %v530 = vunpack.c.l.b16 %v210
    %v531 = vunpack.c.l.b16 %v211
    %v532 = vunpack.c.l.b16 %v212
    %v533 = vunpack.c.l.b16 %v213
    %v534 = vunpack.c.l.b16 %v214
    %v535 = vunpack.c.l.b16 %v215
    %v536 = vunpack.c.l.b16 %v216
    %v537 = vunpack.c.l.b16 %v217
    %v538 = vunpack.c.l.b16 %v218
    %v539 = vunpack.c.l.b16 %v219
    %v540 = vunpack.c.l.b16 %v220
    %v541 = vunpack.c.l.b16 %v221
    %v542 = vunpack.c.l.b16 %v222
    %v543 = vunpack.c.l.b16 %v223
    %v544 = vunpack.c.l.b16 %v224
    %v545 = vunpack.c.l.b16 %v225
    %v546 = vunpack.c.l.b16 %v226
    %v547 = vunpack.c.l.b16 %v227
    %v548 = vunpack.c.l.b16 %v228
    %v549 = vunpack.c.l.b16 %v229
    %v550 = vunpack.c.l.b16 %v230
    %v551 = vunpack.c.l.b16 %v231
    %v552 = vunpack.c.l.b16 %v232
    %v553 = vunpack.c.l.b16 %v233
    %v554 = vunpack.c.l.b16 %v234
    %v555 = vunpack.c.l.b16 %v235
    %v556 = vunpack.c.l.b16 %v236
    %v557 = vunpack.c.l.b16 %v237
    %v558 = vunpack.c.l.b16 %v238
    %v559 = vunpack.c.l.b16 %v239
    %v560 = vunpack.c.l.b16 %v240
    %v561 = vunpack.c.l.b16 %v241
    %v562 = vunpack.c.l.b16 %v242
    %v563 = vunpack.c.l.b16 %v243
    %v564 = vunpack.c.l.b16 %v244
    %v565 = vunpack.c.l.b16 %v245
    %v566 = vunpack.c.l.b16 %v246
    %v567 = vunpack.c.l.b16 %v247
    %v568 = vunpack.c.l.b16 %v248
    %v569 = vunpack.c.l.b16 %v249
    %v570 = vunpack.c.l.b16 %v250
    %v571 = vunpack.c.l.b16 %v251
    %v572 = vunpack.c.l.b16 %v252
    %v573 = vunpack.c.l.b16 %v253
    %v574 = vunpack.c.l.b16 %v254
    %v575 = vunpack.c.l.b16 %v255
    %v576 = vunpack.c.l.b16 %v256
    %v577 = vunpack.c.l.b16 %v257
    %v578 = vunpack.c.l.b16 %v258
    %v579 = vunpack.c.l.b16 %v259
    %v580 = vunpack.c.l.b16 %v260
    %v581 = vunpack.c.l.b16 %v261
    %v582 = vunpack.c.l.b16 %v262
    %v583 = vunpack.c.l.b16 %v263
    %v584 = vunpack.c.l.b16 %v264
    %v585 = vunpack.c.l.b16 %v265
    %v586 = vunpack.c.l.b16 %v266
    %v587 = vunpack.c.l.b16 %v267
    %v588 = vunpack.c.l.b16 %v268
    %v589 = vunpack.c.l.b16 %v269
    %v590 = vunpack.c.l.b16 %v270
    %v591 = vunpack.c.l.b16 %v271
    %v592 = vunpack.c.l.b16 %v272
    %v593 = vunpack.c.l.b16 %v273
    %v594 = vunpack.c.l.b16 %v274
    %v595 = vunpack.c.l.b16 %v275
    %v596 = vunpack.c.l.b16 %v276
    %v597 = vunpack.c.l.b16 %v277
    %v598 = vunpack.c.l.b16 %v278
    %v599 = vunpack.c.l.b16 %v279
    %v600 = vunpack.c.l.b16 %v280
    %v601 = vunpack.c.l.b16 %v281
    %v602 = vunpack.c.l.b16 %v282
    %v603 = vunpack.c.l.b16 %v283
    %v604 = vunpack.c.l.b16 %v284
    %v605 = vunpack.c.l.b16 %v285
    %v606 = vunpack.c.l.b16 %v286
    %v607 = vunpack.c.l.b16 %v287
    %v608 = vunpack.c.l.b16 %v288
    %v609 = vunpack.c.l.b16 %v289
    %v610 = vunpack.c.l.b16 %v290
    %v611 = vunpack.c.l.b16 %v291
    %v612 = vunpack.c.l.b16 %v292
    %v613 = vunpack.c.l.b16 %v293
    %v614 = vunpack.c.l.b16 %v294
    %v615 = vunpack.c.l.b16 %v295
    %v616 = vunpack.c.l.b16 %v296
    %v617 = vunpack.c.l.b16 %v297
    %v618 = vunpack.c.l.b16 %v298
    %v619 = vunpack.c.l.b16 %v299
    %v620 = vunpack.c.l.b16 %v300
    %v621 = vunpack.c.l.b16 %v301
    %v622 = vunpack.c.l.b16 %v302
    %v623 = vunpack.c.l.b16 %v303
    %v624 = vunpack.c.l.b16 %v304
    %v625 = vunpack.c.l.b16 %v305
    %v626 = vunpack.c.l.b16 %v306
    %v627 = vunpack.c.l.b16 %v307
    %v628 = vunpack.c.l.b16 %v308
    %v629 = vunpack.c.l.b16 %v309
    %v630 = vunpack.c.l.b16 %v310
    %v631 = vunpack.c.l.b16 %v311
    %v632 = vunpack.c.l.b16 %v312
    %v633 = vunpack.c.l.b16 %v313
    %v634 = vunpack.c.l.b16 %v314
    %v635 = vunpack.c.l.b16 %v315
    %v636 = vunpack.c.l.b16 %v316
    %v637 = vunpack.c.l.b16 %v317
    %v638 = vunpack.c.l.b16 %v318
    %v639 = vunpack.c.l.b16 %v319
    %v640 = vunpack.c.l.b16 %v320
    %v641 = vunpack.c.l.b16 %v321
    %v642 = vunpack.c.l.b16 %v322
    %v643 = vunpack.c.l.b16 %v323
    %v644 = vunpack.c.l.b16 %v324
    %v645 = vunpack.c.l.b16 %v325
    %v646 = vpack.c.b16 %v519, %v518
    %v647 = vpack.c.b16 %v521, %v520
    %v648 = vpack.c.b16 %v523, %v522
    %v649 = vpack.c.b16 %v525, %v524
    %v650 = vpack.c.b16 %v527, %v526
    %v651 = vpack.c.b16 %v529, %v528
    %v652 = vpack.c.b16 %v531, %v530
    %v653 = vpack.c.b16 %v533, %v532
    %v654 = vpack.c.b16 %v535, %v534
    %v655 = vpack.c.b16 %v537, %v536
    %v656 = vpack.c.b16 %v539, %v538
    %v657 = vpack.c.b16 %v541, %v540
    %v658 = vpack.c.b16 %v543, %v542
    %v659 = vpack.c.b16 %v545, %v544
    %v660 = vpack.c.b16 %v547, %v546
    %v661 = vpack.c.b16 %v549, %v548
    %v662 = vpack.c.b16 %v551, %v550
    %v663 = vpack.c.b16 %v553, %v552
    %v664 = vpack.c.b16 %v555, %v554
    %v665 = vpack.c.b16 %v557, %v556
    %v666 = vpack.c.b16 %v559, %v558
    %v667 = vpack.c.b16 %v561, %v560
    %v668 = vpack.c.b16 %v563, %v562
    %v669 = vpack.c.b16 %v565, %v564
    %v670 = vpack.c.b16 %v567, %v566
    %v671 = vpack.c.b16 %v569, %v568
    %v672 = vpack.c.b16 %v571, %v570
    %v673 = vpack.c.b16 %v573, %v572
    %v674 = vpack.c.b16 %v575, %v574
    %v675 = vpack.c.b16 %v577, %v576
    %v676 = vpack.c.b16 %v579, %v578
    %v677 = vpack.c.b16 %v581, %v580
    %v678 = vpack.c.b16 %v583, %v582
    %v679 = vpack.c.b16 %v585, %v584
    %v680 = vpack.c.b16 %v587, %v586
    %v681 = vpack.c.b16 %v589, %v588
    %v682 = vpack.c.b16 %v591, %v590
    %v683 = vpack.c.b16 %v593, %v592
    %v684 = vpack.c.b16 %v595, %v594
    %v685 = vpack.c.b16 %v597, %v596
    %v686 = vpack.c.b16 %v599, %v598
    %v687 = vpack.c.b16 %v601, %v600
    %v688 = vpack.c.b16 %v603, %v602
    %v689 = vpack.c.b16 %v605, %v604
    %v690 = vpack.c.b16 %v607, %v606
    %v691 = vpack.c.b16 %v609, %v608
    %v692 = vpack.c.b16 %v611, %v610
    %v693 = vpack.c.b16 %v613, %v612
    %v694 = vpack.c.b16 %v615, %v614
    %v695 = vpack.c.b16 %v617, %v616
    %v696 = vpack.c.b16 %v619, %v618
    %v697 = vpack.c.b16 %v621, %v620
    %v698 = vpack.c.b16 %v623, %v622
    %v699 = vpack.c.b16 %v625, %v624
    %v700 = vpack.c.b16 %v627, %v626
    %v701 = vpack.c.b16 %v629, %v628
    %v702 = vpack.c.b16 %v631, %v630
    %v703 = vpack.c.b16 %v633, %v632
    %v704 = vpack.c.b16 %v635, %v634
    %v705 = vpack.c.b16 %v637, %v636
    %v706 = vpack.c.b16 %v639, %v638
    %v707 = vpack.c.b16 %v641, %v640
    %v708 = vpack.c.b16 %v643, %v642
    %v709 = vpack.c.b16 %v645, %v644
    %774 = vmatprep.subr.bf16.mxu0 0
    %775 = vmatpush1.bf16.msra.mxu0 %v646
    %776 = vmatprep.subr.bf16.mxu0 0
    %777 = vmatpush1.bf16.msra.mxu0 %v647
    %778 = vmatprep.subr.bf16.mxu0 0
    %779 = vmatpush1.bf16.msra.mxu0 %v648
    %780 = vmatprep.subr.bf16.mxu0 0
    %781 = vmatpush1.bf16.msra.mxu0 %v649
    %782 = vmatprep.subr.bf16.mxu0 0
    %783 = vmatpush1.bf16.msra.mxu0 %v650
    %784 = vmatprep.subr.bf16.mxu0 0
    %785 = vmatpush1.bf16.msra.mxu0 %v651
    %786 = vmatprep.subr.bf16.mxu0 0
    %787 = vmatpush1.bf16.msra.mxu0 %v652
    %788 = vmatprep.subr.bf16.mxu0 0
    %789 = vmatpush1.bf16.msra.mxu0 %v653
    %790 = vmatprep.subr.bf16.mxu0 0
    %791 = vmatpush1.bf16.msra.mxu0 %v654
    %792 = vmatprep.subr.bf16.mxu0 0
    %793 = vmatpush1.bf16.msra.mxu0 %v655
    %794 = vmatprep.subr.bf16.mxu0 0
    %795 = vmatpush1.bf16.msra.mxu0 %v656
    %796 = vmatprep.subr.bf16.mxu0 0
    %797 = vmatpush1.bf16.msra.mxu0 %v657
    %798 = vmatprep.subr.bf16.mxu0 0
    %799 = vmatpush1.bf16.msra.mxu0 %v658
    %800 = vmatprep.subr.bf16.mxu0 0
    %801 = vmatpush1.bf16.msra.mxu0 %v659
    %802 = vmatprep.subr.bf16.mxu0 0
    %803 = vmatpush1.bf16.msra.mxu0 %v660
    %804 = vmatprep.subr.bf16.mxu0 0
    %805 = vmatpush1.bf16.msra.mxu0 %v661
    %806 = vmatprep.mubr.bf16.mxu0 %v375
    %807 = vmatmul.mubr.bf16.gmra.mrb[0].mxu0 %v374
    %v808 = vpop.f32.mrb[0].mxu0
    %v809 = vadd.f32 %v331, %v808
    %v810 = vpop.f32.mrb[0].mxu0
    %v811 = vpop.f32.mrb[0].mxu0
    %v812 = vpop.f32.mrb[0].mxu0
    %813 = vdwg.mxu0
    %814 = vmatprep.subr.bf16.mxu0 0
    %815 = vmatpush1.bf16.msra.mxu0 %v662
    %816 = vmatprep.subr.bf16.mxu0 0
    %817 = vmatpush1.bf16.msra.mxu0 %v663
    %818 = vmatprep.subr.bf16.mxu0 0
    %819 = vmatpush1.bf16.msra.mxu0 %v664
    %820 = vmatprep.subr.bf16.mxu0 0
    %821 = vmatpush1.bf16.msra.mxu0 %v665
    %822 = vmatprep.subr.bf16.mxu0 0
    %823 = vmatpush1.bf16.msra.mxu0 %v666
    %824 = vmatprep.subr.bf16.mxu0 0
    %825 = vmatpush1.bf16.msra.mxu0 %v667
    %826 = vmatprep.subr.bf16.mxu0 0
    %827 = vmatpush1.bf16.msra.mxu0 %v668
    %828 = vmatprep.subr.bf16.mxu0 0
    %829 = vmatpush1.bf16.msra.mxu0 %v669
    %830 = vmatprep.subr.bf16.mxu0 0
    %831 = vmatpush1.bf16.msra.mxu0 %v670
    %832 = vmatprep.subr.bf16.mxu0 0
    %833 = vmatpush1.bf16.msra.mxu0 %v671
    %834 = vmatprep.subr.bf16.mxu0 0
    %835 = vmatpush1.bf16.msra.mxu0 %v672
    %836 = vmatprep.subr.bf16.mxu0 0
    %837 = vmatpush1.bf16.msra.mxu0 %v673
    %838 = vmatprep.subr.bf16.mxu0 0
    %839 = vmatpush1.bf16.msra.mxu0 %v674
    %840 = vmatprep.subr.bf16.mxu0 0
    %841 = vmatpush1.bf16.msra.mxu0 %v675
    %842 = vmatprep.subr.bf16.mxu0 0
    %843 = vmatpush1.bf16.msra.mxu0 %v676
    %844 = vmatprep.subr.bf16.mxu0 0
    %845 = vmatpush1.bf16.msra.mxu0 %v677
    %846 = vmatprep.mubr.bf16.mxu0 %v377
    %847 = vmatmul.mubr.bf16.gmra.mrb[0].mxu0 %v376
    %v848 = vpop.f32.mrb[0].mxu0
    %v849 = vadd.f32 %v809, %v848
    %v850 = vpop.f32.mrb[0].mxu0
    %v851 = vpop.f32.mrb[0].mxu0
    %v852 = vpop.f32.mrb[0].mxu0
    %853 = vdwg.mxu0
    %854 = vmatprep.subr.bf16.mxu0 0
    %855 = vmatpush1.bf16.msra.mxu0 %v678
    %856 = vmatprep.subr.bf16.mxu0 0
    %857 = vmatpush1.bf16.msra.mxu0 %v679
    %858 = vmatprep.subr.bf16.mxu0 0
    %859 = vmatpush1.bf16.msra.mxu0 %v680
    %860 = vmatprep.subr.bf16.mxu0 0
    %861 = vmatpush1.bf16.msra.mxu0 %v681
    %862 = vmatprep.subr.bf16.mxu0 0
    %863 = vmatpush1.bf16.msra.mxu0 %v682
    %864 = vmatprep.subr.bf16.mxu0 0
    %865 = vmatpush1.bf16.msra.mxu0 %v683
    %866 = vmatprep.subr.bf16.mxu0 0
    %867 = vmatpush1.bf16.msra.mxu0 %v684
    %868 = vmatprep.subr.bf16.mxu0 0
    %869 = vmatpush1.bf16.msra.mxu0 %v685
    %870 = vmatprep.subr.bf16.mxu0 0
    %871 = vmatpush1.bf16.msra.mxu0 %v686
    %872 = vmatprep.subr.bf16.mxu0 0
    %873 = vmatpush1.bf16.msra.mxu0 %v687
    %874 = vmatprep.subr.bf16.mxu0 0
    %875 = vmatpush1.bf16.msra.mxu0 %v688
    %876 = vmatprep.subr.bf16.mxu0 0
    %877 = vmatpush1.bf16.msra.mxu0 %v689
    %878 = vmatprep.subr.bf16.mxu0 0
    %879 = vmatpush1.bf16.msra.mxu0 %v690
    %880 = vmatprep.subr.bf16.mxu0 0
    %881 = vmatpush1.bf16.msra.mxu0 %v691
    %882 = vmatprep.subr.bf16.mxu0 0
    %883 = vmatpush1.bf16.msra.mxu0 %v692
    %884 = vmatprep.subr.bf16.mxu0 0
    %885 = vmatpush1.bf16.msra.mxu0 %v693
    %886 = vmatprep.mubr.bf16.mxu0 %v379
    %887 = vmatmul.mubr.bf16.gmra.mrb[0].mxu0 %v378
    %v888 = vpop.f32.mrb[0].mxu0
    %v889 = vadd.f32 %v849, %v888
    %v890 = vpop.f32.mrb[0].mxu0
    %v891 = vpop.f32.mrb[0].mxu0
    %v892 = vpop.f32.mrb[0].mxu0
    %893 = vdwg.mxu0
    %894 = vmatprep.subr.bf16.mxu0 0
    %895 = vmatpush1.bf16.msra.mxu0 %v694
    %896 = vmatprep.subr.bf16.mxu0 0
    %897 = vmatpush1.bf16.msra.mxu0 %v695
    %898 = vmatprep.subr.bf16.mxu0 0
    %899 = vmatpush1.bf16.msra.mxu0 %v696
    %900 = vmatprep.subr.bf16.mxu0 0
    %901 = vmatpush1.bf16.msra.mxu0 %v697
    %902 = vmatprep.subr.bf16.mxu0 0
    %903 = vmatpush1.bf16.msra.mxu0 %v698
    %904 = vmatprep.subr.bf16.mxu0 0
    %905 = vmatpush1.bf16.msra.mxu0 %v699
    %906 = vmatprep.subr.bf16.mxu0 0
    %907 = vmatpush1.bf16.msra.mxu0 %v700
    %908 = vmatprep.subr.bf16.mxu0 0
    %909 = vmatpush1.bf16.msra.mxu0 %v701
    %910 = vmatprep.subr.bf16.mxu0 0
    %911 = vmatpush1.bf16.msra.mxu0 %v702
    %912 = vmatprep.subr.bf16.mxu0 0
    %913 = vmatpush1.bf16.msra.mxu0 %v703
    %914 = vmatprep.subr.bf16.mxu0 0
    %915 = vmatpush1.bf16.msra.mxu0 %v704
    %916 = vmatprep.subr.bf16.mxu0 0
    %917 = vmatpush1.bf16.msra.mxu0 %v705
    %918 = vmatprep.subr.bf16.mxu0 0
    %919 = vmatpush1.bf16.msra.mxu0 %v706
    %920 = vmatprep.subr.bf16.mxu0 0
    %921 = vmatpush1.bf16.msra.mxu0 %v707
    %922 = vmatprep.subr.bf16.mxu0 0
    %923 = vmatpush1.bf16.msra.mxu0 %v708
    %924 = vmatprep.subr.bf16.mxu0 0
    %925 = vmatpush1.bf16.msra.mxu0 %v709
    %926 = vmatprep.mubr.bf16.mxu0 %v381
    %927 = vmatmul.mubr.bf16.gmra.mrb[0].mxu0 %v380
    %v928 = vpop.f32.mrb[0].mxu0
    %v929 = vadd.f32 %v889, %v928
    %v930 = vpop.f32.mrb[0].mxu0
    %v931 = vpop.f32.mrb[0].mxu0
    %v932 = vpop.f32.mrb[0].mxu0
    %933 = vdwg.mxu0
    %v934 = vmul.f32 %v929, %v929
    %vm935 = vcmask 1041408
    %v936 = vsel %vm935, %v934, 0.0
    %937 = vadd.xlane.f32.xlu0 %v936
    %v938 = vpop.xlane.xlu0 %937
    %v939 = vadd.f32 %v938, 1e-12
    %v940 = vrsqrt.pop %v939
    %v941 = vmul.f32 %v929, %v940
    %942 = vst [vmem:[#allocation2] sm:$0x3] %v941
    // Predicated region
    $region14: #{model_forward.1} parent=1 // pred_check
      _
    $region15: #{model_forward.1} parent=1 // pred_check_branch
      %944 = sbr.rel (0) target = $region17
    $region16: #{model_forward.1} parent=1 // pred_region
      %s946 = ssub.s32 32, 32
      %947 = vsyncadd [#allocation3], %s946
      %s949 = sshll.u32 [#allocation2], 4
      %s950 = int_to_ptr.vmem [resolvable:$true] %s949
      %952 = dma.vmem_to_hbm [thread:$0]  %s950, 32, %s3, [#allocation3]
    $region17: #{model_forward.1} parent=1 // pred_fallthru
      _
    // Predicated region
    $region18: #{model_forward.1} parent=1 // pred_check
      _
    $region19: #{model_forward.1} parent=1 // pred_check_branch
      %954 = sbr.rel (0) target = $region21
    $region20: #{model_forward.1} parent=1 // pred_region
      %955 = dma.done [#allocation3], 32
    $region21: #{model_forward.1} parent=1 // pred_fallthru
      _
    %956 = vsyncpa [#allocation3], 1

</llo_original>
